<compile_context>
chip_gen: v5e
topology: v5e:2x2
jax: 0.10.0
libtpu: 0.0.40
codegen_flags: <defaults>
</compile_context>

<pallas_src>
import math

import jax
import jax.numpy as jnp
from jax.experimental import pallas as pl
from jax.experimental.pallas import tpu as pltpu

LRELU_SLOPE = 0.2
BN_EPS = 1e-5

# Inter-layer activations are stored in bf16 and MXU operands are bf16 (f32 accumulation,
# f32 BN/LeakyReLU math).  Set both to jnp.float32 for an exact-f32 run.
STORE_DTYPE = jnp.bfloat16
DOT_DTYPE = jnp.bfloat16
CIN_PAD = 8     # pad the 3-channel image (and conv_in weights) to 8 input channels
COUT_PAD = 8    # conv_out: pad Cout 1 -> 8 (masked lane stores, but 16x less than 128)


# ----------------------------------------------------------------------------
# Small helpers
# ----------------------------------------------------------------------------
def _round_up(x, m):
    return ((x + m - 1) // m) * m


def _vmem_limit_bytes():
    """Scoped-VMEM budget sized from the actual chip (64 MiB on v7x, 128 on v5e/v6e)."""
    try:
        cap = int(pltpu.get_tpu_info().vmem_capacity_bytes)
    except Exception:
        cap = 64 << 20                      # conservative (v7x-sized) fallback
    return int(min(max(cap - (16 << 20), 32 << 20), 96 << 20))


def _pick_row_tile(H, WP, c, vmem_limit):
    """Rows per grid step: multiple of 8, divides H, per-step working set <~60% VMEM."""
    sb = jnp.dtype(STORE_DTYPE).itemsize
    budget = 0.6 * vmem_limit
    cap = H if H < 16 else max(H // 2, 8)   # keep >=2 row tiles per image for megacore
    best = 8
    for th in range(8, cap + 1, 8):
        if H % th:
            continue
        s = th * WP
        est = (s * c * (2 * sb + 2 + 8)        # input (x2 bufs) + bf16 window + f32 temps
               + s * c * (4 * sb + 8)          # output + residual (x2 bufs) + f32 acc
               + 8 * WP * c * (2 * sb + 2)     # halo blocks
               + 9 * c * c * 2 + (2 << 20))    # weights + slack
        if est <= budget:
            best = th
    return best


def _const_spec(shape, index_map):
    """Single-buffered BlockSpec for constant-index_map operands (never re-DMA'd)."""
    try:
        return pl.BlockSpec(shape, index_map, pipeline_mode=pl.Buffered(1))
    except Exception:                           # API without pipeline_mode: double-buffer
        return pl.BlockSpec(shape, index_map)


def _to_flat_rows(x_nhwc, WP):
    """(N, H, W, C) -> (N, H*WP, C): each image row zero-padded to width WP."""
    n, h, w, c = x_nhwc.shape
    xp = jnp.pad(x_nhwc, ((0, 0), (0, 0), (0, WP - w), (0, 0)))
    return xp.reshape(n, h * WP, c)


def _bn_affine(stats, gamma, beta, count):
    """Fold batch sum/sumsq + gamma/beta into per-channel scale/shift (f32)."""
    mean = stats[0] / count
    var = jnp.maximum(stats[1] / count - mean * mean, 0.0)
    scale = gamma * jax.lax.rsqrt(var + BN_EPS)
    shift = beta - mean * scale
    c = scale.shape[0]
    return scale.reshape(1, c), shift.reshape(1, c)


# ----------------------------------------------------------------------------
# Pallas kernel: fused [BN-apply + LeakyReLU +] 3x3 conv [+ residual] [+ BN stats]
# ----------------------------------------------------------------------------
def _make_conv_kernel(*, apply_norm, has_residual, emit_stats, inv_out_scale,
                      th, W, WP, cin, cout, n_tiles, out_dtype):
    M_OUT = th * WP
    HALO = 2 * WP

    def lrelu(v):
        return jnp.where(v > 0, v, LRELU_SLOPE * v)

    def kernel(*refs):
        it = iter(refs)
        up_ref = next(it)                           # 2 image rows above the tile
        main_ref = next(it)                         # th image rows
        down_ref = next(it)                         # 2 image rows below the tile
        scale_ref = next(it) if apply_norm else None
        shift_ref = next(it) if apply_norm else None
        w_ref = next(it)                            # (9, cin, cout)
        b_ref = next(it)                            # (1, cout)
        res_ref = next(it) if has_residual else None
        o_ref = next(it)
        stats_ref = next(it) if emit_stats else None

        ti = pl.program_id(1)
        colmask = jax.lax.broadcasted_iota(jnp.int32, (1, WP, 1), 1) < W   # (1,WP,1)

        # ---- halo pieces: interior/boundary masks built from iota range compares ----
        k = jax.lax.broadcasted_iota(jnp.int32, (HALO, 1), 0)
        up_mask = (k >= WP) & (k < WP + W) & (ti >= 1)
        dn_mask = (k < W) & (ti < n_tiles - 1)

        up = up_ref[0].astype(jnp.float32)
        dn = down_ref[0].astype(jnp.float32)

        if apply_norm:
            scale = scale_ref[...]                  # (1, cin) f32
            shift = shift_ref[...]
            up = jnp.where(up_mask, lrelu(up * scale + shift), 0.0)
            dn = jnp.where(dn_mask, lrelu(dn * scale + shift), 0.0)
            x3 = main_ref[0].astype(jnp.float32).reshape(th, WP, cin)
            y3 = jnp.where(colmask, lrelu(x3 * scale + shift), 0.0)
            main = y3.reshape(M_OUT, cin).astype(DOT_DTYPE)
        else:
            up = jnp.where(up_mask, up, 0.0)
            dn = jnp.where(dn_mask, dn, 0.0)
            main = main_ref[0].astype(DOT_DTYPE)    # pad cols already zero, rows interior

        win = jnp.concatenate(
            [up.astype(DOT_DTYPE), main, dn.astype(DOT_DTYPE)], axis=0)   # (M_OUT+4*WP, cin)

        # ---- 9 accumulating MXU matmuls (K = cin); no im2col materialisation ---------
        wts = w_ref[...]
        acc = None
        for dy in range(3):
            for dx in range(3):
                off = (dy + 1) * WP + dx - 1
                part = jnp.dot(win[off:off + M_OUT, :], wts[dy * 3 + dx],
                               preferred_element_type=jnp.float32)
                acc = part if acc is None else acc + part

        a3 = acc.reshape(th, WP, cout) + b_ref[...].astype(jnp.float32)
        # Zero the padding columns: keeps the stored activation directly consumable as
        # the next layer's input and makes the fused BN statistics exact.
        a3 = jnp.where(colmask, a3, 0.0)
        out2d = a3.reshape(M_OUT, cout)

        if emit_stats:
            s = jnp.sum(out2d, axis=0, keepdims=True)
            ss = jnp.sum(out2d * out2d, axis=0, keepdims=True)
            stats_ref[...] = jnp.concatenate([s, ss], axis=0)[None, None]

        if has_residual:
            out2d = (out2d + res_ref[0].astype(jnp.float32)) * inv_out_scale
        o_ref[0] = out2d.astype(out_dtype)

    return kernel


# ----------------------------------------------------------------------------
# pallas_call wrapper
# ----------------------------------------------------------------------------
def conv3x3(xflat, w, b, *, H, W, WP, th, vmem_limit,
            norm_scale=None, norm_shift=None, residual=None,
            output_scale_factor=1.0, emit_stats=False, out_dtype=None):
    """Fused 3x3 conv (padding=1) on the flat-row layout (N, H*WP, C).

    The input's padding columns (>= W in every image row) must be zero; the output's
    are zeroed in the kernel, so the output feeds the next conv3x3 directly.
    """
    n = xflat.shape[0]
    cin = xflat.shape[-1]
    cout = w.shape[-1]
    if out_dtype is None:
        out_dtype = STORE_DTYPE
    M_OUT = th * WP
    HALO = 2 * WP
    n_tiles = H // th
    g = th // 2                       # main-block start measured in 2-row (2*WP) blocks
    apply_norm = norm_scale is not None
    has_res = residual is not None

    kernel = _make_conv_kernel(
        apply_norm=apply_norm, has_residual=has_res, emit_stats=emit_stats,
        inv_out_scale=1.0 / output_scale_factor, th=th, W=W, WP=WP,
        cin=cin, cout=cout, n_tiles=n_tiles, out_dtype=out_dtype)

    main_map = lambda ni, ti: (ni, ti, 0)
    up_map = lambda ni, ti: (ni, jnp.maximum(ti * g - 1, 0), 0)
    down_map = lambda ni, ti: (ni, jnp.minimum((ti + 1) * g, H // 2 - 1), 0)

    in_specs = [pl.BlockSpec((1, HALO, cin), up_map),
                pl.BlockSpec((1, M_OUT, cin), main_map),
                pl.BlockSpec((1, HALO, cin), down_map)]
    args = [xflat, xflat, xflat]
    if apply_norm:
        in_specs += [_const_spec((1, cin), lambda ni, ti: (0, 0)),
                     _const_spec((1, cin), lambda ni, ti: (0, 0))]
        args += [norm_scale.astype(jnp.float32), norm_shift.astype(jnp.float32)]
    in_specs += [_const_spec((9, cin, cout), lambda ni, ti: (0, 0, 0)),
                 _const_spec((1, cout), lambda ni, ti: (0, 0))]
    args += [w.reshape(9, cin, cout).astype(DOT_DTYPE),
             b.reshape(1, cout).astype(jnp.float32)]
    if has_res:
        in_specs.append(pl.BlockSpec((1, M_OUT, cout), main_map))
        args.append(residual)

    out_shape = [jax.ShapeDtypeStruct((n, H * WP, cout), out_dtype)]
    out_specs = [pl.BlockSpec((1, M_OUT, cout), main_map)]
    if emit_stats:
        out_shape.append(jax.ShapeDtypeStruct((n, n_tiles, 2, cout), jnp.float32))
        out_specs.append(pl.BlockSpec((1, 1, 2, cout), lambda ni, ti: (ni, ti, 0, 0)))

    return pl.pallas_call(
        kernel,
        grid=(n, n_tiles),
        in_specs=in_specs,
        out_specs=out_specs if emit_stats else out_specs[0],
        out_shape=out_shape if emit_stats else out_shape[0],
        compiler_params=pltpu.CompilerParams(
            dimension_semantics=("parallel", "parallel"),
            vmem_limit_bytes=vmem_limit),
    )(*args)


# ----------------------------------------------------------------------------
# Parameter init (deterministic, mirrors weight_init in the PyTorch module)
# ----------------------------------------------------------------------------
def init_params(key, in_channels=3, block_out_channels=(64,)):
    assert len(block_out_channels) == 1, "default config: single (final) block"
    c0 = block_out_channels[0]

    def conv_init(k, cin, cout):
        kw, kb = jax.random.split(k)
        w = 0.02 * jax.random.normal(kw, (3, 3, cin, cout), jnp.float32)
        bound = 1.0 / math.sqrt(cin * 9)
        b = jax.random.uniform(kb, (cout,), jnp.float32, -bound, bound)
        return w, b

    def bn_init(k, c):
        gamma = 1.0 + 0.02 * jax.random.normal(k, (c,), jnp.float32)
        beta = jnp.zeros((c,), jnp.float32)
        return gamma, beta

    keys = jax.random.split(key, 6)
    return {
        "conv_in": conv_init(keys[0], in_channels, c0),
        "norm1": bn_init(keys[1], c0),
        "conv1": conv_init(keys[2], c0, c0),
        "norm2": bn_init(keys[3], c0),
        "conv2": conv_init(keys[4], c0, c0),
        "conv_out": conv_init(keys[5], c0, 1),
    }


# ----------------------------------------------------------------------------
# Forward pass (Pallas)
# ----------------------------------------------------------------------------
def discriminator2d_forward(params, x_nchw):
    x = jnp.transpose(x_nchw, (0, 2, 3, 1)).astype(jnp.float32)     # NCHW -> NHWC
    n, H, W, cin = x.shape
    assert H % 8 == 0, "row tiling requires H to be a multiple of 8"
    WP = _round_up(W + 2, 8)          # row stride: >=2 zero pad columns, sublane aligned
    vmem_limit = _vmem_limit_bytes()
    c0 = params["conv_in"][0].shape[-1]
    th = _pick_row_tile(H, WP, c0, vmem_limit)
    count = float(n * H * W)
    common = dict(H=H, W=W, WP=WP, th=th, vmem_limit=vmem_limit)

    # Image -> flat-row layout (channels padded 3 -> 8 so every tap matmul has K=8).
    w_in, b_in = params["conv_in"]
    if cin < CIN_PAD:
        x = jnp.pad(x, ((0, 0), (0, 0), (0, 0), (0, CIN_PAD - cin)))
        w_in = jnp.pad(w_in, ((0, 0), (0, 0), (0, CIN_PAD - cin), (0, 0)))
    xf = _to_flat_rows(x, WP)                                        # (N, H*WP, 8) f32

    # conv_in (+ fused per-tile stats for norm1)
    y0, st0 = conv3x3(xf, w_in, b_in, emit_stats=True, **common)     # bf16 (N,H*WP,64)

    # DiscriminatorBlock2D (final block): shortcut / downsampler / dropout are identities
    g1, be1 = params["norm1"]
    scale1, shift1 = _bn_affine(jnp.sum(st0, axis=(0, 1)), g1, be1, count)

    w, b = params["conv1"]
    y1, st1 = conv3x3(y0, w, b, norm_scale=scale1, norm_shift=shift1,
                      emit_stats=True, **common)

    g2, be2 = params["norm2"]
    scale2, shift2 = _bn_affine(jnp.sum(st1, axis=(0, 1)), g2, be2, count)

    w, b = params["conv2"]
    y2 = conv3x3(y1, w, b, norm_scale=scale2, norm_shift=shift2,
                 residual=y0, output_scale_factor=math.sqrt(2.0), **common)

    # conv_out: Cout padded 1 -> 8, stored f32; take channel 0 outside (tiny slice).
    w, b = params["conv_out"]
    w_pad = jnp.pad(w, ((0, 0), (0, 0), (0, 0), (0, COUT_PAD - 1)))
    b_pad = jnp.pad(b, ((0, COUT_PAD - 1),))
    ylog = conv3x3(y2, w_pad, b_pad, out_dtype=jnp.float32, **common)  # (N, H*WP, 8)

    logits = ylog.reshape(n, H, WP, COUT_PAD)[:, :, :W, :1]            # (N, H, W, 1)
    return jnp.transpose(logits, (0, 3, 1, 2))                         # NHWC -> NCHW


def discriminator_forward(params, x_2d=None, x_3d=None):
    logits_2d = discriminator2d_forward(params, x_2d) if x_2d is not None else None
    logits_3d = None    # use_3d=False in the default config
    return logits_2d, logits_3d


# ----------------------------------------------------------------------------
# Pure-JAX references for the correctness check
# ----------------------------------------------------------------------------
def _conv3x3_ref(x, w, b, cast):
    if cast:
        x = x.astype(jnp.bfloat16)
        w = w.astype(jnp.bfloat16)
    y = jax.lax.conv_general_dilated(
        x, w, (1, 1), ((1, 1), (1, 1)),
        dimension_numbers=("NHWC", "HWIO", "NHWC"),
        preferred_element_type=jnp.float32)
    return y + b


def _forward_ref(params, x_nchw, match_kernel_precision):
    """match_kernel_precision=True mirrors the kernel's precision policy (bf16 matmul
    operands + bf16 inter-layer storage, f32 BN / accumulation); False is exact f32."""
    cast = match_kernel_precision and (DOT_DTYPE != jnp.float32)
    store_cast = match_kernel_precision and (STORE_DTYPE != jnp.float32)
    store = (lambda t: t.astype(STORE_DTYPE).astype(jnp.float32)) if store_cast else (lambda t: t)

    x = jnp.transpose(x_nchw, (0, 2, 3, 1)).astype(jnp.float32)
    n, H, W, _ = x.shape
    count = float(n * H * W)

    def bn_lrelu(y_full, y_stored, gamma, beta):
        stats = jnp.stack([jnp.sum(y_full, axis=(0, 1, 2)),
                           jnp.sum(y_full * y_full, axis=(0, 1, 2))], axis=0)
        scale, shift = _bn_affine(stats, gamma, beta, count)
        h = y_stored * scale.reshape(1, 1, 1, -1) + shift.reshape(1, 1, 1, -1)
        return jnp.where(h > 0, h, LRELU_SLOPE * h)

    w, b = params["conv_in"]
    y0 = _conv3x3_ref(x, w, b, cast)
    y0s = store(y0)
    shortcut = y0s
    g1, be1 = params["norm1"]
    h = bn_lrelu(y0, y0s, g1, be1)
    w, b = params["conv1"]
    y1 = _conv3x3_ref(h, w, b, cast)
    y1s = store(y1)
    g2, be2 = params["norm2"]
    h = bn_lrelu(y1, y1s, g2, be2)
    w, b = params["conv2"]
    y2 = (_conv3x3_ref(h, w, b, cast) + shortcut) / math.sqrt(2.0)
    y2s = store(y2)
    w, b = params["conv_out"]
    logits = _conv3x3_ref(y2s, w, b, cast)
    return jnp.transpose(logits, (0, 3, 1, 2))


# ----------------------------------------------------------------------------
if __name__ == "__main__":
    key = jax.random.PRNGKey(0)
    k_params, k_x = jax.random.split(key)

    params = init_params(k_params, in_channels=3, block_out_channels=(64,))
    x_2d = jax.random.normal(k_x, (2, 3, 16, 16), jnp.float32)       # NCHW like PyTorch

    fwd = jax.jit(lambda p, x: discriminator_forward(p, x_2d=x))
    logits_2d, logits_3d = fwd(params, x_2d)
    logits_2d = jax.block_until_ready(logits_2d)

    assert logits_2d.shape == (2, 1, 16, 16), logits_2d.shape
    assert logits_3d is None

    # Tight check against a reference that mirrors the kernel's precision policy.
    ref_matched = _forward_ref(params, x_2d, match_kernel_precision=True)
    err_m = float(jnp.max(jnp.abs(logits_2d - ref_matched)))
    assert jnp.allclose(logits_2d, ref_matched, rtol=5e-3, atol=5e-3), err_m

    # Loose sanity check against the exact-f32 reference of the PyTorch module.
    ref_f32 = _forward_ref(params, x_2d, match_kernel_precision=False)
    err_f = float(jnp.max(jnp.abs(logits_2d - ref_f32)))
    assert jnp.allclose(logits_2d, ref_f32, rtol=3e-2, atol=3e-2), err_f

    print("KERNEL_OK")
</pallas_src>

<mosaic_0001>
module attributes {stable_mosaic.version = 11 : i64} {
  func.func @kernel(%arg0: i32, %arg1: i32, %arg2: memref<1x48x8xf32, #tpu.memory_space<vmem>>, %arg3: memref<1x192x8xf32, #tpu.memory_space<vmem>>, %arg4: memref<1x48x8xf32, #tpu.memory_space<vmem>>, %arg5: memref<9x8x64xbf16, #tpu.memory_space<vmem>>, %arg6: memref<1x64xf32, #tpu.memory_space<vmem>>, %arg7: memref<1x192x64xbf16, #tpu.memory_space<vmem>>, %arg8: memref<1x1x2x64xf32, #tpu.memory_space<vmem>>) attributes {dimension_semantics = [#tpu.dimension_semantics<parallel>, #tpu.dimension_semantics<parallel>], iteration_bounds = array<i64: 2, 2>, scalar_prefetch = 0 : i64, scratch_operands = 0 : i64, tpu.core_type = #tpu.core_type<tc>, window_params = [{transform_indices = @transform_0, window_bounds = array<i64: 1, 48, 8>}, {transform_indices = @transform_1, window_bounds = array<i64: 1, 192, 8>}, {transform_indices = @transform_2, window_bounds = array<i64: 1, 48, 8>}, {pipeline_mode = #tpu.pipeline_mode<synchronous>, transform_indices = @transform_3, window_bounds = array<i64: 9, 8, 64>}, {pipeline_mode = #tpu.pipeline_mode<synchronous>, transform_indices = @transform_4, window_bounds = array<i64: 1, 64>}, {transform_indices = @transform_5, window_bounds = array<i64: 1, 192, 64>}, {transform_indices = @transform_6, window_bounds = array<i64: 1, 1, 2, 64>}]} {
    %0 = tpu.iota {dimensions = array<i32: 1>} : vector<1x24x1xi32>
    %c16_i32 = arith.constant 16 : i32
    %1 = vector.broadcast %c16_i32 : i32 to vector<1x24x1xi32>
    %2 = arith.cmpi slt, %0, %1 : vector<1x24x1xi32>
    %3 = tpu.iota {dimensions = array<i32: 0>} : vector<48x1xi32>
    %c24_i32 = arith.constant 24 : i32
    %4 = vector.broadcast %c24_i32 : i32 to vector<48x1xi32>
    %5 = arith.cmpi sge, %3, %4 : vector<48x1xi32>
    %c40_i32 = arith.constant 40 : i32
    %6 = vector.broadcast %c40_i32 : i32 to vector<48x1xi32>
    %7 = arith.cmpi slt, %3, %6 : vector<48x1xi32>
    %8 = arith.andi %5, %7 : vector<48x1xi1>
    %c1_i32 = arith.constant 1 : i32
    %9 = arith.cmpi sge, %arg1, %c1_i32 : i32
    %10 = vector.broadcast %9 : i1 to vector<48x1xi1>
    %11 = arith.andi %8, %10 : vector<48x1xi1>
    %c16_i32_0 = arith.constant 16 : i32
    %12 = vector.broadcast %c16_i32_0 : i32 to vector<48x1xi32>
    %13 = arith.cmpi slt, %3, %12 : vector<48x1xi32>
    %c1_i32_1 = arith.constant 1 : i32
    %14 = arith.cmpi slt, %arg1, %c1_i32_1 : i32
    %15 = vector.broadcast %14 : i1 to vector<48x1xi1>
    %16 = arith.andi %13, %15 : vector<48x1xi1>
    %c0 = arith.constant 0 : index
    %c0_2 = arith.constant 0 : index
    %c0_3 = arith.constant 0 : index
    %17 = vector.load %arg2[%c0, %c0_2, %c0_3] : memref<1x48x8xf32, #tpu.memory_space<vmem>>, vector<1x48x8xf32>
    %18 = vector.shape_cast %17 : vector<1x48x8xf32> to vector<48x8xf32>
    %c0_4 = arith.constant 0 : index
    %c0_5 = arith.constant 0 : index
    %c0_6 = arith.constant 0 : index
    %19 = vector.load %arg4[%c0_4, %c0_5, %c0_6] : memref<1x48x8xf32, #tpu.memory_space<vmem>>, vector<1x48x8xf32>
    %20 = vector.shape_cast %19 : vector<1x48x8xf32> to vector<48x8xf32>
    %cst = arith.constant 0.000000e+00 : f32
    %21 = vector.shape_cast %11 : vector<48x1xi1> to vector<48x1xi1>
    %22 = vector.broadcast %21 : vector<48x1xi1> to vector<48x8xi1>
    %23 = vector.broadcast %cst : f32 to vector<48x8xf32>
    %24 = arith.select %22, %18, %23 : vector<48x8xi1>, vector<48x8xf32>
    %cst_7 = arith.constant 0.000000e+00 : f32
    %25 = vector.shape_cast %16 : vector<48x1xi1> to vector<48x1xi1>
    %26 = vector.broadcast %25 : vector<48x1xi1> to vector<48x8xi1>
    %27 = vector.broadcast %cst_7 : f32 to vector<48x8xf32>
    %28 = arith.select %26, %20, %27 : vector<48x8xi1>, vector<48x8xf32>
    %c0_8 = arith.constant 0 : index
    %c0_9 = arith.constant 0 : index
    %c0_10 = arith.constant 0 : index
    %29 = vector.load %arg3[%c0_8, %c0_9, %c0_10] : memref<1x192x8xf32, #tpu.memory_space<vmem>>, vector<1x192x8xf32>
    %30 = vector.shape_cast %29 : vector<1x192x8xf32> to vector<192x8xf32>
    %31 = arith.truncf %30 : vector<192x8xf32> to vector<192x8xbf16>
    %32 = arith.truncf %24 : vector<48x8xf32> to vector<48x8xbf16>
    %33 = arith.truncf %28 : vector<48x8xf32> to vector<48x8xbf16>
    %34 = tpu.concatenate %32, %31, %33 in 0 : vector<48x8xbf16>, vector<192x8xbf16>, vector<48x8xbf16> -> vector<288x8xbf16>
    %c0_11 = arith.constant 0 : index
    %c0_12 = arith.constant 0 : index
    %c0_13 = arith.constant 0 : index
    %35 = vector.load %arg5[%c0_11, %c0_12, %c0_13] : memref<9x8x64xbf16, #tpu.memory_space<vmem>>, vector<9x8x64xbf16>
    %36 = vector.extract_strided_slice %34 {offsets = [23, 0], sizes = [192, 8], strides = [1, 1]} : vector<288x8xbf16> to vector<192x8xbf16>
    %37 = vector.extract_strided_slice %35 {offsets = [0, 0, 0], sizes = [1, 8, 64], strides = [1, 1, 1]} : vector<9x8x64xbf16> to vector<1x8x64xbf16>
    %38 = vector.shape_cast %37 : vector<1x8x64xbf16> to vector<8x64xbf16>
    %cst_14 = arith.constant dense<0.000000e+00> : vector<192x64xf32>
    %39 = tpu.matmul %36, %38, %cst_14 {dimension_numbers = #tpu.dot_dimension_numbers<[1], [0], [0], [1], [0, 0, 1, 1], [], []>} : vector<192x8xbf16>, vector<8x64xbf16>, vector<192x64xf32> -> vector<192x64xf32>
    %40 = vector.extract_strided_slice %34 {offsets = [24, 0], sizes = [192, 8], strides = [1, 1]} : vector<288x8xbf16> to vector<192x8xbf16>
    %41 = vector.extract_strided_slice %35 {offsets = [1, 0, 0], sizes = [1, 8, 64], strides = [1, 1, 1]} : vector<9x8x64xbf16> to vector<1x8x64xbf16>
    %42 = vector.shape_cast %41 : vector<1x8x64xbf16> to vector<8x64xbf16>
    %cst_15 = arith.constant dense<0.000000e+00> : vector<192x64xf32>
    %43 = tpu.matmul %40, %42, %cst_15 {dimension_numbers = #tpu.dot_dimension_numbers<[1], [0], [0], [1], [0, 0, 1, 1], [], []>} : vector<192x8xbf16>, vector<8x64xbf16>, vector<192x64xf32> -> vector<192x64xf32>
    %44 = arith.addf %39, %43 : vector<192x64xf32>
    %45 = vector.extract_strided_slice %34 {offsets = [25, 0], sizes = [192, 8], strides = [1, 1]} : vector<288x8xbf16> to vector<192x8xbf16>
    %46 = vector.extract_strided_slice %35 {offsets = [2, 0, 0], sizes = [1, 8, 64], strides = [1, 1, 1]} : vector<9x8x64xbf16> to vector<1x8x64xbf16>
    %47 = vector.shape_cast %46 : vector<1x8x64xbf16> to vector<8x64xbf16>
    %cst_16 = arith.constant dense<0.000000e+00> : vector<192x64xf32>
    %48 = tpu.matmul %45, %47, %cst_16 {dimension_numbers = #tpu.dot_dimension_numbers<[1], [0], [0], [1], [0, 0, 1, 1], [], []>} : vector<192x8xbf16>, vector<8x64xbf16>, vector<192x64xf32> -> vector<192x64xf32>
    %49 = arith.addf %44, %48 : vector<192x64xf32>
    %50 = vector.extract_strided_slice %34 {offsets = [47, 0], sizes = [192, 8], strides = [1, 1]} : vector<288x8xbf16> to vector<192x8xbf16>
    %51 = vector.extract_strided_slice %35 {offsets = [3, 0, 0], sizes = [1, 8, 64], strides = [1, 1, 1]} : vector<9x8x64xbf16> to vector<1x8x64xbf16>
    %52 = vector.shape_cast %51 : vector<1x8x64xbf16> to vector<8x64xbf16>
    %cst_17 = arith.constant dense<0.000000e+00> : vector<192x64xf32>
    %53 = tpu.matmul %50, %52, %cst_17 {dimension_numbers = #tpu.dot_dimension_numbers<[1], [0], [0], [1], [0, 0, 1, 1], [], []>} : vector<192x8xbf16>, vector<8x64xbf16>, vector<192x64xf32> -> vector<192x64xf32>
    %54 = arith.addf %49, %53 : vector<192x64xf32>
    %55 = vector.extract_strided_slice %34 {offsets = [48, 0], sizes = [192, 8], strides = [1, 1]} : vector<288x8xbf16> to vector<192x8xbf16>
    %56 = vector.extract_strided_slice %35 {offsets = [4, 0, 0], sizes = [1, 8, 64], strides = [1, 1, 1]} : vector<9x8x64xbf16> to vector<1x8x64xbf16>
    %57 = vector.shape_cast %56 : vector<1x8x64xbf16> to vector<8x64xbf16>
    %cst_18 = arith.constant dense<0.000000e+00> : vector<192x64xf32>
    %58 = tpu.matmul %55, %57, %cst_18 {dimension_numbers = #tpu.dot_dimension_numbers<[1], [0], [0], [1], [0, 0, 1, 1], [], []>} : vector<192x8xbf16>, vector<8x64xbf16>, vector<192x64xf32> -> vector<192x64xf32>
    %59 = arith.addf %54, %58 : vector<192x64xf32>
    %60 = vector.extract_strided_slice %34 {offsets = [49, 0], sizes = [192, 8], strides = [1, 1]} : vector<288x8xbf16> to vector<192x8xbf16>
    %61 = vector.extract_strided_slice %35 {offsets = [5, 0, 0], sizes = [1, 8, 64], strides = [1, 1, 1]} : vector<9x8x64xbf16> to vector<1x8x64xbf16>
    %62 = vector.shape_cast %61 : vector<1x8x64xbf16> to vector<8x64xbf16>
    %cst_19 = arith.constant dense<0.000000e+00> : vector<192x64xf32>
    %63 = tpu.matmul %60, %62, %cst_19 {dimension_numbers = #tpu.dot_dimension_numbers<[1], [0], [0], [1], [0, 0, 1, 1], [], []>} : vector<192x8xbf16>, vector<8x64xbf16>, vector<192x64xf32> -> vector<192x64xf32>
    %64 = arith.addf %59, %63 : vector<192x64xf32>
    %65 = vector.extract_strided_slice %34 {offsets = [71, 0], sizes = [192, 8], strides = [1, 1]} : vector<288x8xbf16> to vector<192x8xbf16>
    %66 = vector.extract_strided_slice %35 {offsets = [6, 0, 0], sizes = [1, 8, 64], strides = [1, 1, 1]} : vector<9x8x64xbf16> to vector<1x8x64xbf16>
    %67 = vector.shape_cast %66 : vector<1x8x64xbf16> to vector<8x64xbf16>
    %cst_20 = arith.constant dense<0.000000e+00> : vector<192x64xf32>
    %68 = tpu.matmul %65, %67, %cst_20 {dimension_numbers = #tpu.dot_dimension_numbers<[1], [0], [0], [1], [0, 0, 1, 1], [], []>} : vector<192x8xbf16>, vector<8x64xbf16>, vector<192x64xf32> -> vector<192x64xf32>
    %69 = arith.addf %64, %68 : vector<192x64xf32>
    %70 = vector.extract_strided_slice %34 {offsets = [72, 0], sizes = [192, 8], strides = [1, 1]} : vector<288x8xbf16> to vector<192x8xbf16>
    %71 = vector.extract_strided_slice %35 {offsets = [7, 0, 0], sizes = [1, 8, 64], strides = [1, 1, 1]} : vector<9x8x64xbf16> to vector<1x8x64xbf16>
    %72 = vector.shape_cast %71 : vector<1x8x64xbf16> to vector<8x64xbf16>
    %cst_21 = arith.constant dense<0.000000e+00> : vector<192x64xf32>
    %73 = tpu.matmul %70, %72, %cst_21 {dimension_numbers = #tpu.dot_dimension_numbers<[1], [0], [0], [1], [0, 0, 1, 1], [], []>} : vector<192x8xbf16>, vector<8x64xbf16>, vector<192x64xf32> -> vector<192x64xf32>
    %74 = arith.addf %69, %73 : vector<192x64xf32>
    %75 = vector.extract_strided_slice %34 {offsets = [73, 0], sizes = [192, 8], strides = [1, 1]} : vector<288x8xbf16> to vector<192x8xbf16>
    %76 = vector.extract_strided_slice %35 {offsets = [8, 0, 0], sizes = [1, 8, 64], strides = [1, 1, 1]} : vector<9x8x64xbf16> to vector<1x8x64xbf16>
    %77 = vector.shape_cast %76 : vector<1x8x64xbf16> to vector<8x64xbf16>
    %cst_22 = arith.constant dense<0.000000e+00> : vector<192x64xf32>
    %78 = tpu.matmul %75, %77, %cst_22 {dimension_numbers = #tpu.dot_dimension_numbers<[1], [0], [0], [1], [0, 0, 1, 1], [], []>} : vector<192x8xbf16>, vector<8x64xbf16>, vector<192x64xf32> -> vector<192x64xf32>
    %79 = arith.addf %74, %78 : vector<192x64xf32>
    %80 = vector.shape_cast %79 : vector<192x64xf32> to vector<8x24x64xf32>
    %c0_23 = arith.constant 0 : index
    %c0_24 = arith.constant 0 : index
    %81 = vector.load %arg6[%c0_23, %c0_24] : memref<1x64xf32, #tpu.memory_space<vmem>>, vector<1x64xf32>
    %82 = vector.shape_cast %81 : vector<1x64xf32> to vector<1x1x64xf32>
    %83 = vector.broadcast %82 : vector<1x1x64xf32> to vector<8x24x64xf32>
    %84 = arith.addf %80, %83 : vector<8x24x64xf32>
    %cst_25 = arith.constant 0.000000e+00 : f32
    %85 = vector.shape_cast %2 : vector<1x24x1xi1> to vector<1x24x1xi1>
    %86 = vector.broadcast %85 : vector<1x24x1xi1> to vector<8x24x64xi1>
    %87 = vector.broadcast %cst_25 : f32 to vector<8x24x64xf32>
    %88 = arith.select %86, %84, %87 : vector<8x24x64xi1>, vector<8x24x64xf32>
    %89 = vector.shape_cast %88 : vector<8x24x64xf32> to vector<192x64xf32>
    %cst_26 = arith.constant dense<0.000000e+00> : vector<64xf32>
    %90 = vector.multi_reduction <add>, %89, %cst_26 [0] : vector<192x64xf32> to vector<64xf32>
    %91 = vector.shape_cast %90 : vector<64xf32> to vector<1x64xf32>
    %92 = arith.mulf %89, %89 : vector<192x64xf32>
    %cst_27 = arith.constant dense<0.000000e+00> : vector<64xf32>
    %93 = vector.multi_reduction <add>, %92, %cst_27 [0] : vector<192x64xf32> to vector<64xf32>
    %94 = vector.shape_cast %93 : vector<64xf32> to vector<1x64xf32>
    %95 = tpu.concatenate %91, %94 in 0 : vector<1x64xf32>, vector<1x64xf32> -> vector<2x64xf32>
    %96 = vector.shape_cast %95 : vector<2x64xf32> to vector<1x1x2x64xf32>
    %c0_28 = arith.constant 0 : index
    %c0_29 = arith.constant 0 : index
    %c0_30 = arith.constant 0 : index
    %c0_31 = arith.constant 0 : index
    %97 = vector.load %arg8[%c0_28, %c0_29, %c0_30, %c0_31] : memref<1x1x2x64xf32, #tpu.memory_space<vmem>>, vector<1x1x2x64xf32>
    tpu.vector_store %arg8[%c0_28, %c0_29, %c0_30, %c0_31], %96 {strides = array<i32>} : memref<1x1x2x64xf32, #tpu.memory_space<vmem>>, vector<1x1x2x64xf32>,
    %98 = arith.truncf %89 : vector<192x64xf32> to vector<192x64xbf16>
    %c0_32 = arith.constant 0 : index
    %c0_33 = arith.constant 0 : index
    %c0_34 = arith.constant 0 : index
    %99 = vector.load %arg7[%c0_32, %c0_33, %c0_34] : memref<1x192x64xbf16, #tpu.memory_space<vmem>>, vector<1x192x64xbf16>
    %100 = vector.shape_cast %99 : vector<1x192x64xbf16> to vector<192x64xbf16>
    %101 = vector.shape_cast %98 : vector<192x64xbf16> to vector<1x192x64xbf16>
    tpu.vector_store %arg7[%c0_32, %c0_33, %c0_34], %101 {strides = array<i32>} : memref<1x192x64xbf16, #tpu.memory_space<vmem>>, vector<1x192x64xbf16>,
    return
  }
  func.func @transform_0(%arg0: i32, %arg1: i32) -> (i32, i32, i32) {
    %c4_i32 = arith.constant 4 : i32
    %0 = arith.muli %arg1, %c4_i32 : i32
    %c1_i32 = arith.constant 1 : i32
    %1 = arith.subi %0, %c1_i32 : i32
    %c0_i32 = arith.constant 0 : i32
    %2 = arith.maxsi %1, %c0_i32 : i32
    %c0_i32_0 = arith.constant 0 : i32
    %c0_i32_1 = arith.constant 0 : i32
    return %arg0, %2, %c0_i32_0 : i32, i32, i32
  }
  func.func @transform_1(%arg0: i32, %arg1: i32) -> (i32, i32, i32) {
    %c0_i32 = arith.constant 0 : i32
    %c0_i32_0 = arith.constant 0 : i32
    return %arg0, %arg1, %c0_i32 : i32, i32, i32
  }
  func.func @transform_2(%arg0: i32, %arg1: i32) -> (i32, i32, i32) {
    %c1_i32 = arith.constant 1 : i32
    %0 = arith.addi %arg1, %c1_i32 : i32
    %c4_i32 = arith.constant 4 : i32
    %1 = arith.muli %0, %c4_i32 : i32
    %c7_i32 = arith.constant 7 : i32
    %2 = arith.minsi %1, %c7_i32 : i32
    %c0_i32 = arith.constant 0 : i32
    %c0_i32_0 = arith.constant 0 : i32
    return %arg0, %2, %c0_i32 : i32, i32, i32
  }
  func.func @transform_3(%arg0: i32, %arg1: i32) -> (i32, i32, i32) {
    %c0_i32 = arith.constant 0 : i32
    %c0_i32_0 = arith.constant 0 : i32
    %c0_i32_1 = arith.constant 0 : i32
    %c0_i32_2 = arith.constant 0 : i32
    return %c0_i32, %c0_i32_0, %c0_i32_1 : i32, i32, i32
  }
  func.func @transform_4(%arg0: i32, %arg1: i32) -> (i32, i32) {
    %c0_i32 = arith.constant 0 : i32
    %c0_i32_0 = arith.constant 0 : i32
    %c0_i32_1 = arith.constant 0 : i32
    return %c0_i32, %c0_i32_0 : i32, i32
  }
  func.func @transform_5(%arg0: i32, %arg1: i32) -> (i32, i32, i32) {
    %c0_i32 = arith.constant 0 : i32
    %c0_i32_0 = arith.constant 0 : i32
    return %arg0, %arg1, %c0_i32 : i32, i32, i32
  }
  func.func @transform_6(%arg0: i32, %arg1: i32) -> (i32, i32, i32, i32) {
    %c0_i32 = arith.constant 0 : i32
    %c0_i32_0 = arith.constant 0 : i32
    %c0_i32_1 = arith.constant 0 : i32
    return %arg0, %arg1, %c0_i32, %c0_i32_0 : i32, i32, i32, i32
  }
}

module attributes {stable_mosaic.version = 11 : i64} {
  func.func @kernel(%arg0: i32, %arg1: i32, %arg2: memref<1x48x64xbf16, #tpu.memory_space<vmem>>, %arg3: memref<1x192x64xbf16, #tpu.memory_space<vmem>>, %arg4: memref<1x48x64xbf16, #tpu.memory_space<vmem>>, %arg5: memref<1x64xf32, #tpu.memory_space<vmem>>, %arg6: memref<1x64xf32, #tpu.memory_space<vmem>>, %arg7: memref<9x64x64xbf16, #tpu.memory_space<vmem>>, %arg8: memref<1x64xf32, #tpu.memory_space<vmem>>, %arg9: memref<1x192x64xbf16, #tpu.memory_space<vmem>>, %arg10: memref<1x1x2x64xf32, #tpu.memory_space<vmem>>) attributes {dimension_semantics = [#tpu.dimension_semantics<parallel>, #tpu.dimension_semantics<parallel>], iteration_bounds = array<i64: 2, 2>, scalar_prefetch = 0 : i64, scratch_operands = 0 : i64, tpu.core_type = #tpu.core_type<tc>, window_params = [{transform_indices = @transform_0, window_bounds = array<i64: 1, 48, 64>}, {transform_indices = @transform_1, window_bounds = array<i64: 1, 192, 64>}, {transform_indices = @transform_2, window_bounds = array<i64: 1, 48, 64>}, {pipeline_mode = #tpu.pipeline_mode<synchronous>, transform_indices = @transform_3, window_bounds = array<i64: 1, 64>}, {pipeline_mode = #tpu.pipeline_mode<synchronous>, transform_indices = @transform_4, window_bounds = array<i64: 1, 64>}, {pipeline_mode = #tpu.pipeline_mode<synchronous>, transform_indices = @transform_5, window_bounds = array<i64: 9, 64, 64>}, {pipeline_mode = #tpu.pipeline_mode<synchronous>, transform_indices = @transform_6, window_bounds = array<i64: 1, 64>}, {transform_indices = @transform_7, window_bounds = array<i64: 1, 192, 64>}, {transform_indices = @transform_8, window_bounds = array<i64: 1, 1, 2, 64>}]} {
    %0 = tpu.iota {dimensions = array<i32: 1>} : vector<1x24x1xi32>
    %c16_i32 = arith.constant 16 : i32
    %1 = vector.broadcast %c16_i32 : i32 to vector<1x24x1xi32>
    %2 = arith.cmpi slt, %0, %1 : vector<1x24x1xi32>
    %3 = tpu.iota {dimensions = array<i32: 0>} : vector<48x1xi32>
    %c24_i32 = arith.constant 24 : i32
    %4 = vector.broadcast %c24_i32 : i32 to vector<48x1xi32>
    %5 = arith.cmpi sge, %3, %4 : vector<48x1xi32>
    %c40_i32 = arith.constant 40 : i32
    %6 = vector.broadcast %c40_i32 : i32 to vector<48x1xi32>
    %7 = arith.cmpi slt, %3, %6 : vector<48x1xi32>
    %8 = arith.andi %5, %7 : vector<48x1xi1>
    %c1_i32 = arith.constant 1 : i32
    %9 = arith.cmpi sge, %arg1, %c1_i32 : i32
    %10 = vector.broadcast %9 : i1 to vector<48x1xi1>
    %11 = arith.andi %8, %10 : vector<48x1xi1>
    %c16_i32_0 = arith.constant 16 : i32
    %12 = vector.broadcast %c16_i32_0 : i32 to vector<48x1xi32>
    %13 = arith.cmpi slt, %3, %12 : vector<48x1xi32>
    %c1_i32_1 = arith.constant 1 : i32
    %14 = arith.cmpi slt, %arg1, %c1_i32_1 : i32
    %15 = vector.broadcast %14 : i1 to vector<48x1xi1>
    %16 = arith.andi %13, %15 : vector<48x1xi1>
    %c0 = arith.constant 0 : index
    %c0_2 = arith.constant 0 : index
    %c0_3 = arith.constant 0 : index
    %17 = vector.load %arg2[%c0, %c0_2, %c0_3] : memref<1x48x64xbf16, #tpu.memory_space<vmem>>, vector<1x48x64xbf16>
    %18 = vector.shape_cast %17 : vector<1x48x64xbf16> to vector<48x64xbf16>
    %19 = arith.extf %18 : vector<48x64xbf16> to vector<48x64xf32>
    %c0_4 = arith.constant 0 : index
    %c0_5 = arith.constant 0 : index
    %c0_6 = arith.constant 0 : index
    %20 = vector.load %arg4[%c0_4, %c0_5, %c0_6] : memref<1x48x64xbf16, #tpu.memory_space<vmem>>, vector<1x48x64xbf16>
    %21 = vector.shape_cast %20 : vector<1x48x64xbf16> to vector<48x64xbf16>
    %22 = arith.extf %21 : vector<48x64xbf16> to vector<48x64xf32>
    %c0_7 = arith.constant 0 : index
    %c0_8 = arith.constant 0 : index
    %23 = vector.load %arg5[%c0_7, %c0_8] : memref<1x64xf32, #tpu.memory_space<vmem>>, vector<1x64xf32>
    %c0_9 = arith.constant 0 : index
    %c0_10 = arith.constant 0 : index
    %24 = vector.load %arg6[%c0_9, %c0_10] : memref<1x64xf32, #tpu.memory_space<vmem>>, vector<1x64xf32>
    %25 = vector.broadcast %23 : vector<1x64xf32> to vector<48x64xf32>
    %26 = arith.mulf %19, %25 : vector<48x64xf32>
    %27 = vector.broadcast %24 : vector<1x64xf32> to vector<48x64xf32>
    %28 = arith.addf %26, %27 : vector<48x64xf32>
    %cst = arith.constant 0.000000e+00 : f32
    %29 = vector.broadcast %cst : f32 to vector<48x64xf32>
    %30 = arith.cmpf ogt, %28, %29 : vector<48x64xf32>
    %cst_11 = arith.constant 2.000000e-01 : f32
    %31 = vector.broadcast %cst_11 : f32 to vector<48x64xf32>
    %32 = arith.mulf %31, %28 : vector<48x64xf32>
    %33 = arith.select %30, %28, %32 : vector<48x64xi1>, vector<48x64xf32>
    %cst_12 = arith.constant 0.000000e+00 : f32
    %34 = vector.shape_cast %11 : vector<48x1xi1> to vector<48x1xi1>
    %35 = vector.broadcast %34 : vector<48x1xi1> to vector<48x64xi1>
    %36 = vector.broadcast %cst_12 : f32 to vector<48x64xf32>
    %37 = arith.select %35, %33, %36 : vector<48x64xi1>, vector<48x64xf32>
    %38 = vector.broadcast %23 : vector<1x64xf32> to vector<48x64xf32>
    %39 = arith.mulf %22, %38 : vector<48x64xf32>
    %40 = vector.broadcast %24 : vector<1x64xf32> to vector<48x64xf32>
    %41 = arith.addf %39, %40 : vector<48x64xf32>
    %cst_13 = arith.constant 0.000000e+00 : f32
    %42 = vector.broadcast %cst_13 : f32 to vector<48x64xf32>
    %43 = arith.cmpf ogt, %41, %42 : vector<48x64xf32>
    %cst_14 = arith.constant 2.000000e-01 : f32
    %44 = vector.broadcast %cst_14 : f32 to vector<48x64xf32>
    %45 = arith.mulf %44, %41 : vector<48x64xf32>
    %46 = arith.select %43, %41, %45 : vector<48x64xi1>, vector<48x64xf32>
    %cst_15 = arith.constant 0.000000e+00 : f32
    %47 = vector.shape_cast %16 : vector<48x1xi1> to vector<48x1xi1>
    %48 = vector.broadcast %47 : vector<48x1xi1> to vector<48x64xi1>
    %49 = vector.broadcast %cst_15 : f32 to vector<48x64xf32>
    %50 = arith.select %48, %46, %49 : vector<48x64xi1>, vector<48x64xf32>
    %c0_16 = arith.constant 0 : index
    %c0_17 = arith.constant 0 : index
    %c0_18 = arith.constant 0 : index
    %51 = vector.load %arg3[%c0_16, %c0_17, %c0_18] : memref<1x192x64xbf16, #tpu.memory_space<vmem>>, vector<1x192x64xbf16>
    %52 = vector.shape_cast %51 : vector<1x192x64xbf16> to vector<192x64xbf16>
    %53 = arith.extf %52 : vector<192x64xbf16> to vector<192x64xf32>
    %54 = vector.shape_cast %53 : vector<192x64xf32> to vector<8x24x64xf32>
    %55 = vector.shape_cast %23 : vector<1x64xf32> to vector<1x1x64xf32>
    %56 = vector.broadcast %55 : vector<1x1x64xf32> to vector<8x24x64xf32>
    %57 = arith.mulf %54, %56 : vector<8x24x64xf32>
    %58 = vector.shape_cast %24 : vector<1x64xf32> to vector<1x1x64xf32>
    %59 = vector.broadcast %58 : vector<1x1x64xf32> to vector<8x24x64xf32>
    %60 = arith.addf %57, %59 : vector<8x24x64xf32>
    %cst_19 = arith.constant 0.000000e+00 : f32
    %61 = vector.broadcast %cst_19 : f32 to vector<8x24x64xf32>
    %62 = arith.cmpf ogt, %60, %61 : vector<8x24x64xf32>
    %cst_20 = arith.constant 2.000000e-01 : f32
    %63 = vector.broadcast %cst_20 : f32 to vector<8x24x64xf32>
    %64 = arith.mulf %63, %60 : vector<8x24x64xf32>
    %65 = arith.select %62, %60, %64 : vector<8x24x64xi1>, vector<8x24x64xf32>
    %cst_21 = arith.constant 0.000000e+00 : f32
    %66 = vector.shape_cast %2 : vector<1x24x1xi1> to vector<1x24x1xi1>
    %67 = vector.broadcast %66 : vector<1x24x1xi1> to vector<8x24x64xi1>
    %68 = vector.broadcast %cst_21 : f32 to vector<8x24x64xf32>
    %69 = arith.select %67, %65, %68 : vector<8x24x64xi1>, vector<8x24x64xf32>
    %70 = vector.shape_cast %69 : vector<8x24x64xf32> to vector<192x64xf32>
    %71 = arith.truncf %70 : vector<192x64xf32> to vector<192x64xbf16>
    %72 = arith.truncf %37 : vector<48x64xf32> to vector<48x64xbf16>
    %73 = arith.truncf %50 : vector<48x64xf32> to vector<48x64xbf16>
    %74 = tpu.concatenate %72, %71, %73 in 0 : vector<48x64xbf16>, vector<192x64xbf16>, vector<48x64xbf16> -> vector<288x64xbf16>
    %c0_22 = arith.constant 0 : index
    %c0_23 = arith.constant 0 : index
    %c0_24 = arith.constant 0 : index
    %75 = vector.load %arg7[%c0_22, %c0_23, %c0_24] : memref<9x64x64xbf16, #tpu.memory_space<vmem>>, vector<9x64x64xbf16>
    %76 = vector.extract_strided_slice %74 {offsets = [23, 0], sizes = [192, 64], strides = [1, 1]} : vector<288x64xbf16> to vector<192x64xbf16>
    %77 = vector.extract_strided_slice %75 {offsets = [0, 0, 0], sizes = [1, 64, 64], strides = [1, 1, 1]} : vector<9x64x64xbf16> to vector<1x64x64xbf16>
    %78 = vector.shape_cast %77 : vector<1x64x64xbf16> to vector<64x64xbf16>
    %cst_25 = arith.constant dense<0.000000e+00> : vector<192x64xf32>
    %79 = tpu.matmul %76, %78, %cst_25 {dimension_numbers = #tpu.dot_dimension_numbers<[1], [0], [0], [1], [0, 0, 1, 1], [], []>} : vector<192x64xbf16>, vector<64x64xbf16>, vector<192x64xf32> -> vector<192x64xf32>
    %80 = vector.extract_strided_slice %74 {offsets = [24, 0], sizes = [192, 64], strides = [1, 1]} : vector<288x64xbf16> to vector<192x64xbf16>
    %81 = vector.extract_strided_slice %75 {offsets = [1, 0, 0], sizes = [1, 64, 64], strides = [1, 1, 1]} : vector<9x64x64xbf16> to vector<1x64x64xbf16>
    %82 = vector.shape_cast %81 : vector<1x64x64xbf16> to vector<64x64xbf16>
    %cst_26 = arith.constant dense<0.000000e+00> : vector<192x64xf32>
    %83 = tpu.matmul %80, %82, %cst_26 {dimension_numbers = #tpu.dot_dimension_numbers<[1], [0], [0], [1], [0, 0, 1, 1], [], []>} : vector<192x64xbf16>, vector<64x64xbf16>, vector<192x64xf32> -> vector<192x64xf32>
    %84 = arith.addf %79, %83 : vector<192x64xf32>
    %85 = vector.extract_strided_slice %74 {offsets = [25, 0], sizes = [192, 64], strides = [1, 1]} : vector<288x64xbf16> to vector<192x64xbf16>
    %86 = vector.extract_strided_slice %75 {offsets = [2, 0, 0], sizes = [1, 64, 64], strides = [1, 1, 1]} : vector<9x64x64xbf16> to vector<1x64x64xbf16>
    %87 = vector.shape_cast %86 : vector<1x64x64xbf16> to vector<64x64xbf16>
    %cst_27 = arith.constant dense<0.000000e+00> : vector<192x64xf32>
    %88 = tpu.matmul %85, %87, %cst_27 {dimension_numbers = #tpu.dot_dimension_numbers<[1], [0], [0], [1], [0, 0, 1, 1], [], []>} : vector<192x64xbf16>, vector<64x64xbf16>, vector<192x64xf32> -> vector<192x64xf32>
    %89 = arith.addf %84, %88 : vector<192x64xf32>
    %90 = vector.extract_strided_slice %74 {offsets = [47, 0], sizes = [192, 64], strides = [1, 1]} : vector<288x64xbf16> to vector<192x64xbf16>
    %91 = vector.extract_strided_slice %75 {offsets = [3, 0, 0], sizes = [1, 64, 64], strides = [1, 1, 1]} : vector<9x64x64xbf16> to vector<1x64x64xbf16>
    %92 = vector.shape_cast %91 : vector<1x64x64xbf16> to vector<64x64xbf16>
    %cst_28 = arith.constant dense<0.000000e+00> : vector<192x64xf32>
    %93 = tpu.matmul %90, %92, %cst_28 {dimension_numbers = #tpu.dot_dimension_numbers<[1], [0], [0], [1], [0, 0, 1, 1], [], []>} : vector<192x64xbf16>, vector<64x64xbf16>, vector<192x64xf32> -> vector<192x64xf32>
    %94 = arith.addf %89, %93 : vector<192x64xf32>
    %95 = vector.extract_strided_slice %74 {offsets = [48, 0], sizes = [192, 64], strides = [1, 1]} : vector<288x64xbf16> to vector<192x64xbf16>
    %96 = vector.extract_strided_slice %75 {offsets = [4, 0, 0], sizes = [1, 64, 64], strides = [1, 1, 1]} : vector<9x64x64xbf16> to vector<1x64x64xbf16>
    %97 = vector.shape_cast %96 : vector<1x64x64xbf16> to vector<64x64xbf16>
    %cst_29 = arith.constant dense<0.000000e+00> : vector<192x64xf32>
    %98 = tpu.matmul %95, %97, %cst_29 {dimension_numbers = #tpu.dot_dimension_numbers<[1], [0], [0], [1], [0, 0, 1, 1], [], []>} : vector<192x64xbf16>, vector<64x64xbf16>, vector<192x64xf32> -> vector<192x64xf32>
    %99 = arith.addf %94, %98 : vector<192x64xf32>
    %100 = vector.extract_strided_slice %74 {offsets = [49, 0], sizes = [192, 64], strides = [1, 1]} : vector<288x64xbf16> to vector<192x64xbf16>
    %101 = vector.extract_strided_slice %75 {offsets = [5, 0, 0], sizes = [1, 64, 64], strides = [1, 1, 1]} : vector<9x64x64xbf16> to vector<1x64x64xbf16>
    %102 = vector.shape_cast %101 : vector<1x64x64xbf16> to vector<64x64xbf16>
    %cst_30 = arith.constant dense<0.000000e+00> : vector<192x64xf32>
    %103 = tpu.matmul %100, %102, %cst_30 {dimension_numbers = #tpu.dot_dimension_numbers<[1], [0], [0], [1], [0, 0, 1, 1], [], []>} : vector<192x64xbf16>, vector<64x64xbf16>, vector<192x64xf32> -> vector<192x64xf32>
    %104 = arith.addf %99, %103 : vector<192x64xf32>
    %105 = vector.extract_strided_slice %74 {offsets = [71, 0], sizes = [192, 64], strides = [1, 1]} : vector<288x64xbf16> to vector<192x64xbf16>
    %106 = vector.extract_strided_slice %75 {offsets = [6, 0, 0], sizes = [1, 64, 64], strides = [1, 1, 1]} : vector<9x64x64xbf16> to vector<1x64x64xbf16>
    %107 = vector.shape_cast %106 : vector<1x64x64xbf16> to vector<64x64xbf16>
    %cst_31 = arith.constant dense<0.000000e+00> : vector<192x64xf32>
    %108 = tpu.matmul %105, %107, %cst_31 {dimension_numbers = #tpu.dot_dimension_numbers<[1], [0], [0], [1], [0, 0, 1, 1], [], []>} : vector<192x64xbf16>, vector<64x64xbf16>, vector<192x64xf32> -> vector<192x64xf32>
    %109 = arith.addf %104, %108 : vector<192x64xf32>
    %110 = vector.extract_strided_slice %74 {offsets = [72, 0], sizes = [192, 64], strides = [1, 1]} : vector<288x64xbf16> to vector<192x64xbf16>
    %111 = vector.extract_strided_slice %75 {offsets = [7, 0, 0], sizes = [1, 64, 64], strides = [1, 1, 1]} : vector<9x64x64xbf16> to vector<1x64x64xbf16>
    %112 = vector.shape_cast %111 : vector<1x64x64xbf16> to vector<64x64xbf16>
    %cst_32 = arith.constant dense<0.000000e+00> : vector<192x64xf32>
    %113 = tpu.matmul %110, %112, %cst_32 {dimension_numbers = #tpu.dot_dimension_numbers<[1], [0], [0], [1], [0, 0, 1, 1], [], []>} : vector<192x64xbf16>, vector<64x64xbf16>, vector<192x64xf32> -> vector<192x64xf32>
    %114 = arith.addf %109, %113 : vector<192x64xf32>
    %115 = vector.extract_strided_slice %74 {offsets = [73, 0], sizes = [192, 64], strides = [1, 1]} : vector<288x64xbf16> to vector<192x64xbf16>
    %116 = vector.extract_strided_slice %75 {offsets = [8, 0, 0], sizes = [1, 64, 64], strides = [1, 1, 1]} : vector<9x64x64xbf16> to vector<1x64x64xbf16>
    %117 = vector.shape_cast %116 : vector<1x64x64xbf16> to vector<64x64xbf16>
    %cst_33 = arith.constant dense<0.000000e+00> : vector<192x64xf32>
    %118 = tpu.matmul %115, %117, %cst_33 {dimension_numbers = #tpu.dot_dimension_numbers<[1], [0], [0], [1], [0, 0, 1, 1], [], []>} : vector<192x64xbf16>, vector<64x64xbf16>, vector<192x64xf32> -> vector<192x64xf32>
    %119 = arith.addf %114, %118 : vector<192x64xf32>
    %120 = vector.shape_cast %119 : vector<192x64xf32> to vector<8x24x64xf32>
    %c0_34 = arith.constant 0 : index
    %c0_35 = arith.constant 0 : index
    %121 = vector.load %arg8[%c0_34, %c0_35] : memref<1x64xf32, #tpu.memory_space<vmem>>, vector<1x64xf32>
    %122 = vector.shape_cast %121 : vector<1x64xf32> to vector<1x1x64xf32>
    %123 = vector.broadcast %122 : vector<1x1x64xf32> to vector<8x24x64xf32>
    %124 = arith.addf %120, %123 : vector<8x24x64xf32>
    %cst_36 = arith.constant 0.000000e+00 : f32
    %125 = vector.shape_cast %2 : vector<1x24x1xi1> to vector<1x24x1xi1>
    %126 = vector.broadcast %125 : vector<1x24x1xi1> to vector<8x24x64xi1>
    %127 = vector.broadcast %cst_36 : f32 to vector<8x24x64xf32>
    %128 = arith.select %126, %124, %127 : vector<8x24x64xi1>, vector<8x24x64xf32>
    %129 = vector.shape_cast %128 : vector<8x24x64xf32> to vector<192x64xf32>
    %cst_37 = arith.constant dense<0.000000e+00> : vector<64xf32>
    %130 = vector.multi_reduction <add>, %129, %cst_37 [0] : vector<192x64xf32> to vector<64xf32>
    %131 = vector.shape_cast %130 : vector<64xf32> to vector<1x64xf32>
    %132 = arith.mulf %129, %129 : vector<192x64xf32>
    %cst_38 = arith.constant dense<0.000000e+00> : vector<64xf32>
    %133 = vector.multi_reduction <add>, %132, %cst_38 [0] : vector<192x64xf32> to vector<64xf32>
    %134 = vector.shape_cast %133 : vector<64xf32> to vector<1x64xf32>
    %135 = tpu.concatenate %131, %134 in 0 : vector<1x64xf32>, vector<1x64xf32> -> vector<2x64xf32>
    %136 = vector.shape_cast %135 : vector<2x64xf32> to vector<1x1x2x64xf32>
    %c0_39 = arith.constant 0 : index
    %c0_40 = arith.constant 0 : index
    %c0_41 = arith.constant 0 : index
    %c0_42 = arith.constant 0 : index
    %137 = vector.load %arg10[%c0_39, %c0_40, %c0_41, %c0_42] : memref<1x1x2x64xf32, #tpu.memory_space<vmem>>, vector<1x1x2x64xf32>
    tpu.vector_store %arg10[%c0_39, %c0_40, %c0_41, %c0_42], %136 {strides = array<i32>} : memref<1x1x2x64xf32, #tpu.memory_space<vmem>>, vector<1x1x2x64xf32>,
    %138 = arith.truncf %129 : vector<192x64xf32> to vector<192x64xbf16>
    %c0_43 = arith.constant 0 : index
    %c0_44 = arith.constant 0 : index
    %c0_45 = arith.constant 0 : index
    %139 = vector.load %arg9[%c0_43, %c0_44, %c0_45] : memref<1x192x64xbf16, #tpu.memory_space<vmem>>, vector<1x192x64xbf16>
    %140 = vector.shape_cast %139 : vector<1x192x64xbf16> to vector<192x64xbf16>
    %141 = vector.shape_cast %138 : vector<192x64xbf16> to vector<1x192x64xbf16>
    tpu.vector_store %arg9[%c0_43, %c0_44, %c0_45], %141 {strides = array<i32>} : memref<1x192x64xbf16, #tpu.memory_space<vmem>>, vector<1x192x64xbf16>,
    return
  }
  func.func @transform_0(%arg0: i32, %arg1: i32) -> (i32, i32, i32) {
    %c4_i32 = arith.constant 4 : i32
    %0 = arith.muli %arg1, %c4_i32 : i32
    %c1_i32 = arith.constant 1 : i32
    %1 = arith.subi %0, %c1_i32 : i32
    %c0_i32 = arith.constant 0 : i32
    %2 = arith.maxsi %1, %c0_i32 : i32
    %c0_i32_0 = arith.constant 0 : i32
    %c0_i32_1 = arith.constant 0 : i32
    return %arg0, %2, %c0_i32_0 : i32, i32, i32
  }
  func.func @transform_1(%arg0: i32, %arg1: i32) -> (i32, i32, i32) {
    %c0_i32 = arith.constant 0 : i32
    %c0_i32_0 = arith.constant 0 : i32
    return %arg0, %arg1, %c0_i32 : i32, i32, i32
  }
  func.func @transform_2(%arg0: i32, %arg1: i32) -> (i32, i32, i32) {
    %c1_i32 = arith.constant 1 : i32
    %0 = arith.addi %arg1, %c1_i32 : i32
    %c4_i32 = arith.constant 4 : i32
    %1 = arith.muli %0, %c4_i32 : i32
    %c7_i32 = arith.constant 7 : i32
    %2 = arith.minsi %1, %c7_i32 : i32
    %c0_i32 = arith.constant 0 : i32
    %c0_i32_0 = arith.constant 0 : i32
    return %arg0, %2, %c0_i32 : i32, i32, i32
  }
  func.func @transform_3(%arg0: i32, %arg1: i32) -> (i32, i32) {
    %c0_i32 = arith.constant 0 : i32
    %c0_i32_0 = arith.constant 0 : i32
    %c0_i32_1 = arith.constant 0 : i32
    return %c0_i32, %c0_i32_0 : i32, i32
  }
  func.func @transform_4(%arg0: i32, %arg1: i32) -> (i32, i32) {
    %c0_i32 = arith.constant 0 : i32
    %c0_i32_0 = arith.constant 0 : i32
    %c0_i32_1 = arith.constant 0 : i32
    return %c0_i32, %c0_i32_0 : i32, i32
  }
  func.func @transform_5(%arg0: i32, %arg1: i32) -> (i32, i32, i32) {
    %c0_i32 = arith.constant 0 : i32
    %c0_i32_0 = arith.constant 0 : i32
    %c0_i32_1 = arith.constant 0 : i32
    %c0_i32_2 = arith.constant 0 : i32
    return %c0_i32, %c0_i32_0, %c0_i32_1 : i32, i32, i32
  }
  func.func @transform_6(%arg0: i32, %arg1: i32) -> (i32, i32) {
    %c0_i32 = arith.constant 0 : i32
    %c0_i32_0 = arith.constant 0 : i32
    %c0_i32_1 = arith.constant 0 : i32
    return %c0_i32, %c0_i32_0 : i32, i32
  }
  func.func @transform_7(%arg0: i32, %arg1: i32) -> (i32, i32, i32) {
    %c0_i32 = arith.constant 0 : i32
    %c0_i32_0 = arith.constant 0 : i32
    return %arg0, %arg1, %c0_i32 : i32, i32, i32
  }
  func.func @transform_8(%arg0: i32, %arg1: i32) -> (i32, i32, i32, i32) {
    %c0_i32 = arith.constant 0 : i32
    %c0_i32_0 = arith.constant 0 : i32
    %c0_i32_1 = arith.constant 0 : i32
    return %arg0, %arg1, %c0_i32, %c0_i32_0 : i32, i32, i32, i32
  }
}

module attributes {stable_mosaic.version = 11 : i64} {
  func.func @kernel(%arg0: i32, %arg1: i32, %arg2: memref<1x48x64xbf16, #tpu.memory_space<vmem>>, %arg3: memref<1x192x64xbf16, #tpu.memory_space<vmem>>, %arg4: memref<1x48x64xbf16, #tpu.memory_space<vmem>>, %arg5: memref<1x64xf32, #tpu.memory_space<vmem>>, %arg6: memref<1x64xf32, #tpu.memory_space<vmem>>, %arg7: memref<9x64x64xbf16, #tpu.memory_space<vmem>>, %arg8: memref<1x64xf32, #tpu.memory_space<vmem>>, %arg9: memref<1x192x64xbf16, #tpu.memory_space<vmem>>, %arg10: memref<1x192x64xbf16, #tpu.memory_space<vmem>>) attributes {dimension_semantics = [#tpu.dimension_semantics<parallel>, #tpu.dimension_semantics<parallel>], iteration_bounds = array<i64: 2, 2>, scalar_prefetch = 0 : i64, scratch_operands = 0 : i64, tpu.core_type = #tpu.core_type<tc>, window_params = [{transform_indices = @transform_0, window_bounds = array<i64: 1, 48, 64>}, {transform_indices = @transform_1, window_bounds = array<i64: 1, 192, 64>}, {transform_indices = @transform_2, window_bounds = array<i64: 1, 48, 64>}, {pipeline_mode = #tpu.pipeline_mode<synchronous>, transform_indices = @transform_3, window_bounds = array<i64: 1, 64>}, {pipeline_mode = #tpu.pipeline_mode<synchronous>, transform_indices = @transform_4, window_bounds = array<i64: 1, 64>}, {pipeline_mode = #tpu.pipeline_mode<synchronous>, transform_indices = @transform_5, window_bounds = array<i64: 9, 64, 64>}, {pipeline_mode = #tpu.pipeline_mode<synchronous>, transform_indices = @transform_6, window_bounds = array<i64: 1, 64>}, {transform_indices = @transform_7, window_bounds = array<i64: 1, 192, 64>}, {transform_indices = @transform_8, window_bounds = array<i64: 1, 192, 64>}]} {
    %0 = tpu.iota {dimensions = array<i32: 1>} : vector<1x24x1xi32>
    %c16_i32 = arith.constant 16 : i32
    %1 = vector.broadcast %c16_i32 : i32 to vector<1x24x1xi32>
    %2 = arith.cmpi slt, %0, %1 : vector<1x24x1xi32>
    %3 = tpu.iota {dimensions = array<i32: 0>} : vector<48x1xi32>
    %c24_i32 = arith.constant 24 : i32
    %4 = vector.broadcast %c24_i32 : i32 to vector<48x1xi32>
    %5 = arith.cmpi sge, %3, %4 : vector<48x1xi32>
    %c40_i32 = arith.constant 40 : i32
    %6 = vector.broadcast %c40_i32 : i32 to vector<48x1xi32>
    %7 = arith.cmpi slt, %3, %6 : vector<48x1xi32>
    %8 = arith.andi %5, %7 : vector<48x1xi1>
    %c1_i32 = arith.constant 1 : i32
    %9 = arith.cmpi sge, %arg1, %c1_i32 : i32
    %10 = vector.broadcast %9 : i1 to vector<48x1xi1>
    %11 = arith.andi %8, %10 : vector<48x1xi1>
    %c16_i32_0 = arith.constant 16 : i32
    %12 = vector.broadcast %c16_i32_0 : i32 to vector<48x1xi32>
    %13 = arith.cmpi slt, %3, %12 : vector<48x1xi32>
    %c1_i32_1 = arith.constant 1 : i32
    %14 = arith.cmpi slt, %arg1, %c1_i32_1 : i32
    %15 = vector.broadcast %14 : i1 to vector<48x1xi1>
    %16 = arith.andi %13, %15 : vector<48x1xi1>
    %c0 = arith.constant 0 : index
    %c0_2 = arith.constant 0 : index
    %c0_3 = arith.constant 0 : index
    %17 = vector.load %arg2[%c0, %c0_2, %c0_3] : memref<1x48x64xbf16, #tpu.memory_space<vmem>>, vector<1x48x64xbf16>
    %18 = vector.shape_cast %17 : vector<1x48x64xbf16> to vector<48x64xbf16>
    %19 = arith.extf %18 : vector<48x64xbf16> to vector<48x64xf32>
    %c0_4 = arith.constant 0 : index
    %c0_5 = arith.constant 0 : index
    %c0_6 = arith.constant 0 : index
    %20 = vector.load %arg4[%c0_4, %c0_5, %c0_6] : memref<1x48x64xbf16, #tpu.memory_space<vmem>>, vector<1x48x64xbf16>
    %21 = vector.shape_cast %20 : vector<1x48x64xbf16> to vector<48x64xbf16>
    %22 = arith.extf %21 : vector<48x64xbf16> to vector<48x64xf32>
    %c0_7 = arith.constant 0 : index
    %c0_8 = arith.constant 0 : index
    %23 = vector.load %arg5[%c0_7, %c0_8] : memref<1x64xf32, #tpu.memory_space<vmem>>, vector<1x64xf32>
    %c0_9 = arith.constant 0 : index
    %c0_10 = arith.constant 0 : index
    %24 = vector.load %arg6[%c0_9, %c0_10] : memref<1x64xf32, #tpu.memory_space<vmem>>, vector<1x64xf32>
    %25 = vector.broadcast %23 : vector<1x64xf32> to vector<48x64xf32>
    %26 = arith.mulf %19, %25 : vector<48x64xf32>
    %27 = vector.broadcast %24 : vector<1x64xf32> to vector<48x64xf32>
    %28 = arith.addf %26, %27 : vector<48x64xf32>
    %cst = arith.constant 0.000000e+00 : f32
    %29 = vector.broadcast %cst : f32 to vector<48x64xf32>
    %30 = arith.cmpf ogt, %28, %29 : vector<48x64xf32>
    %cst_11 = arith.constant 2.000000e-01 : f32
    %31 = vector.broadcast %cst_11 : f32 to vector<48x64xf32>
    %32 = arith.mulf %31, %28 : vector<48x64xf32>
    %33 = arith.select %30, %28, %32 : vector<48x64xi1>, vector<48x64xf32>
    %cst_12 = arith.constant 0.000000e+00 : f32
    %34 = vector.shape_cast %11 : vector<48x1xi1> to vector<48x1xi1>
    %35 = vector.broadcast %34 : vector<48x1xi1> to vector<48x64xi1>
    %36 = vector.broadcast %cst_12 : f32 to vector<48x64xf32>
    %37 = arith.select %35, %33, %36 : vector<48x64xi1>, vector<48x64xf32>
    %38 = vector.broadcast %23 : vector<1x64xf32> to vector<48x64xf32>
    %39 = arith.mulf %22, %38 : vector<48x64xf32>
    %40 = vector.broadcast %24 : vector<1x64xf32> to vector<48x64xf32>
    %41 = arith.addf %39, %40 : vector<48x64xf32>
    %cst_13 = arith.constant 0.000000e+00 : f32
    %42 = vector.broadcast %cst_13 : f32 to vector<48x64xf32>
    %43 = arith.cmpf ogt, %41, %42 : vector<48x64xf32>
    %cst_14 = arith.constant 2.000000e-01 : f32
    %44 = vector.broadcast %cst_14 : f32 to vector<48x64xf32>
    %45 = arith.mulf %44, %41 : vector<48x64xf32>
    %46 = arith.select %43, %41, %45 : vector<48x64xi1>, vector<48x64xf32>
    %cst_15 = arith.constant 0.000000e+00 : f32
    %47 = vector.shape_cast %16 : vector<48x1xi1> to vector<48x1xi1>
    %48 = vector.broadcast %47 : vector<48x1xi1> to vector<48x64xi1>
    %49 = vector.broadcast %cst_15 : f32 to vector<48x64xf32>
    %50 = arith.select %48, %46, %49 : vector<48x64xi1>, vector<48x64xf32>
    %c0_16 = arith.constant 0 : index
    %c0_17 = arith.constant 0 : index
    %c0_18 = arith.constant 0 : index
    %51 = vector.load %arg3[%c0_16, %c0_17, %c0_18] : memref<1x192x64xbf16, #tpu.memory_space<vmem>>, vector<1x192x64xbf16>
    %52 = vector.shape_cast %51 : vector<1x192x64xbf16> to vector<192x64xbf16>
    %53 = arith.extf %52 : vector<192x64xbf16> to vector<192x64xf32>
    %54 = vector.shape_cast %53 : vector<192x64xf32> to vector<8x24x64xf32>
    %55 = vector.shape_cast %23 : vector<1x64xf32> to vector<1x1x64xf32>
    %56 = vector.broadcast %55 : vector<1x1x64xf32> to vector<8x24x64xf32>
    %57 = arith.mulf %54, %56 : vector<8x24x64xf32>
    %58 = vector.shape_cast %24 : vector<1x64xf32> to vector<1x1x64xf32>
    %59 = vector.broadcast %58 : vector<1x1x64xf32> to vector<8x24x64xf32>
    %60 = arith.addf %57, %59 : vector<8x24x64xf32>
    %cst_19 = arith.constant 0.000000e+00 : f32
    %61 = vector.broadcast %cst_19 : f32 to vector<8x24x64xf32>
    %62 = arith.cmpf ogt, %60, %61 : vector<8x24x64xf32>
    %cst_20 = arith.constant 2.000000e-01 : f32
    %63 = vector.broadcast %cst_20 : f32 to vector<8x24x64xf32>
    %64 = arith.mulf %63, %60 : vector<8x24x64xf32>
    %65 = arith.select %62, %60, %64 : vector<8x24x64xi1>, vector<8x24x64xf32>
    %cst_21 = arith.constant 0.000000e+00 : f32
    %66 = vector.shape_cast %2 : vector<1x24x1xi1> to vector<1x24x1xi1>
    %67 = vector.broadcast %66 : vector<1x24x1xi1> to vector<8x24x64xi1>
    %68 = vector.broadcast %cst_21 : f32 to vector<8x24x64xf32>
    %69 = arith.select %67, %65, %68 : vector<8x24x64xi1>, vector<8x24x64xf32>
    %70 = vector.shape_cast %69 : vector<8x24x64xf32> to vector<192x64xf32>
    %71 = arith.truncf %70 : vector<192x64xf32> to vector<192x64xbf16>
    %72 = arith.truncf %37 : vector<48x64xf32> to vector<48x64xbf16>
    %73 = arith.truncf %50 : vector<48x64xf32> to vector<48x64xbf16>
    %74 = tpu.concatenate %72, %71, %73 in 0 : vector<48x64xbf16>, vector<192x64xbf16>, vector<48x64xbf16> -> vector<288x64xbf16>
    %c0_22 = arith.constant 0 : index
    %c0_23 = arith.constant 0 : index
    %c0_24 = arith.constant 0 : index
    %75 = vector.load %arg7[%c0_22, %c0_23, %c0_24] : memref<9x64x64xbf16, #tpu.memory_space<vmem>>, vector<9x64x64xbf16>
    %76 = vector.extract_strided_slice %74 {offsets = [23, 0], sizes = [192, 64], strides = [1, 1]} : vector<288x64xbf16> to vector<192x64xbf16>
    %77 = vector.extract_strided_slice %75 {offsets = [0, 0, 0], sizes = [1, 64, 64], strides = [1, 1, 1]} : vector<9x64x64xbf16> to vector<1x64x64xbf16>
    %78 = vector.shape_cast %77 : vector<1x64x64xbf16> to vector<64x64xbf16>
    %cst_25 = arith.constant dense<0.000000e+00> : vector<192x64xf32>
    %79 = tpu.matmul %76, %78, %cst_25 {dimension_numbers = #tpu.dot_dimension_numbers<[1], [0], [0], [1], [0, 0, 1, 1], [], []>} : vector<192x64xbf16>, vector<64x64xbf16>, vector<192x64xf32> -> vector<192x64xf32>
    %80 = vector.extract_strided_slice %74 {offsets = [24, 0], sizes = [192, 64], strides = [1, 1]} : vector<288x64xbf16> to vector<192x64xbf16>
    %81 = vector.extract_strided_slice %75 {offsets = [1, 0, 0], sizes = [1, 64, 64], strides = [1, 1, 1]} : vector<9x64x64xbf16> to vector<1x64x64xbf16>
    %82 = vector.shape_cast %81 : vector<1x64x64xbf16> to vector<64x64xbf16>
    %cst_26 = arith.constant dense<0.000000e+00> : vector<192x64xf32>
    %83 = tpu.matmul %80, %82, %cst_26 {dimension_numbers = #tpu.dot_dimension_numbers<[1], [0], [0], [1], [0, 0, 1, 1], [], []>} : vector<192x64xbf16>, vector<64x64xbf16>, vector<192x64xf32> -> vector<192x64xf32>
    %84 = arith.addf %79, %83 : vector<192x64xf32>
    %85 = vector.extract_strided_slice %74 {offsets = [25, 0], sizes = [192, 64], strides = [1, 1]} : vector<288x64xbf16> to vector<192x64xbf16>
    %86 = vector.extract_strided_slice %75 {offsets = [2, 0, 0], sizes = [1, 64, 64], strides = [1, 1, 1]} : vector<9x64x64xbf16> to vector<1x64x64xbf16>
    %87 = vector.shape_cast %86 : vector<1x64x64xbf16> to vector<64x64xbf16>
    %cst_27 = arith.constant dense<0.000000e+00> : vector<192x64xf32>
    %88 = tpu.matmul %85, %87, %cst_27 {dimension_numbers = #tpu.dot_dimension_numbers<[1], [0], [0], [1], [0, 0, 1, 1], [], []>} : vector<192x64xbf16>, vector<64x64xbf16>, vector<192x64xf32> -> vector<192x64xf32>
    %89 = arith.addf %84, %88 : vector<192x64xf32>
    %90 = vector.extract_strided_slice %74 {offsets = [47, 0], sizes = [192, 64], strides = [1, 1]} : vector<288x64xbf16> to vector<192x64xbf16>
    %91 = vector.extract_strided_slice %75 {offsets = [3, 0, 0], sizes = [1, 64, 64], strides = [1, 1, 1]} : vector<9x64x64xbf16> to vector<1x64x64xbf16>
    %92 = vector.shape_cast %91 : vector<1x64x64xbf16> to vector<64x64xbf16>
    %cst_28 = arith.constant dense<0.000000e+00> : vector<192x64xf32>
    %93 = tpu.matmul %90, %92, %cst_28 {dimension_numbers = #tpu.dot_dimension_numbers<[1], [0], [0], [1], [0, 0, 1, 1], [], []>} : vector<192x64xbf16>, vector<64x64xbf16>, vector<192x64xf32> -> vector<192x64xf32>
    %94 = arith.addf %89, %93 : vector<192x64xf32>
    %95 = vector.extract_strided_slice %74 {offsets = [48, 0], sizes = [192, 64], strides = [1, 1]} : vector<288x64xbf16> to vector<192x64xbf16>
    %96 = vector.extract_strided_slice %75 {offsets = [4, 0, 0], sizes = [1, 64, 64], strides = [1, 1, 1]} : vector<9x64x64xbf16> to vector<1x64x64xbf16>
    %97 = vector.shape_cast %96 : vector<1x64x64xbf16> to vector<64x64xbf16>
    %cst_29 = arith.constant dense<0.000000e+00> : vector<192x64xf32>
    %98 = tpu.matmul %95, %97, %cst_29 {dimension_numbers = #tpu.dot_dimension_numbers<[1], [0], [0], [1], [0, 0, 1, 1], [], []>} : vector<192x64xbf16>, vector<64x64xbf16>, vector<192x64xf32> -> vector<192x64xf32>
    %99 = arith.addf %94, %98 : vector<192x64xf32>
    %100 = vector.extract_strided_slice %74 {offsets = [49, 0], sizes = [192, 64], strides = [1, 1]} : vector<288x64xbf16> to vector<192x64xbf16>
    %101 = vector.extract_strided_slice %75 {offsets = [5, 0, 0], sizes = [1, 64, 64], strides = [1, 1, 1]} : vector<9x64x64xbf16> to vector<1x64x64xbf16>
    %102 = vector.shape_cast %101 : vector<1x64x64xbf16> to vector<64x64xbf16>
    %cst_30 = arith.constant dense<0.000000e+00> : vector<192x64xf32>
    %103 = tpu.matmul %100, %102, %cst_30 {dimension_numbers = #tpu.dot_dimension_numbers<[1], [0], [0], [1], [0, 0, 1, 1], [], []>} : vector<192x64xbf16>, vector<64x64xbf16>, vector<192x64xf32> -> vector<192x64xf32>
    %104 = arith.addf %99, %103 : vector<192x64xf32>
    %105 = vector.extract_strided_slice %74 {offsets = [71, 0], sizes = [192, 64], strides = [1, 1]} : vector<288x64xbf16> to vector<192x64xbf16>
    %106 = vector.extract_strided_slice %75 {offsets = [6, 0, 0], sizes = [1, 64, 64], strides = [1, 1, 1]} : vector<9x64x64xbf16> to vector<1x64x64xbf16>
    %107 = vector.shape_cast %106 : vector<1x64x64xbf16> to vector<64x64xbf16>
    %cst_31 = arith.constant dense<0.000000e+00> : vector<192x64xf32>
    %108 = tpu.matmul %105, %107, %cst_31 {dimension_numbers = #tpu.dot_dimension_numbers<[1], [0], [0], [1], [0, 0, 1, 1], [], []>} : vector<192x64xbf16>, vector<64x64xbf16>, vector<192x64xf32> -> vector<192x64xf32>
    %109 = arith.addf %104, %108 : vector<192x64xf32>
    %110 = vector.extract_strided_slice %74 {offsets = [72, 0], sizes = [192, 64], strides = [1, 1]} : vector<288x64xbf16> to vector<192x64xbf16>
    %111 = vector.extract_strided_slice %75 {offsets = [7, 0, 0], sizes = [1, 64, 64], strides = [1, 1, 1]} : vector<9x64x64xbf16> to vector<1x64x64xbf16>
    %112 = vector.shape_cast %111 : vector<1x64x64xbf16> to vector<64x64xbf16>
    %cst_32 = arith.constant dense<0.000000e+00> : vector<192x64xf32>
    %113 = tpu.matmul %110, %112, %cst_32 {dimension_numbers = #tpu.dot_dimension_numbers<[1], [0], [0], [1], [0, 0, 1, 1], [], []>} : vector<192x64xbf16>, vector<64x64xbf16>, vector<192x64xf32> -> vector<192x64xf32>
    %114 = arith.addf %109, %113 : vector<192x64xf32>
    %115 = vector.extract_strided_slice %74 {offsets = [73, 0], sizes = [192, 64], strides = [1, 1]} : vector<288x64xbf16> to vector<192x64xbf16>
    %116 = vector.extract_strided_slice %75 {offsets = [8, 0, 0], sizes = [1, 64, 64], strides = [1, 1, 1]} : vector<9x64x64xbf16> to vector<1x64x64xbf16>
    %117 = vector.shape_cast %116 : vector<1x64x64xbf16> to vector<64x64xbf16>
    %cst_33 = arith.constant dense<0.000000e+00> : vector<192x64xf32>
    %118 = tpu.matmul %115, %117, %cst_33 {dimension_numbers = #tpu.dot_dimension_numbers<[1], [0], [0], [1], [0, 0, 1, 1], [], []>} : vector<192x64xbf16>, vector<64x64xbf16>, vector<192x64xf32> -> vector<192x64xf32>
    %119 = arith.addf %114, %118 : vector<192x64xf32>
    %120 = vector.shape_cast %119 : vector<192x64xf32> to vector<8x24x64xf32>
    %c0_34 = arith.constant 0 : index
    %c0_35 = arith.constant 0 : index
    %121 = vector.load %arg8[%c0_34, %c0_35] : memref<1x64xf32, #tpu.memory_space<vmem>>, vector<1x64xf32>
    %122 = vector.shape_cast %121 : vector<1x64xf32> to vector<1x1x64xf32>
    %123 = vector.broadcast %122 : vector<1x1x64xf32> to vector<8x24x64xf32>
    %124 = arith.addf %120, %123 : vector<8x24x64xf32>
    %cst_36 = arith.constant 0.000000e+00 : f32
    %125 = vector.shape_cast %2 : vector<1x24x1xi1> to vector<1x24x1xi1>
    %126 = vector.broadcast %125 : vector<1x24x1xi1> to vector<8x24x64xi1>
    %127 = vector.broadcast %cst_36 : f32 to vector<8x24x64xf32>
    %128 = arith.select %126, %124, %127 : vector<8x24x64xi1>, vector<8x24x64xf32>
    %129 = vector.shape_cast %128 : vector<8x24x64xf32> to vector<192x64xf32>
    %c0_37 = arith.constant 0 : index
    %c0_38 = arith.constant 0 : index
    %c0_39 = arith.constant 0 : index
    %130 = vector.load %arg9[%c0_37, %c0_38, %c0_39] : memref<1x192x64xbf16, #tpu.memory_space<vmem>>, vector<1x192x64xbf16>
    %131 = vector.shape_cast %130 : vector<1x192x64xbf16> to vector<192x64xbf16>
    %132 = arith.extf %131 : vector<192x64xbf16> to vector<192x64xf32>
    %133 = arith.addf %129, %132 : vector<192x64xf32>
    %cst_40 = arith.constant 0.707106769 : f32
    %134 = vector.broadcast %cst_40 : f32 to vector<192x64xf32>
    %135 = arith.mulf %133, %134 : vector<192x64xf32>
    %136 = arith.truncf %135 : vector<192x64xf32> to vector<192x64xbf16>
    %c0_41 = arith.constant 0 : index
    %c0_42 = arith.constant 0 : index
    %c0_43 = arith.constant 0 : index
    %137 = vector.load %arg10[%c0_41, %c0_42, %c0_43] : memref<1x192x64xbf16, #tpu.memory_space<vmem>>, vector<1x192x64xbf16>
    %138 = vector.shape_cast %137 : vector<1x192x64xbf16> to vector<192x64xbf16>
    %139 = vector.shape_cast %136 : vector<192x64xbf16> to vector<1x192x64xbf16>
    tpu.vector_store %arg10[%c0_41, %c0_42, %c0_43], %139 {strides = array<i32>} : memref<1x192x64xbf16, #tpu.memory_space<vmem>>, vector<1x192x64xbf16>,
    return
  }
  func.func @transform_0(%arg0: i32, %arg1: i32) -> (i32, i32, i32) {
    %c4_i32 = arith.constant 4 : i32
    %0 = arith.muli %arg1, %c4_i32 : i32
    %c1_i32 = arith.constant 1 : i32
    %1 = arith.subi %0, %c1_i32 : i32
    %c0_i32 = arith.constant 0 : i32
    %2 = arith.maxsi %1, %c0_i32 : i32
    %c0_i32_0 = arith.constant 0 : i32
    %c0_i32_1 = arith.constant 0 : i32
    return %arg0, %2, %c0_i32_0 : i32, i32, i32
  }
  func.func @transform_1(%arg0: i32, %arg1: i32) -> (i32, i32, i32) {
    %c0_i32 = arith.constant 0 : i32
    %c0_i32_0 = arith.constant 0 : i32
    return %arg0, %arg1, %c0_i32 : i32, i32, i32
  }
  func.func @transform_2(%arg0: i32, %arg1: i32) -> (i32, i32, i32) {
    %c1_i32 = arith.constant 1 : i32
    %0 = arith.addi %arg1, %c1_i32 : i32
    %c4_i32 = arith.constant 4 : i32
    %1 = arith.muli %0, %c4_i32 : i32
    %c7_i32 = arith.constant 7 : i32
    %2 = arith.minsi %1, %c7_i32 : i32
    %c0_i32 = arith.constant 0 : i32
    %c0_i32_0 = arith.constant 0 : i32
    return %arg0, %2, %c0_i32 : i32, i32, i32
  }
  func.func @transform_3(%arg0: i32, %arg1: i32) -> (i32, i32) {
    %c0_i32 = arith.constant 0 : i32
    %c0_i32_0 = arith.constant 0 : i32
    %c0_i32_1 = arith.constant 0 : i32
    return %c0_i32, %c0_i32_0 : i32, i32
  }
  func.func @transform_4(%arg0: i32, %arg1: i32) -> (i32, i32) {
    %c0_i32 = arith.constant 0 : i32
    %c0_i32_0 = arith.constant 0 : i32
    %c0_i32_1 = arith.constant 0 : i32
    return %c0_i32, %c0_i32_0 : i32, i32
  }
  func.func @transform_5(%arg0: i32, %arg1: i32) -> (i32, i32, i32) {
    %c0_i32 = arith.constant 0 : i32
    %c0_i32_0 = arith.constant 0 : i32
    %c0_i32_1 = arith.constant 0 : i32
    %c0_i32_2 = arith.constant 0 : i32
    return %c0_i32, %c0_i32_0, %c0_i32_1 : i32, i32, i32
  }
  func.func @transform_6(%arg0: i32, %arg1: i32) -> (i32, i32) {
    %c0_i32 = arith.constant 0 : i32
    %c0_i32_0 = arith.constant 0 : i32
    %c0_i32_1 = arith.constant 0 : i32
    return %c0_i32, %c0_i32_0 : i32, i32
  }
  func.func @transform_7(%arg0: i32, %arg1: i32) -> (i32, i32, i32) {
    %c0_i32 = arith.constant 0 : i32
    %c0_i32_0 = arith.constant 0 : i32
    return %arg0, %arg1, %c0_i32 : i32, i32, i32
  }
  func.func @transform_8(%arg0: i32, %arg1: i32) -> (i32, i32, i32) {
    %c0_i32 = arith.constant 0 : i32
    %c0_i32_0 = arith.constant 0 : i32
    return %arg0, %arg1, %c0_i32 : i32, i32, i32
  }
}

module attributes {stable_mosaic.version = 11 : i64} {
  func.func @kernel(%arg0: i32, %arg1: i32, %arg2: memref<1x48x64xbf16, #tpu.memory_space<vmem>>, %arg3: memref<1x192x64xbf16, #tpu.memory_space<vmem>>, %arg4: memref<1x48x64xbf16, #tpu.memory_space<vmem>>, %arg5: memref<9x64x8xbf16, #tpu.memory_space<vmem>>, %arg6: memref<1x8xf32, #tpu.memory_space<vmem>>, %arg7: memref<1x192x8xf32, #tpu.memory_space<vmem>>) attributes {dimension_semantics = [#tpu.dimension_semantics<parallel>, #tpu.dimension_semantics<parallel>], iteration_bounds = array<i64: 2, 2>, scalar_prefetch = 0 : i64, scratch_operands = 0 : i64, tpu.core_type = #tpu.core_type<tc>, window_params = [{transform_indices = @transform_0, window_bounds = array<i64: 1, 48, 64>}, {transform_indices = @transform_1, window_bounds = array<i64: 1, 192, 64>}, {transform_indices = @transform_2, window_bounds = array<i64: 1, 48, 64>}, {pipeline_mode = #tpu.pipeline_mode<synchronous>, transform_indices = @transform_3, window_bounds = array<i64: 9, 64, 8>}, {pipeline_mode = #tpu.pipeline_mode<synchronous>, transform_indices = @transform_4, window_bounds = array<i64: 1, 8>}, {transform_indices = @transform_5, window_bounds = array<i64: 1, 192, 8>}]} {
    %0 = tpu.iota {dimensions = array<i32: 1>} : vector<1x24x1xi32>
    %c16_i32 = arith.constant 16 : i32
    %1 = vector.broadcast %c16_i32 : i32 to vector<1x24x1xi32>
    %2 = arith.cmpi slt, %0, %1 : vector<1x24x1xi32>
    %3 = tpu.iota {dimensions = array<i32: 0>} : vector<48x1xi32>
    %c24_i32 = arith.constant 24 : i32
    %4 = vector.broadcast %c24_i32 : i32 to vector<48x1xi32>
    %5 = arith.cmpi sge, %3, %4 : vector<48x1xi32>
    %c40_i32 = arith.constant 40 : i32
    %6 = vector.broadcast %c40_i32 : i32 to vector<48x1xi32>
    %7 = arith.cmpi slt, %3, %6 : vector<48x1xi32>
    %8 = arith.andi %5, %7 : vector<48x1xi1>
    %c1_i32 = arith.constant 1 : i32
    %9 = arith.cmpi sge, %arg1, %c1_i32 : i32
    %10 = vector.broadcast %9 : i1 to vector<48x1xi1>
    %11 = arith.andi %8, %10 : vector<48x1xi1>
    %c16_i32_0 = arith.constant 16 : i32
    %12 = vector.broadcast %c16_i32_0 : i32 to vector<48x1xi32>
    %13 = arith.cmpi slt, %3, %12 : vector<48x1xi32>
    %c1_i32_1 = arith.constant 1 : i32
    %14 = arith.cmpi slt, %arg1, %c1_i32_1 : i32
    %15 = vector.broadcast %14 : i1 to vector<48x1xi1>
    %16 = arith.andi %13, %15 : vector<48x1xi1>
    %c0 = arith.constant 0 : index
    %c0_2 = arith.constant 0 : index
    %c0_3 = arith.constant 0 : index
    %17 = vector.load %arg2[%c0, %c0_2, %c0_3] : memref<1x48x64xbf16, #tpu.memory_space<vmem>>, vector<1x48x64xbf16>
    %18 = vector.shape_cast %17 : vector<1x48x64xbf16> to vector<48x64xbf16>
    %19 = arith.extf %18 : vector<48x64xbf16> to vector<48x64xf32>
    %c0_4 = arith.constant 0 : index
    %c0_5 = arith.constant 0 : index
    %c0_6 = arith.constant 0 : index
    %20 = vector.load %arg4[%c0_4, %c0_5, %c0_6] : memref<1x48x64xbf16, #tpu.memory_space<vmem>>, vector<1x48x64xbf16>
    %21 = vector.shape_cast %20 : vector<1x48x64xbf16> to vector<48x64xbf16>
    %22 = arith.extf %21 : vector<48x64xbf16> to vector<48x64xf32>
    %cst = arith.constant 0.000000e+00 : f32
    %23 = vector.shape_cast %11 : vector<48x1xi1> to vector<48x1xi1>
    %24 = vector.broadcast %23 : vector<48x1xi1> to vector<48x64xi1>
    %25 = vector.broadcast %cst : f32 to vector<48x64xf32>
    %26 = arith.select %24, %19, %25 : vector<48x64xi1>, vector<48x64xf32>
    %cst_7 = arith.constant 0.000000e+00 : f32
    %27 = vector.shape_cast %16 : vector<48x1xi1> to vector<48x1xi1>
    %28 = vector.broadcast %27 : vector<48x1xi1> to vector<48x64xi1>
    %29 = vector.broadcast %cst_7 : f32 to vector<48x64xf32>
    %30 = arith.select %28, %22, %29 : vector<48x64xi1>, vector<48x64xf32>
    %c0_8 = arith.constant 0 : index
    %c0_9 = arith.constant 0 : index
    %c0_10 = arith.constant 0 : index
    %31 = vector.load %arg3[%c0_8, %c0_9, %c0_10] : memref<1x192x64xbf16, #tpu.memory_space<vmem>>, vector<1x192x64xbf16>
    %32 = vector.shape_cast %31 : vector<1x192x64xbf16> to vector<192x64xbf16>
    %33 = arith.truncf %26 : vector<48x64xf32> to vector<48x64xbf16>
    %34 = arith.truncf %30 : vector<48x64xf32> to vector<48x64xbf16>
    %35 = tpu.concatenate %33, %32, %34 in 0 : vector<48x64xbf16>, vector<192x64xbf16>, vector<48x64xbf16> -> vector<288x64xbf16>
    %c0_11 = arith.constant 0 : index
    %c0_12 = arith.constant 0 : index
    %c0_13 = arith.constant 0 : index
    %36 = vector.load %arg5[%c0_11, %c0_12, %c0_13] : memref<9x64x8xbf16, #tpu.memory_space<vmem>>, vector<9x64x8xbf16>
    %37 = vector.extract_strided_slice %35 {offsets = [23, 0], sizes = [192, 64], strides = [1, 1]} : vector<288x64xbf16> to vector<192x64xbf16>
    %38 = vector.extract_strided_slice %36 {offsets = [0, 0, 0], sizes = [1, 64, 8], strides = [1, 1, 1]} : vector<9x64x8xbf16> to vector<1x64x8xbf16>
    %39 = vector.shape_cast %38 : vector<1x64x8xbf16> to vector<64x8xbf16>
    %cst_14 = arith.constant dense<0.000000e+00> : vector<192x8xf32>
    %40 = tpu.matmul %37, %39, %cst_14 {dimension_numbers = #tpu.dot_dimension_numbers<[1], [0], [0], [1], [0, 0, 1, 1], [], []>} : vector<192x64xbf16>, vector<64x8xbf16>, vector<192x8xf32> -> vector<192x8xf32>
    %41 = vector.extract_strided_slice %35 {offsets = [24, 0], sizes = [192, 64], strides = [1, 1]} : vector<288x64xbf16> to vector<192x64xbf16>
    %42 = vector.extract_strided_slice %36 {offsets = [1, 0, 0], sizes = [1, 64, 8], strides = [1, 1, 1]} : vector<9x64x8xbf16> to vector<1x64x8xbf16>
    %43 = vector.shape_cast %42 : vector<1x64x8xbf16> to vector<64x8xbf16>
    %cst_15 = arith.constant dense<0.000000e+00> : vector<192x8xf32>
    %44 = tpu.matmul %41, %43, %cst_15 {dimension_numbers = #tpu.dot_dimension_numbers<[1], [0], [0], [1], [0, 0, 1, 1], [], []>} : vector<192x64xbf16>, vector<64x8xbf16>, vector<192x8xf32> -> vector<192x8xf32>
    %45 = arith.addf %40, %44 : vector<192x8xf32>
    %46 = vector.extract_strided_slice %35 {offsets = [25, 0], sizes = [192, 64], strides = [1, 1]} : vector<288x64xbf16> to vector<192x64xbf16>
    %47 = vector.extract_strided_slice %36 {offsets = [2, 0, 0], sizes = [1, 64, 8], strides = [1, 1, 1]} : vector<9x64x8xbf16> to vector<1x64x8xbf16>
    %48 = vector.shape_cast %47 : vector<1x64x8xbf16> to vector<64x8xbf16>
    %cst_16 = arith.constant dense<0.000000e+00> : vector<192x8xf32>
    %49 = tpu.matmul %46, %48, %cst_16 {dimension_numbers = #tpu.dot_dimension_numbers<[1], [0], [0], [1], [0, 0, 1, 1], [], []>} : vector<192x64xbf16>, vector<64x8xbf16>, vector<192x8xf32> -> vector<192x8xf32>
    %50 = arith.addf %45, %49 : vector<192x8xf32>
    %51 = vector.extract_strided_slice %35 {offsets = [47, 0], sizes = [192, 64], strides = [1, 1]} : vector<288x64xbf16> to vector<192x64xbf16>
    %52 = vector.extract_strided_slice %36 {offsets = [3, 0, 0], sizes = [1, 64, 8], strides = [1, 1, 1]} : vector<9x64x8xbf16> to vector<1x64x8xbf16>
    %53 = vector.shape_cast %52 : vector<1x64x8xbf16> to vector<64x8xbf16>
    %cst_17 = arith.constant dense<0.000000e+00> : vector<192x8xf32>
    %54 = tpu.matmul %51, %53, %cst_17 {dimension_numbers = #tpu.dot_dimension_numbers<[1], [0], [0], [1], [0, 0, 1, 1], [], []>} : vector<192x64xbf16>, vector<64x8xbf16>, vector<192x8xf32> -> vector<192x8xf32>
    %55 = arith.addf %50, %54 : vector<192x8xf32>
    %56 = vector.extract_strided_slice %35 {offsets = [48, 0], sizes = [192, 64], strides = [1, 1]} : vector<288x64xbf16> to vector<192x64xbf16>
    %57 = vector.extract_strided_slice %36 {offsets = [4, 0, 0], sizes = [1, 64, 8], strides = [1, 1, 1]} : vector<9x64x8xbf16> to vector<1x64x8xbf16>
    %58 = vector.shape_cast %57 : vector<1x64x8xbf16> to vector<64x8xbf16>
    %cst_18 = arith.constant dense<0.000000e+00> : vector<192x8xf32>
    %59 = tpu.matmul %56, %58, %cst_18 {dimension_numbers = #tpu.dot_dimension_numbers<[1], [0], [0], [1], [0, 0, 1, 1], [], []>} : vector<192x64xbf16>, vector<64x8xbf16>, vector<192x8xf32> -> vector<192x8xf32>
    %60 = arith.addf %55, %59 : vector<192x8xf32>
    %61 = vector.extract_strided_slice %35 {offsets = [49, 0], sizes = [192, 64], strides = [1, 1]} : vector<288x64xbf16> to vector<192x64xbf16>
    %62 = vector.extract_strided_slice %36 {offsets = [5, 0, 0], sizes = [1, 64, 8], strides = [1, 1, 1]} : vector<9x64x8xbf16> to vector<1x64x8xbf16>
    %63 = vector.shape_cast %62 : vector<1x64x8xbf16> to vector<64x8xbf16>
    %cst_19 = arith.constant dense<0.000000e+00> : vector<192x8xf32>
    %64 = tpu.matmul %61, %63, %cst_19 {dimension_numbers = #tpu.dot_dimension_numbers<[1], [0], [0], [1], [0, 0, 1, 1], [], []>} : vector<192x64xbf16>, vector<64x8xbf16>, vector<192x8xf32> -> vector<192x8xf32>
    %65 = arith.addf %60, %64 : vector<192x8xf32>
    %66 = vector.extract_strided_slice %35 {offsets = [71, 0], sizes = [192, 64], strides = [1, 1]} : vector<288x64xbf16> to vector<192x64xbf16>
    %67 = vector.extract_strided_slice %36 {offsets = [6, 0, 0], sizes = [1, 64, 8], strides = [1, 1, 1]} : vector<9x64x8xbf16> to vector<1x64x8xbf16>
    %68 = vector.shape_cast %67 : vector<1x64x8xbf16> to vector<64x8xbf16>
    %cst_20 = arith.constant dense<0.000000e+00> : vector<192x8xf32>
    %69 = tpu.matmul %66, %68, %cst_20 {dimension_numbers = #tpu.dot_dimension_numbers<[1], [0], [0], [1], [0, 0, 1, 1], [], []>} : vector<192x64xbf16>, vector<64x8xbf16>, vector<192x8xf32> -> vector<192x8xf32>
    %70 = arith.addf %65, %69 : vector<192x8xf32>
    %71 = vector.extract_strided_slice %35 {offsets = [72, 0], sizes = [192, 64], strides = [1, 1]} : vector<288x64xbf16> to vector<192x64xbf16>
    %72 = vector.extract_strided_slice %36 {offsets = [7, 0, 0], sizes = [1, 64, 8], strides = [1, 1, 1]} : vector<9x64x8xbf16> to vector<1x64x8xbf16>
    %73 = vector.shape_cast %72 : vector<1x64x8xbf16> to vector<64x8xbf16>
    %cst_21 = arith.constant dense<0.000000e+00> : vector<192x8xf32>
    %74 = tpu.matmul %71, %73, %cst_21 {dimension_numbers = #tpu.dot_dimension_numbers<[1], [0], [0], [1], [0, 0, 1, 1], [], []>} : vector<192x64xbf16>, vector<64x8xbf16>, vector<192x8xf32> -> vector<192x8xf32>
    %75 = arith.addf %70, %74 : vector<192x8xf32>
    %76 = vector.extract_strided_slice %35 {offsets = [73, 0], sizes = [192, 64], strides = [1, 1]} : vector<288x64xbf16> to vector<192x64xbf16>
    %77 = vector.extract_strided_slice %36 {offsets = [8, 0, 0], sizes = [1, 64, 8], strides = [1, 1, 1]} : vector<9x64x8xbf16> to vector<1x64x8xbf16>
    %78 = vector.shape_cast %77 : vector<1x64x8xbf16> to vector<64x8xbf16>
    %cst_22 = arith.constant dense<0.000000e+00> : vector<192x8xf32>
    %79 = tpu.matmul %76, %78, %cst_22 {dimension_numbers = #tpu.dot_dimension_numbers<[1], [0], [0], [1], [0, 0, 1, 1], [], []>} : vector<192x64xbf16>, vector<64x8xbf16>, vector<192x8xf32> -> vector<192x8xf32>
    %80 = arith.addf %75, %79 : vector<192x8xf32>
    %81 = vector.shape_cast %80 : vector<192x8xf32> to vector<8x24x8xf32>
    %c0_23 = arith.constant 0 : index
    %c0_24 = arith.constant 0 : index
    %82 = vector.load %arg6[%c0_23, %c0_24] : memref<1x8xf32, #tpu.memory_space<vmem>>, vector<1x8xf32>
    %83 = vector.shape_cast %82 : vector<1x8xf32> to vector<1x1x8xf32>
    %84 = vector.broadcast %83 : vector<1x1x8xf32> to vector<8x24x8xf32>
    %85 = arith.addf %81, %84 : vector<8x24x8xf32>
    %cst_25 = arith.constant 0.000000e+00 : f32
    %86 = vector.shape_cast %2 : vector<1x24x1xi1> to vector<1x24x1xi1>
    %87 = vector.broadcast %86 : vector<1x24x1xi1> to vector<8x24x8xi1>
    %88 = vector.broadcast %cst_25 : f32 to vector<8x24x8xf32>
    %89 = arith.select %87, %85, %88 : vector<8x24x8xi1>, vector<8x24x8xf32>
    %90 = vector.shape_cast %89 : vector<8x24x8xf32> to vector<192x8xf32>
    %c0_26 = arith.constant 0 : index
    %c0_27 = arith.constant 0 : index
    %c0_28 = arith.constant 0 : index
    %91 = vector.load %arg7[%c0_26, %c0_27, %c0_28] : memref<1x192x8xf32, #tpu.memory_space<vmem>>, vector<1x192x8xf32>
    %92 = vector.shape_cast %91 : vector<1x192x8xf32> to vector<192x8xf32>
    %93 = vector.shape_cast %90 : vector<192x8xf32> to vector<1x192x8xf32>
    tpu.vector_store %arg7[%c0_26, %c0_27, %c0_28], %93 {strides = array<i32>} : memref<1x192x8xf32, #tpu.memory_space<vmem>>, vector<1x192x8xf32>,
    return
  }
  func.func @transform_0(%arg0: i32, %arg1: i32) -> (i32, i32, i32) {
    %c4_i32 = arith.constant 4 : i32
    %0 = arith.muli %arg1, %c4_i32 : i32
    %c1_i32 = arith.constant 1 : i32
    %1 = arith.subi %0, %c1_i32 : i32
    %c0_i32 = arith.constant 0 : i32
    %2 = arith.maxsi %1, %c0_i32 : i32
    %c0_i32_0 = arith.constant 0 : i32
    %c0_i32_1 = arith.constant 0 : i32
    return %arg0, %2, %c0_i32_0 : i32, i32, i32
  }
  func.func @transform_1(%arg0: i32, %arg1: i32) -> (i32, i32, i32) {
    %c0_i32 = arith.constant 0 : i32
    %c0_i32_0 = arith.constant 0 : i32
    return %arg0, %arg1, %c0_i32 : i32, i32, i32
  }
  func.func @transform_2(%arg0: i32, %arg1: i32) -> (i32, i32, i32) {
    %c1_i32 = arith.constant 1 : i32
    %0 = arith.addi %arg1, %c1_i32 : i32
    %c4_i32 = arith.constant 4 : i32
    %1 = arith.muli %0, %c4_i32 : i32
    %c7_i32 = arith.constant 7 : i32
    %2 = arith.minsi %1, %c7_i32 : i32
    %c0_i32 = arith.constant 0 : i32
    %c0_i32_0 = arith.constant 0 : i32
    return %arg0, %2, %c0_i32 : i32, i32, i32
  }
  func.func @transform_3(%arg0: i32, %arg1: i32) -> (i32, i32, i32) {
    %c0_i32 = arith.constant 0 : i32
    %c0_i32_0 = arith.constant 0 : i32
    %c0_i32_1 = arith.constant 0 : i32
    %c0_i32_2 = arith.constant 0 : i32
    return %c0_i32, %c0_i32_0, %c0_i32_1 : i32, i32, i32
  }
  func.func @transform_4(%arg0: i32, %arg1: i32) -> (i32, i32) {
    %c0_i32 = arith.constant 0 : i32
    %c0_i32_0 = arith.constant 0 : i32
    %c0_i32_1 = arith.constant 0 : i32
    return %c0_i32, %c0_i32_0 : i32, i32
  }
  func.func @transform_5(%arg0: i32, %arg1: i32) -> (i32, i32, i32) {
    %c0_i32 = arith.constant 0 : i32
    %c0_i32_0 = arith.constant 0 : i32
    return %arg0, %arg1, %c0_i32 : i32, i32, i32
  }
}

</mosaic_0001>

<llo_original>
// kernel: _lambda_.4
$region0: #{_lambda_.4}
  #allocation0 [shape = 'u32[]', space=smem, size = 0x4, offset = 0x4, fixed_abs, tag = 'smem constant byte address 0x4 - core index']
  #allocation1 [shape = 'u32[72,128]{1,0:T(1,128)}', space=vmem, size = 0x9000, scoped, tag = 'internal scratch']
  %s0 = inlined_call_operand.vmem [shape: f32[2,384,8], index: 0, kind: input, shape index: {}, may-alias: {0,1,2}]
  %s1 = inlined_call_operand.vmem [shape: f32[2,384,8], index: 1, kind: input, shape index: {}, may-alias: {0,1,2}]
  %s2 = inlined_call_operand.vmem [shape: f32[2,384,8], index: 2, kind: input, shape index: {}, may-alias: {0,1,2}]
  %s3 = inlined_call_operand.vmem [shape: bf16[9,8,64], index: 3, kind: input, shape index: {}]
  %s4 = inlined_call_operand.vmem [shape: f32[1,64], index: 4, kind: input, shape index: {}]
  %s5 = inlined_call_operand.vmem [shape: bf16[2,384,64], index: 5, kind: output, shape index: {0}]
  %s6 = inlined_call_operand.vmem [shape: f32[2,2,2,64], index: 6, kind: output, shape index: {1}]
  %7 = xla_tuple %s5, %s6
  %s8 = sld [smem:[#allocation0]]
  $region61: #{_lambda_.4} parent=0
    _
  %s10 = ssub.s32 1, %s8
  %s11 = scalar_select 0, %s10, %s8
  loop: start=0, step=1, limit=6
  $region2: #{_lambda_.4} parent=0 // loop_pre_header
    _
  $region3: #{_lambda_.4} parent=0 // loop_header
    %s13 = sphi 0, %s17
    %p14 = scmp.ge.s32.totalorder %s13, 6
    %s20 = sphi 0, %s32
    %s21 = sphi 0, %s28
    %s22 = sphi 0, %s20
    %s23 = sphi 0, %s21
    %s24 = sphi 0, %s22
    %s25 = sphi 0, %s23
    %s45 = sphi 0, %s47
    %s48 = sphi 0, %s45
    %s49 = sphi 0, %s48
    %s65 = sphi 0, %s49
    %s73 = sphi 0, %s75
    %s76 = sphi 0, %s73
    %s77 = sphi 0, %s76
    %s93 = sphi 0, %s77
    %s109 = sphi 0, %s111
    %s112 = sphi 0, %s109
    %s113 = sphi 0, %s112
    %s129 = sphi 0, %s113
    %s133 = sphi 0, %s133
    %s135 = sphi 0, %s133
    %s136 = sphi 0, %s135
    %s150 = sphi 0, %s136
    %s154 = sphi 0, %s154
    %s156 = sphi 0, %s154
    %s157 = sphi 0, %s156
    %s171 = sphi 0, %s157
    %s179 = sphi 0, %s181
    %s182 = sphi 0, %s179
    %s183 = sphi 0, %s182
    %s199 = sphi 0, %s183
    %s207 = sphi 0, %s209
    %s210 = sphi 0, %s207
    %s211 = sphi 0, %s210
    %s227 = sphi 0, %s211
  $region4: #{_lambda_.4} parent=0 // loop_header_branch
    %16 = sbr.rel (%p14) target = $region8
  $region5: #{_lambda_.4} parent=0 // loop_body
    %s18 = ssub.s32 %s13, 1
    %s19 = ssub.s32 %s13, 2
    %s26 = sadd.s32 1, %s21
    %p27 = scmp.ge.s32.totalorder %s26, 2
    %s28 = scalar_select %p27, 0, %s26
    %s29 = sadd.s32 1, %s20
    %s30 = scalar_select %p27, %s29, %s20
    %p31 = scmp.ge.s32.totalorder %s30, 2
    %s32 = scalar_select %p31, 0, %s30
    %s33 = smul.u32 %s21, 4
    %s34 = ssub.s32 %s33, 1
    %p35 = scmp.gt.s32.totalorder %s34, 0
    %s36 = scalar_select %p35, %s34, 0
    %s37 = smul.u32 %s28, 4
    %s38 = ssub.s32 %s37, 1
    %p39 = scmp.gt.s32.totalorder %s38, 0
    %s40 = scalar_select %p39, %s38, 0
    %s41 = ssub.s32 %s20, %s32
    %s42 = ssub.s32 %s36, %s40
    %s43 = sor.u32 %s41, %s42
    %p44 = scmp.eq.s32.totalorder %s43, 0
    %s46 = sadd.s32 %s45, 1
    %s47 = scalar_select %p44, %s45, %s46
    %p50 = pneg %p44
    %p51 = scmp.eq.s32.totalorder %s13, 3
    %p52 = por %p50, %p51
    %p53 = scmp.ne.s32.totalorder %s45, %s48
    %p54 = scmp.eq.s32.totalorder %s13, 0
    %p55 = por %p53, %p54
    %p56 = scmp.ne.s32.totalorder %s45, %s48
    %p57 = scmp.eq.s32.totalorder %s18, 3
    %p58 = por %p56, %p57
    %p59 = scmp.ne.s32.totalorder %s48, %s49
    %p60 = scmp.eq.s32.totalorder %s18, 0
    %p61 = por %p59, %p60
    %p62 = scmp.ne.s32.totalorder %s48, %s49
    %p63 = scmp.eq.s32.totalorder %s19, 3
    %p64 = por %p62, %p63
    %p66 = scmp.ne.s32.totalorder %s49, %s65
    %p67 = scmp.eq.s32.totalorder %s19, 0
    %p68 = por %p66, %p67
    %s69 = ssub.s32 %s20, %s32
    %s70 = ssub.s32 %s21, %s28
    %s71 = sor.u32 %s69, %s70
    %p72 = scmp.eq.s32.totalorder %s71, 0
    %s74 = sadd.s32 %s73, 1
    %s75 = scalar_select %p72, %s73, %s74
    %p78 = pneg %p72
    %p79 = scmp.eq.s32.totalorder %s13, 3
    %p80 = por %p78, %p79
    %p81 = scmp.ne.s32.totalorder %s73, %s76
    %p82 = scmp.eq.s32.totalorder %s13, 0
    %p83 = por %p81, %p82
    %p84 = scmp.ne.s32.totalorder %s73, %s76
    %p85 = scmp.eq.s32.totalorder %s18, 3
    %p86 = por %p84, %p85
    %p87 = scmp.ne.s32.totalorder %s76, %s77
    %p88 = scmp.eq.s32.totalorder %s18, 0
    %p89 = por %p87, %p88
    %p90 = scmp.ne.s32.totalorder %s76, %s77
    %p91 = scmp.eq.s32.totalorder %s19, 3
    %p92 = por %p90, %p91
    %p94 = scmp.ne.s32.totalorder %s77, %s93
    %p95 = scmp.eq.s32.totalorder %s19, 0
    %p96 = por %p94, %p95
    %s97 = sadd.s32 %s21, 1
    %s98 = smul.u32 %s97, 4
    %p99 = scmp.lt.s32.totalorder %s98, 7
    %s100 = scalar_select %p99, %s98, 7
    %s101 = sadd.s32 %s28, 1
    %s102 = smul.u32 %s101, 4
    %p103 = scmp.lt.s32.totalorder %s102, 7
    %s104 = scalar_select %p103, %s102, 7
    %s105 = ssub.s32 %s20, %s32
    %s106 = ssub.s32 %s100, %s104
    %s107 = sor.u32 %s105, %s106
    %p108 = scmp.eq.s32.totalorder %s107, 0
    %s110 = sadd.s32 %s109, 1
    %s111 = scalar_select %p108, %s109, %s110
    %p114 = pneg %p108
    %p115 = scmp.eq.s32.totalorder %s13, 3
    %p116 = por %p114, %p115
    %p117 = scmp.ne.s32.totalorder %s109, %s112
    %p118 = scmp.eq.s32.totalorder %s13, 0
    %p119 = por %p117, %p118
    %p120 = scmp.ne.s32.totalorder %s109, %s112
    %p121 = scmp.eq.s32.totalorder %s18, 3
    %p122 = por %p120, %p121
    %p123 = scmp.ne.s32.totalorder %s112, %s113
    %p124 = scmp.eq.s32.totalorder %s18, 0
    %p125 = por %p123, %p124
    %p126 = scmp.ne.s32.totalorder %s112, %s113
    %p127 = scmp.eq.s32.totalorder %s19, 3
    %p128 = por %p126, %p127
    %p130 = scmp.ne.s32.totalorder %s113, %s129
    %p131 = scmp.eq.s32.totalorder %s19, 0
    %p132 = por %p130, %p131
    %s134 = sadd.s32 %s133, 1
    %p137 = scmp.eq.s32.totalorder %s13, 3
    %p138 = scmp.ne.s32.totalorder %s133, %s135
    %p139 = scmp.eq.s32.totalorder %s13, 0
    %p140 = por %p138, %p139
    %p141 = scmp.ne.s32.totalorder %s133, %s135
    %p142 = scmp.eq.s32.totalorder %s18, 3
    %p143 = por %p141, %p142
    %p144 = scmp.ne.s32.totalorder %s135, %s136
    %p145 = scmp.eq.s32.totalorder %s18, 0
    %p146 = por %p144, %p145
    %p147 = scmp.ne.s32.totalorder %s135, %s136
    %p148 = scmp.eq.s32.totalorder %s19, 3
    %p149 = por %p147, %p148
    %p151 = scmp.ne.s32.totalorder %s136, %s150
    %p152 = scmp.eq.s32.totalorder %s19, 0
    %p153 = por %p151, %p152
    %s155 = sadd.s32 %s154, 1
    %p158 = scmp.eq.s32.totalorder %s13, 3
    %p159 = scmp.ne.s32.totalorder %s154, %s156
    %p160 = scmp.eq.s32.totalorder %s13, 0
    %p161 = por %p159, %p160
    %p162 = scmp.ne.s32.totalorder %s154, %s156
    %p163 = scmp.eq.s32.totalorder %s18, 3
    %p164 = por %p162, %p163
    %p165 = scmp.ne.s32.totalorder %s156, %s157
    %p166 = scmp.eq.s32.totalorder %s18, 0
    %p167 = por %p165, %p166
    %p168 = scmp.ne.s32.totalorder %s156, %s157
    %p169 = scmp.eq.s32.totalorder %s19, 3
    %p170 = por %p168, %p169
    %p172 = scmp.ne.s32.totalorder %s157, %s171
    %p173 = scmp.eq.s32.totalorder %s19, 0
    %p174 = por %p172, %p173
    %s175 = ssub.s32 %s20, %s32
    %s176 = ssub.s32 %s21, %s28
    %s177 = sor.u32 %s175, %s176
    %p178 = scmp.eq.s32.totalorder %s177, 0
    %s180 = sadd.s32 %s179, 1
    %s181 = scalar_select %p178, %s179, %s180
    %p184 = pneg %p178
    %p185 = scmp.eq.s32.totalorder %s13, 3
    %p186 = por %p184, %p185
    %p187 = scmp.ne.s32.totalorder %s179, %s182
    %p188 = scmp.eq.s32.totalorder %s13, 0
    %p189 = por %p187, %p188
    %p190 = scmp.ne.s32.totalorder %s179, %s182
    %p191 = scmp.eq.s32.totalorder %s18, 3
    %p192 = por %p190, %p191
    %p193 = scmp.ne.s32.totalorder %s182, %s183
    %p194 = scmp.eq.s32.totalorder %s18, 0
    %p195 = por %p193, %p194
    %p196 = scmp.ne.s32.totalorder %s182, %s183
    %p197 = scmp.eq.s32.totalorder %s19, 3
    %p198 = por %p196, %p197
    %p200 = scmp.ne.s32.totalorder %s183, %s199
    %p201 = scmp.eq.s32.totalorder %s19, 0
    %p202 = por %p200, %p201
    %s203 = ssub.s32 %s20, %s32
    %s204 = ssub.s32 %s21, %s28
    %s205 = sor.u32 %s203, %s204
    %p206 = scmp.eq.s32.totalorder %s205, 0
    %s208 = sadd.s32 %s207, 1
    %s209 = scalar_select %p206, %s207, %s208
    %p212 = pneg %p206
    %p213 = scmp.eq.s32.totalorder %s13, 3
    %p214 = por %p212, %p213
    %p215 = scmp.ne.s32.totalorder %s207, %s210
    %p216 = scmp.eq.s32.totalorder %s13, 0
    %p217 = por %p215, %p216
    %p218 = scmp.ne.s32.totalorder %s207, %s210
    %p219 = scmp.eq.s32.totalorder %s18, 3
    %p220 = por %p218, %p219
    %p221 = scmp.ne.s32.totalorder %s210, %s211
    %p222 = scmp.eq.s32.totalorder %s18, 0
    %p223 = por %p221, %p222
    %p224 = scmp.ne.s32.totalorder %s210, %s211
    %p225 = scmp.eq.s32.totalorder %s19, 3
    %p226 = por %p224, %p225
    %p228 = scmp.ne.s32.totalorder %s211, %s227
    %p229 = scmp.eq.s32.totalorder %s19, 0
    %p230 = por %p228, %p229
    %p231 = scmp.le.s32.totalorder 1, %s13
    %p232 = scmp.lt.s32.totalorder %s13, 5
    %p233 = pnand %p231, %p232
    %p234 = pneg %p233
    // Predicated region
    $region9: #{_lambda_.4} parent=5 // pred_check
      _
    $region10: #{_lambda_.4} parent=5 // pred_check_branch
      %236 = sbr.rel (%p233) target = $region12
    $region11: #{_lambda_.4} parent=5 // pred_region
      %s237 = ssub.s32 %s13, 1
      // Predicated region
      $region13: #{_lambda_.4} parent=11 // pred_check
        %p238 = pneg %p146
      $region14: #{_lambda_.4} parent=11 // pred_check_branch
        %240 = sbr.rel (%p238) target = $region16
      $region15: #{_lambda_.4} parent=11 // pred_region
        _
      $region16: #{_lambda_.4} parent=11 // pred_fallthru
        _
      // Predicated region
      $region17: #{_lambda_.4} parent=11 // pred_check
        %p241 = pneg %p167
      $region18: #{_lambda_.4} parent=11 // pred_check_branch
        %243 = sbr.rel (%p241) target = $region20
      $region19: #{_lambda_.4} parent=11 // pred_region
        _
      $region20: #{_lambda_.4} parent=11 // pred_fallthru
        _
    $region12: #{_lambda_.4} parent=5 // pred_fallthru
      _
    %p244 = scmp.lt.s32.totalorder %s13, 4
    // Predicated region
    $region21: #{_lambda_.4} parent=5 // pred_check
      %p245 = pneg %p244
    $region22: #{_lambda_.4} parent=5 // pred_check_branch
      %247 = sbr.rel (%p245) target = $region24
    $region23: #{_lambda_.4} parent=5 // pred_region
      // Predicated region
      $region25: #{_lambda_.4} parent=23 // pred_check
        %p248 = pneg %p55
      $region26: #{_lambda_.4} parent=23 // pred_check_branch
        %250 = sbr.rel (%p248) target = $region28
      $region27: #{_lambda_.4} parent=23 // pred_region
        %s251 = smul.u32 %s21, 4
        %s252 = ssub.s32 %s251, 1
        %p253 = scmp.gt.s32.totalorder %s252, 0
        %s254 = scalar_select %p253, %s252, 0
        %s255 = smul.u32 6, %s254
        %p256 = scmp.lt.s32.totalorder %s20, 1
        %s257 = scalar_select %p256, %s20, 1
        %p258 = scmp.lt.s32.totalorder %s255, 47
        %s259 = scalar_select %p258, %s255, 47
        %s260 = smul.addr %s257, 48
        %s261 = sadd.s32 %s259, %s260
        %s262 = smul.addr %s261, 8
        %s263 = scalar_lea.vmem %s0, %s262
        %s264 = smul.u32 %s21, 4
        %s265 = ssub.s32 %s264, 1
        %p266 = scmp.gt.s32.totalorder %s265, 0
        %s267 = scalar_select %p266, %s265, 0
        %s268 = smul.u32 6, %s267
      $region28: #{_lambda_.4} parent=23 // pred_fallthru
        _
      // Predicated region
      $region29: #{_lambda_.4} parent=23 // pred_check
        %p269 = pneg %p83
      $region30: #{_lambda_.4} parent=23 // pred_check_branch
        %271 = sbr.rel (%p269) target = $region32
      $region31: #{_lambda_.4} parent=23 // pred_region
        %s272 = smul.u32 24, %s21
        %p273 = scmp.lt.s32.totalorder %s20, 1
        %s274 = scalar_select %p273, %s20, 1
        %p275 = scmp.lt.s32.totalorder %s272, 47
        %s276 = scalar_select %p275, %s272, 47
        %s277 = smul.addr %s274, 48
        %s278 = sadd.s32 %s276, %s277
        %s279 = smul.addr %s278, 8
        %s280 = scalar_lea.vmem %s1, %s279
        %s281 = smul.u32 24, %s21
      $region32: #{_lambda_.4} parent=23 // pred_fallthru
        _
      // Predicated region
      $region33: #{_lambda_.4} parent=23 // pred_check
        %p282 = pneg %p119
      $region34: #{_lambda_.4} parent=23 // pred_check_branch
        %284 = sbr.rel (%p282) target = $region36
      $region35: #{_lambda_.4} parent=23 // pred_region
        %s285 = sadd.s32 %s21, 1
        %s286 = smul.u32 %s285, 4
        %p287 = scmp.lt.s32.totalorder %s286, 7
        %s288 = scalar_select %p287, %s286, 7
        %s289 = smul.u32 6, %s288
        %p290 = scmp.lt.s32.totalorder %s20, 1
        %s291 = scalar_select %p290, %s20, 1
        %p292 = scmp.lt.s32.totalorder %s289, 47
        %s293 = scalar_select %p292, %s289, 47
        %s294 = smul.addr %s291, 48
        %s295 = sadd.s32 %s293, %s294
        %s296 = smul.addr %s295, 8
        %s297 = scalar_lea.vmem %s2, %s296
        %s298 = sadd.s32 %s21, 1
        %s299 = smul.u32 %s298, 4
        %p300 = scmp.lt.s32.totalorder %s299, 7
        %s301 = scalar_select %p300, %s299, 7
        %s302 = smul.u32 6, %s301
      $region36: #{_lambda_.4} parent=23 // pred_fallthru
        _
    $region24: #{_lambda_.4} parent=5 // pred_fallthru
      _
    %p303 = scmp.le.s32.totalorder 1, %s13
    %p304 = scmp.lt.s32.totalorder %s13, 5
    %p305 = pnand %p303, %p304
    %p306 = pneg %p305
    // Predicated region
    $region37: #{_lambda_.4} parent=5 // pred_check
      _
    $region38: #{_lambda_.4} parent=5 // pred_check_branch
      %308 = sbr.rel (%p305) target = $region40
    $region39: #{_lambda_.4} parent=5 // pred_region
      %s309 = ssub.s32 %s13, 1
      %s310 = smul.u32 %s23, 4
      %s311 = ssub.s32 %s310, 1
      %p312 = scmp.gt.s32.totalorder %s311, 0
      %s313 = scalar_select %p312, %s311, 0
      %s314 = smul.u32 6, %s313
      %p315 = scmp.lt.s32.totalorder %s22, 1
      %s316 = scalar_select %p315, %s22, 1
      %p317 = scmp.lt.s32.totalorder %s314, 47
      %s318 = scalar_select %p317, %s314, 47
      %s319 = smul.addr %s316, 48
      %s320 = sadd.s32 %s318, %s319
      %s321 = smul.addr %s320, 8
      %s322 = scalar_lea.vmem %s0, %s321
      %p323 = pneg %p61
      %p324 = pneg %p58
      %s325 = smul.u32 24, %s23
      %p326 = scmp.lt.s32.totalorder %s22, 1
      %s327 = scalar_select %p326, %s22, 1
      %p328 = scmp.lt.s32.totalorder %s325, 47
      %s329 = scalar_select %p328, %s325, 47
      %s330 = smul.addr %s327, 48
      %s331 = sadd.s32 %s329, %s330
      %s332 = smul.addr %s331, 8
      %s333 = scalar_lea.vmem %s1, %s332
      %p334 = pneg %p89
      %p335 = pneg %p86
      %s336 = sadd.s32 %s23, 1
      %s337 = smul.u32 %s336, 4
      %p338 = scmp.lt.s32.totalorder %s337, 7
      %s339 = scalar_select %p338, %s337, 7
      %s340 = smul.u32 6, %s339
      %p341 = scmp.lt.s32.totalorder %s22, 1
      %s342 = scalar_select %p341, %s22, 1
      %p343 = scmp.lt.s32.totalorder %s340, 47
      %s344 = scalar_select %p343, %s340, 47
      %s345 = smul.addr %s342, 48
      %s346 = sadd.s32 %s344, %s345
      %s347 = smul.addr %s346, 8
      %s348 = scalar_lea.vmem %s2, %s347
      %p349 = pneg %p125
      %p350 = pneg %p122
      %p351 = pneg %p146
      %p352 = pneg %p143
      %p353 = pneg %p167
      %p354 = pneg %p164
      %p355 = pneg %p195
      %p356 = pneg %p192
      %s357 = smul.u32 24, %s23
      %p358 = scmp.lt.s32.totalorder %s22, 1
      %s359 = scalar_select %p358, %s22, 1
      %p360 = scmp.lt.s32.totalorder %s357, 47
      %s361 = scalar_select %p360, %s357, 47
      %s362 = smul.addr %s359, 48
      %s363 = sadd.s32 %s361, %s362
      %s364 = smul.addr %s363, 4
      %s365 = scalar_lea.vmem %s5, %s364
      %p366 = pneg %p223
      %p367 = pneg %p220
      %p368 = scmp.lt.s32.totalorder %s22, 1
      %s369 = scalar_select %p368, %s22, 1
      %p370 = scmp.lt.s32.totalorder %s23, 1
      %s371 = scalar_select %p370, %s23, 1
      %s372 = smul.addr %s369, 2
      %s373 = sadd.s32 %s371, %s372
      %s374 = smul.addr %s373, 2
      %s375 = scalar_lea.vmem %s6, %s374
      %s376 = smul.u32 %s23, 4
      %s377 = ssub.s32 %s376, 1
      %p378 = scmp.gt.s32.totalorder %s377, 0
      %s379 = scalar_select %p378, %s377, 0
      %s380 = smul.u32 6, %s379
      %p381 = scmp.lt.s32.totalorder %s22, 1
      %s382 = scalar_select %p381, %s22, 1
      %p383 = scmp.lt.s32.totalorder %s380, 47
      %s384 = scalar_select %p383, %s380, 47
      %s385 = smul.addr %s382, 48
      %s386 = sadd.s32 %s384, %s385
      %s387 = smul.addr %s386, 8
      %s388 = scalar_lea.vmem %s0, %s387
      %s389 = smul.u32 %s23, 4
      %s390 = ssub.s32 %s389, 1
      %p391 = scmp.gt.s32.totalorder %s390, 0
      %s392 = scalar_select %p391, %s390, 0
      %s393 = smul.u32 6, %s392
      %s394 = smul.u32 24, %s23
      %p395 = scmp.lt.s32.totalorder %s22, 1
      %s396 = scalar_select %p395, %s22, 1
      %p397 = scmp.lt.s32.totalorder %s394, 47
      %s398 = scalar_select %p397, %s394, 47
      %s399 = smul.addr %s396, 48
      %s400 = sadd.s32 %s398, %s399
      %s401 = smul.addr %s400, 8
      %s402 = scalar_lea.vmem %s1, %s401
      %s403 = smul.u32 24, %s23
      %s404 = sadd.s32 %s23, 1
      %s405 = smul.u32 %s404, 4
      %p406 = scmp.lt.s32.totalorder %s405, 7
      %s407 = scalar_select %p406, %s405, 7
      %s408 = smul.u32 6, %s407
      %p409 = scmp.lt.s32.totalorder %s22, 1
      %s410 = scalar_select %p409, %s22, 1
      %p411 = scmp.lt.s32.totalorder %s408, 47
      %s412 = scalar_select %p411, %s408, 47
      %s413 = smul.addr %s410, 48
      %s414 = sadd.s32 %s412, %s413
      %s415 = smul.addr %s414, 8
      %s416 = scalar_lea.vmem %s2, %s415
      %s417 = sadd.s32 %s23, 1
      %s418 = smul.u32 %s417, 4
      %p419 = scmp.lt.s32.totalorder %s418, 7
      %s420 = scalar_select %p419, %s418, 7
      %s421 = smul.u32 6, %s420
      %s422 = smul.u32 24, %s23
      %p423 = scmp.lt.s32.totalorder %s22, 1
      %s424 = scalar_select %p423, %s22, 1
      %p425 = scmp.lt.s32.totalorder %s422, 47
      %s426 = scalar_select %p425, %s422, 47
      %s427 = smul.addr %s424, 48
      %s428 = sadd.s32 %s426, %s427
      %s429 = smul.addr %s428, 4
      %s430 = scalar_lea.vmem %s5, %s429
      %s431 = smul.u32 24, %s23
      %p432 = scmp.lt.s32.totalorder %s22, 1
      %s433 = scalar_select %p432, %s22, 1
      %p434 = scmp.lt.s32.totalorder %s23, 1
      %s435 = scalar_select %p434, %s23, 1
      %s436 = smul.addr %s433, 2
      %s437 = sadd.s32 %s435, %s436
      %s438 = smul.addr %s437, 2
      %s439 = scalar_lea.vmem %s6, %s438
      %v441 = vlaneseq
      %v442 = vshrl.u32 %v441, 7
      %v443 = vadd.s32 %v442, 8
      %v444 = vadd.s32 %v442, 16
      %vm445 = vcmp.lt.s32.totalorder %v442, 16
      %vm446 = vcmp.lt.s32.totalorder %v443, 16
      %vm447 = vcmp.lt.s32.totalorder %v444, 16
      %v448 = vadd.s32 %v442, 24
      %v449 = vadd.s32 %v442, 32
      %v450 = vadd.s32 %v442, 40
      %vm451 = vcmp.ge.s32.totalorder %v444, 24
      %vm452 = vcmp.ge.s32.totalorder %v448, 24
      %vm453 = vcmp.ge.s32.totalorder %v449, 24
      %vm454 = vcmp.ge.s32.totalorder %v450, 24
      %vm455 = vcmp.lt.s32.totalorder %v444, 40
      %vm456 = vcmp.lt.s32.totalorder %v448, 40
      %vm457 = vcmp.lt.s32.totalorder %v449, 40
      %vm458 = vcmp.lt.s32.totalorder %v450, 40
      %vm459 = vmand %vm451, %vm455
      %vm460 = vmand %vm452, %vm456
      %vm461 = vmand %vm453, %vm457
      %vm462 = vmand %vm454, %vm458
      %p463 = scmp.ge.s32.totalorder %s23, 1
      %s464 = scalar_select %p463, 1, 0
      %v465 = vstv %s464
      %vm466 = vcmp.eq.s32.totalorder %v465, 1
      %vm467 = vmand %vm459, %vm466
      %vm468 = vmand %vm460, %vm466
      %vm469 = vmand %vm461, %vm466
      %vm470 = vmand %vm462, %vm466
      %vm471 = vcmp.lt.s32.totalorder %v448, 16
      %p472 = scmp.lt.s32.totalorder %s23, 1
      %s473 = scalar_select %p472, 1, 0
      %v474 = vstv %s473
      %vm475 = vcmp.eq.s32.totalorder %v474, 1
      %vm476 = vmand %vm445, %vm475
      %vm477 = vmand %vm446, %vm475
      %vm478 = vmand %vm447, %vm475
      %vm479 = vmand %vm471, %vm475
      %v480 = vld [vmem:[%s388 + $0x10] sm:$0xff]
      %v481 = vld [vmem:[%s388 + $0x18] sm:$0xff]
      %v482 = vld [vmem:[%s388 + $0x20] sm:$0xff]
      %v483 = vld [vmem:[%s388 + $0x28] sm:$0xff]
      %v484 = vld [vmem:[%s416] sm:$0xff]
      %v485 = vld [vmem:[%s416 + $0x8] sm:$0xff]
      %v486 = vld [vmem:[%s416 + $0x10] sm:$0xff]
      %v487 = vld [vmem:[%s416 + $0x18] sm:$0xff]
      %v488 = vsel %vm467, 1, 0
      %v489 = vsel %vm468, 1, 0
      %v490 = vsel %vm469, 1, 0
      %v491 = vsel %vm470, 1, 0
      %vm492 = vcmp.eq.s32.totalorder %v488, 1
      %vm493 = vcmp.eq.s32.totalorder %v489, 1
      %vm494 = vcmp.eq.s32.totalorder %v490, 1
      %vm495 = vcmp.eq.s32.totalorder %v491, 1
      %v496 = vsel %vm492, %v480, 0.0
      %v497 = vsel %vm493, %v481, 0.0
      %v498 = vsel %vm494, %v482, 0.0
      %v499 = vsel %vm495, %v483, 0.0
      %v500 = vsel %vm476, 1, 0
      %v501 = vsel %vm477, 1, 0
      %v502 = vsel %vm478, 1, 0
      %v503 = vsel %vm479, 1, 0
      %vm504 = vcmp.eq.s32.totalorder %v500, 1
      %vm505 = vcmp.eq.s32.totalorder %v501, 1
      %vm506 = vcmp.eq.s32.totalorder %v502, 1
      %vm507 = vcmp.eq.s32.totalorder %v503, 1
      %v508 = vsel %vm504, %v484, 0.0
      %v509 = vsel %vm505, %v485, 0.0
      %v510 = vsel %vm506, %v486, 0.0
      %v511 = vsel %vm507, %v487, 0.0
      %v512 = vld [vmem:[%s402] sm:$0xff]
      %v513 = vld [vmem:[%s402 + $0x8] sm:$0xff]
      %v514 = vld [vmem:[%s402 + $0x10] sm:$0xff]
      %v515 = vld [vmem:[%s402 + $0x18] sm:$0xff]
      %v516 = vld [vmem:[%s402 + $0x20] sm:$0xff]
      %v517 = vld [vmem:[%s402 + $0x28] sm:$0xff]
      %v518 = vld [vmem:[%s402 + $0x30] sm:$0xff]
      %v519 = vld [vmem:[%s402 + $0x38] sm:$0xff]
      %v520 = vld [vmem:[%s402 + $0x40] sm:$0xff]
      %v521 = vld [vmem:[%s402 + $0x48] sm:$0xff]
      %v522 = vld [vmem:[%s402 + $0x50] sm:$0xff]
      %v523 = vld [vmem:[%s402 + $0x58] sm:$0xff]
      %v524 = vld [vmem:[%s402 + $0x60] sm:$0xff]
      %v525 = vld [vmem:[%s402 + $0x68] sm:$0xff]
      %v526 = vld [vmem:[%s402 + $0x70] sm:$0xff]
      %v527 = vld [vmem:[%s402 + $0x78] sm:$0xff]
      %v528 = vld [vmem:[%s402 + $0x80] sm:$0xff]
      %v529 = vld [vmem:[%s402 + $0x88] sm:$0xff]
      %v530 = vld [vmem:[%s402 + $0x90] sm:$0xff]
      %v531 = vld [vmem:[%s402 + $0x98] sm:$0xff]
      %v532 = vld [vmem:[%s402 + $0xa0] sm:$0xff]
      %v533 = vld [vmem:[%s402 + $0xa8] sm:$0xff]
      %v534 = vld [vmem:[%s402 + $0xb0] sm:$0xff]
      %v535 = vld [vmem:[%s402 + $0xb8] sm:$0xff]
      %v536 = vpack.c.bf16 %v512, %v512
      %v537 = vpack.c.bf16 %v513, %v513
      %v538 = vpack.c.bf16 %v514, %v514
      %v539 = vpack.c.bf16 %v515, %v515
      %v540 = vpack.c.bf16 %v516, %v516
      %v541 = vpack.c.bf16 %v517, %v517
      %v542 = vpack.c.bf16 %v518, %v518
      %v543 = vpack.c.bf16 %v519, %v519
      %v544 = vpack.c.bf16 %v520, %v520
      %v545 = vpack.c.bf16 %v521, %v521
      %v546 = vpack.c.bf16 %v522, %v522
      %v547 = vpack.c.bf16 %v523, %v523
      %v548 = vpack.c.bf16 %v524, %v524
      %v549 = vpack.c.bf16 %v525, %v525
      %v550 = vpack.c.bf16 %v526, %v526
      %v551 = vpack.c.bf16 %v527, %v527
      %v552 = vpack.c.bf16 %v528, %v528
      %v553 = vpack.c.bf16 %v529, %v529
      %v554 = vpack.c.bf16 %v530, %v530
      %v555 = vpack.c.bf16 %v531, %v531
      %v556 = vpack.c.bf16 %v532, %v532
      %v557 = vpack.c.bf16 %v533, %v533
      %v558 = vpack.c.bf16 %v534, %v534
      %v559 = vpack.c.bf16 %v535, %v535
      %v560 = vpack.c.bf16 %v496, %v496
      %v561 = vpack.c.bf16 %v497, %v497
      %v562 = vpack.c.bf16 %v498, %v498
      %v563 = vpack.c.bf16 %v499, %v499
      %v564 = vpack.c.bf16 %v508, %v508
      %v565 = vpack.c.bf16 %v509, %v509
      %v566 = vpack.c.bf16 %v510, %v510
      %v567 = vpack.c.bf16 %v511, %v511
      %v572 = vunpack.c.l.b16 %v560
      %v573 = vunpack.c.l.b16 %v561
      %v574 = vunpack.c.l.b16 %v562
      %v575 = vunpack.c.l.b16 %v563
      %v576 = vpack.c.b16 %v573, %v572
      %v577 = vpack.c.b16 %v575, %v574
      %v602 = vunpack.c.l.b16 %v536
      %v603 = vunpack.c.l.b16 %v537
      %v604 = vunpack.c.l.b16 %v538
      %v605 = vunpack.c.l.b16 %v539
      %v606 = vunpack.c.l.b16 %v540
      %v607 = vunpack.c.l.b16 %v541
      %v608 = vunpack.c.l.b16 %v542
      %v609 = vunpack.c.l.b16 %v543
      %v610 = vunpack.c.l.b16 %v544
      %v611 = vunpack.c.l.b16 %v545
      %v612 = vunpack.c.l.b16 %v546
      %v613 = vunpack.c.l.b16 %v547
      %v614 = vunpack.c.l.b16 %v548
      %v615 = vunpack.c.l.b16 %v549
      %v616 = vunpack.c.l.b16 %v550
      %v617 = vunpack.c.l.b16 %v551
      %v618 = vunpack.c.l.b16 %v552
      %v619 = vunpack.c.l.b16 %v553
      %v620 = vunpack.c.l.b16 %v554
      %v621 = vunpack.c.l.b16 %v555
      %v622 = vunpack.c.l.b16 %v556
      %v623 = vunpack.c.l.b16 %v557
      %v624 = vunpack.c.l.b16 %v558
      %v625 = vunpack.c.l.b16 %v559
      %v626 = vpack.c.b16 %v603, %v602
      %v627 = vpack.c.b16 %v605, %v604
      %v628 = vpack.c.b16 %v607, %v606
      %v629 = vpack.c.b16 %v609, %v608
      %v630 = vpack.c.b16 %v611, %v610
      %v631 = vpack.c.b16 %v613, %v612
      %v632 = vpack.c.b16 %v615, %v614
      %v633 = vpack.c.b16 %v617, %v616
      %v634 = vpack.c.b16 %v619, %v618
      %v635 = vpack.c.b16 %v621, %v620
      %v636 = vpack.c.b16 %v623, %v622
      %v637 = vpack.c.b16 %v625, %v624
      %v642 = vunpack.c.l.b16 %v564
      %v643 = vunpack.c.l.b16 %v565
      %v644 = vunpack.c.l.b16 %v566
      %v645 = vunpack.c.l.b16 %v567
      %v646 = vpack.c.b16 %v643, %v642
      %v647 = vpack.c.b16 %v645, %v644
      %v648 = vld [vmem:[%s3] sm:$0xf]
      %v649 = vld [vmem:[%s3 + $0x4] sm:$0xf]
      %v650 = vld [vmem:[%s3 + $0x8] sm:$0xf]
      %v651 = vld [vmem:[%s3 + $0xc] sm:$0xf]
      %v652 = vld [vmem:[%s3 + $0x10] sm:$0xf]
      %v653 = vld [vmem:[%s3 + $0x14] sm:$0xf]
      %v654 = vld [vmem:[%s3 + $0x18] sm:$0xf]
      %v655 = vld [vmem:[%s3 + $0x1c] sm:$0xf]
      %v656 = vld [vmem:[%s3 + $0x20] sm:$0xf]
      %vm657 = vcmask 1043456
      %v658 = vrot.slane %v576, 4
      %v659 = vrot.slane %v577, 4
      %v660 = vsel %vm657, %v658, %v659
      %v661 = vrot.slane %v626, 4
      %v662 = vsel %vm657, %v659, %v661
      %v663 = vrot.slane %v627, 4
      %v664 = vsel %vm657, %v661, %v663
      %v665 = vrot.slane %v628, 4
      %v666 = vsel %vm657, %v663, %v665
      %v667 = vrot.slane %v629, 4
      %v668 = vsel %vm657, %v665, %v667
      %v669 = vrot.slane %v630, 4
      %v670 = vsel %vm657, %v667, %v669
      %v671 = vrot.slane %v631, 4
      %v672 = vsel %vm657, %v669, %v671
      %v673 = vrot.slane %v632, 4
      %v674 = vsel %vm657, %v671, %v673
      %v675 = vrot.slane %v633, 4
      %v676 = vsel %vm657, %v673, %v675
      %v677 = vrot.slane %v634, 4
      %v678 = vsel %vm657, %v675, %v677
      %v679 = vrot.slane %v635, 4
      %v680 = vsel %vm657, %v677, %v679
      %v681 = vrot.slane %v636, 4
      %v682 = vsel %vm657, %v679, %v681
      %vm683 = vcmask 64512
      %v685 = vsel %vm683, %v660, 0
      %v688 = vsel %vm683, %v662, 0
      %v691 = vsel %vm683, %v664, 0
      %v694 = vsel %vm683, %v666, 0
      %v697 = vsel %vm683, %v668, 0
      %v700 = vsel %vm683, %v670, 0
      %v703 = vsel %vm683, %v672, 0
      %v706 = vsel %vm683, %v674, 0
      %v709 = vsel %vm683, %v676, 0
      %v712 = vsel %vm683, %v678, 0
      %v715 = vsel %vm683, %v680, 0
      %v718 = vsel %vm683, %v682, 0
      %vm720 = vcmask 1043456
      %v722 = vsel %vm720, %v649, 0
      %724 = vmatpush.bf16.msra.mxu0 0
      %725 = vmatpush.bf16.msra.mxu0 0
      %726 = vmatpush.bf16.msra.mxu0 0
      %727 = vmatpush.bf16.msra.mxu0 0
      %728 = vmatpush.bf16.msra.mxu0 0
      %729 = vmatpush.bf16.msra.mxu0 0
      %730 = vmatpush.bf16.msra.mxu0 0
      %731 = vmatpush.bf16.msra.mxu0 %v722
      %732 = vmatmul.bf16.gmra.mxu0 %v685
      %v733 = vpop.f32.mrf.mxu0
      %v734 = vadd.f32 0.0, %v733
      %v735 = vpop.f32.mrf.mxu0
      %v736 = vadd.f32 0.0, %v735
      %737 = vmatmul.bf16.gmra.mxu0 %v688
      %v738 = vpop.f32.mrf.mxu0
      %v739 = vadd.f32 0.0, %v738
      %v740 = vpop.f32.mrf.mxu0
      %v741 = vadd.f32 0.0, %v740
      %742 = vmatmul.bf16.gmra.mxu0 %v691
      %v743 = vpop.f32.mrf.mxu0
      %v744 = vadd.f32 0.0, %v743
      %v745 = vpop.f32.mrf.mxu0
      %v746 = vadd.f32 0.0, %v745
      %747 = vmatmul.bf16.gmra.mxu0 %v694
      %v748 = vpop.f32.mrf.mxu0
      %v749 = vadd.f32 0.0, %v748
      %v750 = vpop.f32.mrf.mxu0
      %v751 = vadd.f32 0.0, %v750
      %752 = vmatmul.bf16.gmra.mxu0 %v697
      %v753 = vpop.f32.mrf.mxu0
      %v754 = vadd.f32 0.0, %v753
      %v755 = vpop.f32.mrf.mxu0
      %v756 = vadd.f32 0.0, %v755
      %757 = vmatmul.bf16.gmra.mxu0 %v700
      %v758 = vpop.f32.mrf.mxu0
      %v759 = vadd.f32 0.0, %v758
      %v760 = vpop.f32.mrf.mxu0
      %v761 = vadd.f32 0.0, %v760
      %762 = vmatmul.bf16.gmra.mxu0 %v703
      %v763 = vpop.f32.mrf.mxu0
      %v764 = vadd.f32 0.0, %v763
      %v765 = vpop.f32.mrf.mxu0
      %v766 = vadd.f32 0.0, %v765
      %767 = vmatmul.bf16.gmra.mxu0 %v706
      %v768 = vpop.f32.mrf.mxu0
      %v769 = vadd.f32 0.0, %v768
      %v770 = vpop.f32.mrf.mxu0
      %v771 = vadd.f32 0.0, %v770
      %772 = vmatmul.bf16.gmra.mxu0 %v709
      %v773 = vpop.f32.mrf.mxu0
      %v774 = vadd.f32 0.0, %v773
      %v775 = vpop.f32.mrf.mxu0
      %v776 = vadd.f32 0.0, %v775
      %777 = vmatmul.bf16.gmra.mxu0 %v712
      %v778 = vpop.f32.mrf.mxu0
      %v779 = vadd.f32 0.0, %v778
      %v780 = vpop.f32.mrf.mxu0
      %v781 = vadd.f32 0.0, %v780
      %782 = vmatmul.bf16.gmra.mxu0 %v715
      %v783 = vpop.f32.mrf.mxu0
      %v784 = vadd.f32 0.0, %v783
      %v785 = vpop.f32.mrf.mxu0
      %v786 = vadd.f32 0.0, %v785
      %787 = vmatmul.bf16.gmra.mxu0 %v718
      %v788 = vpop.f32.mrf.mxu0
      %v789 = vadd.f32 0.0, %v788
      %v790 = vpop.f32.mrf.mxu0
      %v791 = vadd.f32 0.0, %v790
      %792 = vdwg.mxu0
      %vm793 = vsmask.f32 4352
      %v795 = vshrl.u32 %v576, 16
      %v797 = vrot.slane %v795, 3
      %v798 = vshll.u32 %v576, 16
      %v800 = vrot.slane %v798, 4
      %v801 = vor.u32 %v797, %v800
      %v803 = vshrl.u32 %v577, 16
      %v805 = vrot.slane %v803, 3
      %v806 = vshll.u32 %v577, 16
      %v808 = vrot.slane %v806, 4
      %v809 = vor.u32 %v805, %v808
      %v810 = vsel %vm793, %v801, %v809
      %v812 = vshrl.u32 %v626, 16
      %v814 = vrot.slane %v812, 3
      %v815 = vshll.u32 %v626, 16
      %v817 = vrot.slane %v815, 4
      %v818 = vor.u32 %v814, %v817
      %v819 = vsel %vm793, %v809, %v818
      %v821 = vshrl.u32 %v627, 16
      %v823 = vrot.slane %v821, 3
      %v824 = vshll.u32 %v627, 16
      %v826 = vrot.slane %v824, 4
      %v827 = vor.u32 %v823, %v826
      %v828 = vsel %vm793, %v818, %v827
      %v830 = vshrl.u32 %v628, 16
      %v832 = vrot.slane %v830, 3
      %v833 = vshll.u32 %v628, 16
      %v835 = vrot.slane %v833, 4
      %v836 = vor.u32 %v832, %v835
      %v837 = vsel %vm793, %v827, %v836
      %v839 = vshrl.u32 %v629, 16
      %v841 = vrot.slane %v839, 3
      %v842 = vshll.u32 %v629, 16
      %v844 = vrot.slane %v842, 4
      %v845 = vor.u32 %v841, %v844
      %v846 = vsel %vm793, %v836, %v845
      %v848 = vshrl.u32 %v630, 16
      %v850 = vrot.slane %v848, 3
      %v851 = vshll.u32 %v630, 16
      %v853 = vrot.slane %v851, 4
      %v854 = vor.u32 %v850, %v853
      %v855 = vsel %vm793, %v845, %v854
      %v857 = vshrl.u32 %v631, 16
      %v859 = vrot.slane %v857, 3
      %v860 = vshll.u32 %v631, 16
      %v862 = vrot.slane %v860, 4
      %v863 = vor.u32 %v859, %v862
      %v864 = vsel %vm793, %v854, %v863
      %v866 = vshrl.u32 %v632, 16
      %v868 = vrot.slane %v866, 3
      %v869 = vshll.u32 %v632, 16
      %v871 = vrot.slane %v869, 4
      %v872 = vor.u32 %v868, %v871
      %v873 = vsel %vm793, %v863, %v872
      %v875 = vshrl.u32 %v633, 16
      %v877 = vrot.slane %v875, 3
      %v878 = vshll.u32 %v633, 16
      %v880 = vrot.slane %v878, 4
      %v881 = vor.u32 %v877, %v880
      %v882 = vsel %vm793, %v872, %v881
      %v884 = vshrl.u32 %v634, 16
      %v886 = vrot.slane %v884, 3
      %v887 = vshll.u32 %v634, 16
      %v889 = vrot.slane %v887, 4
      %v890 = vor.u32 %v886, %v889
      %v891 = vsel %vm793, %v881, %v890
      %v893 = vshrl.u32 %v635, 16
      %v895 = vrot.slane %v893, 3
      %v896 = vshll.u32 %v635, 16
      %v898 = vrot.slane %v896, 4
      %v899 = vor.u32 %v895, %v898
      %v900 = vsel %vm793, %v890, %v899
      %v902 = vshrl.u32 %v636, 16
      %v904 = vrot.slane %v902, 3
      %v905 = vshll.u32 %v636, 16
      %v907 = vrot.slane %v905, 4
      %v908 = vor.u32 %v904, %v907
      %v909 = vsel %vm793, %v899, %v908
      %v911 = vsel %vm683, %v810, 0
      %v914 = vsel %vm683, %v819, 0
      %v917 = vsel %vm683, %v828, 0
      %v920 = vsel %vm683, %v837, 0
      %v923 = vsel %vm683, %v846, 0
      %v926 = vsel %vm683, %v855, 0
      %v929 = vsel %vm683, %v864, 0
      %v932 = vsel %vm683, %v873, 0
      %v935 = vsel %vm683, %v882, 0
      %v938 = vsel %vm683, %v891, 0
      %v941 = vsel %vm683, %v900, 0
      %v944 = vsel %vm683, %v909, 0
      %v947 = vsel %vm720, %v648, 0
      %949 = vmatpush.bf16.msra.mxu0 0
      %950 = vmatpush.bf16.msra.mxu0 0
      %951 = vmatpush.bf16.msra.mxu0 0
      %952 = vmatpush.bf16.msra.mxu0 0
      %953 = vmatpush.bf16.msra.mxu0 0
      %954 = vmatpush.bf16.msra.mxu0 0
      %955 = vmatpush.bf16.msra.mxu0 0
      %956 = vmatpush.bf16.msra.mxu0 %v947
      %957 = vmatmul.bf16.gmra.mxu0 %v911
      %v958 = vpop.f32.mrf.mxu0
      %v959 = vadd.f32 %v734, %v958
      %v960 = vpop.f32.mrf.mxu0
      %v961 = vadd.f32 %v736, %v960
      %962 = vmatmul.bf16.gmra.mxu0 %v914
      %v963 = vpop.f32.mrf.mxu0
      %v964 = vadd.f32 %v739, %v963
      %v965 = vpop.f32.mrf.mxu0
      %v966 = vadd.f32 %v741, %v965
      %967 = vmatmul.bf16.gmra.mxu0 %v917
      %v968 = vpop.f32.mrf.mxu0
      %v969 = vadd.f32 %v744, %v968
      %v970 = vpop.f32.mrf.mxu0
      %v971 = vadd.f32 %v746, %v970
      %972 = vmatmul.bf16.gmra.mxu0 %v920
      %v973 = vpop.f32.mrf.mxu0
      %v974 = vadd.f32 %v749, %v973
      %v975 = vpop.f32.mrf.mxu0
      %v976 = vadd.f32 %v751, %v975
      %977 = vmatmul.bf16.gmra.mxu0 %v923
      %v978 = vpop.f32.mrf.mxu0
      %v979 = vadd.f32 %v754, %v978
      %v980 = vpop.f32.mrf.mxu0
      %v981 = vadd.f32 %v756, %v980
      %982 = vmatmul.bf16.gmra.mxu0 %v926
      %v983 = vpop.f32.mrf.mxu0
      %v984 = vadd.f32 %v759, %v983
      %v985 = vpop.f32.mrf.mxu0
      %v986 = vadd.f32 %v761, %v985
      %987 = vmatmul.bf16.gmra.mxu0 %v929
      %v988 = vpop.f32.mrf.mxu0
      %v989 = vadd.f32 %v764, %v988
      %v990 = vpop.f32.mrf.mxu0
      %v991 = vadd.f32 %v766, %v990
      %992 = vmatmul.bf16.gmra.mxu0 %v932
      %v993 = vpop.f32.mrf.mxu0
      %v994 = vadd.f32 %v769, %v993
      %v995 = vpop.f32.mrf.mxu0
      %v996 = vadd.f32 %v771, %v995
      %997 = vmatmul.bf16.gmra.mxu0 %v935
      %v998 = vpop.f32.mrf.mxu0
      %v999 = vadd.f32 %v774, %v998
      %v1000 = vpop.f32.mrf.mxu0
      %v1001 = vadd.f32 %v776, %v1000
      %1002 = vmatmul.bf16.gmra.mxu0 %v938
      %v1003 = vpop.f32.mrf.mxu0
      %v1004 = vadd.f32 %v779, %v1003
      %v1005 = vpop.f32.mrf.mxu0
      %v1006 = vadd.f32 %v781, %v1005
      %1007 = vmatmul.bf16.gmra.mxu0 %v941
      %v1008 = vpop.f32.mrf.mxu0
      %v1009 = vadd.f32 %v784, %v1008
      %v1010 = vpop.f32.mrf.mxu0
      %v1011 = vadd.f32 %v786, %v1010
      %1012 = vmatmul.bf16.gmra.mxu0 %v944
      %v1013 = vpop.f32.mrf.mxu0
      %v1014 = vadd.f32 %v789, %v1013
      %v1015 = vpop.f32.mrf.mxu0
      %v1016 = vadd.f32 %v791, %v1015
      %1017 = vdwg.mxu0
      %vm1018 = vsmask.f32 3328
      %v1019 = vrot.slane %v795, 4
      %v1020 = vrot.slane %v798, 5
      %v1021 = vor.u32 %v1019, %v1020
      %v1022 = vrot.slane %v803, 4
      %v1023 = vrot.slane %v806, 5
      %v1024 = vor.u32 %v1022, %v1023
      %v1025 = vsel %vm1018, %v1021, %v1024
      %v1026 = vrot.slane %v812, 4
      %v1027 = vrot.slane %v815, 5
      %v1028 = vor.u32 %v1026, %v1027
      %v1029 = vsel %vm1018, %v1024, %v1028
      %v1030 = vrot.slane %v821, 4
      %v1031 = vrot.slane %v824, 5
      %v1032 = vor.u32 %v1030, %v1031
      %v1033 = vsel %vm1018, %v1028, %v1032
      %v1034 = vrot.slane %v830, 4
      %v1035 = vrot.slane %v833, 5
      %v1036 = vor.u32 %v1034, %v1035
      %v1037 = vsel %vm1018, %v1032, %v1036
      %v1038 = vrot.slane %v839, 4
      %v1039 = vrot.slane %v842, 5
      %v1040 = vor.u32 %v1038, %v1039
      %v1041 = vsel %vm1018, %v1036, %v1040
      %v1042 = vrot.slane %v848, 4
      %v1043 = vrot.slane %v851, 5
      %v1044 = vor.u32 %v1042, %v1043
      %v1045 = vsel %vm1018, %v1040, %v1044
      %v1046 = vrot.slane %v857, 4
      %v1047 = vrot.slane %v860, 5
      %v1048 = vor.u32 %v1046, %v1047
      %v1049 = vsel %vm1018, %v1044, %v1048
      %v1050 = vrot.slane %v866, 4
      %v1051 = vrot.slane %v869, 5
      %v1052 = vor.u32 %v1050, %v1051
      %v1053 = vsel %vm1018, %v1048, %v1052
      %v1054 = vrot.slane %v875, 4
      %v1055 = vrot.slane %v878, 5
      %v1056 = vor.u32 %v1054, %v1055
      %v1057 = vsel %vm1018, %v1052, %v1056
      %v1058 = vrot.slane %v884, 4
      %v1059 = vrot.slane %v887, 5
      %v1060 = vor.u32 %v1058, %v1059
      %v1061 = vsel %vm1018, %v1056, %v1060
      %v1062 = vrot.slane %v893, 4
      %v1063 = vrot.slane %v896, 5
      %v1064 = vor.u32 %v1062, %v1063
      %v1065 = vsel %vm1018, %v1060, %v1064
      %v1066 = vrot.slane %v902, 4
      %v1067 = vrot.slane %v905, 5
      %v1068 = vor.u32 %v1066, %v1067
      %v1069 = vsel %vm1018, %v1064, %v1068
      %v1071 = vsel %vm683, %v1025, 0
      %v1074 = vsel %vm683, %v1029, 0
      %v1077 = vsel %vm683, %v1033, 0
      %v1080 = vsel %vm683, %v1037, 0
      %v1083 = vsel %vm683, %v1041, 0
      %v1086 = vsel %vm683, %v1045, 0
      %v1089 = vsel %vm683, %v1049, 0
      %v1092 = vsel %vm683, %v1053, 0
      %v1095 = vsel %vm683, %v1057, 0
      %v1098 = vsel %vm683, %v1061, 0
      %v1101 = vsel %vm683, %v1065, 0
      %v1104 = vsel %vm683, %v1069, 0
      %v1107 = vsel %vm720, %v650, 0
      %1109 = vmatpush.bf16.msra.mxu0 0
      %1110 = vmatpush.bf16.msra.mxu0 0
      %1111 = vmatpush.bf16.msra.mxu0 0
      %1112 = vmatpush.bf16.msra.mxu0 0
      %1113 = vmatpush.bf16.msra.mxu0 0
      %1114 = vmatpush.bf16.msra.mxu0 0
      %1115 = vmatpush.bf16.msra.mxu0 0
      %1116 = vmatpush.bf16.msra.mxu0 %v1107
      %1117 = vmatmul.bf16.gmra.mxu0 %v1071
      %v1118 = vpop.f32.mrf.mxu0
      %v1119 = vadd.f32 0.0, %v1118
      %v1120 = vpop.f32.mrf.mxu0
      %v1121 = vadd.f32 0.0, %v1120
      %1122 = vmatmul.bf16.gmra.mxu0 %v1074
      %v1123 = vpop.f32.mrf.mxu0
      %v1124 = vadd.f32 0.0, %v1123
      %v1125 = vpop.f32.mrf.mxu0
      %v1126 = vadd.f32 0.0, %v1125
      %1127 = vmatmul.bf16.gmra.mxu0 %v1077
      %v1128 = vpop.f32.mrf.mxu0
      %v1129 = vadd.f32 0.0, %v1128
      %v1130 = vpop.f32.mrf.mxu0
      %v1131 = vadd.f32 0.0, %v1130
      %1132 = vmatmul.bf16.gmra.mxu0 %v1080
      %v1133 = vpop.f32.mrf.mxu0
      %v1134 = vadd.f32 0.0, %v1133
      %v1135 = vpop.f32.mrf.mxu0
      %v1136 = vadd.f32 0.0, %v1135
      %1137 = vmatmul.bf16.gmra.mxu0 %v1083
      %v1138 = vpop.f32.mrf.mxu0
      %v1139 = vadd.f32 0.0, %v1138
      %v1140 = vpop.f32.mrf.mxu0
      %v1141 = vadd.f32 0.0, %v1140
      %1142 = vmatmul.bf16.gmra.mxu0 %v1086
      %v1143 = vpop.f32.mrf.mxu0
      %v1144 = vadd.f32 0.0, %v1143
      %v1145 = vpop.f32.mrf.mxu0
      %v1146 = vadd.f32 0.0, %v1145
      %1147 = vmatmul.bf16.gmra.mxu0 %v1089
      %v1148 = vpop.f32.mrf.mxu0
      %v1149 = vadd.f32 0.0, %v1148
      %v1150 = vpop.f32.mrf.mxu0
      %v1151 = vadd.f32 0.0, %v1150
      %1152 = vmatmul.bf16.gmra.mxu0 %v1092
      %v1153 = vpop.f32.mrf.mxu0
      %v1154 = vadd.f32 0.0, %v1153
      %v1155 = vpop.f32.mrf.mxu0
      %v1156 = vadd.f32 0.0, %v1155
      %1157 = vmatmul.bf16.gmra.mxu0 %v1095
      %v1158 = vpop.f32.mrf.mxu0
      %v1159 = vadd.f32 0.0, %v1158
      %v1160 = vpop.f32.mrf.mxu0
      %v1161 = vadd.f32 0.0, %v1160
      %1162 = vmatmul.bf16.gmra.mxu0 %v1098
      %v1163 = vpop.f32.mrf.mxu0
      %v1164 = vadd.f32 0.0, %v1163
      %v1165 = vpop.f32.mrf.mxu0
      %v1166 = vadd.f32 0.0, %v1165
      %1167 = vmatmul.bf16.gmra.mxu0 %v1101
      %v1168 = vpop.f32.mrf.mxu0
      %v1169 = vadd.f32 0.0, %v1168
      %v1170 = vpop.f32.mrf.mxu0
      %v1171 = vadd.f32 0.0, %v1170
      %1172 = vmatmul.bf16.gmra.mxu0 %v1104
      %v1173 = vpop.f32.mrf.mxu0
      %v1174 = vadd.f32 0.0, %v1173
      %v1175 = vpop.f32.mrf.mxu0
      %v1176 = vadd.f32 0.0, %v1175
      %1177 = vdwg.mxu0
      %v1178 = vadd.f32 %v959, %v1119
      %v1179 = vadd.f32 %v961, %v1121
      %v1180 = vadd.f32 %v964, %v1124
      %v1181 = vadd.f32 %v966, %v1126
      %v1182 = vadd.f32 %v969, %v1129
      %v1183 = vadd.f32 %v971, %v1131
      %v1184 = vadd.f32 %v974, %v1134
      %v1185 = vadd.f32 %v976, %v1136
      %v1186 = vadd.f32 %v979, %v1139
      %v1187 = vadd.f32 %v981, %v1141
      %v1188 = vadd.f32 %v984, %v1144
      %v1189 = vadd.f32 %v986, %v1146
      %v1190 = vadd.f32 %v989, %v1149
      %v1191 = vadd.f32 %v991, %v1151
      %v1192 = vadd.f32 %v994, %v1154
      %v1193 = vadd.f32 %v996, %v1156
      %v1194 = vadd.f32 %v999, %v1159
      %v1195 = vadd.f32 %v1001, %v1161
      %v1196 = vadd.f32 %v1004, %v1164
      %v1197 = vadd.f32 %v1006, %v1166
      %v1198 = vadd.f32 %v1009, %v1169
      %v1199 = vadd.f32 %v1011, %v1171
      %v1200 = vadd.f32 %v1014, %v1174
      %v1201 = vadd.f32 %v1016, %v1176
      %vm1202 = vsmask.f32 256
      %v1203 = vrot.slane %v803, 7
      %v1204 = vrot.slane %v812, 7
      %v1205 = vor.u32 %v1204, %v815
      %v1206 = vsel %vm1202, %v1203, %v1205
      %v1207 = vrot.slane %v821, 7
      %v1208 = vor.u32 %v1207, %v824
      %v1209 = vsel %vm1202, %v1204, %v1208
      %v1210 = vrot.slane %v830, 7
      %v1211 = vor.u32 %v1210, %v833
      %v1212 = vsel %vm1202, %v1207, %v1211
      %v1213 = vrot.slane %v839, 7
      %v1214 = vor.u32 %v1213, %v842
      %v1215 = vsel %vm1202, %v1210, %v1214
      %v1216 = vrot.slane %v848, 7
      %v1217 = vor.u32 %v1216, %v851
      %v1218 = vsel %vm1202, %v1213, %v1217
      %v1219 = vrot.slane %v857, 7
      %v1220 = vor.u32 %v1219, %v860
      %v1221 = vsel %vm1202, %v1216, %v1220
      %v1222 = vrot.slane %v866, 7
      %v1223 = vor.u32 %v1222, %v869
      %v1224 = vsel %vm1202, %v1219, %v1223
      %v1225 = vrot.slane %v875, 7
      %v1226 = vor.u32 %v1225, %v878
      %v1227 = vsel %vm1202, %v1222, %v1226
      %v1228 = vrot.slane %v884, 7
      %v1229 = vor.u32 %v1228, %v887
      %v1230 = vsel %vm1202, %v1225, %v1229
      %v1231 = vrot.slane %v893, 7
      %v1232 = vor.u32 %v1231, %v896
      %v1233 = vsel %vm1202, %v1228, %v1232
      %v1234 = vrot.slane %v902, 7
      %v1235 = vor.u32 %v1234, %v905
      %v1236 = vsel %vm1202, %v1231, %v1235
      %v1238 = vshrl.u32 %v637, 16
      %v1240 = vrot.slane %v1238, 7
      %v1241 = vshll.u32 %v637, 16
      %v1243 = vor.u32 %v1240, %v1241
      %v1244 = vsel %vm1202, %v1234, %v1243
      %v1246 = vsel %vm683, %v1206, 0
      %v1249 = vsel %vm683, %v1209, 0
      %v1252 = vsel %vm683, %v1212, 0
      %v1255 = vsel %vm683, %v1215, 0
      %v1258 = vsel %vm683, %v1218, 0
      %v1261 = vsel %vm683, %v1221, 0
      %v1264 = vsel %vm683, %v1224, 0
      %v1267 = vsel %vm683, %v1227, 0
      %v1270 = vsel %vm683, %v1230, 0
      %v1273 = vsel %vm683, %v1233, 0
      %v1276 = vsel %vm683, %v1236, 0
      %v1279 = vsel %vm683, %v1244, 0
      %v1282 = vsel %vm720, %v651, 0
      %1284 = vmatpush.bf16.msra.mxu0 0
      %1285 = vmatpush.bf16.msra.mxu0 0
      %1286 = vmatpush.bf16.msra.mxu0 0
      %1287 = vmatpush.bf16.msra.mxu0 0
      %1288 = vmatpush.bf16.msra.mxu0 0
      %1289 = vmatpush.bf16.msra.mxu0 0
      %1290 = vmatpush.bf16.msra.mxu0 0
      %1291 = vmatpush.bf16.msra.mxu0 %v1282
      %1292 = vmatmul.bf16.gmra.mxu0 %v1246
      %v1293 = vpop.f32.mrf.mxu0
      %v1294 = vadd.f32 0.0, %v1293
      %v1295 = vpop.f32.mrf.mxu0
      %v1296 = vadd.f32 0.0, %v1295
      %1297 = vmatmul.bf16.gmra.mxu0 %v1249
      %v1298 = vpop.f32.mrf.mxu0
      %v1299 = vadd.f32 0.0, %v1298
      %v1300 = vpop.f32.mrf.mxu0
      %v1301 = vadd.f32 0.0, %v1300
      %1302 = vmatmul.bf16.gmra.mxu0 %v1252
      %v1303 = vpop.f32.mrf.mxu0
      %v1304 = vadd.f32 0.0, %v1303
      %v1305 = vpop.f32.mrf.mxu0
      %v1306 = vadd.f32 0.0, %v1305
      %1307 = vmatmul.bf16.gmra.mxu0 %v1255
      %v1308 = vpop.f32.mrf.mxu0
      %v1309 = vadd.f32 0.0, %v1308
      %v1310 = vpop.f32.mrf.mxu0
      %v1311 = vadd.f32 0.0, %v1310
      %1312 = vmatmul.bf16.gmra.mxu0 %v1258
      %v1313 = vpop.f32.mrf.mxu0
      %v1314 = vadd.f32 0.0, %v1313
      %v1315 = vpop.f32.mrf.mxu0
      %v1316 = vadd.f32 0.0, %v1315
      %1317 = vmatmul.bf16.gmra.mxu0 %v1261
      %v1318 = vpop.f32.mrf.mxu0
      %v1319 = vadd.f32 0.0, %v1318
      %v1320 = vpop.f32.mrf.mxu0
      %v1321 = vadd.f32 0.0, %v1320
      %1322 = vmatmul.bf16.gmra.mxu0 %v1264
      %v1323 = vpop.f32.mrf.mxu0
      %v1324 = vadd.f32 0.0, %v1323
      %v1325 = vpop.f32.mrf.mxu0
      %v1326 = vadd.f32 0.0, %v1325
      %1327 = vmatmul.bf16.gmra.mxu0 %v1267
      %v1328 = vpop.f32.mrf.mxu0
      %v1329 = vadd.f32 0.0, %v1328
      %v1330 = vpop.f32.mrf.mxu0
      %v1331 = vadd.f32 0.0, %v1330
      %1332 = vmatmul.bf16.gmra.mxu0 %v1270
      %v1333 = vpop.f32.mrf.mxu0
      %v1334 = vadd.f32 0.0, %v1333
      %v1335 = vpop.f32.mrf.mxu0
      %v1336 = vadd.f32 0.0, %v1335
      %1337 = vmatmul.bf16.gmra.mxu0 %v1273
      %v1338 = vpop.f32.mrf.mxu0
      %v1339 = vadd.f32 0.0, %v1338
      %v1340 = vpop.f32.mrf.mxu0
      %v1341 = vadd.f32 0.0, %v1340
      %1342 = vmatmul.bf16.gmra.mxu0 %v1276
      %v1343 = vpop.f32.mrf.mxu0
      %v1344 = vadd.f32 0.0, %v1343
      %v1345 = vpop.f32.mrf.mxu0
      %v1346 = vadd.f32 0.0, %v1345
      %1347 = vmatmul.bf16.gmra.mxu0 %v1279
      %v1348 = vpop.f32.mrf.mxu0
      %v1349 = vadd.f32 0.0, %v1348
      %v1350 = vpop.f32.mrf.mxu0
      %v1351 = vadd.f32 0.0, %v1350
      %1352 = vdwg.mxu0
      %v1353 = vadd.f32 %v1178, %v1294
      %v1354 = vadd.f32 %v1179, %v1296
      %v1355 = vadd.f32 %v1180, %v1299
      %v1356 = vadd.f32 %v1181, %v1301
      %v1357 = vadd.f32 %v1182, %v1304
      %v1358 = vadd.f32 %v1183, %v1306
      %v1359 = vadd.f32 %v1184, %v1309
      %v1360 = vadd.f32 %v1185, %v1311
      %v1361 = vadd.f32 %v1186, %v1314
      %v1362 = vadd.f32 %v1187, %v1316
      %v1363 = vadd.f32 %v1188, %v1319
      %v1364 = vadd.f32 %v1189, %v1321
      %v1365 = vadd.f32 %v1190, %v1324
      %v1366 = vadd.f32 %v1191, %v1326
      %v1367 = vadd.f32 %v1192, %v1329
      %v1368 = vadd.f32 %v1193, %v1331
      %v1369 = vadd.f32 %v1194, %v1334
      %v1370 = vadd.f32 %v1195, %v1336
      %v1371 = vadd.f32 %v1196, %v1339
      %v1372 = vadd.f32 %v1197, %v1341
      %v1373 = vadd.f32 %v1198, %v1344
      %v1374 = vadd.f32 %v1199, %v1346
      %v1375 = vadd.f32 %v1200, %v1349
      %v1376 = vadd.f32 %v1201, %v1351
      %v1377 = vsel %vm683, %v626, 0
      %v1379 = vsel %vm683, %v627, 0
      %v1381 = vsel %vm683, %v628, 0
      %v1383 = vsel %vm683, %v629, 0
      %v1385 = vsel %vm683, %v630, 0
      %v1387 = vsel %vm683, %v631, 0
      %v1389 = vsel %vm683, %v632, 0
      %v1391 = vsel %vm683, %v633, 0
      %v1393 = vsel %vm683, %v634, 0
      %v1395 = vsel %vm683, %v635, 0
      %v1397 = vsel %vm683, %v636, 0
      %v1399 = vsel %vm683, %v637, 0
      %v1402 = vsel %vm720, %v652, 0
      %1404 = vmatpush.bf16.msra.mxu0 0
      %1405 = vmatpush.bf16.msra.mxu0 0
      %1406 = vmatpush.bf16.msra.mxu0 0
      %1407 = vmatpush.bf16.msra.mxu0 0
      %1408 = vmatpush.bf16.msra.mxu0 0
      %1409 = vmatpush.bf16.msra.mxu0 0
      %1410 = vmatpush.bf16.msra.mxu0 0
      %1411 = vmatpush.bf16.msra.mxu0 %v1402
      %1412 = vmatmul.bf16.gmra.mxu0 %v1377
      %v1413 = vpop.f32.mrf.mxu0
      %v1414 = vadd.f32 0.0, %v1413
      %v1415 = vpop.f32.mrf.mxu0
      %v1416 = vadd.f32 0.0, %v1415
      %1417 = vmatmul.bf16.gmra.mxu0 %v1379
      %v1418 = vpop.f32.mrf.mxu0
      %v1419 = vadd.f32 0.0, %v1418
      %v1420 = vpop.f32.mrf.mxu0
      %v1421 = vadd.f32 0.0, %v1420
      %1422 = vmatmul.bf16.gmra.mxu0 %v1381
      %v1423 = vpop.f32.mrf.mxu0
      %v1424 = vadd.f32 0.0, %v1423
      %v1425 = vpop.f32.mrf.mxu0
      %v1426 = vadd.f32 0.0, %v1425
      %1427 = vmatmul.bf16.gmra.mxu0 %v1383
      %v1428 = vpop.f32.mrf.mxu0
      %v1429 = vadd.f32 0.0, %v1428
      %v1430 = vpop.f32.mrf.mxu0
      %v1431 = vadd.f32 0.0, %v1430
      %1432 = vmatmul.bf16.gmra.mxu0 %v1385
      %v1433 = vpop.f32.mrf.mxu0
      %v1434 = vadd.f32 0.0, %v1433
      %v1435 = vpop.f32.mrf.mxu0
      %v1436 = vadd.f32 0.0, %v1435
      %1437 = vmatmul.bf16.gmra.mxu0 %v1387
      %v1438 = vpop.f32.mrf.mxu0
      %v1439 = vadd.f32 0.0, %v1438
      %v1440 = vpop.f32.mrf.mxu0
      %v1441 = vadd.f32 0.0, %v1440
      %1442 = vmatmul.bf16.gmra.mxu0 %v1389
      %v1443 = vpop.f32.mrf.mxu0
      %v1444 = vadd.f32 0.0, %v1443
      %v1445 = vpop.f32.mrf.mxu0
      %v1446 = vadd.f32 0.0, %v1445
      %1447 = vmatmul.bf16.gmra.mxu0 %v1391
      %v1448 = vpop.f32.mrf.mxu0
      %v1449 = vadd.f32 0.0, %v1448
      %v1450 = vpop.f32.mrf.mxu0
      %v1451 = vadd.f32 0.0, %v1450
      %1452 = vmatmul.bf16.gmra.mxu0 %v1393
      %v1453 = vpop.f32.mrf.mxu0
      %v1454 = vadd.f32 0.0, %v1453
      %v1455 = vpop.f32.mrf.mxu0
      %v1456 = vadd.f32 0.0, %v1455
      %1457 = vmatmul.bf16.gmra.mxu0 %v1395
      %v1458 = vpop.f32.mrf.mxu0
      %v1459 = vadd.f32 0.0, %v1458
      %v1460 = vpop.f32.mrf.mxu0
      %v1461 = vadd.f32 0.0, %v1460
      %1462 = vmatmul.bf16.gmra.mxu0 %v1397
      %v1463 = vpop.f32.mrf.mxu0
      %v1464 = vadd.f32 0.0, %v1463
      %v1465 = vpop.f32.mrf.mxu0
      %v1466 = vadd.f32 0.0, %v1465
      %1467 = vmatmul.bf16.gmra.mxu0 %v1399
      %v1468 = vpop.f32.mrf.mxu0
      %v1469 = vadd.f32 0.0, %v1468
      %v1470 = vpop.f32.mrf.mxu0
      %v1471 = vadd.f32 0.0, %v1470
      %1472 = vdwg.mxu0
      %v1473 = vadd.f32 %v1353, %v1414
      %v1474 = vadd.f32 %v1354, %v1416
      %v1475 = vadd.f32 %v1355, %v1419
      %v1476 = vadd.f32 %v1356, %v1421
      %v1477 = vadd.f32 %v1357, %v1424
      %v1478 = vadd.f32 %v1358, %v1426
      %v1479 = vadd.f32 %v1359, %v1429
      %v1480 = vadd.f32 %v1360, %v1431
      %v1481 = vadd.f32 %v1361, %v1434
      %v1482 = vadd.f32 %v1362, %v1436
      %v1483 = vadd.f32 %v1363, %v1439
      %v1484 = vadd.f32 %v1364, %v1441
      %v1485 = vadd.f32 %v1365, %v1444
      %v1486 = vadd.f32 %v1366, %v1446
      %v1487 = vadd.f32 %v1367, %v1449
      %v1488 = vadd.f32 %v1368, %v1451
      %v1489 = vadd.f32 %v1369, %v1454
      %v1490 = vadd.f32 %v1370, %v1456
      %v1491 = vadd.f32 %v1371, %v1459
      %v1492 = vadd.f32 %v1372, %v1461
      %v1493 = vadd.f32 %v1373, %v1464
      %v1494 = vadd.f32 %v1374, %v1466
      %v1495 = vadd.f32 %v1375, %v1469
      %v1496 = vadd.f32 %v1376, %v1471
      %vm1497 = vsmask.f32 7424
      %v1498 = vrot.slane %v815, 1
      %v1499 = vor.u32 %v812, %v1498
      %v1500 = vrot.slane %v824, 1
      %v1501 = vsel %vm1497, %v1499, %v1500
      %v1502 = vor.u32 %v821, %v1500
      %v1503 = vrot.slane %v833, 1
      %v1504 = vsel %vm1497, %v1502, %v1503
      %v1505 = vor.u32 %v830, %v1503
      %v1506 = vrot.slane %v842, 1
      %v1507 = vsel %vm1497, %v1505, %v1506
      %v1508 = vor.u32 %v839, %v1506
      %v1509 = vrot.slane %v851, 1
      %v1510 = vsel %vm1497, %v1508, %v1509
      %v1511 = vor.u32 %v848, %v1509
      %v1512 = vrot.slane %v860, 1
      %v1513 = vsel %vm1497, %v1511, %v1512
      %v1514 = vor.u32 %v857, %v1512
      %v1515 = vrot.slane %v869, 1
      %v1516 = vsel %vm1497, %v1514, %v1515
      %v1517 = vor.u32 %v866, %v1515
      %v1518 = vrot.slane %v878, 1
      %v1519 = vsel %vm1497, %v1517, %v1518
      %v1520 = vor.u32 %v875, %v1518
      %v1521 = vrot.slane %v887, 1
      %v1522 = vsel %vm1497, %v1520, %v1521
      %v1523 = vor.u32 %v884, %v1521
      %v1524 = vrot.slane %v896, 1
      %v1525 = vsel %vm1497, %v1523, %v1524
      %v1526 = vor.u32 %v893, %v1524
      %v1527 = vrot.slane %v905, 1
      %v1528 = vsel %vm1497, %v1526, %v1527
      %v1529 = vor.u32 %v902, %v1527
      %v1530 = vrot.slane %v1241, 1
      %v1531 = vsel %vm1497, %v1529, %v1530
      %v1532 = vor.u32 %v1238, %v1530
      %v1534 = vshll.u32 %v646, 16
      %v1536 = vrot.slane %v1534, 1
      %v1537 = vsel %vm1497, %v1532, %v1536
      %v1539 = vsel %vm683, %v1501, 0
      %v1542 = vsel %vm683, %v1504, 0
      %v1545 = vsel %vm683, %v1507, 0
      %v1548 = vsel %vm683, %v1510, 0
      %v1551 = vsel %vm683, %v1513, 0
      %v1554 = vsel %vm683, %v1516, 0
      %v1557 = vsel %vm683, %v1519, 0
      %v1560 = vsel %vm683, %v1522, 0
      %v1563 = vsel %vm683, %v1525, 0
      %v1566 = vsel %vm683, %v1528, 0
      %v1569 = vsel %vm683, %v1531, 0
      %v1572 = vsel %vm683, %v1537, 0
      %v1575 = vsel %vm720, %v653, 0
      %1577 = vmatpush.bf16.msra.mxu0 0
      %1578 = vmatpush.bf16.msra.mxu0 0
      %1579 = vmatpush.bf16.msra.mxu0 0
      %1580 = vmatpush.bf16.msra.mxu0 0
      %1581 = vmatpush.bf16.msra.mxu0 0
      %1582 = vmatpush.bf16.msra.mxu0 0
      %1583 = vmatpush.bf16.msra.mxu0 0
      %1584 = vmatpush.bf16.msra.mxu0 %v1575
      %1585 = vmatmul.bf16.gmra.mxu0 %v1539
      %v1586 = vpop.f32.mrf.mxu0
      %v1587 = vadd.f32 0.0, %v1586
      %v1588 = vpop.f32.mrf.mxu0
      %v1589 = vadd.f32 0.0, %v1588
      %1590 = vmatmul.bf16.gmra.mxu0 %v1542
      %v1591 = vpop.f32.mrf.mxu0
      %v1592 = vadd.f32 0.0, %v1591
      %v1593 = vpop.f32.mrf.mxu0
      %v1594 = vadd.f32 0.0, %v1593
      %1595 = vmatmul.bf16.gmra.mxu0 %v1545
      %v1596 = vpop.f32.mrf.mxu0
      %v1597 = vadd.f32 0.0, %v1596
      %v1598 = vpop.f32.mrf.mxu0
      %v1599 = vadd.f32 0.0, %v1598
      %1600 = vmatmul.bf16.gmra.mxu0 %v1548
      %v1601 = vpop.f32.mrf.mxu0
      %v1602 = vadd.f32 0.0, %v1601
      %v1603 = vpop.f32.mrf.mxu0
      %v1604 = vadd.f32 0.0, %v1603
      %1605 = vmatmul.bf16.gmra.mxu0 %v1551
      %v1606 = vpop.f32.mrf.mxu0
      %v1607 = vadd.f32 0.0, %v1606
      %v1608 = vpop.f32.mrf.mxu0
      %v1609 = vadd.f32 0.0, %v1608
      %1610 = vmatmul.bf16.gmra.mxu0 %v1554
      %v1611 = vpop.f32.mrf.mxu0
      %v1612 = vadd.f32 0.0, %v1611
      %v1613 = vpop.f32.mrf.mxu0
      %v1614 = vadd.f32 0.0, %v1613
      %1615 = vmatmul.bf16.gmra.mxu0 %v1557
      %v1616 = vpop.f32.mrf.mxu0
      %v1617 = vadd.f32 0.0, %v1616
      %v1618 = vpop.f32.mrf.mxu0
      %v1619 = vadd.f32 0.0, %v1618
      %1620 = vmatmul.bf16.gmra.mxu0 %v1560
      %v1621 = vpop.f32.mrf.mxu0
      %v1622 = vadd.f32 0.0, %v1621
      %v1623 = vpop.f32.mrf.mxu0
      %v1624 = vadd.f32 0.0, %v1623
      %1625 = vmatmul.bf16.gmra.mxu0 %v1563
      %v1626 = vpop.f32.mrf.mxu0
      %v1627 = vadd.f32 0.0, %v1626
      %v1628 = vpop.f32.mrf.mxu0
      %v1629 = vadd.f32 0.0, %v1628
      %1630 = vmatmul.bf16.gmra.mxu0 %v1566
      %v1631 = vpop.f32.mrf.mxu0
      %v1632 = vadd.f32 0.0, %v1631
      %v1633 = vpop.f32.mrf.mxu0
      %v1634 = vadd.f32 0.0, %v1633
      %1635 = vmatmul.bf16.gmra.mxu0 %v1569
      %v1636 = vpop.f32.mrf.mxu0
      %v1637 = vadd.f32 0.0, %v1636
      %v1638 = vpop.f32.mrf.mxu0
      %v1639 = vadd.f32 0.0, %v1638
      %1640 = vmatmul.bf16.gmra.mxu0 %v1572
      %v1641 = vpop.f32.mrf.mxu0
      %v1642 = vadd.f32 0.0, %v1641
      %v1643 = vpop.f32.mrf.mxu0
      %v1644 = vadd.f32 0.0, %v1643
      %1645 = vdwg.mxu0
      %v1646 = vadd.f32 %v1473, %v1587
      %v1647 = vadd.f32 %v1474, %v1589
      %v1648 = vadd.f32 %v1475, %v1592
      %v1649 = vadd.f32 %v1476, %v1594
      %v1650 = vadd.f32 %v1477, %v1597
      %v1651 = vadd.f32 %v1478, %v1599
      %v1652 = vadd.f32 %v1479, %v1602
      %v1653 = vadd.f32 %v1480, %v1604
      %v1654 = vadd.f32 %v1481, %v1607
      %v1655 = vadd.f32 %v1482, %v1609
      %v1656 = vadd.f32 %v1483, %v1612
      %v1657 = vadd.f32 %v1484, %v1614
      %v1658 = vadd.f32 %v1485, %v1617
      %v1659 = vadd.f32 %v1486, %v1619
      %v1660 = vadd.f32 %v1487, %v1622
      %v1661 = vadd.f32 %v1488, %v1624
      %v1662 = vadd.f32 %v1489, %v1627
      %v1663 = vadd.f32 %v1490, %v1629
      %v1664 = vadd.f32 %v1491, %v1632
      %v1665 = vadd.f32 %v1492, %v1634
      %v1666 = vadd.f32 %v1493, %v1637
      %v1667 = vadd.f32 %v1494, %v1639
      %v1668 = vadd.f32 %v1495, %v1642
      %v1669 = vadd.f32 %v1496, %v1644
      %v1670 = vrot.slane %v1238, 3
      %v1671 = vrot.slane %v1241, 4
      %v1672 = vor.u32 %v1670, %v1671
      %v1673 = vsel %vm793, %v908, %v1672
      %v1674 = vshrl.u32 %v646, 16
      %v1676 = vrot.slane %v1674, 3
      %v1677 = vrot.slane %v1534, 4
      %v1678 = vor.u32 %v1676, %v1677
      %v1679 = vsel %vm793, %v1672, %v1678
      %v1681 = vshrl.u32 %v647, 16
      %v1683 = vrot.slane %v1681, 3
      %v1684 = vshll.u32 %v647, 16
      %v1686 = vrot.slane %v1684, 4
      %v1687 = vor.u32 %v1683, %v1686
      %v1688 = vsel %vm793, %v1678, %v1687
      %v1690 = vsel %vm683, %v1673, 0
      %v1693 = vsel %vm683, %v1679, 0
      %v1696 = vsel %vm683, %v1688, 0
      %v1699 = vsel %vm720, %v654, 0
      %1701 = vmatpush.bf16.msra.mxu0 0
      %1702 = vmatpush.bf16.msra.mxu0 0
      %1703 = vmatpush.bf16.msra.mxu0 0
      %1704 = vmatpush.bf16.msra.mxu0 0
      %1705 = vmatpush.bf16.msra.mxu0 0
      %1706 = vmatpush.bf16.msra.mxu0 0
      %1707 = vmatpush.bf16.msra.mxu0 0
      %1708 = vmatpush.bf16.msra.mxu0 %v1699
      %1709 = vmatmul.bf16.gmra.mxu0 %v920
      %v1710 = vpop.f32.mrf.mxu0
      %v1711 = vadd.f32 0.0, %v1710
      %v1712 = vpop.f32.mrf.mxu0
      %v1713 = vadd.f32 0.0, %v1712
      %1714 = vmatmul.bf16.gmra.mxu0 %v923
      %v1715 = vpop.f32.mrf.mxu0
      %v1716 = vadd.f32 0.0, %v1715
      %v1717 = vpop.f32.mrf.mxu0
      %v1718 = vadd.f32 0.0, %v1717
      %1719 = vmatmul.bf16.gmra.mxu0 %v926
      %v1720 = vpop.f32.mrf.mxu0
      %v1721 = vadd.f32 0.0, %v1720
      %v1722 = vpop.f32.mrf.mxu0
      %v1723 = vadd.f32 0.0, %v1722
      %1724 = vmatmul.bf16.gmra.mxu0 %v929
      %v1725 = vpop.f32.mrf.mxu0
      %v1726 = vadd.f32 0.0, %v1725
      %v1727 = vpop.f32.mrf.mxu0
      %v1728 = vadd.f32 0.0, %v1727
      %1729 = vmatmul.bf16.gmra.mxu0 %v932
      %v1730 = vpop.f32.mrf.mxu0
      %v1731 = vadd.f32 0.0, %v1730
      %v1732 = vpop.f32.mrf.mxu0
      %v1733 = vadd.f32 0.0, %v1732
      %1734 = vmatmul.bf16.gmra.mxu0 %v935
      %v1735 = vpop.f32.mrf.mxu0
      %v1736 = vadd.f32 0.0, %v1735
      %v1737 = vpop.f32.mrf.mxu0
      %v1738 = vadd.f32 0.0, %v1737
      %1739 = vmatmul.bf16.gmra.mxu0 %v938
      %v1740 = vpop.f32.mrf.mxu0
      %v1741 = vadd.f32 0.0, %v1740
      %v1742 = vpop.f32.mrf.mxu0
      %v1743 = vadd.f32 0.0, %v1742
      %1744 = vmatmul.bf16.gmra.mxu0 %v941
      %v1745 = vpop.f32.mrf.mxu0
      %v1746 = vadd.f32 0.0, %v1745
      %v1747 = vpop.f32.mrf.mxu0
      %v1748 = vadd.f32 0.0, %v1747
      %1749 = vmatmul.bf16.gmra.mxu0 %v944
      %v1750 = vpop.f32.mrf.mxu0
      %v1751 = vadd.f32 0.0, %v1750
      %v1752 = vpop.f32.mrf.mxu0
      %v1753 = vadd.f32 0.0, %v1752
      %1754 = vmatmul.bf16.gmra.mxu0 %v1690
      %v1755 = vpop.f32.mrf.mxu0
      %v1756 = vadd.f32 0.0, %v1755
      %v1757 = vpop.f32.mrf.mxu0
      %v1758 = vadd.f32 0.0, %v1757
      %1759 = vmatmul.bf16.gmra.mxu0 %v1693
      %v1760 = vpop.f32.mrf.mxu0
      %v1761 = vadd.f32 0.0, %v1760
      %v1762 = vpop.f32.mrf.mxu0
      %v1763 = vadd.f32 0.0, %v1762
      %1764 = vmatmul.bf16.gmra.mxu0 %v1696
      %v1765 = vpop.f32.mrf.mxu0
      %v1766 = vadd.f32 0.0, %v1765
      %v1767 = vpop.f32.mrf.mxu0
      %v1768 = vadd.f32 0.0, %v1767
      %1769 = vdwg.mxu0
      %v1770 = vadd.f32 %v1646, %v1711
      %v1771 = vadd.f32 %v1647, %v1713
      %v1772 = vadd.f32 %v1648, %v1716
      %v1773 = vadd.f32 %v1649, %v1718
      %v1774 = vadd.f32 %v1650, %v1721
      %v1775 = vadd.f32 %v1651, %v1723
      %v1776 = vadd.f32 %v1652, %v1726
      %v1777 = vadd.f32 %v1653, %v1728
      %v1778 = vadd.f32 %v1654, %v1731
      %v1779 = vadd.f32 %v1655, %v1733
      %v1780 = vadd.f32 %v1656, %v1736
      %v1781 = vadd.f32 %v1657, %v1738
      %v1782 = vadd.f32 %v1658, %v1741
      %v1783 = vadd.f32 %v1659, %v1743
      %v1784 = vadd.f32 %v1660, %v1746
      %v1785 = vadd.f32 %v1661, %v1748
      %v1786 = vadd.f32 %v1662, %v1751
      %v1787 = vadd.f32 %v1663, %v1753
      %v1788 = vadd.f32 %v1664, %v1756
      %v1789 = vadd.f32 %v1665, %v1758
      %v1790 = vadd.f32 %v1666, %v1761
      %v1791 = vadd.f32 %v1667, %v1763
      %v1792 = vadd.f32 %v1668, %v1766
      %v1793 = vadd.f32 %v1669, %v1768
      %v1794 = vrot.slane %v637, 4
      %v1795 = vsel %vm657, %v681, %v1794
      %v1796 = vrot.slane %v646, 4
      %v1797 = vsel %vm657, %v1794, %v1796
      %v1798 = vrot.slane %v647, 4
      %v1799 = vsel %vm657, %v1796, %v1798
      %v1801 = vsel %vm683, %v1795, 0
      %v1804 = vsel %vm683, %v1797, 0
      %v1807 = vsel %vm683, %v1799, 0
      %v1810 = vsel %vm720, %v655, 0
      %1812 = vmatpush.bf16.msra.mxu0 0
      %1813 = vmatpush.bf16.msra.mxu0 0
      %1814 = vmatpush.bf16.msra.mxu0 0
      %1815 = vmatpush.bf16.msra.mxu0 0
      %1816 = vmatpush.bf16.msra.mxu0 0
      %1817 = vmatpush.bf16.msra.mxu0 0
      %1818 = vmatpush.bf16.msra.mxu0 0
      %1819 = vmatpush.bf16.msra.mxu0 %v1810
      %1820 = vmatmul.bf16.gmra.mxu0 %v694
      %v1821 = vpop.f32.mrf.mxu0
      %v1822 = vadd.f32 0.0, %v1821
      %v1823 = vpop.f32.mrf.mxu0
      %v1824 = vadd.f32 0.0, %v1823
      %1825 = vmatmul.bf16.gmra.mxu0 %v697
      %v1826 = vpop.f32.mrf.mxu0
      %v1827 = vadd.f32 0.0, %v1826
      %v1828 = vpop.f32.mrf.mxu0
      %v1829 = vadd.f32 0.0, %v1828
      %1830 = vmatmul.bf16.gmra.mxu0 %v700
      %v1831 = vpop.f32.mrf.mxu0
      %v1832 = vadd.f32 0.0, %v1831
      %v1833 = vpop.f32.mrf.mxu0
      %v1834 = vadd.f32 0.0, %v1833
      %1835 = vmatmul.bf16.gmra.mxu0 %v703
      %v1836 = vpop.f32.mrf.mxu0
      %v1837 = vadd.f32 0.0, %v1836
      %v1838 = vpop.f32.mrf.mxu0
      %v1839 = vadd.f32 0.0, %v1838
      %1840 = vmatmul.bf16.gmra.mxu0 %v706
      %v1841 = vpop.f32.mrf.mxu0
      %v1842 = vadd.f32 0.0, %v1841
      %v1843 = vpop.f32.mrf.mxu0
      %v1844 = vadd.f32 0.0, %v1843
      %1845 = vmatmul.bf16.gmra.mxu0 %v709
      %v1846 = vpop.f32.mrf.mxu0
      %v1847 = vadd.f32 0.0, %v1846
      %v1848 = vpop.f32.mrf.mxu0
      %v1849 = vadd.f32 0.0, %v1848
      %1850 = vmatmul.bf16.gmra.mxu0 %v712
      %v1851 = vpop.f32.mrf.mxu0
      %v1852 = vadd.f32 0.0, %v1851
      %v1853 = vpop.f32.mrf.mxu0
      %v1854 = vadd.f32 0.0, %v1853
      %1855 = vmatmul.bf16.gmra.mxu0 %v715
      %v1856 = vpop.f32.mrf.mxu0
      %v1857 = vadd.f32 0.0, %v1856
      %v1858 = vpop.f32.mrf.mxu0
      %v1859 = vadd.f32 0.0, %v1858
      %1860 = vmatmul.bf16.gmra.mxu0 %v718
      %v1861 = vpop.f32.mrf.mxu0
      %v1862 = vadd.f32 0.0, %v1861
      %v1863 = vpop.f32.mrf.mxu0
      %v1864 = vadd.f32 0.0, %v1863
      %1865 = vmatmul.bf16.gmra.mxu0 %v1801
      %v1866 = vpop.f32.mrf.mxu0
      %v1867 = vadd.f32 0.0, %v1866
      %v1868 = vpop.f32.mrf.mxu0
      %v1869 = vadd.f32 0.0, %v1868
      %1870 = vmatmul.bf16.gmra.mxu0 %v1804
      %v1871 = vpop.f32.mrf.mxu0
      %v1872 = vadd.f32 0.0, %v1871
      %v1873 = vpop.f32.mrf.mxu0
      %v1874 = vadd.f32 0.0, %v1873
      %1875 = vmatmul.bf16.gmra.mxu0 %v1807
      %v1876 = vpop.f32.mrf.mxu0
      %v1877 = vadd.f32 0.0, %v1876
      %v1878 = vpop.f32.mrf.mxu0
      %v1879 = vadd.f32 0.0, %v1878
      %1880 = vdwg.mxu0
      %v1881 = vadd.f32 %v1770, %v1822
      %v1882 = vadd.f32 %v1771, %v1824
      %v1883 = vadd.f32 %v1772, %v1827
      %v1884 = vadd.f32 %v1773, %v1829
      %v1885 = vadd.f32 %v1774, %v1832
      %v1886 = vadd.f32 %v1775, %v1834
      %v1887 = vadd.f32 %v1776, %v1837
      %v1888 = vadd.f32 %v1777, %v1839
      %v1889 = vadd.f32 %v1778, %v1842
      %v1890 = vadd.f32 %v1779, %v1844
      %v1891 = vadd.f32 %v1780, %v1847
      %v1892 = vadd.f32 %v1781, %v1849
      %v1893 = vadd.f32 %v1782, %v1852
      %v1894 = vadd.f32 %v1783, %v1854
      %v1895 = vadd.f32 %v1784, %v1857
      %v1896 = vadd.f32 %v1785, %v1859
      %v1897 = vadd.f32 %v1786, %v1862
      %v1898 = vadd.f32 %v1787, %v1864
      %v1899 = vadd.f32 %v1788, %v1867
      %v1900 = vadd.f32 %v1789, %v1869
      %v1901 = vadd.f32 %v1790, %v1872
      %v1902 = vadd.f32 %v1791, %v1874
      %v1903 = vadd.f32 %v1792, %v1877
      %v1904 = vadd.f32 %v1793, %v1879
      %v1905 = vrot.slane %v1238, 4
      %v1906 = vrot.slane %v1241, 5
      %v1907 = vor.u32 %v1905, %v1906
      %v1908 = vsel %vm1018, %v1068, %v1907
      %v1909 = vrot.slane %v1674, 4
      %v1910 = vrot.slane %v1534, 5
      %v1911 = vor.u32 %v1909, %v1910
      %v1912 = vsel %vm1018, %v1907, %v1911
      %v1913 = vrot.slane %v1681, 4
      %v1914 = vrot.slane %v1684, 5
      %v1915 = vor.u32 %v1913, %v1914
      %v1916 = vsel %vm1018, %v1911, %v1915
      %v1918 = vsel %vm683, %v1908, 0
      %v1921 = vsel %vm683, %v1912, 0
      %v1924 = vsel %vm683, %v1916, 0
      %v1927 = vsel %vm720, %v656, 0
      %1929 = vmatpush.bf16.msra.mxu0 0
      %1930 = vmatpush.bf16.msra.mxu0 0
      %1931 = vmatpush.bf16.msra.mxu0 0
      %1932 = vmatpush.bf16.msra.mxu0 0
      %1933 = vmatpush.bf16.msra.mxu0 0
      %1934 = vmatpush.bf16.msra.mxu0 0
      %1935 = vmatpush.bf16.msra.mxu0 0
      %1936 = vmatpush.bf16.msra.mxu0 %v1927
      %1937 = vmatmul.bf16.gmra.mxu0 %v1080
      %v1938 = vpop.f32.mrf.mxu0
      %v1939 = vadd.f32 0.0, %v1938
      %v1940 = vpop.f32.mrf.mxu0
      %v1941 = vadd.f32 0.0, %v1940
      %1942 = vmatmul.bf16.gmra.mxu0 %v1083
      %v1943 = vpop.f32.mrf.mxu0
      %v1944 = vadd.f32 0.0, %v1943
      %v1945 = vpop.f32.mrf.mxu0
      %v1946 = vadd.f32 0.0, %v1945
      %1947 = vmatmul.bf16.gmra.mxu0 %v1086
      %v1948 = vpop.f32.mrf.mxu0
      %v1949 = vadd.f32 0.0, %v1948
      %v1950 = vpop.f32.mrf.mxu0
      %v1951 = vadd.f32 0.0, %v1950
      %1952 = vmatmul.bf16.gmra.mxu0 %v1089
      %v1953 = vpop.f32.mrf.mxu0
      %v1954 = vadd.f32 0.0, %v1953
      %v1955 = vpop.f32.mrf.mxu0
      %v1956 = vadd.f32 0.0, %v1955
      %1957 = vmatmul.bf16.gmra.mxu0 %v1092
      %v1958 = vpop.f32.mrf.mxu0
      %v1959 = vadd.f32 0.0, %v1958
      %v1960 = vpop.f32.mrf.mxu0
      %v1961 = vadd.f32 0.0, %v1960
      %1962 = vmatmul.bf16.gmra.mxu0 %v1095
      %v1963 = vpop.f32.mrf.mxu0
      %v1964 = vadd.f32 0.0, %v1963
      %v1965 = vpop.f32.mrf.mxu0
      %v1966 = vadd.f32 0.0, %v1965
      %1967 = vmatmul.bf16.gmra.mxu0 %v1098
      %v1968 = vpop.f32.mrf.mxu0
      %v1969 = vadd.f32 0.0, %v1968
      %v1970 = vpop.f32.mrf.mxu0
      %v1971 = vadd.f32 0.0, %v1970
      %1972 = vmatmul.bf16.gmra.mxu0 %v1101
      %v1973 = vpop.f32.mrf.mxu0
      %v1974 = vadd.f32 0.0, %v1973
      %v1975 = vpop.f32.mrf.mxu0
      %v1976 = vadd.f32 0.0, %v1975
      %1977 = vmatmul.bf16.gmra.mxu0 %v1104
      %v1978 = vpop.f32.mrf.mxu0
      %v1979 = vadd.f32 0.0, %v1978
      %v1980 = vpop.f32.mrf.mxu0
      %v1981 = vadd.f32 0.0, %v1980
      %1982 = vmatmul.bf16.gmra.mxu0 %v1918
      %v1983 = vpop.f32.mrf.mxu0
      %v1984 = vadd.f32 0.0, %v1983
      %v1985 = vpop.f32.mrf.mxu0
      %v1986 = vadd.f32 0.0, %v1985
      %1987 = vmatmul.bf16.gmra.mxu0 %v1921
      %v1988 = vpop.f32.mrf.mxu0
      %v1989 = vadd.f32 0.0, %v1988
      %v1990 = vpop.f32.mrf.mxu0
      %v1991 = vadd.f32 0.0, %v1990
      %1992 = vmatmul.bf16.gmra.mxu0 %v1924
      %v1993 = vpop.f32.mrf.mxu0
      %v1994 = vadd.f32 0.0, %v1993
      %v1995 = vpop.f32.mrf.mxu0
      %v1996 = vadd.f32 0.0, %v1995
      %1997 = vdwg.mxu0
      %v1998 = vadd.f32 %v1881, %v1939
      %v1999 = vadd.f32 %v1882, %v1941
      %v2000 = vadd.f32 %v1883, %v1944
      %v2001 = vadd.f32 %v1884, %v1946
      %v2002 = vadd.f32 %v1885, %v1949
      %v2003 = vadd.f32 %v1886, %v1951
      %v2004 = vadd.f32 %v1887, %v1954
      %v2005 = vadd.f32 %v1888, %v1956
      %v2006 = vadd.f32 %v1889, %v1959
      %v2007 = vadd.f32 %v1890, %v1961
      %v2008 = vadd.f32 %v1891, %v1964
      %v2009 = vadd.f32 %v1892, %v1966
      %v2010 = vadd.f32 %v1893, %v1969
      %v2011 = vadd.f32 %v1894, %v1971
      %v2012 = vadd.f32 %v1895, %v1974
      %v2013 = vadd.f32 %v1896, %v1976
      %v2014 = vadd.f32 %v1897, %v1979
      %v2015 = vadd.f32 %v1898, %v1981
      %v2016 = vadd.f32 %v1899, %v1984
      %v2017 = vadd.f32 %v1900, %v1986
      %v2018 = vadd.f32 %v1901, %v1989
      %v2019 = vadd.f32 %v1902, %v1991
      %v2020 = vadd.f32 %v1903, %v1994
      %v2021 = vadd.f32 %v1904, %v1996
      %v2022 = vld [vmem:[%s4] sm:$0x1]
      %v2024 = vperm.slane %v2022, 0
      %v2026 = vadd.f32 %v1998, %v2024
      %v2027 = vadd.f32 %v1999, %v2024
      %v2028 = vadd.f32 %v2000, %v2024
      %v2029 = vadd.f32 %v2001, %v2024
      %v2030 = vadd.f32 %v2002, %v2024
      %v2031 = vadd.f32 %v2003, %v2024
      %v2032 = vadd.f32 %v2004, %v2024
      %v2033 = vadd.f32 %v2005, %v2024
      %v2034 = vadd.f32 %v2006, %v2024
      %v2035 = vadd.f32 %v2007, %v2024
      %v2036 = vadd.f32 %v2008, %v2024
      %v2037 = vadd.f32 %v2009, %v2024
      %v2038 = vadd.f32 %v2010, %v2024
      %v2039 = vadd.f32 %v2011, %v2024
      %v2040 = vadd.f32 %v2012, %v2024
      %v2041 = vadd.f32 %v2013, %v2024
      %v2042 = vadd.f32 %v2014, %v2024
      %v2043 = vadd.f32 %v2015, %v2024
      %v2044 = vadd.f32 %v2016, %v2024
      %v2045 = vadd.f32 %v2017, %v2024
      %v2046 = vadd.f32 %v2018, %v2024
      %v2047 = vadd.f32 %v2019, %v2024
      %v2048 = vadd.f32 %v2020, %v2024
      %v2049 = vadd.f32 %v2021, %v2024
      %v2050 = vsel %vm445, 1, 0
      %v2051 = vsel %vm446, 1, 0
      %v2052 = vsel %vm447, 1, 0
      %vm2053 = vcmp.eq.s32.totalorder %v2050, 1
      %vm2054 = vcmp.eq.s32.totalorder %v2051, 1
      %vm2055 = vcmp.eq.s32.totalorder %v2052, 1
      %v2056 = vsel %vm2053, %v2026, 0.0
      %v2057 = vsel %vm2054, %v2027, 0.0
      %v2058 = vsel %vm2055, %v2028, 0.0
      %v2059 = vsel %vm2053, %v2029, 0.0
      %v2060 = vsel %vm2054, %v2030, 0.0
      %v2061 = vsel %vm2055, %v2031, 0.0
      %v2062 = vsel %vm2053, %v2032, 0.0
      %v2063 = vsel %vm2054, %v2033, 0.0
      %v2064 = vsel %vm2055, %v2034, 0.0
      %v2065 = vsel %vm2053, %v2035, 0.0
      %v2066 = vsel %vm2054, %v2036, 0.0
      %v2067 = vsel %vm2055, %v2037, 0.0
      %v2068 = vsel %vm2053, %v2038, 0.0
      %v2069 = vsel %vm2054, %v2039, 0.0
      %v2070 = vsel %vm2055, %v2040, 0.0
      %v2071 = vsel %vm2053, %v2041, 0.0
      %v2072 = vsel %vm2054, %v2042, 0.0
      %v2073 = vsel %vm2055, %v2043, 0.0
      %v2074 = vsel %vm2053, %v2044, 0.0
      %v2075 = vsel %vm2054, %v2045, 0.0
      %v2076 = vsel %vm2055, %v2046, 0.0
      %v2077 = vsel %vm2053, %v2047, 0.0
      %v2078 = vsel %vm2054, %v2048, 0.0
      %v2079 = vsel %vm2055, %v2049, 0.0
      %vm2080 = vcmask 523264
      %v2081 = vsel %vm2080, %v2056, 0.0
      %v2082 = vsel %vm2080, %v2057, 0.0
      %v2083 = vadd.f32 %v2081, %v2082
      %v2084 = vsel %vm2080, %v2058, 0.0
      %v2085 = vadd.f32 %v2083, %v2084
      %v2086 = vsel %vm2080, %v2059, 0.0
      %v2087 = vadd.f32 %v2085, %v2086
      %v2088 = vsel %vm2080, %v2060, 0.0
      %v2089 = vadd.f32 %v2087, %v2088
      %v2090 = vsel %vm2080, %v2061, 0.0
      %v2091 = vadd.f32 %v2089, %v2090
      %v2092 = vsel %vm2080, %v2062, 0.0
      %v2093 = vadd.f32 %v2091, %v2092
      %v2094 = vsel %vm2080, %v2063, 0.0
      %v2095 = vadd.f32 %v2093, %v2094
      %v2096 = vsel %vm2080, %v2064, 0.0
      %v2097 = vadd.f32 %v2095, %v2096
      %v2098 = vsel %vm2080, %v2065, 0.0
      %v2099 = vadd.f32 %v2097, %v2098
      %v2100 = vsel %vm2080, %v2066, 0.0
      %v2101 = vadd.f32 %v2099, %v2100
      %v2102 = vsel %vm2080, %v2067, 0.0
      %v2103 = vadd.f32 %v2101, %v2102
      %v2104 = vsel %vm2080, %v2068, 0.0
      %v2105 = vadd.f32 %v2103, %v2104
      %v2106 = vsel %vm2080, %v2069, 0.0
      %v2107 = vadd.f32 %v2105, %v2106
      %v2108 = vsel %vm2080, %v2070, 0.0
      %v2109 = vadd.f32 %v2107, %v2108
      %v2110 = vsel %vm2080, %v2071, 0.0
      %v2111 = vadd.f32 %v2109, %v2110
      %v2112 = vsel %vm2080, %v2072, 0.0
      %v2113 = vadd.f32 %v2111, %v2112
      %v2114 = vsel %vm2080, %v2073, 0.0
      %v2115 = vadd.f32 %v2113, %v2114
      %v2116 = vsel %vm2080, %v2074, 0.0
      %v2117 = vadd.f32 %v2115, %v2116
      %v2118 = vsel %vm2080, %v2075, 0.0
      %v2119 = vadd.f32 %v2117, %v2118
      %v2120 = vsel %vm2080, %v2076, 0.0
      %v2121 = vadd.f32 %v2119, %v2120
      %v2122 = vsel %vm2080, %v2077, 0.0
      %v2123 = vadd.f32 %v2121, %v2122
      %v2124 = vsel %vm2080, %v2078, 0.0
      %v2125 = vadd.f32 %v2123, %v2124
      %v2126 = vsel %vm2080, %v2079, 0.0
      %v2127 = vadd.f32 %v2125, %v2126
      %v2128 = vrot.slane %v2127, 4
      %v2129 = vadd.f32 %v2127, %v2128
      %v2130 = vrot.slane %v2129, 2
      %v2131 = vadd.f32 %v2129, %v2130
      %v2132 = vrot.slane %v2131, 1
      %v2133 = vadd.f32 %v2131, %v2132
      %v2134 = vmul.f32 %v2056, %v2056
      %v2135 = vmul.f32 %v2057, %v2057
      %v2136 = vmul.f32 %v2058, %v2058
      %v2137 = vmul.f32 %v2059, %v2059
      %v2138 = vmul.f32 %v2060, %v2060
      %v2139 = vmul.f32 %v2061, %v2061
      %v2140 = vmul.f32 %v2062, %v2062
      %v2141 = vmul.f32 %v2063, %v2063
      %v2142 = vmul.f32 %v2064, %v2064
      %v2143 = vmul.f32 %v2065, %v2065
      %v2144 = vmul.f32 %v2066, %v2066
      %v2145 = vmul.f32 %v2067, %v2067
      %v2146 = vmul.f32 %v2068, %v2068
      %v2147 = vmul.f32 %v2069, %v2069
      %v2148 = vmul.f32 %v2070, %v2070
      %v2149 = vmul.f32 %v2071, %v2071
      %v2150 = vmul.f32 %v2072, %v2072
      %v2151 = vmul.f32 %v2073, %v2073
      %v2152 = vmul.f32 %v2074, %v2074
      %v2153 = vmul.f32 %v2075, %v2075
      %v2154 = vmul.f32 %v2076, %v2076
      %v2155 = vmul.f32 %v2077, %v2077
      %v2156 = vmul.f32 %v2078, %v2078
      %v2157 = vmul.f32 %v2079, %v2079
      %v2158 = vsel %vm2080, %v2134, 0.0
      %v2159 = vsel %vm2080, %v2135, 0.0
      %v2160 = vadd.f32 %v2158, %v2159
      %v2161 = vsel %vm2080, %v2136, 0.0
      %v2162 = vadd.f32 %v2160, %v2161
      %v2163 = vsel %vm2080, %v2137, 0.0
      %v2164 = vadd.f32 %v2162, %v2163
      %v2165 = vsel %vm2080, %v2138, 0.0
      %v2166 = vadd.f32 %v2164, %v2165
      %v2167 = vsel %vm2080, %v2139, 0.0
      %v2168 = vadd.f32 %v2166, %v2167
      %v2169 = vsel %vm2080, %v2140, 0.0
      %v2170 = vadd.f32 %v2168, %v2169
      %v2171 = vsel %vm2080, %v2141, 0.0
      %v2172 = vadd.f32 %v2170, %v2171
      %v2173 = vsel %vm2080, %v2142, 0.0
      %v2174 = vadd.f32 %v2172, %v2173
      %v2175 = vsel %vm2080, %v2143, 0.0
      %v2176 = vadd.f32 %v2174, %v2175
      %v2177 = vsel %vm2080, %v2144, 0.0
      %v2178 = vadd.f32 %v2176, %v2177
      %v2179 = vsel %vm2080, %v2145, 0.0
      %v2180 = vadd.f32 %v2178, %v2179
      %v2181 = vsel %vm2080, %v2146, 0.0
      %v2182 = vadd.f32 %v2180, %v2181
      %v2183 = vsel %vm2080, %v2147, 0.0
      %v2184 = vadd.f32 %v2182, %v2183
      %v2185 = vsel %vm2080, %v2148, 0.0
      %v2186 = vadd.f32 %v2184, %v2185
      %v2187 = vsel %vm2080, %v2149, 0.0
      %v2188 = vadd.f32 %v2186, %v2187
      %v2189 = vsel %vm2080, %v2150, 0.0
      %v2190 = vadd.f32 %v2188, %v2189
      %v2191 = vsel %vm2080, %v2151, 0.0
      %v2192 = vadd.f32 %v2190, %v2191
      %v2193 = vsel %vm2080, %v2152, 0.0
      %v2194 = vadd.f32 %v2192, %v2193
      %v2195 = vsel %vm2080, %v2153, 0.0
      %v2196 = vadd.f32 %v2194, %v2195
      %v2197 = vsel %vm2080, %v2154, 0.0
      %v2198 = vadd.f32 %v2196, %v2197
      %v2199 = vsel %vm2080, %v2155, 0.0
      %v2200 = vadd.f32 %v2198, %v2199
      %v2201 = vsel %vm2080, %v2156, 0.0
      %v2202 = vadd.f32 %v2200, %v2201
      %v2203 = vsel %vm2080, %v2157, 0.0
      %v2204 = vadd.f32 %v2202, %v2203
      %v2205 = vrot.slane %v2204, 4
      %v2206 = vadd.f32 %v2204, %v2205
      %v2207 = vrot.slane %v2206, 2
      %v2208 = vadd.f32 %v2206, %v2207
      %v2209 = vrot.slane %v2208, 1
      %v2210 = vadd.f32 %v2208, %v2209
      %vm2211 = vcmask 1040384
      %v2212 = vsel %vm2211, %v2133, %v2210
      %vm2213 = vcmask 517120
      %2214 = vst.msk [vmem:[%s439] sm:$0x3] %vm2213, %v2212
      %v2215 = vpack.c.bf16 %v2056, %v2056
      %v2216 = vpack.c.bf16 %v2057, %v2057
      %v2217 = vpack.c.bf16 %v2058, %v2058
      %v2218 = vpack.c.bf16 %v2059, %v2059
      %v2219 = vpack.c.bf16 %v2060, %v2060
      %v2220 = vpack.c.bf16 %v2061, %v2061
      %v2221 = vpack.c.bf16 %v2062, %v2062
      %v2222 = vpack.c.bf16 %v2063, %v2063
      %v2223 = vpack.c.bf16 %v2064, %v2064
      %v2224 = vpack.c.bf16 %v2065, %v2065
      %v2225 = vpack.c.bf16 %v2066, %v2066
      %v2226 = vpack.c.bf16 %v2067, %v2067
      %v2227 = vpack.c.bf16 %v2068, %v2068
      %v2228 = vpack.c.bf16 %v2069, %v2069
      %v2229 = vpack.c.bf16 %v2070, %v2070
      %v2230 = vpack.c.bf16 %v2071, %v2071
      %v2231 = vpack.c.bf16 %v2072, %v2072
      %v2232 = vpack.c.bf16 %v2073, %v2073
      %v2233 = vpack.c.bf16 %v2074, %v2074
      %v2234 = vpack.c.bf16 %v2075, %v2075
      %v2235 = vpack.c.bf16 %v2076, %v2076
      %v2236 = vpack.c.bf16 %v2077, %v2077
      %v2237 = vpack.c.bf16 %v2078, %v2078
      %v2238 = vpack.c.bf16 %v2079, %v2079
      %vm2239 = vcmask 519168
      %2240 = vst.msk [vmem:[%s430] sm:$0xf] %vm2239, %v2215
      %2241 = vst.msk [vmem:[%s430 + $0x4] sm:$0xf] %vm2239, %v2216
      %2242 = vst.msk [vmem:[%s430 + $0x8] sm:$0xf] %vm2239, %v2217
      %2243 = vst.msk [vmem:[%s430 + $0xc] sm:$0xf] %vm2239, %v2218
      %2244 = vst.msk [vmem:[%s430 + $0x10] sm:$0xf] %vm2239, %v2219
      %2245 = vst.msk [vmem:[%s430 + $0x14] sm:$0xf] %vm2239, %v2220
      %2246 = vst.msk [vmem:[%s430 + $0x18] sm:$0xf] %vm2239, %v2221
      %2247 = vst.msk [vmem:[%s430 + $0x1c] sm:$0xf] %vm2239, %v2222
      %2248 = vst.msk [vmem:[%s430 + $0x20] sm:$0xf] %vm2239, %v2223
      %2249 = vst.msk [vmem:[%s430 + $0x24] sm:$0xf] %vm2239, %v2224
      %2250 = vst.msk [vmem:[%s430 + $0x28] sm:$0xf] %vm2239, %v2225
      %2251 = vst.msk [vmem:[%s430 + $0x2c] sm:$0xf] %vm2239, %v2226
      %2252 = vst.msk [vmem:[%s430 + $0x30] sm:$0xf] %vm2239, %v2227
      %2253 = vst.msk [vmem:[%s430 + $0x34] sm:$0xf] %vm2239, %v2228
      %2254 = vst.msk [vmem:[%s430 + $0x38] sm:$0xf] %vm2239, %v2229
      %2255 = vst.msk [vmem:[%s430 + $0x3c] sm:$0xf] %vm2239, %v2230
      %2256 = vst.msk [vmem:[%s430 + $0x40] sm:$0xf] %vm2239, %v2231
      %2257 = vst.msk [vmem:[%s430 + $0x44] sm:$0xf] %vm2239, %v2232
      %2258 = vst.msk [vmem:[%s430 + $0x48] sm:$0xf] %vm2239, %v2233
      %2259 = vst.msk [vmem:[%s430 + $0x4c] sm:$0xf] %vm2239, %v2234
      %2260 = vst.msk [vmem:[%s430 + $0x50] sm:$0xf] %vm2239, %v2235
      %2261 = vst.msk [vmem:[%s430 + $0x54] sm:$0xf] %vm2239, %v2236
      %2262 = vst.msk [vmem:[%s430 + $0x58] sm:$0xf] %vm2239, %v2237
      %2263 = vst.msk [vmem:[%s430 + $0x5c] sm:$0xf] %vm2239, %v2238
      %s2264 = smul.u32 24, %s23
      %p2265 = scmp.lt.s32.totalorder %s22, 1
      %s2266 = scalar_select %p2265, %s22, 1
      %p2267 = scmp.lt.s32.totalorder %s2264, 47
      %s2268 = scalar_select %p2267, %s2264, 47
      %s2269 = smul.addr %s2266, 48
      %s2270 = sadd.s32 %s2268, %s2269
      %s2271 = smul.addr %s2270, 4
      %s2272 = scalar_lea.vmem %s5, %s2271
      %p2273 = scmp.lt.s32.totalorder %s22, 1
      %s2274 = scalar_select %p2273, %s22, 1
      %p2275 = scmp.lt.s32.totalorder %s23, 1
      %s2276 = scalar_select %p2275, %s23, 1
      %s2277 = smul.addr %s2274, 2
      %s2278 = sadd.s32 %s2276, %s2277
      %s2279 = smul.addr %s2278, 2
      %s2280 = scalar_lea.vmem %s6, %s2279
      // Predicated region
      $region41: #{_lambda_.4} parent=39 // pred_check
        %p2281 = pneg %p192
      $region42: #{_lambda_.4} parent=39 // pred_check_branch
        %2283 = sbr.rel (%p2281) target = $region44
      $region43: #{_lambda_.4} parent=39 // pred_region
        %s2284 = smul.u32 24, %s23
      $region44: #{_lambda_.4} parent=39 // pred_fallthru
        _
      // Predicated region
      $region45: #{_lambda_.4} parent=39 // pred_check
        %p2285 = pneg %p220
      $region46: #{_lambda_.4} parent=39 // pred_check_branch
        %2287 = sbr.rel (%p2285) target = $region48
      $region47: #{_lambda_.4} parent=39 // pred_region
        _
      $region48: #{_lambda_.4} parent=39 // pred_fallthru
        _
    $region40: #{_lambda_.4} parent=5 // pred_fallthru
      _
    %p2288 = scmp.le.s32.totalorder 2, %s13
    // Predicated region
    $region49: #{_lambda_.4} parent=5 // pred_check
      %p2289 = pneg %p2288
    $region50: #{_lambda_.4} parent=5 // pred_check_branch
      %2291 = sbr.rel (%p2289) target = $region52
    $region51: #{_lambda_.4} parent=5 // pred_region
      %s2292 = ssub.s32 %s13, 2
      // Predicated region
      $region53: #{_lambda_.4} parent=51 // pred_check
        %p2293 = pneg %p198
      $region54: #{_lambda_.4} parent=51 // pred_check_branch
        %2295 = sbr.rel (%p2293) target = $region56
      $region55: #{_lambda_.4} parent=51 // pred_region
        %s2296 = smul.u32 24, %s25
        %p2297 = scmp.lt.s32.totalorder %s24, 1
        %s2298 = scalar_select %p2297, %s24, 1
        %p2299 = scmp.lt.s32.totalorder %s2296, 47
        %s2300 = scalar_select %p2299, %s2296, 47
        %s2301 = smul.addr %s2298, 48
        %s2302 = sadd.s32 %s2300, %s2301
        %s2303 = smul.addr %s2302, 4
        %s2304 = scalar_lea.vmem %s5, %s2303
      $region56: #{_lambda_.4} parent=51 // pred_fallthru
        _
      // Predicated region
      $region57: #{_lambda_.4} parent=51 // pred_check
        %p2305 = pneg %p226
      $region58: #{_lambda_.4} parent=51 // pred_check_branch
        %2307 = sbr.rel (%p2305) target = $region60
      $region59: #{_lambda_.4} parent=51 // pred_region
        %p2308 = scmp.lt.s32.totalorder %s24, 1
        %s2309 = scalar_select %p2308, %s24, 1
        %p2310 = scmp.lt.s32.totalorder %s25, 1
        %s2311 = scalar_select %p2310, %s25, 1
        %s2312 = smul.addr %s2309, 2
        %s2313 = sadd.s32 %s2311, %s2312
        %s2314 = smul.addr %s2313, 2
        %s2315 = scalar_lea.vmem %s6, %s2314
      $region60: #{_lambda_.4} parent=51 // pred_fallthru
        _
    $region52: #{_lambda_.4} parent=5 // pred_fallthru
      _
  $region6: #{_lambda_.4} parent=0 // loop_footer
    %s17 = sadd.s32 1, %s13
  $region7: #{_lambda_.4} parent=0 // loop_footer_branch
    %12 = sbr.rel target = $region3
  $region8: #{_lambda_.4} parent=0 // loop_exit
    _

// kernel: _lambda_.6
$region0: #{_lambda_.6}
  #allocation0 [shape = 'u32[]', space=smem, size = 0x4, offset = 0x4, fixed_abs, tag = 'smem constant byte address 0x4 - core index']
  #allocation1 [shape = 'u32[72,128]{1,0:T(1,128)}', space=vmem, size = 0x9000, scoped, tag = 'internal scratch']
  %s0 = inlined_call_operand.vmem [shape: bf16[2,384,64], index: 0, kind: input, shape index: {}, may-alias: {0,1,2}]
  %s1 = inlined_call_operand.vmem [shape: bf16[2,384,64], index: 1, kind: input, shape index: {}, may-alias: {0,1,2}]
  %s2 = inlined_call_operand.vmem [shape: bf16[2,384,64], index: 2, kind: input, shape index: {}, may-alias: {0,1,2}]
  %s3 = inlined_call_operand.vmem [shape: f32[1,64], index: 3, kind: input, shape index: {}]
  %s4 = inlined_call_operand.vmem [shape: f32[1,64], index: 4, kind: input, shape index: {}]
  %s5 = inlined_call_operand.vmem [shape: bf16[9,64,64], index: 5, kind: input, shape index: {}]
  %s6 = inlined_call_operand.vmem [shape: f32[1,64], index: 6, kind: input, shape index: {}]
  %s7 = inlined_call_operand.vmem [shape: bf16[2,384,64], index: 7, kind: input, shape index: {}]
  %s8 = inlined_call_operand.vmem [shape: bf16[2,384,64], index: 8, kind: output, shape index: {}]
  %s9 = sld [smem:[#allocation0]]
  $region65: #{_lambda_.6} parent=0
    _
  %s11 = ssub.s32 1, %s9
  %s12 = scalar_select 0, %s11, %s9
  loop: start=0, step=1, limit=6
  $region2: #{_lambda_.6} parent=0 // loop_pre_header
    _
  $region3: #{_lambda_.6} parent=0 // loop_header
    %s14 = sphi 0, %s18
    %p15 = scmp.ge.s32.totalorder %s14, 6
    %s21 = sphi 0, %s33
    %s22 = sphi 0, %s29
    %s23 = sphi 0, %s21
    %s24 = sphi 0, %s22
    %s25 = sphi 0, %s23
    %s26 = sphi 0, %s24
    %s46 = sphi 0, %s48
    %s49 = sphi 0, %s46
    %s50 = sphi 0, %s49
    %s66 = sphi 0, %s50
    %s74 = sphi 0, %s76
    %s77 = sphi 0, %s74
    %s78 = sphi 0, %s77
    %s94 = sphi 0, %s78
    %s110 = sphi 0, %s112
    %s113 = sphi 0, %s110
    %s114 = sphi 0, %s113
    %s130 = sphi 0, %s114
    %s134 = sphi 0, %s134
    %s136 = sphi 0, %s134
    %s137 = sphi 0, %s136
    %s151 = sphi 0, %s137
    %s155 = sphi 0, %s155
    %s157 = sphi 0, %s155
    %s158 = sphi 0, %s157
    %s172 = sphi 0, %s158
    %s176 = sphi 0, %s176
    %s178 = sphi 0, %s176
    %s179 = sphi 0, %s178
    %s193 = sphi 0, %s179
    %s197 = sphi 0, %s197
    %s199 = sphi 0, %s197
    %s200 = sphi 0, %s199
    %s214 = sphi 0, %s200
    %s222 = sphi 0, %s224
    %s225 = sphi 0, %s222
    %s226 = sphi 0, %s225
    %s242 = sphi 0, %s226
    %s250 = sphi 0, %s252
    %s253 = sphi 0, %s250
    %s254 = sphi 0, %s253
    %s270 = sphi 0, %s254
  $region4: #{_lambda_.6} parent=0 // loop_header_branch
    %17 = sbr.rel (%p15) target = $region8
  $region5: #{_lambda_.6} parent=0 // loop_body
    %s19 = ssub.s32 %s14, 1
    %s20 = ssub.s32 %s14, 2
    %s27 = sadd.s32 1, %s22
    %p28 = scmp.ge.s32.totalorder %s27, 2
    %s29 = scalar_select %p28, 0, %s27
    %s30 = sadd.s32 1, %s21
    %s31 = scalar_select %p28, %s30, %s21
    %p32 = scmp.ge.s32.totalorder %s31, 2
    %s33 = scalar_select %p32, 0, %s31
    %s34 = smul.u32 %s22, 4
    %s35 = ssub.s32 %s34, 1
    %p36 = scmp.gt.s32.totalorder %s35, 0
    %s37 = scalar_select %p36, %s35, 0
    %s38 = smul.u32 %s29, 4
    %s39 = ssub.s32 %s38, 1
    %p40 = scmp.gt.s32.totalorder %s39, 0
    %s41 = scalar_select %p40, %s39, 0
    %s42 = ssub.s32 %s21, %s33
    %s43 = ssub.s32 %s37, %s41
    %s44 = sor.u32 %s42, %s43
    %p45 = scmp.eq.s32.totalorder %s44, 0
    %s47 = sadd.s32 %s46, 1
    %s48 = scalar_select %p45, %s46, %s47
    %p51 = pneg %p45
    %p52 = scmp.eq.s32.totalorder %s14, 3
    %p53 = por %p51, %p52
    %p54 = scmp.ne.s32.totalorder %s46, %s49
    %p55 = scmp.eq.s32.totalorder %s14, 0
    %p56 = por %p54, %p55
    %p57 = scmp.ne.s32.totalorder %s46, %s49
    %p58 = scmp.eq.s32.totalorder %s19, 3
    %p59 = por %p57, %p58
    %p60 = scmp.ne.s32.totalorder %s49, %s50
    %p61 = scmp.eq.s32.totalorder %s19, 0
    %p62 = por %p60, %p61
    %p63 = scmp.ne.s32.totalorder %s49, %s50
    %p64 = scmp.eq.s32.totalorder %s20, 3
    %p65 = por %p63, %p64
    %p67 = scmp.ne.s32.totalorder %s50, %s66
    %p68 = scmp.eq.s32.totalorder %s20, 0
    %p69 = por %p67, %p68
    %s70 = ssub.s32 %s21, %s33
    %s71 = ssub.s32 %s22, %s29
    %s72 = sor.u32 %s70, %s71
    %p73 = scmp.eq.s32.totalorder %s72, 0
    %s75 = sadd.s32 %s74, 1
    %s76 = scalar_select %p73, %s74, %s75
    %p79 = pneg %p73
    %p80 = scmp.eq.s32.totalorder %s14, 3
    %p81 = por %p79, %p80
    %p82 = scmp.ne.s32.totalorder %s74, %s77
    %p83 = scmp.eq.s32.totalorder %s14, 0
    %p84 = por %p82, %p83
    %p85 = scmp.ne.s32.totalorder %s74, %s77
    %p86 = scmp.eq.s32.totalorder %s19, 3
    %p87 = por %p85, %p86
    %p88 = scmp.ne.s32.totalorder %s77, %s78
    %p89 = scmp.eq.s32.totalorder %s19, 0
    %p90 = por %p88, %p89
    %p91 = scmp.ne.s32.totalorder %s77, %s78
    %p92 = scmp.eq.s32.totalorder %s20, 3
    %p93 = por %p91, %p92
    %p95 = scmp.ne.s32.totalorder %s78, %s94
    %p96 = scmp.eq.s32.totalorder %s20, 0
    %p97 = por %p95, %p96
    %s98 = sadd.s32 %s22, 1
    %s99 = smul.u32 %s98, 4
    %p100 = scmp.lt.s32.totalorder %s99, 7
    %s101 = scalar_select %p100, %s99, 7
    %s102 = sadd.s32 %s29, 1
    %s103 = smul.u32 %s102, 4
    %p104 = scmp.lt.s32.totalorder %s103, 7
    %s105 = scalar_select %p104, %s103, 7
    %s106 = ssub.s32 %s21, %s33
    %s107 = ssub.s32 %s101, %s105
    %s108 = sor.u32 %s106, %s107
    %p109 = scmp.eq.s32.totalorder %s108, 0
    %s111 = sadd.s32 %s110, 1
    %s112 = scalar_select %p109, %s110, %s111
    %p115 = pneg %p109
    %p116 = scmp.eq.s32.totalorder %s14, 3
    %p117 = por %p115, %p116
    %p118 = scmp.ne.s32.totalorder %s110, %s113
    %p119 = scmp.eq.s32.totalorder %s14, 0
    %p120 = por %p118, %p119
    %p121 = scmp.ne.s32.totalorder %s110, %s113
    %p122 = scmp.eq.s32.totalorder %s19, 3
    %p123 = por %p121, %p122
    %p124 = scmp.ne.s32.totalorder %s113, %s114
    %p125 = scmp.eq.s32.totalorder %s19, 0
    %p126 = por %p124, %p125
    %p127 = scmp.ne.s32.totalorder %s113, %s114
    %p128 = scmp.eq.s32.totalorder %s20, 3
    %p129 = por %p127, %p128
    %p131 = scmp.ne.s32.totalorder %s114, %s130
    %p132 = scmp.eq.s32.totalorder %s20, 0
    %p133 = por %p131, %p132
    %s135 = sadd.s32 %s134, 1
    %p138 = scmp.eq.s32.totalorder %s14, 3
    %p139 = scmp.ne.s32.totalorder %s134, %s136
    %p140 = scmp.eq.s32.totalorder %s14, 0
    %p141 = por %p139, %p140
    %p142 = scmp.ne.s32.totalorder %s134, %s136
    %p143 = scmp.eq.s32.totalorder %s19, 3
    %p144 = por %p142, %p143
    %p145 = scmp.ne.s32.totalorder %s136, %s137
    %p146 = scmp.eq.s32.totalorder %s19, 0
    %p147 = por %p145, %p146
    %p148 = scmp.ne.s32.totalorder %s136, %s137
    %p149 = scmp.eq.s32.totalorder %s20, 3
    %p150 = por %p148, %p149
    %p152 = scmp.ne.s32.totalorder %s137, %s151
    %p153 = scmp.eq.s32.totalorder %s20, 0
    %p154 = por %p152, %p153
    %s156 = sadd.s32 %s155, 1
    %p159 = scmp.eq.s32.totalorder %s14, 3
    %p160 = scmp.ne.s32.totalorder %s155, %s157
    %p161 = scmp.eq.s32.totalorder %s14, 0
    %p162 = por %p160, %p161
    %p163 = scmp.ne.s32.totalorder %s155, %s157
    %p164 = scmp.eq.s32.totalorder %s19, 3
    %p165 = por %p163, %p164
    %p166 = scmp.ne.s32.totalorder %s157, %s158
    %p167 = scmp.eq.s32.totalorder %s19, 0
    %p168 = por %p166, %p167
    %p169 = scmp.ne.s32.totalorder %s157, %s158
    %p170 = scmp.eq.s32.totalorder %s20, 3
    %p171 = por %p169, %p170
    %p173 = scmp.ne.s32.totalorder %s158, %s172
    %p174 = scmp.eq.s32.totalorder %s20, 0
    %p175 = por %p173, %p174
    %s177 = sadd.s32 %s176, 1
    %p180 = scmp.eq.s32.totalorder %s14, 3
    %p181 = scmp.ne.s32.totalorder %s176, %s178
    %p182 = scmp.eq.s32.totalorder %s14, 0
    %p183 = por %p181, %p182
    %p184 = scmp.ne.s32.totalorder %s176, %s178
    %p185 = scmp.eq.s32.totalorder %s19, 3
    %p186 = por %p184, %p185
    %p187 = scmp.ne.s32.totalorder %s178, %s179
    %p188 = scmp.eq.s32.totalorder %s19, 0
    %p189 = por %p187, %p188
    %p190 = scmp.ne.s32.totalorder %s178, %s179
    %p191 = scmp.eq.s32.totalorder %s20, 3
    %p192 = por %p190, %p191
    %p194 = scmp.ne.s32.totalorder %s179, %s193
    %p195 = scmp.eq.s32.totalorder %s20, 0
    %p196 = por %p194, %p195
    %s198 = sadd.s32 %s197, 1
    %p201 = scmp.eq.s32.totalorder %s14, 3
    %p202 = scmp.ne.s32.totalorder %s197, %s199
    %p203 = scmp.eq.s32.totalorder %s14, 0
    %p204 = por %p202, %p203
    %p205 = scmp.ne.s32.totalorder %s197, %s199
    %p206 = scmp.eq.s32.totalorder %s19, 3
    %p207 = por %p205, %p206
    %p208 = scmp.ne.s32.totalorder %s199, %s200
    %p209 = scmp.eq.s32.totalorder %s19, 0
    %p210 = por %p208, %p209
    %p211 = scmp.ne.s32.totalorder %s199, %s200
    %p212 = scmp.eq.s32.totalorder %s20, 3
    %p213 = por %p211, %p212
    %p215 = scmp.ne.s32.totalorder %s200, %s214
    %p216 = scmp.eq.s32.totalorder %s20, 0
    %p217 = por %p215, %p216
    %s218 = ssub.s32 %s21, %s33
    %s219 = ssub.s32 %s22, %s29
    %s220 = sor.u32 %s218, %s219
    %p221 = scmp.eq.s32.totalorder %s220, 0
    %s223 = sadd.s32 %s222, 1
    %s224 = scalar_select %p221, %s222, %s223
    %p227 = pneg %p221
    %p228 = scmp.eq.s32.totalorder %s14, 3
    %p229 = por %p227, %p228
    %p230 = scmp.ne.s32.totalorder %s222, %s225
    %p231 = scmp.eq.s32.totalorder %s14, 0
    %p232 = por %p230, %p231
    %p233 = scmp.ne.s32.totalorder %s222, %s225
    %p234 = scmp.eq.s32.totalorder %s19, 3
    %p235 = por %p233, %p234
    %p236 = scmp.ne.s32.totalorder %s225, %s226
    %p237 = scmp.eq.s32.totalorder %s19, 0
    %p238 = por %p236, %p237
    %p239 = scmp.ne.s32.totalorder %s225, %s226
    %p240 = scmp.eq.s32.totalorder %s20, 3
    %p241 = por %p239, %p240
    %p243 = scmp.ne.s32.totalorder %s226, %s242
    %p244 = scmp.eq.s32.totalorder %s20, 0
    %p245 = por %p243, %p244
    %s246 = ssub.s32 %s21, %s33
    %s247 = ssub.s32 %s22, %s29
    %s248 = sor.u32 %s246, %s247
    %p249 = scmp.eq.s32.totalorder %s248, 0
    %s251 = sadd.s32 %s250, 1
    %s252 = scalar_select %p249, %s250, %s251
    %p255 = pneg %p249
    %p256 = scmp.eq.s32.totalorder %s14, 3
    %p257 = por %p255, %p256
    %p258 = scmp.ne.s32.totalorder %s250, %s253
    %p259 = scmp.eq.s32.totalorder %s14, 0
    %p260 = por %p258, %p259
    %p261 = scmp.ne.s32.totalorder %s250, %s253
    %p262 = scmp.eq.s32.totalorder %s19, 3
    %p263 = por %p261, %p262
    %p264 = scmp.ne.s32.totalorder %s253, %s254
    %p265 = scmp.eq.s32.totalorder %s19, 0
    %p266 = por %p264, %p265
    %p267 = scmp.ne.s32.totalorder %s253, %s254
    %p268 = scmp.eq.s32.totalorder %s20, 3
    %p269 = por %p267, %p268
    %p271 = scmp.ne.s32.totalorder %s254, %s270
    %p272 = scmp.eq.s32.totalorder %s20, 0
    %p273 = por %p271, %p272
    %p274 = scmp.le.s32.totalorder 1, %s14
    %p275 = scmp.lt.s32.totalorder %s14, 5
    %p276 = pnand %p274, %p275
    %p277 = pneg %p276
    // Predicated region
    $region9: #{_lambda_.6} parent=5 // pred_check
      _
    $region10: #{_lambda_.6} parent=5 // pred_check_branch
      %279 = sbr.rel (%p276) target = $region12
    $region11: #{_lambda_.6} parent=5 // pred_region
      %s280 = ssub.s32 %s14, 1
      // Predicated region
      $region13: #{_lambda_.6} parent=11 // pred_check
        %p281 = pneg %p147
      $region14: #{_lambda_.6} parent=11 // pred_check_branch
        %283 = sbr.rel (%p281) target = $region16
      $region15: #{_lambda_.6} parent=11 // pred_region
        _
      $region16: #{_lambda_.6} parent=11 // pred_fallthru
        _
      // Predicated region
      $region17: #{_lambda_.6} parent=11 // pred_check
        %p284 = pneg %p168
      $region18: #{_lambda_.6} parent=11 // pred_check_branch
        %286 = sbr.rel (%p284) target = $region20
      $region19: #{_lambda_.6} parent=11 // pred_region
        _
      $region20: #{_lambda_.6} parent=11 // pred_fallthru
        _
      // Predicated region
      $region21: #{_lambda_.6} parent=11 // pred_check
        %p287 = pneg %p189
      $region22: #{_lambda_.6} parent=11 // pred_check_branch
        %289 = sbr.rel (%p287) target = $region24
      $region23: #{_lambda_.6} parent=11 // pred_region
        _
      $region24: #{_lambda_.6} parent=11 // pred_fallthru
        _
      // Predicated region
      $region25: #{_lambda_.6} parent=11 // pred_check
        %p290 = pneg %p210
      $region26: #{_lambda_.6} parent=11 // pred_check_branch
        %292 = sbr.rel (%p290) target = $region28
      $region27: #{_lambda_.6} parent=11 // pred_region
        _
      $region28: #{_lambda_.6} parent=11 // pred_fallthru
        _
    $region12: #{_lambda_.6} parent=5 // pred_fallthru
      _
    %p293 = scmp.lt.s32.totalorder %s14, 4
    // Predicated region
    $region29: #{_lambda_.6} parent=5 // pred_check
      %p294 = pneg %p293
    $region30: #{_lambda_.6} parent=5 // pred_check_branch
      %296 = sbr.rel (%p294) target = $region32
    $region31: #{_lambda_.6} parent=5 // pred_region
      // Predicated region
      $region33: #{_lambda_.6} parent=31 // pred_check
        %p297 = pneg %p56
      $region34: #{_lambda_.6} parent=31 // pred_check_branch
        %299 = sbr.rel (%p297) target = $region36
      $region35: #{_lambda_.6} parent=31 // pred_region
        %s300 = smul.u32 %s22, 4
        %s301 = ssub.s32 %s300, 1
        %p302 = scmp.gt.s32.totalorder %s301, 0
        %s303 = scalar_select %p302, %s301, 0
        %s304 = smul.u32 6, %s303
        %p305 = scmp.lt.s32.totalorder %s21, 1
        %s306 = scalar_select %p305, %s21, 1
        %p307 = scmp.lt.s32.totalorder %s304, 47
        %s308 = scalar_select %p307, %s304, 47
        %s309 = smul.addr %s306, 48
        %s310 = sadd.s32 %s308, %s309
        %s311 = smul.addr %s310, 4
        %s312 = scalar_lea.vmem %s0, %s311
        %s313 = smul.u32 %s22, 4
        %s314 = ssub.s32 %s313, 1
        %p315 = scmp.gt.s32.totalorder %s314, 0
        %s316 = scalar_select %p315, %s314, 0
        %s317 = smul.u32 6, %s316
      $region36: #{_lambda_.6} parent=31 // pred_fallthru
        _
      // Predicated region
      $region37: #{_lambda_.6} parent=31 // pred_check
        %p318 = pneg %p84
      $region38: #{_lambda_.6} parent=31 // pred_check_branch
        %320 = sbr.rel (%p318) target = $region40
      $region39: #{_lambda_.6} parent=31 // pred_region
        %s321 = smul.u32 24, %s22
        %p322 = scmp.lt.s32.totalorder %s21, 1
        %s323 = scalar_select %p322, %s21, 1
        %p324 = scmp.lt.s32.totalorder %s321, 47
        %s325 = scalar_select %p324, %s321, 47
        %s326 = smul.addr %s323, 48
        %s327 = sadd.s32 %s325, %s326
        %s328 = smul.addr %s327, 4
        %s329 = scalar_lea.vmem %s1, %s328
        %s330 = smul.u32 24, %s22
      $region40: #{_lambda_.6} parent=31 // pred_fallthru
        _
      // Predicated region
      $region41: #{_lambda_.6} parent=31 // pred_check
        %p331 = pneg %p120
      $region42: #{_lambda_.6} parent=31 // pred_check_branch
        %333 = sbr.rel (%p331) target = $region44
      $region43: #{_lambda_.6} parent=31 // pred_region
        %s334 = sadd.s32 %s22, 1
        %s335 = smul.u32 %s334, 4
        %p336 = scmp.lt.s32.totalorder %s335, 7
        %s337 = scalar_select %p336, %s335, 7
        %s338 = smul.u32 6, %s337
        %p339 = scmp.lt.s32.totalorder %s21, 1
        %s340 = scalar_select %p339, %s21, 1
        %p341 = scmp.lt.s32.totalorder %s338, 47
        %s342 = scalar_select %p341, %s338, 47
        %s343 = smul.addr %s340, 48
        %s344 = sadd.s32 %s342, %s343
        %s345 = smul.addr %s344, 4
        %s346 = scalar_lea.vmem %s2, %s345
        %s347 = sadd.s32 %s22, 1
        %s348 = smul.u32 %s347, 4
        %p349 = scmp.lt.s32.totalorder %s348, 7
        %s350 = scalar_select %p349, %s348, 7
        %s351 = smul.u32 6, %s350
      $region44: #{_lambda_.6} parent=31 // pred_fallthru
        _
      // Predicated region
      $region45: #{_lambda_.6} parent=31 // pred_check
        %p352 = pneg %p232
      $region46: #{_lambda_.6} parent=31 // pred_check_branch
        %354 = sbr.rel (%p352) target = $region48
      $region47: #{_lambda_.6} parent=31 // pred_region
        %s355 = smul.u32 24, %s22
        %p356 = scmp.lt.s32.totalorder %s21, 1
        %s357 = scalar_select %p356, %s21, 1
        %p358 = scmp.lt.s32.totalorder %s355, 47
        %s359 = scalar_select %p358, %s355, 47
        %s360 = smul.addr %s357, 48
        %s361 = sadd.s32 %s359, %s360
        %s362 = smul.addr %s361, 4
        %s363 = scalar_lea.vmem %s7, %s362
        %s364 = smul.u32 24, %s22
      $region48: #{_lambda_.6} parent=31 // pred_fallthru
        _
    $region32: #{_lambda_.6} parent=5 // pred_fallthru
      _
    %p365 = scmp.le.s32.totalorder 1, %s14
    %p366 = scmp.lt.s32.totalorder %s14, 5
    %p367 = pnand %p365, %p366
    %p368 = pneg %p367
    // Predicated region
    $region49: #{_lambda_.6} parent=5 // pred_check
      _
    $region50: #{_lambda_.6} parent=5 // pred_check_branch
      %370 = sbr.rel (%p367) target = $region52
    $region51: #{_lambda_.6} parent=5 // pred_region
      %s371 = ssub.s32 %s14, 1
      %s372 = smul.u32 %s24, 4
      %s373 = ssub.s32 %s372, 1
      %p374 = scmp.gt.s32.totalorder %s373, 0
      %s375 = scalar_select %p374, %s373, 0
      %s376 = smul.u32 6, %s375
      %p377 = scmp.lt.s32.totalorder %s23, 1
      %s378 = scalar_select %p377, %s23, 1
      %p379 = scmp.lt.s32.totalorder %s376, 47
      %s380 = scalar_select %p379, %s376, 47
      %s381 = smul.addr %s378, 48
      %s382 = sadd.s32 %s380, %s381
      %s383 = smul.addr %s382, 4
      %s384 = scalar_lea.vmem %s0, %s383
      %p385 = pneg %p62
      %p386 = pneg %p59
      %s387 = smul.u32 24, %s24
      %p388 = scmp.lt.s32.totalorder %s23, 1
      %s389 = scalar_select %p388, %s23, 1
      %p390 = scmp.lt.s32.totalorder %s387, 47
      %s391 = scalar_select %p390, %s387, 47
      %s392 = smul.addr %s389, 48
      %s393 = sadd.s32 %s391, %s392
      %s394 = smul.addr %s393, 4
      %s395 = scalar_lea.vmem %s1, %s394
      %p396 = pneg %p90
      %p397 = pneg %p87
      %s398 = sadd.s32 %s24, 1
      %s399 = smul.u32 %s398, 4
      %p400 = scmp.lt.s32.totalorder %s399, 7
      %s401 = scalar_select %p400, %s399, 7
      %s402 = smul.u32 6, %s401
      %p403 = scmp.lt.s32.totalorder %s23, 1
      %s404 = scalar_select %p403, %s23, 1
      %p405 = scmp.lt.s32.totalorder %s402, 47
      %s406 = scalar_select %p405, %s402, 47
      %s407 = smul.addr %s404, 48
      %s408 = sadd.s32 %s406, %s407
      %s409 = smul.addr %s408, 4
      %s410 = scalar_lea.vmem %s2, %s409
      %p411 = pneg %p126
      %p412 = pneg %p123
      %p413 = pneg %p147
      %p414 = pneg %p144
      %p415 = pneg %p168
      %p416 = pneg %p165
      %p417 = pneg %p189
      %p418 = pneg %p186
      %p419 = pneg %p210
      %p420 = pneg %p207
      %s421 = smul.u32 24, %s24
      %p422 = scmp.lt.s32.totalorder %s23, 1
      %s423 = scalar_select %p422, %s23, 1
      %p424 = scmp.lt.s32.totalorder %s421, 47
      %s425 = scalar_select %p424, %s421, 47
      %s426 = smul.addr %s423, 48
      %s427 = sadd.s32 %s425, %s426
      %s428 = smul.addr %s427, 4
      %s429 = scalar_lea.vmem %s7, %s428
      %p430 = pneg %p238
      %p431 = pneg %p235
      %p432 = pneg %p266
      %p433 = pneg %p263
      %s434 = smul.u32 24, %s24
      %p435 = scmp.lt.s32.totalorder %s23, 1
      %s436 = scalar_select %p435, %s23, 1
      %p437 = scmp.lt.s32.totalorder %s434, 47
      %s438 = scalar_select %p437, %s434, 47
      %s439 = smul.addr %s436, 48
      %s440 = sadd.s32 %s438, %s439
      %s441 = smul.addr %s440, 4
      %s442 = scalar_lea.vmem %s8, %s441
      %s443 = smul.u32 %s24, 4
      %s444 = ssub.s32 %s443, 1
      %p445 = scmp.gt.s32.totalorder %s444, 0
      %s446 = scalar_select %p445, %s444, 0
      %s447 = smul.u32 6, %s446
      %p448 = scmp.lt.s32.totalorder %s23, 1
      %s449 = scalar_select %p448, %s23, 1
      %p450 = scmp.lt.s32.totalorder %s447, 47
      %s451 = scalar_select %p450, %s447, 47
      %s452 = smul.addr %s449, 48
      %s453 = sadd.s32 %s451, %s452
      %s454 = smul.addr %s453, 4
      %s455 = scalar_lea.vmem %s0, %s454
      %s456 = smul.u32 %s24, 4
      %s457 = ssub.s32 %s456, 1
      %p458 = scmp.gt.s32.totalorder %s457, 0
      %s459 = scalar_select %p458, %s457, 0
      %s460 = smul.u32 6, %s459
      %s461 = smul.u32 24, %s24
      %p462 = scmp.lt.s32.totalorder %s23, 1
      %s463 = scalar_select %p462, %s23, 1
      %p464 = scmp.lt.s32.totalorder %s461, 47
      %s465 = scalar_select %p464, %s461, 47
      %s466 = smul.addr %s463, 48
      %s467 = sadd.s32 %s465, %s466
      %s468 = smul.addr %s467, 4
      %s469 = scalar_lea.vmem %s1, %s468
      %s470 = smul.u32 24, %s24
      %s471 = sadd.s32 %s24, 1
      %s472 = smul.u32 %s471, 4
      %p473 = scmp.lt.s32.totalorder %s472, 7
      %s474 = scalar_select %p473, %s472, 7
      %s475 = smul.u32 6, %s474
      %p476 = scmp.lt.s32.totalorder %s23, 1
      %s477 = scalar_select %p476, %s23, 1
      %p478 = scmp.lt.s32.totalorder %s475, 47
      %s479 = scalar_select %p478, %s475, 47
      %s480 = smul.addr %s477, 48
      %s481 = sadd.s32 %s479, %s480
      %s482 = smul.addr %s481, 4
      %s483 = scalar_lea.vmem %s2, %s482
      %s484 = sadd.s32 %s24, 1
      %s485 = smul.u32 %s484, 4
      %p486 = scmp.lt.s32.totalorder %s485, 7
      %s487 = scalar_select %p486, %s485, 7
      %s488 = smul.u32 6, %s487
      %s489 = smul.u32 24, %s24
      %p490 = scmp.lt.s32.totalorder %s23, 1
      %s491 = scalar_select %p490, %s23, 1
      %p492 = scmp.lt.s32.totalorder %s489, 47
      %s493 = scalar_select %p492, %s489, 47
      %s494 = smul.addr %s491, 48
      %s495 = sadd.s32 %s493, %s494
      %s496 = smul.addr %s495, 4
      %s497 = scalar_lea.vmem %s7, %s496
      %s498 = smul.u32 24, %s24
      %s499 = smul.u32 24, %s24
      %p500 = scmp.lt.s32.totalorder %s23, 1
      %s501 = scalar_select %p500, %s23, 1
      %p502 = scmp.lt.s32.totalorder %s499, 47
      %s503 = scalar_select %p502, %s499, 47
      %s504 = smul.addr %s501, 48
      %s505 = sadd.s32 %s503, %s504
      %s506 = smul.addr %s505, 4
      %s507 = scalar_lea.vmem %s8, %s506
      %s508 = smul.u32 24, %s24
      %v510 = vlaneseq
      %v511 = vshrl.u32 %v510, 7
      %v512 = vadd.s32 %v511, 8
      %v513 = vadd.s32 %v511, 16
      %vm514 = vcmp.lt.s32.totalorder %v511, 16
      %vm515 = vcmp.lt.s32.totalorder %v512, 16
      %vm516 = vcmp.lt.s32.totalorder %v513, 16
      %v517 = vadd.s32 %v511, 24
      %v518 = vadd.s32 %v511, 32
      %v519 = vadd.s32 %v511, 40
      %vm520 = vcmp.ge.s32.totalorder %v513, 24
      %vm521 = vcmp.ge.s32.totalorder %v517, 24
      %vm522 = vcmp.ge.s32.totalorder %v518, 24
      %vm523 = vcmp.ge.s32.totalorder %v519, 24
      %vm524 = vcmp.lt.s32.totalorder %v513, 40
      %vm525 = vcmp.lt.s32.totalorder %v517, 40
      %vm526 = vcmp.lt.s32.totalorder %v518, 40
      %vm527 = vcmp.lt.s32.totalorder %v519, 40
      %vm528 = vmand %vm520, %vm524
      %vm529 = vmand %vm521, %vm525
      %vm530 = vmand %vm522, %vm526
      %vm531 = vmand %vm523, %vm527
      %p532 = scmp.ge.s32.totalorder %s24, 1
      %s533 = scalar_select %p532, 1, 0
      %v534 = vstv %s533
      %vm535 = vcmp.eq.s32.totalorder %v534, 1
      %vm536 = vmand %vm528, %vm535
      %vm537 = vmand %vm529, %vm535
      %vm538 = vmand %vm530, %vm535
      %vm539 = vmand %vm531, %vm535
      %vm540 = vcmp.lt.s32.totalorder %v517, 16
      %p541 = scmp.lt.s32.totalorder %s24, 1
      %s542 = scalar_select %p541, 1, 0
      %v543 = vstv %s542
      %vm544 = vcmp.eq.s32.totalorder %v543, 1
      %vm545 = vmand %vm514, %vm544
      %vm546 = vmand %vm515, %vm544
      %vm547 = vmand %vm516, %vm544
      %vm548 = vmand %vm540, %vm544
      %v549 = vld [vmem:[%s455 + $0x8] sm:$0xf]
      %v550 = vld [vmem:[%s455 + $0xc] sm:$0xf]
      %v551 = vld [vmem:[%s455 + $0x10] sm:$0xf]
      %v552 = vld [vmem:[%s455 + $0x14] sm:$0xf]
      %v553 = vunpack.c.l.bf16 %v549
      %v554 = vunpack.c.l.bf16 %v550
      %v555 = vunpack.c.l.bf16 %v551
      %v556 = vunpack.c.l.bf16 %v552
      %v557 = vld [vmem:[%s483] sm:$0xf]
      %v558 = vld [vmem:[%s483 + $0x4] sm:$0xf]
      %v559 = vld [vmem:[%s483 + $0x8] sm:$0xf]
      %v560 = vld [vmem:[%s483 + $0xc] sm:$0xf]
      %v561 = vunpack.c.l.bf16 %v557
      %v562 = vunpack.c.l.bf16 %v558
      %v563 = vunpack.c.l.bf16 %v559
      %v564 = vunpack.c.l.bf16 %v560
      %v565 = vld [vmem:[%s3] sm:$0x1]
      %v566 = vld [vmem:[%s4] sm:$0x1]
      %v568 = vperm.slane %v565, 0
      %v570 = vmul.f32 %v553, %v568
      %v571 = vmul.f32 %v554, %v568
      %v572 = vmul.f32 %v555, %v568
      %v573 = vmul.f32 %v556, %v568
      %v575 = vperm.slane %v566, 0
      %v577 = vadd.f32 %v570, %v575
      %v578 = vadd.f32 %v571, %v575
      %v579 = vadd.f32 %v572, %v575
      %v580 = vadd.f32 %v573, %v575
      %vm581 = vcmp.gt.f32.partialorder %v577, 0.0
      %vm582 = vcmp.gt.f32.partialorder %v578, 0.0
      %vm583 = vcmp.gt.f32.partialorder %v579, 0.0
      %vm584 = vcmp.gt.f32.partialorder %v580, 0.0
      %v585 = vmul.f32 %v577, 0.2
      %v586 = vmul.f32 %v578, 0.2
      %v587 = vmul.f32 %v579, 0.2
      %v588 = vmul.f32 %v580, 0.2
      %v589 = vsel %vm581, %v577, %v585
      %v590 = vsel %vm582, %v578, %v586
      %v591 = vsel %vm583, %v579, %v587
      %v592 = vsel %vm584, %v580, %v588
      %v593 = vsel %vm536, 1, 0
      %v594 = vsel %vm537, 1, 0
      %v595 = vsel %vm538, 1, 0
      %v596 = vsel %vm539, 1, 0
      %vm597 = vcmp.eq.s32.totalorder %v593, 1
      %vm598 = vcmp.eq.s32.totalorder %v594, 1
      %vm599 = vcmp.eq.s32.totalorder %v595, 1
      %vm600 = vcmp.eq.s32.totalorder %v596, 1
      %v601 = vsel %vm597, %v589, 0.0
      %v602 = vsel %vm598, %v590, 0.0
      %v603 = vsel %vm599, %v591, 0.0
      %v604 = vsel %vm600, %v592, 0.0
      %v605 = vmul.f32 %v561, %v568
      %v606 = vmul.f32 %v562, %v568
      %v607 = vmul.f32 %v563, %v568
      %v608 = vmul.f32 %v564, %v568
      %v609 = vadd.f32 %v605, %v575
      %v610 = vadd.f32 %v606, %v575
      %v611 = vadd.f32 %v607, %v575
      %v612 = vadd.f32 %v608, %v575
      %vm613 = vcmp.gt.f32.partialorder %v609, 0.0
      %vm614 = vcmp.gt.f32.partialorder %v610, 0.0
      %vm615 = vcmp.gt.f32.partialorder %v611, 0.0
      %vm616 = vcmp.gt.f32.partialorder %v612, 0.0
      %v617 = vmul.f32 %v609, 0.2
      %v618 = vmul.f32 %v610, 0.2
      %v619 = vmul.f32 %v611, 0.2
      %v620 = vmul.f32 %v612, 0.2
      %v621 = vsel %vm613, %v609, %v617
      %v622 = vsel %vm614, %v610, %v618
      %v623 = vsel %vm615, %v611, %v619
      %v624 = vsel %vm616, %v612, %v620
      %v625 = vsel %vm545, 1, 0
      %v626 = vsel %vm546, 1, 0
      %v627 = vsel %vm547, 1, 0
      %v628 = vsel %vm548, 1, 0
      %vm629 = vcmp.eq.s32.totalorder %v625, 1
      %vm630 = vcmp.eq.s32.totalorder %v626, 1
      %vm631 = vcmp.eq.s32.totalorder %v627, 1
      %vm632 = vcmp.eq.s32.totalorder %v628, 1
      %v633 = vsel %vm629, %v621, 0.0
      %v634 = vsel %vm630, %v622, 0.0
      %v635 = vsel %vm631, %v623, 0.0
      %v636 = vsel %vm632, %v624, 0.0
      %v637 = vld [vmem:[%s469] sm:$0xf]
      %v638 = vld [vmem:[%s469 + $0x4] sm:$0xf]
      %v639 = vld [vmem:[%s469 + $0x8] sm:$0xf]
      %v640 = vld [vmem:[%s469 + $0xc] sm:$0xf]
      %v641 = vld [vmem:[%s469 + $0x10] sm:$0xf]
      %v642 = vld [vmem:[%s469 + $0x14] sm:$0xf]
      %v643 = vld [vmem:[%s469 + $0x18] sm:$0xf]
      %v644 = vld [vmem:[%s469 + $0x1c] sm:$0xf]
      %v645 = vld [vmem:[%s469 + $0x20] sm:$0xf]
      %v646 = vld [vmem:[%s469 + $0x24] sm:$0xf]
      %v647 = vld [vmem:[%s469 + $0x28] sm:$0xf]
      %v648 = vld [vmem:[%s469 + $0x2c] sm:$0xf]
      %v649 = vld [vmem:[%s469 + $0x30] sm:$0xf]
      %v650 = vld [vmem:[%s469 + $0x34] sm:$0xf]
      %v651 = vld [vmem:[%s469 + $0x38] sm:$0xf]
      %v652 = vld [vmem:[%s469 + $0x3c] sm:$0xf]
      %v653 = vld [vmem:[%s469 + $0x40] sm:$0xf]
      %v654 = vld [vmem:[%s469 + $0x44] sm:$0xf]
      %v655 = vld [vmem:[%s469 + $0x48] sm:$0xf]
      %v656 = vld [vmem:[%s469 + $0x4c] sm:$0xf]
      %v657 = vld [vmem:[%s469 + $0x50] sm:$0xf]
      %v658 = vld [vmem:[%s469 + $0x54] sm:$0xf]
      %v659 = vld [vmem:[%s469 + $0x58] sm:$0xf]
      %v660 = vld [vmem:[%s469 + $0x5c] sm:$0xf]
      %v661 = vunpack.c.l.bf16 %v637
      %v662 = vunpack.c.l.bf16 %v638
      %v663 = vunpack.c.l.bf16 %v639
      %v664 = vunpack.c.l.bf16 %v640
      %v665 = vunpack.c.l.bf16 %v641
      %v666 = vunpack.c.l.bf16 %v642
      %v667 = vunpack.c.l.bf16 %v643
      %v668 = vunpack.c.l.bf16 %v644
      %v669 = vunpack.c.l.bf16 %v645
      %v670 = vunpack.c.l.bf16 %v646
      %v671 = vunpack.c.l.bf16 %v647
      %v672 = vunpack.c.l.bf16 %v648
      %v673 = vunpack.c.l.bf16 %v649
      %v674 = vunpack.c.l.bf16 %v650
      %v675 = vunpack.c.l.bf16 %v651
      %v676 = vunpack.c.l.bf16 %v652
      %v677 = vunpack.c.l.bf16 %v653
      %v678 = vunpack.c.l.bf16 %v654
      %v679 = vunpack.c.l.bf16 %v655
      %v680 = vunpack.c.l.bf16 %v656
      %v681 = vunpack.c.l.bf16 %v657
      %v682 = vunpack.c.l.bf16 %v658
      %v683 = vunpack.c.l.bf16 %v659
      %v684 = vunpack.c.l.bf16 %v660
      %v685 = vmul.f32 %v661, %v568
      %v686 = vmul.f32 %v662, %v568
      %v687 = vmul.f32 %v663, %v568
      %v688 = vmul.f32 %v664, %v568
      %v689 = vmul.f32 %v665, %v568
      %v690 = vmul.f32 %v666, %v568
      %v691 = vmul.f32 %v667, %v568
      %v692 = vmul.f32 %v668, %v568
      %v693 = vmul.f32 %v669, %v568
      %v694 = vmul.f32 %v670, %v568
      %v695 = vmul.f32 %v671, %v568
      %v696 = vmul.f32 %v672, %v568
      %v697 = vmul.f32 %v673, %v568
      %v698 = vmul.f32 %v674, %v568
      %v699 = vmul.f32 %v675, %v568
      %v700 = vmul.f32 %v676, %v568
      %v701 = vmul.f32 %v677, %v568
      %v702 = vmul.f32 %v678, %v568
      %v703 = vmul.f32 %v679, %v568
      %v704 = vmul.f32 %v680, %v568
      %v705 = vmul.f32 %v681, %v568
      %v706 = vmul.f32 %v682, %v568
      %v707 = vmul.f32 %v683, %v568
      %v708 = vmul.f32 %v684, %v568
      %v709 = vadd.f32 %v685, %v575
      %v710 = vadd.f32 %v686, %v575
      %v711 = vadd.f32 %v687, %v575
      %v712 = vadd.f32 %v688, %v575
      %v713 = vadd.f32 %v689, %v575
      %v714 = vadd.f32 %v690, %v575
      %v715 = vadd.f32 %v691, %v575
      %v716 = vadd.f32 %v692, %v575
      %v717 = vadd.f32 %v693, %v575
      %v718 = vadd.f32 %v694, %v575
      %v719 = vadd.f32 %v695, %v575
      %v720 = vadd.f32 %v696, %v575
      %v721 = vadd.f32 %v697, %v575
      %v722 = vadd.f32 %v698, %v575
      %v723 = vadd.f32 %v699, %v575
      %v724 = vadd.f32 %v700, %v575
      %v725 = vadd.f32 %v701, %v575
      %v726 = vadd.f32 %v702, %v575
      %v727 = vadd.f32 %v703, %v575
      %v728 = vadd.f32 %v704, %v575
      %v729 = vadd.f32 %v705, %v575
      %v730 = vadd.f32 %v706, %v575
      %v731 = vadd.f32 %v707, %v575
      %v732 = vadd.f32 %v708, %v575
      %vm733 = vcmp.gt.f32.partialorder %v709, 0.0
      %vm734 = vcmp.gt.f32.partialorder %v710, 0.0
      %vm735 = vcmp.gt.f32.partialorder %v711, 0.0
      %vm736 = vcmp.gt.f32.partialorder %v712, 0.0
      %vm737 = vcmp.gt.f32.partialorder %v713, 0.0
      %vm738 = vcmp.gt.f32.partialorder %v714, 0.0
      %vm739 = vcmp.gt.f32.partialorder %v715, 0.0
      %vm740 = vcmp.gt.f32.partialorder %v716, 0.0
      %vm741 = vcmp.gt.f32.partialorder %v717, 0.0
      %vm742 = vcmp.gt.f32.partialorder %v718, 0.0
      %vm743 = vcmp.gt.f32.partialorder %v719, 0.0
      %vm744 = vcmp.gt.f32.partialorder %v720, 0.0
      %vm745 = vcmp.gt.f32.partialorder %v721, 0.0
      %vm746 = vcmp.gt.f32.partialorder %v722, 0.0
      %vm747 = vcmp.gt.f32.partialorder %v723, 0.0
      %vm748 = vcmp.gt.f32.partialorder %v724, 0.0
      %vm749 = vcmp.gt.f32.partialorder %v725, 0.0
      %vm750 = vcmp.gt.f32.partialorder %v726, 0.0
      %vm751 = vcmp.gt.f32.partialorder %v727, 0.0
      %vm752 = vcmp.gt.f32.partialorder %v728, 0.0
      %vm753 = vcmp.gt.f32.partialorder %v729, 0.0
      %vm754 = vcmp.gt.f32.partialorder %v730, 0.0
      %vm755 = vcmp.gt.f32.partialorder %v731, 0.0
      %vm756 = vcmp.gt.f32.partialorder %v732, 0.0
      %v757 = vmul.f32 %v709, 0.2
      %v758 = vmul.f32 %v710, 0.2
      %v759 = vmul.f32 %v711, 0.2
      %v760 = vmul.f32 %v712, 0.2
      %v761 = vmul.f32 %v713, 0.2
      %v762 = vmul.f32 %v714, 0.2
      %v763 = vmul.f32 %v715, 0.2
      %v764 = vmul.f32 %v716, 0.2
      %v765 = vmul.f32 %v717, 0.2
      %v766 = vmul.f32 %v718, 0.2
      %v767 = vmul.f32 %v719, 0.2
      %v768 = vmul.f32 %v720, 0.2
      %v769 = vmul.f32 %v721, 0.2
      %v770 = vmul.f32 %v722, 0.2
      %v771 = vmul.f32 %v723, 0.2
      %v772 = vmul.f32 %v724, 0.2
      %v773 = vmul.f32 %v725, 0.2
      %v774 = vmul.f32 %v726, 0.2
      %v775 = vmul.f32 %v727, 0.2
      %v776 = vmul.f32 %v728, 0.2
      %v777 = vmul.f32 %v729, 0.2
      %v778 = vmul.f32 %v730, 0.2
      %v779 = vmul.f32 %v731, 0.2
      %v780 = vmul.f32 %v732, 0.2
      %v781 = vsel %vm733, %v709, %v757
      %v782 = vsel %vm734, %v710, %v758
      %v783 = vsel %vm735, %v711, %v759
      %v784 = vsel %vm736, %v712, %v760
      %v785 = vsel %vm737, %v713, %v761
      %v786 = vsel %vm738, %v714, %v762
      %v787 = vsel %vm739, %v715, %v763
      %v788 = vsel %vm740, %v716, %v764
      %v789 = vsel %vm741, %v717, %v765
      %v790 = vsel %vm742, %v718, %v766
      %v791 = vsel %vm743, %v719, %v767
      %v792 = vsel %vm744, %v720, %v768
      %v793 = vsel %vm745, %v721, %v769
      %v794 = vsel %vm746, %v722, %v770
      %v795 = vsel %vm747, %v723, %v771
      %v796 = vsel %vm748, %v724, %v772
      %v797 = vsel %vm749, %v725, %v773
      %v798 = vsel %vm750, %v726, %v774
      %v799 = vsel %vm751, %v727, %v775
      %v800 = vsel %vm752, %v728, %v776
      %v801 = vsel %vm753, %v729, %v777
      %v802 = vsel %vm754, %v730, %v778
      %v803 = vsel %vm755, %v731, %v779
      %v804 = vsel %vm756, %v732, %v780
      %v805 = vsel %vm514, 1, 0
      %v806 = vsel %vm515, 1, 0
      %v807 = vsel %vm516, 1, 0
      %vm808 = vcmp.eq.s32.totalorder %v805, 1
      %vm809 = vcmp.eq.s32.totalorder %v806, 1
      %vm810 = vcmp.eq.s32.totalorder %v807, 1
      %v811 = vsel %vm808, %v781, 0.0
      %v812 = vsel %vm809, %v782, 0.0
      %v813 = vsel %vm810, %v783, 0.0
      %v814 = vsel %vm808, %v784, 0.0
      %v815 = vsel %vm809, %v785, 0.0
      %v816 = vsel %vm810, %v786, 0.0
      %v817 = vsel %vm808, %v787, 0.0
      %v818 = vsel %vm809, %v788, 0.0
      %v819 = vsel %vm810, %v789, 0.0
      %v820 = vsel %vm808, %v790, 0.0
      %v821 = vsel %vm809, %v791, 0.0
      %v822 = vsel %vm810, %v792, 0.0
      %v823 = vsel %vm808, %v793, 0.0
      %v824 = vsel %vm809, %v794, 0.0
      %v825 = vsel %vm810, %v795, 0.0
      %v826 = vsel %vm808, %v796, 0.0
      %v827 = vsel %vm809, %v797, 0.0
      %v828 = vsel %vm810, %v798, 0.0
      %v829 = vsel %vm808, %v799, 0.0
      %v830 = vsel %vm809, %v800, 0.0
      %v831 = vsel %vm810, %v801, 0.0
      %v832 = vsel %vm808, %v802, 0.0
      %v833 = vsel %vm809, %v803, 0.0
      %v834 = vsel %vm810, %v804, 0.0
      %v835 = vpack.c.bf16 %v811, %v811
      %v836 = vpack.c.bf16 %v812, %v812
      %v837 = vpack.c.bf16 %v813, %v813
      %v838 = vpack.c.bf16 %v814, %v814
      %v839 = vpack.c.bf16 %v815, %v815
      %v840 = vpack.c.bf16 %v816, %v816
      %v841 = vpack.c.bf16 %v817, %v817
      %v842 = vpack.c.bf16 %v818, %v818
      %v843 = vpack.c.bf16 %v819, %v819
      %v844 = vpack.c.bf16 %v820, %v820
      %v845 = vpack.c.bf16 %v821, %v821
      %v846 = vpack.c.bf16 %v822, %v822
      %v847 = vpack.c.bf16 %v823, %v823
      %v848 = vpack.c.bf16 %v824, %v824
      %v849 = vpack.c.bf16 %v825, %v825
      %v850 = vpack.c.bf16 %v826, %v826
      %v851 = vpack.c.bf16 %v827, %v827
      %v852 = vpack.c.bf16 %v828, %v828
      %v853 = vpack.c.bf16 %v829, %v829
      %v854 = vpack.c.bf16 %v830, %v830
      %v855 = vpack.c.bf16 %v831, %v831
      %v856 = vpack.c.bf16 %v832, %v832
      %v857 = vpack.c.bf16 %v833, %v833
      %v858 = vpack.c.bf16 %v834, %v834
      %v859 = vpack.c.bf16 %v601, %v601
      %v860 = vpack.c.bf16 %v602, %v602
      %v861 = vpack.c.bf16 %v603, %v603
      %v862 = vpack.c.bf16 %v604, %v604
      %v863 = vpack.c.bf16 %v633, %v633
      %v864 = vpack.c.bf16 %v634, %v634
      %v865 = vpack.c.bf16 %v635, %v635
      %v866 = vpack.c.bf16 %v636, %v636
      %v871 = vunpack.c.l.b16 %v859
      %v872 = vunpack.c.l.b16 %v860
      %v873 = vunpack.c.l.b16 %v861
      %v874 = vunpack.c.l.b16 %v862
      %v875 = vpack.c.b16 %v872, %v871
      %v876 = vpack.c.b16 %v874, %v873
      %v901 = vunpack.c.l.b16 %v835
      %v902 = vunpack.c.l.b16 %v836
      %v903 = vunpack.c.l.b16 %v837
      %v904 = vunpack.c.l.b16 %v838
      %v905 = vunpack.c.l.b16 %v839
      %v906 = vunpack.c.l.b16 %v840
      %v907 = vunpack.c.l.b16 %v841
      %v908 = vunpack.c.l.b16 %v842
      %v909 = vunpack.c.l.b16 %v843
      %v910 = vunpack.c.l.b16 %v844
      %v911 = vunpack.c.l.b16 %v845
      %v912 = vunpack.c.l.b16 %v846
      %v913 = vunpack.c.l.b16 %v847
      %v914 = vunpack.c.l.b16 %v848
      %v915 = vunpack.c.l.b16 %v849
      %v916 = vunpack.c.l.b16 %v850
      %v917 = vunpack.c.l.b16 %v851
      %v918 = vunpack.c.l.b16 %v852
      %v919 = vunpack.c.l.b16 %v853
      %v920 = vunpack.c.l.b16 %v854
      %v921 = vunpack.c.l.b16 %v855
      %v922 = vunpack.c.l.b16 %v856
      %v923 = vunpack.c.l.b16 %v857
      %v924 = vunpack.c.l.b16 %v858
      %v925 = vpack.c.b16 %v902, %v901
      %v926 = vpack.c.b16 %v904, %v903
      %v927 = vpack.c.b16 %v906, %v905
      %v928 = vpack.c.b16 %v908, %v907
      %v929 = vpack.c.b16 %v910, %v909
      %v930 = vpack.c.b16 %v912, %v911
      %v931 = vpack.c.b16 %v914, %v913
      %v932 = vpack.c.b16 %v916, %v915
      %v933 = vpack.c.b16 %v918, %v917
      %v934 = vpack.c.b16 %v920, %v919
      %v935 = vpack.c.b16 %v922, %v921
      %v936 = vpack.c.b16 %v924, %v923
      %v941 = vunpack.c.l.b16 %v863
      %v942 = vunpack.c.l.b16 %v864
      %v943 = vunpack.c.l.b16 %v865
      %v944 = vunpack.c.l.b16 %v866
      %v945 = vpack.c.b16 %v942, %v941
      %v946 = vpack.c.b16 %v944, %v943
      %v947 = vld [vmem:[%s5] sm:$0xf]
      %v948 = vld [vmem:[%s5 + $0x4] sm:$0xf]
      %v949 = vld [vmem:[%s5 + $0x8] sm:$0xf]
      %v950 = vld [vmem:[%s5 + $0xc] sm:$0xf]
      %v951 = vld [vmem:[%s5 + $0x10] sm:$0xf]
      %v952 = vld [vmem:[%s5 + $0x14] sm:$0xf]
      %v953 = vld [vmem:[%s5 + $0x18] sm:$0xf]
      %v954 = vld [vmem:[%s5 + $0x1c] sm:$0xf]
      %v955 = vld [vmem:[%s5 + $0x20] sm:$0xf]
      %v956 = vld [vmem:[%s5 + $0x24] sm:$0xf]
      %v957 = vld [vmem:[%s5 + $0x28] sm:$0xf]
      %v958 = vld [vmem:[%s5 + $0x2c] sm:$0xf]
      %v959 = vld [vmem:[%s5 + $0x30] sm:$0xf]
      %v960 = vld [vmem:[%s5 + $0x34] sm:$0xf]
      %v961 = vld [vmem:[%s5 + $0x38] sm:$0xf]
      %v962 = vld [vmem:[%s5 + $0x3c] sm:$0xf]
      %v963 = vld [vmem:[%s5 + $0x40] sm:$0xf]
      %v964 = vld [vmem:[%s5 + $0x44] sm:$0xf]
      %v965 = vld [vmem:[%s5 + $0x48] sm:$0xf]
      %v966 = vld [vmem:[%s5 + $0x4c] sm:$0xf]
      %v967 = vld [vmem:[%s5 + $0x50] sm:$0xf]
      %v968 = vld [vmem:[%s5 + $0x54] sm:$0xf]
      %v969 = vld [vmem:[%s5 + $0x58] sm:$0xf]
      %v970 = vld [vmem:[%s5 + $0x5c] sm:$0xf]
      %v971 = vld [vmem:[%s5 + $0x60] sm:$0xf]
      %v972 = vld [vmem:[%s5 + $0x64] sm:$0xf]
      %v973 = vld [vmem:[%s5 + $0x68] sm:$0xf]
      %v974 = vld [vmem:[%s5 + $0x6c] sm:$0xf]
      %v975 = vld [vmem:[%s5 + $0x70] sm:$0xf]
      %v976 = vld [vmem:[%s5 + $0x74] sm:$0xf]
      %v977 = vld [vmem:[%s5 + $0x78] sm:$0xf]
      %v978 = vld [vmem:[%s5 + $0x7c] sm:$0xf]
      %v979 = vld [vmem:[%s5 + $0x80] sm:$0xf]
      %v980 = vld [vmem:[%s5 + $0x84] sm:$0xf]
      %v981 = vld [vmem:[%s5 + $0x88] sm:$0xf]
      %v982 = vld [vmem:[%s5 + $0x8c] sm:$0xf]
      %v983 = vld [vmem:[%s5 + $0x90] sm:$0xf]
      %v984 = vld [vmem:[%s5 + $0x94] sm:$0xf]
      %v985 = vld [vmem:[%s5 + $0x98] sm:$0xf]
      %v986 = vld [vmem:[%s5 + $0x9c] sm:$0xf]
      %v987 = vld [vmem:[%s5 + $0xa0] sm:$0xf]
      %v988 = vld [vmem:[%s5 + $0xa4] sm:$0xf]
      %v989 = vld [vmem:[%s5 + $0xa8] sm:$0xf]
      %v990 = vld [vmem:[%s5 + $0xac] sm:$0xf]
      %v991 = vld [vmem:[%s5 + $0xb0] sm:$0xf]
      %v992 = vld [vmem:[%s5 + $0xb4] sm:$0xf]
      %v993 = vld [vmem:[%s5 + $0xb8] sm:$0xf]
      %v994 = vld [vmem:[%s5 + $0xbc] sm:$0xf]
      %v995 = vld [vmem:[%s5 + $0xc0] sm:$0xf]
      %v996 = vld [vmem:[%s5 + $0xc4] sm:$0xf]
      %v997 = vld [vmem:[%s5 + $0xc8] sm:$0xf]
      %v998 = vld [vmem:[%s5 + $0xcc] sm:$0xf]
      %v999 = vld [vmem:[%s5 + $0xd0] sm:$0xf]
      %v1000 = vld [vmem:[%s5 + $0xd4] sm:$0xf]
      %v1001 = vld [vmem:[%s5 + $0xd8] sm:$0xf]
      %v1002 = vld [vmem:[%s5 + $0xdc] sm:$0xf]
      %v1003 = vld [vmem:[%s5 + $0xe0] sm:$0xf]
      %v1004 = vld [vmem:[%s5 + $0xe4] sm:$0xf]
      %v1005 = vld [vmem:[%s5 + $0xe8] sm:$0xf]
      %v1006 = vld [vmem:[%s5 + $0xec] sm:$0xf]
      %v1007 = vld [vmem:[%s5 + $0xf0] sm:$0xf]
      %v1008 = vld [vmem:[%s5 + $0xf4] sm:$0xf]
      %v1009 = vld [vmem:[%s5 + $0xf8] sm:$0xf]
      %v1010 = vld [vmem:[%s5 + $0xfc] sm:$0xf]
      %v1011 = vld [vmem:[%s5 + $0x100] sm:$0xf]
      %v1012 = vld [vmem:[%s5 + $0x104] sm:$0xf]
      %v1013 = vld [vmem:[%s5 + $0x108] sm:$0xf]
      %v1014 = vld [vmem:[%s5 + $0x10c] sm:$0xf]
      %v1015 = vld [vmem:[%s5 + $0x110] sm:$0xf]
      %v1016 = vld [vmem:[%s5 + $0x114] sm:$0xf]
      %v1017 = vld [vmem:[%s5 + $0x118] sm:$0xf]
      %v1018 = vld [vmem:[%s5 + $0x11c] sm:$0xf]
      %vm1019 = vcmask 1043456
      %v1020 = vrot.slane %v875, 4
      %v1021 = vrot.slane %v876, 4
      %v1022 = vsel %vm1019, %v1020, %v1021
      %v1023 = vrot.slane %v925, 4
      %v1024 = vsel %vm1019, %v1021, %v1023
      %v1025 = vrot.slane %v926, 4
      %v1026 = vsel %vm1019, %v1023, %v1025
      %v1027 = vrot.slane %v927, 4
      %v1028 = vsel %vm1019, %v1025, %v1027
      %v1029 = vrot.slane %v928, 4
      %v1030 = vsel %vm1019, %v1027, %v1029
      %v1031 = vrot.slane %v929, 4
      %v1032 = vsel %vm1019, %v1029, %v1031
      %v1033 = vrot.slane %v930, 4
      %v1034 = vsel %vm1019, %v1031, %v1033
      %v1035 = vrot.slane %v931, 4
      %v1036 = vsel %vm1019, %v1033, %v1035
      %v1037 = vrot.slane %v932, 4
      %v1038 = vsel %vm1019, %v1035, %v1037
      %v1039 = vrot.slane %v933, 4
      %v1040 = vsel %vm1019, %v1037, %v1039
      %v1041 = vrot.slane %v934, 4
      %v1042 = vsel %vm1019, %v1039, %v1041
      %v1043 = vrot.slane %v935, 4
      %v1044 = vsel %vm1019, %v1041, %v1043
      %v1053 = vunpack.c.l.b16 %v955
      %v1054 = vunpack.c.l.b16 %v956
      %v1055 = vunpack.c.l.b16 %v957
      %v1056 = vunpack.c.l.b16 %v958
      %v1057 = vunpack.c.l.b16 %v959
      %v1058 = vunpack.c.l.b16 %v960
      %v1059 = vunpack.c.l.b16 %v961
      %v1060 = vunpack.c.l.b16 %v962
      %v1061 = vpack.c.b16 %v1054, %v1053
      %v1062 = vpack.c.b16 %v1056, %v1055
      %v1063 = vpack.c.b16 %v1058, %v1057
      %v1064 = vpack.c.b16 %v1060, %v1059
      %vm1069 = vcmask 523264
      %v1071 = vsel %vm1069, %v1022, 0
      %v1074 = vsel %vm1069, %v1024, 0
      %v1077 = vsel %vm1069, %v1026, 0
      %v1080 = vsel %vm1069, %v1028, 0
      %v1083 = vsel %vm1069, %v1030, 0
      %v1086 = vsel %vm1069, %v1032, 0
      %v1089 = vsel %vm1069, %v1034, 0
      %v1092 = vsel %vm1069, %v1036, 0
      %v1095 = vsel %vm1069, %v1038, 0
      %v1098 = vsel %vm1069, %v1040, 0
      %v1101 = vsel %vm1069, %v1042, 0
      %v1104 = vsel %vm1069, %v1044, 0
      %1106 = vmatpush.bf16.msra.mxu0 0
      %1107 = vmatpush.bf16.msra.mxu0 0
      %1108 = vmatpush.bf16.msra.mxu0 0
      %1109 = vmatpush.bf16.msra.mxu0 0
      %1110 = vmatpush.bf16.msra.mxu0 %v1064
      %1111 = vmatpush.bf16.msra.mxu0 %v1063
      %1112 = vmatpush.bf16.msra.mxu0 %v1062
      %1113 = vmatpush.bf16.msra.mxu0 %v1061
      %1114 = vmatmul.bf16.gmra.mxu0 %v1071
      %v1115 = vpop.f32.mrf.mxu0
      %v1116 = vadd.f32 0.0, %v1115
      %v1117 = vpop.f32.mrf.mxu0
      %v1118 = vadd.f32 0.0, %v1117
      %1119 = vmatmul.bf16.gmra.mxu0 %v1074
      %v1120 = vpop.f32.mrf.mxu0
      %v1121 = vadd.f32 0.0, %v1120
      %v1122 = vpop.f32.mrf.mxu0
      %v1123 = vadd.f32 0.0, %v1122
      %1124 = vmatmul.bf16.gmra.mxu0 %v1077
      %v1125 = vpop.f32.mrf.mxu0
      %v1126 = vadd.f32 0.0, %v1125
      %v1127 = vpop.f32.mrf.mxu0
      %v1128 = vadd.f32 0.0, %v1127
      %1129 = vmatmul.bf16.gmra.mxu0 %v1080
      %v1130 = vpop.f32.mrf.mxu0
      %v1131 = vadd.f32 0.0, %v1130
      %v1132 = vpop.f32.mrf.mxu0
      %v1133 = vadd.f32 0.0, %v1132
      %1134 = vmatmul.bf16.gmra.mxu0 %v1083
      %v1135 = vpop.f32.mrf.mxu0
      %v1136 = vadd.f32 0.0, %v1135
      %v1137 = vpop.f32.mrf.mxu0
      %v1138 = vadd.f32 0.0, %v1137
      %1139 = vmatmul.bf16.gmra.mxu0 %v1086
      %v1140 = vpop.f32.mrf.mxu0
      %v1141 = vadd.f32 0.0, %v1140
      %v1142 = vpop.f32.mrf.mxu0
      %v1143 = vadd.f32 0.0, %v1142
      %1144 = vmatmul.bf16.gmra.mxu0 %v1089
      %v1145 = vpop.f32.mrf.mxu0
      %v1146 = vadd.f32 0.0, %v1145
      %v1147 = vpop.f32.mrf.mxu0
      %v1148 = vadd.f32 0.0, %v1147
      %1149 = vmatmul.bf16.gmra.mxu0 %v1092
      %v1150 = vpop.f32.mrf.mxu0
      %v1151 = vadd.f32 0.0, %v1150
      %v1152 = vpop.f32.mrf.mxu0
      %v1153 = vadd.f32 0.0, %v1152
      %1154 = vmatmul.bf16.gmra.mxu0 %v1095
      %v1155 = vpop.f32.mrf.mxu0
      %v1156 = vadd.f32 0.0, %v1155
      %v1157 = vpop.f32.mrf.mxu0
      %v1158 = vadd.f32 0.0, %v1157
      %1159 = vmatmul.bf16.gmra.mxu0 %v1098
      %v1160 = vpop.f32.mrf.mxu0
      %v1161 = vadd.f32 0.0, %v1160
      %v1162 = vpop.f32.mrf.mxu0
      %v1163 = vadd.f32 0.0, %v1162
      %1164 = vmatmul.bf16.gmra.mxu0 %v1101
      %v1165 = vpop.f32.mrf.mxu0
      %v1166 = vadd.f32 0.0, %v1165
      %v1167 = vpop.f32.mrf.mxu0
      %v1168 = vadd.f32 0.0, %v1167
      %1169 = vmatmul.bf16.gmra.mxu0 %v1104
      %v1170 = vpop.f32.mrf.mxu0
      %v1171 = vadd.f32 0.0, %v1170
      %v1172 = vpop.f32.mrf.mxu0
      %v1173 = vadd.f32 0.0, %v1172
      %1174 = vdwg.mxu0
      %vm1175 = vsmask.f32 4352
      %v1177 = vshrl.u32 %v875, 16
      %v1179 = vrot.slane %v1177, 3
      %v1180 = vshll.u32 %v875, 16
      %v1182 = vrot.slane %v1180, 4
      %v1183 = vor.u32 %v1179, %v1182
      %v1185 = vshrl.u32 %v876, 16
      %v1187 = vrot.slane %v1185, 3
      %v1188 = vshll.u32 %v876, 16
      %v1190 = vrot.slane %v1188, 4
      %v1191 = vor.u32 %v1187, %v1190
      %v1192 = vsel %vm1175, %v1183, %v1191
      %v1194 = vshrl.u32 %v925, 16
      %v1196 = vrot.slane %v1194, 3
      %v1197 = vshll.u32 %v925, 16
      %v1199 = vrot.slane %v1197, 4
      %v1200 = vor.u32 %v1196, %v1199
      %v1201 = vsel %vm1175, %v1191, %v1200
      %v1203 = vshrl.u32 %v926, 16
      %v1205 = vrot.slane %v1203, 3
      %v1206 = vshll.u32 %v926, 16
      %v1208 = vrot.slane %v1206, 4
      %v1209 = vor.u32 %v1205, %v1208
      %v1210 = vsel %vm1175, %v1200, %v1209
      %v1212 = vshrl.u32 %v927, 16
      %v1214 = vrot.slane %v1212, 3
      %v1215 = vshll.u32 %v927, 16
      %v1217 = vrot.slane %v1215, 4
      %v1218 = vor.u32 %v1214, %v1217
      %v1219 = vsel %vm1175, %v1209, %v1218
      %v1221 = vshrl.u32 %v928, 16
      %v1223 = vrot.slane %v1221, 3
      %v1224 = vshll.u32 %v928, 16
      %v1226 = vrot.slane %v1224, 4
      %v1227 = vor.u32 %v1223, %v1226
      %v1228 = vsel %vm1175, %v1218, %v1227
      %v1230 = vshrl.u32 %v929, 16
      %v1232 = vrot.slane %v1230, 3
      %v1233 = vshll.u32 %v929, 16
      %v1235 = vrot.slane %v1233, 4
      %v1236 = vor.u32 %v1232, %v1235
      %v1237 = vsel %vm1175, %v1227, %v1236
      %v1239 = vshrl.u32 %v930, 16
      %v1241 = vrot.slane %v1239, 3
      %v1242 = vshll.u32 %v930, 16
      %v1244 = vrot.slane %v1242, 4
      %v1245 = vor.u32 %v1241, %v1244
      %v1246 = vsel %vm1175, %v1236, %v1245
      %v1248 = vshrl.u32 %v931, 16
      %v1250 = vrot.slane %v1248, 3
      %v1251 = vshll.u32 %v931, 16
      %v1253 = vrot.slane %v1251, 4
      %v1254 = vor.u32 %v1250, %v1253
      %v1255 = vsel %vm1175, %v1245, %v1254
      %v1257 = vshrl.u32 %v932, 16
      %v1259 = vrot.slane %v1257, 3
      %v1260 = vshll.u32 %v932, 16
      %v1262 = vrot.slane %v1260, 4
      %v1263 = vor.u32 %v1259, %v1262
      %v1264 = vsel %vm1175, %v1254, %v1263
      %v1266 = vshrl.u32 %v933, 16
      %v1268 = vrot.slane %v1266, 3
      %v1269 = vshll.u32 %v933, 16
      %v1271 = vrot.slane %v1269, 4
      %v1272 = vor.u32 %v1268, %v1271
      %v1273 = vsel %vm1175, %v1263, %v1272
      %v1275 = vshrl.u32 %v934, 16
      %v1277 = vrot.slane %v1275, 3
      %v1278 = vshll.u32 %v934, 16
      %v1280 = vrot.slane %v1278, 4
      %v1281 = vor.u32 %v1277, %v1280
      %v1282 = vsel %vm1175, %v1272, %v1281
      %v1284 = vshrl.u32 %v935, 16
      %v1286 = vrot.slane %v1284, 3
      %v1287 = vshll.u32 %v935, 16
      %v1289 = vrot.slane %v1287, 4
      %v1290 = vor.u32 %v1286, %v1289
      %v1291 = vsel %vm1175, %v1281, %v1290
      %v1300 = vunpack.c.l.b16 %v947
      %v1301 = vunpack.c.l.b16 %v948
      %v1302 = vunpack.c.l.b16 %v949
      %v1303 = vunpack.c.l.b16 %v950
      %v1304 = vunpack.c.l.b16 %v951
      %v1305 = vunpack.c.l.b16 %v952
      %v1306 = vunpack.c.l.b16 %v953
      %v1307 = vunpack.c.l.b16 %v954
      %v1308 = vpack.c.b16 %v1301, %v1300
      %v1309 = vpack.c.b16 %v1303, %v1302
      %v1310 = vpack.c.b16 %v1305, %v1304
      %v1311 = vpack.c.b16 %v1307, %v1306
      %v1317 = vsel %vm1069, %v1192, 0
      %v1320 = vsel %vm1069, %v1201, 0
      %v1323 = vsel %vm1069, %v1210, 0
      %v1326 = vsel %vm1069, %v1219, 0
      %v1329 = vsel %vm1069, %v1228, 0
      %v1332 = vsel %vm1069, %v1237, 0
      %v1335 = vsel %vm1069, %v1246, 0
      %v1338 = vsel %vm1069, %v1255, 0
      %v1341 = vsel %vm1069, %v1264, 0
      %v1344 = vsel %vm1069, %v1273, 0
      %v1347 = vsel %vm1069, %v1282, 0
      %v1350 = vsel %vm1069, %v1291, 0
      %1352 = vmatpush.bf16.msra.mxu0 0
      %1353 = vmatpush.bf16.msra.mxu0 0
      %1354 = vmatpush.bf16.msra.mxu0 0
      %1355 = vmatpush.bf16.msra.mxu0 0
      %1356 = vmatpush.bf16.msra.mxu0 %v1311
      %1357 = vmatpush.bf16.msra.mxu0 %v1310
      %1358 = vmatpush.bf16.msra.mxu0 %v1309
      %1359 = vmatpush.bf16.msra.mxu0 %v1308
      %1360 = vmatmul.bf16.gmra.mxu0 %v1317
      %v1361 = vpop.f32.mrf.mxu0
      %v1362 = vadd.f32 %v1116, %v1361
      %v1363 = vpop.f32.mrf.mxu0
      %v1364 = vadd.f32 %v1118, %v1363
      %1365 = vmatmul.bf16.gmra.mxu0 %v1320
      %v1366 = vpop.f32.mrf.mxu0
      %v1367 = vadd.f32 %v1121, %v1366
      %v1368 = vpop.f32.mrf.mxu0
      %v1369 = vadd.f32 %v1123, %v1368
      %1370 = vmatmul.bf16.gmra.mxu0 %v1323
      %v1371 = vpop.f32.mrf.mxu0
      %v1372 = vadd.f32 %v1126, %v1371
      %v1373 = vpop.f32.mrf.mxu0
      %v1374 = vadd.f32 %v1128, %v1373
      %1375 = vmatmul.bf16.gmra.mxu0 %v1326
      %v1376 = vpop.f32.mrf.mxu0
      %v1377 = vadd.f32 %v1131, %v1376
      %v1378 = vpop.f32.mrf.mxu0
      %v1379 = vadd.f32 %v1133, %v1378
      %1380 = vmatmul.bf16.gmra.mxu0 %v1329
      %v1381 = vpop.f32.mrf.mxu0
      %v1382 = vadd.f32 %v1136, %v1381
      %v1383 = vpop.f32.mrf.mxu0
      %v1384 = vadd.f32 %v1138, %v1383
      %1385 = vmatmul.bf16.gmra.mxu0 %v1332
      %v1386 = vpop.f32.mrf.mxu0
      %v1387 = vadd.f32 %v1141, %v1386
      %v1388 = vpop.f32.mrf.mxu0
      %v1389 = vadd.f32 %v1143, %v1388
      %1390 = vmatmul.bf16.gmra.mxu0 %v1335
      %v1391 = vpop.f32.mrf.mxu0
      %v1392 = vadd.f32 %v1146, %v1391
      %v1393 = vpop.f32.mrf.mxu0
      %v1394 = vadd.f32 %v1148, %v1393
      %1395 = vmatmul.bf16.gmra.mxu0 %v1338
      %v1396 = vpop.f32.mrf.mxu0
      %v1397 = vadd.f32 %v1151, %v1396
      %v1398 = vpop.f32.mrf.mxu0
      %v1399 = vadd.f32 %v1153, %v1398
      %1400 = vmatmul.bf16.gmra.mxu0 %v1341
      %v1401 = vpop.f32.mrf.mxu0
      %v1402 = vadd.f32 %v1156, %v1401
      %v1403 = vpop.f32.mrf.mxu0
      %v1404 = vadd.f32 %v1158, %v1403
      %1405 = vmatmul.bf16.gmra.mxu0 %v1344
      %v1406 = vpop.f32.mrf.mxu0
      %v1407 = vadd.f32 %v1161, %v1406
      %v1408 = vpop.f32.mrf.mxu0
      %v1409 = vadd.f32 %v1163, %v1408
      %1410 = vmatmul.bf16.gmra.mxu0 %v1347
      %v1411 = vpop.f32.mrf.mxu0
      %v1412 = vadd.f32 %v1166, %v1411
      %v1413 = vpop.f32.mrf.mxu0
      %v1414 = vadd.f32 %v1168, %v1413
      %1415 = vmatmul.bf16.gmra.mxu0 %v1350
      %v1416 = vpop.f32.mrf.mxu0
      %v1417 = vadd.f32 %v1171, %v1416
      %v1418 = vpop.f32.mrf.mxu0
      %v1419 = vadd.f32 %v1173, %v1418
      %1420 = vdwg.mxu0
      %vm1421 = vsmask.f32 3328
      %v1422 = vrot.slane %v1177, 4
      %v1423 = vrot.slane %v1180, 5
      %v1424 = vor.u32 %v1422, %v1423
      %v1425 = vrot.slane %v1185, 4
      %v1426 = vrot.slane %v1188, 5
      %v1427 = vor.u32 %v1425, %v1426
      %v1428 = vsel %vm1421, %v1424, %v1427
      %v1429 = vrot.slane %v1194, 4
      %v1430 = vrot.slane %v1197, 5
      %v1431 = vor.u32 %v1429, %v1430
      %v1432 = vsel %vm1421, %v1427, %v1431
      %v1433 = vrot.slane %v1203, 4
      %v1434 = vrot.slane %v1206, 5
      %v1435 = vor.u32 %v1433, %v1434
      %v1436 = vsel %vm1421, %v1431, %v1435
      %v1437 = vrot.slane %v1212, 4
      %v1438 = vrot.slane %v1215, 5
      %v1439 = vor.u32 %v1437, %v1438
      %v1440 = vsel %vm1421, %v1435, %v1439
      %v1441 = vrot.slane %v1221, 4
      %v1442 = vrot.slane %v1224, 5
      %v1443 = vor.u32 %v1441, %v1442
      %v1444 = vsel %vm1421, %v1439, %v1443
      %v1445 = vrot.slane %v1230, 4
      %v1446 = vrot.slane %v1233, 5
      %v1447 = vor.u32 %v1445, %v1446
      %v1448 = vsel %vm1421, %v1443, %v1447
      %v1449 = vrot.slane %v1239, 4
      %v1450 = vrot.slane %v1242, 5
      %v1451 = vor.u32 %v1449, %v1450
      %v1452 = vsel %vm1421, %v1447, %v1451
      %v1453 = vrot.slane %v1248, 4
      %v1454 = vrot.slane %v1251, 5
      %v1455 = vor.u32 %v1453, %v1454
      %v1456 = vsel %vm1421, %v1451, %v1455
      %v1457 = vrot.slane %v1257, 4
      %v1458 = vrot.slane %v1260, 5
      %v1459 = vor.u32 %v1457, %v1458
      %v1460 = vsel %vm1421, %v1455, %v1459
      %v1461 = vrot.slane %v1266, 4
      %v1462 = vrot.slane %v1269, 5
      %v1463 = vor.u32 %v1461, %v1462
      %v1464 = vsel %vm1421, %v1459, %v1463
      %v1465 = vrot.slane %v1275, 4
      %v1466 = vrot.slane %v1278, 5
      %v1467 = vor.u32 %v1465, %v1466
      %v1468 = vsel %vm1421, %v1463, %v1467
      %v1469 = vrot.slane %v1284, 4
      %v1470 = vrot.slane %v1287, 5
      %v1471 = vor.u32 %v1469, %v1470
      %v1472 = vsel %vm1421, %v1467, %v1471
      %v1481 = vunpack.c.l.b16 %v963
      %v1482 = vunpack.c.l.b16 %v964
      %v1483 = vunpack.c.l.b16 %v965
      %v1484 = vunpack.c.l.b16 %v966
      %v1485 = vunpack.c.l.b16 %v967
      %v1486 = vunpack.c.l.b16 %v968
      %v1487 = vunpack.c.l.b16 %v969
      %v1488 = vunpack.c.l.b16 %v970
      %v1489 = vpack.c.b16 %v1482, %v1481
      %v1490 = vpack.c.b16 %v1484, %v1483
      %v1491 = vpack.c.b16 %v1486, %v1485
      %v1492 = vpack.c.b16 %v1488, %v1487
      %v1498 = vsel %vm1069, %v1428, 0
      %v1501 = vsel %vm1069, %v1432, 0
      %v1504 = vsel %vm1069, %v1436, 0
      %v1507 = vsel %vm1069, %v1440, 0
      %v1510 = vsel %vm1069, %v1444, 0
      %v1513 = vsel %vm1069, %v1448, 0
      %v1516 = vsel %vm1069, %v1452, 0
      %v1519 = vsel %vm1069, %v1456, 0
      %v1522 = vsel %vm1069, %v1460, 0
      %v1525 = vsel %vm1069, %v1464, 0
      %v1528 = vsel %vm1069, %v1468, 0
      %v1531 = vsel %vm1069, %v1472, 0
      %1533 = vmatpush.bf16.msra.mxu0 0
      %1534 = vmatpush.bf16.msra.mxu0 0
      %1535 = vmatpush.bf16.msra.mxu0 0
      %1536 = vmatpush.bf16.msra.mxu0 0
      %1537 = vmatpush.bf16.msra.mxu0 %v1492
      %1538 = vmatpush.bf16.msra.mxu0 %v1491
      %1539 = vmatpush.bf16.msra.mxu0 %v1490
      %1540 = vmatpush.bf16.msra.mxu0 %v1489
      %1541 = vmatmul.bf16.gmra.mxu0 %v1498
      %v1542 = vpop.f32.mrf.mxu0
      %v1543 = vadd.f32 0.0, %v1542
      %v1544 = vpop.f32.mrf.mxu0
      %v1545 = vadd.f32 0.0, %v1544
      %1546 = vmatmul.bf16.gmra.mxu0 %v1501
      %v1547 = vpop.f32.mrf.mxu0
      %v1548 = vadd.f32 0.0, %v1547
      %v1549 = vpop.f32.mrf.mxu0
      %v1550 = vadd.f32 0.0, %v1549
      %1551 = vmatmul.bf16.gmra.mxu0 %v1504
      %v1552 = vpop.f32.mrf.mxu0
      %v1553 = vadd.f32 0.0, %v1552
      %v1554 = vpop.f32.mrf.mxu0
      %v1555 = vadd.f32 0.0, %v1554
      %1556 = vmatmul.bf16.gmra.mxu0 %v1507
      %v1557 = vpop.f32.mrf.mxu0
      %v1558 = vadd.f32 0.0, %v1557
      %v1559 = vpop.f32.mrf.mxu0
      %v1560 = vadd.f32 0.0, %v1559
      %1561 = vmatmul.bf16.gmra.mxu0 %v1510
      %v1562 = vpop.f32.mrf.mxu0
      %v1563 = vadd.f32 0.0, %v1562
      %v1564 = vpop.f32.mrf.mxu0
      %v1565 = vadd.f32 0.0, %v1564
      %1566 = vmatmul.bf16.gmra.mxu0 %v1513
      %v1567 = vpop.f32.mrf.mxu0
      %v1568 = vadd.f32 0.0, %v1567
      %v1569 = vpop.f32.mrf.mxu0
      %v1570 = vadd.f32 0.0, %v1569
      %1571 = vmatmul.bf16.gmra.mxu0 %v1516
      %v1572 = vpop.f32.mrf.mxu0
      %v1573 = vadd.f32 0.0, %v1572
      %v1574 = vpop.f32.mrf.mxu0
      %v1575 = vadd.f32 0.0, %v1574
      %1576 = vmatmul.bf16.gmra.mxu0 %v1519
      %v1577 = vpop.f32.mrf.mxu0
      %v1578 = vadd.f32 0.0, %v1577
      %v1579 = vpop.f32.mrf.mxu0
      %v1580 = vadd.f32 0.0, %v1579
      %1581 = vmatmul.bf16.gmra.mxu0 %v1522
      %v1582 = vpop.f32.mrf.mxu0
      %v1583 = vadd.f32 0.0, %v1582
      %v1584 = vpop.f32.mrf.mxu0
      %v1585 = vadd.f32 0.0, %v1584
      %1586 = vmatmul.bf16.gmra.mxu0 %v1525
      %v1587 = vpop.f32.mrf.mxu0
      %v1588 = vadd.f32 0.0, %v1587
      %v1589 = vpop.f32.mrf.mxu0
      %v1590 = vadd.f32 0.0, %v1589
      %1591 = vmatmul.bf16.gmra.mxu0 %v1528
      %v1592 = vpop.f32.mrf.mxu0
      %v1593 = vadd.f32 0.0, %v1592
      %v1594 = vpop.f32.mrf.mxu0
      %v1595 = vadd.f32 0.0, %v1594
      %1596 = vmatmul.bf16.gmra.mxu0 %v1531
      %v1597 = vpop.f32.mrf.mxu0
      %v1598 = vadd.f32 0.0, %v1597
      %v1599 = vpop.f32.mrf.mxu0
      %v1600 = vadd.f32 0.0, %v1599
      %1601 = vdwg.mxu0
      %v1602 = vadd.f32 %v1362, %v1543
      %v1603 = vadd.f32 %v1364, %v1545
      %v1604 = vadd.f32 %v1367, %v1548
      %v1605 = vadd.f32 %v1369, %v1550
      %v1606 = vadd.f32 %v1372, %v1553
      %v1607 = vadd.f32 %v1374, %v1555
      %v1608 = vadd.f32 %v1377, %v1558
      %v1609 = vadd.f32 %v1379, %v1560
      %v1610 = vadd.f32 %v1382, %v1563
      %v1611 = vadd.f32 %v1384, %v1565
      %v1612 = vadd.f32 %v1387, %v1568
      %v1613 = vadd.f32 %v1389, %v1570
      %v1614 = vadd.f32 %v1392, %v1573
      %v1615 = vadd.f32 %v1394, %v1575
      %v1616 = vadd.f32 %v1397, %v1578
      %v1617 = vadd.f32 %v1399, %v1580
      %v1618 = vadd.f32 %v1402, %v1583
      %v1619 = vadd.f32 %v1404, %v1585
      %v1620 = vadd.f32 %v1407, %v1588
      %v1621 = vadd.f32 %v1409, %v1590
      %v1622 = vadd.f32 %v1412, %v1593
      %v1623 = vadd.f32 %v1414, %v1595
      %v1624 = vadd.f32 %v1417, %v1598
      %v1625 = vadd.f32 %v1419, %v1600
      %vm1626 = vsmask.f32 256
      %v1627 = vrot.slane %v1185, 7
      %v1628 = vrot.slane %v1194, 7
      %v1629 = vor.u32 %v1628, %v1197
      %v1630 = vsel %vm1626, %v1627, %v1629
      %v1631 = vrot.slane %v1203, 7
      %v1632 = vor.u32 %v1631, %v1206
      %v1633 = vsel %vm1626, %v1628, %v1632
      %v1634 = vrot.slane %v1212, 7
      %v1635 = vor.u32 %v1634, %v1215
      %v1636 = vsel %vm1626, %v1631, %v1635
      %v1637 = vrot.slane %v1221, 7
      %v1638 = vor.u32 %v1637, %v1224
      %v1639 = vsel %vm1626, %v1634, %v1638
      %v1640 = vrot.slane %v1230, 7
      %v1641 = vor.u32 %v1640, %v1233
      %v1642 = vsel %vm1626, %v1637, %v1641
      %v1643 = vrot.slane %v1239, 7
      %v1644 = vor.u32 %v1643, %v1242
      %v1645 = vsel %vm1626, %v1640, %v1644
      %v1646 = vrot.slane %v1248, 7
      %v1647 = vor.u32 %v1646, %v1251
      %v1648 = vsel %vm1626, %v1643, %v1647
      %v1649 = vrot.slane %v1257, 7
      %v1650 = vor.u32 %v1649, %v1260
      %v1651 = vsel %vm1626, %v1646, %v1650
      %v1652 = vrot.slane %v1266, 7
      %v1653 = vor.u32 %v1652, %v1269
      %v1654 = vsel %vm1626, %v1649, %v1653
      %v1655 = vrot.slane %v1275, 7
      %v1656 = vor.u32 %v1655, %v1278
      %v1657 = vsel %vm1626, %v1652, %v1656
      %v1658 = vrot.slane %v1284, 7
      %v1659 = vor.u32 %v1658, %v1287
      %v1660 = vsel %vm1626, %v1655, %v1659
      %v1662 = vshrl.u32 %v936, 16
      %v1664 = vrot.slane %v1662, 7
      %v1665 = vshll.u32 %v936, 16
      %v1667 = vor.u32 %v1664, %v1665
      %v1668 = vsel %vm1626, %v1658, %v1667
      %v1677 = vunpack.c.l.b16 %v971
      %v1678 = vunpack.c.l.b16 %v972
      %v1679 = vunpack.c.l.b16 %v973
      %v1680 = vunpack.c.l.b16 %v974
      %v1681 = vunpack.c.l.b16 %v975
      %v1682 = vunpack.c.l.b16 %v976
      %v1683 = vunpack.c.l.b16 %v977
      %v1684 = vunpack.c.l.b16 %v978
      %v1685 = vpack.c.b16 %v1678, %v1677
      %v1686 = vpack.c.b16 %v1680, %v1679
      %v1687 = vpack.c.b16 %v1682, %v1681
      %v1688 = vpack.c.b16 %v1684, %v1683
      %v1694 = vsel %vm1069, %v1630, 0
      %v1697 = vsel %vm1069, %v1633, 0
      %v1700 = vsel %vm1069, %v1636, 0
      %v1703 = vsel %vm1069, %v1639, 0
      %v1706 = vsel %vm1069, %v1642, 0
      %v1709 = vsel %vm1069, %v1645, 0
      %v1712 = vsel %vm1069, %v1648, 0
      %v1715 = vsel %vm1069, %v1651, 0
      %v1718 = vsel %vm1069, %v1654, 0
      %v1721 = vsel %vm1069, %v1657, 0
      %v1724 = vsel %vm1069, %v1660, 0
      %v1727 = vsel %vm1069, %v1668, 0
      %1729 = vmatpush.bf16.msra.mxu0 0
      %1730 = vmatpush.bf16.msra.mxu0 0
      %1731 = vmatpush.bf16.msra.mxu0 0
      %1732 = vmatpush.bf16.msra.mxu0 0
      %1733 = vmatpush.bf16.msra.mxu0 %v1688
      %1734 = vmatpush.bf16.msra.mxu0 %v1687
      %1735 = vmatpush.bf16.msra.mxu0 %v1686
      %1736 = vmatpush.bf16.msra.mxu0 %v1685
      %1737 = vmatmul.bf16.gmra.mxu0 %v1694
      %v1738 = vpop.f32.mrf.mxu0
      %v1739 = vadd.f32 0.0, %v1738
      %v1740 = vpop.f32.mrf.mxu0
      %v1741 = vadd.f32 0.0, %v1740
      %1742 = vmatmul.bf16.gmra.mxu0 %v1697
      %v1743 = vpop.f32.mrf.mxu0
      %v1744 = vadd.f32 0.0, %v1743
      %v1745 = vpop.f32.mrf.mxu0
      %v1746 = vadd.f32 0.0, %v1745
      %1747 = vmatmul.bf16.gmra.mxu0 %v1700
      %v1748 = vpop.f32.mrf.mxu0
      %v1749 = vadd.f32 0.0, %v1748
      %v1750 = vpop.f32.mrf.mxu0
      %v1751 = vadd.f32 0.0, %v1750
      %1752 = vmatmul.bf16.gmra.mxu0 %v1703
      %v1753 = vpop.f32.mrf.mxu0
      %v1754 = vadd.f32 0.0, %v1753
      %v1755 = vpop.f32.mrf.mxu0
      %v1756 = vadd.f32 0.0, %v1755
      %1757 = vmatmul.bf16.gmra.mxu0 %v1706
      %v1758 = vpop.f32.mrf.mxu0
      %v1759 = vadd.f32 0.0, %v1758
      %v1760 = vpop.f32.mrf.mxu0
      %v1761 = vadd.f32 0.0, %v1760
      %1762 = vmatmul.bf16.gmra.mxu0 %v1709
      %v1763 = vpop.f32.mrf.mxu0
      %v1764 = vadd.f32 0.0, %v1763
      %v1765 = vpop.f32.mrf.mxu0
      %v1766 = vadd.f32 0.0, %v1765
      %1767 = vmatmul.bf16.gmra.mxu0 %v1712
      %v1768 = vpop.f32.mrf.mxu0
      %v1769 = vadd.f32 0.0, %v1768
      %v1770 = vpop.f32.mrf.mxu0
      %v1771 = vadd.f32 0.0, %v1770
      %1772 = vmatmul.bf16.gmra.mxu0 %v1715
      %v1773 = vpop.f32.mrf.mxu0
      %v1774 = vadd.f32 0.0, %v1773
      %v1775 = vpop.f32.mrf.mxu0
      %v1776 = vadd.f32 0.0, %v1775
      %1777 = vmatmul.bf16.gmra.mxu0 %v1718
      %v1778 = vpop.f32.mrf.mxu0
      %v1779 = vadd.f32 0.0, %v1778
      %v1780 = vpop.f32.mrf.mxu0
      %v1781 = vadd.f32 0.0, %v1780
      %1782 = vmatmul.bf16.gmra.mxu0 %v1721
      %v1783 = vpop.f32.mrf.mxu0
      %v1784 = vadd.f32 0.0, %v1783
      %v1785 = vpop.f32.mrf.mxu0
      %v1786 = vadd.f32 0.0, %v1785
      %1787 = vmatmul.bf16.gmra.mxu0 %v1724
      %v1788 = vpop.f32.mrf.mxu0
      %v1789 = vadd.f32 0.0, %v1788
      %v1790 = vpop.f32.mrf.mxu0
      %v1791 = vadd.f32 0.0, %v1790
      %1792 = vmatmul.bf16.gmra.mxu0 %v1727
      %v1793 = vpop.f32.mrf.mxu0
      %v1794 = vadd.f32 0.0, %v1793
      %v1795 = vpop.f32.mrf.mxu0
      %v1796 = vadd.f32 0.0, %v1795
      %1797 = vdwg.mxu0
      %v1798 = vadd.f32 %v1602, %v1739
      %v1799 = vadd.f32 %v1603, %v1741
      %v1800 = vadd.f32 %v1604, %v1744
      %v1801 = vadd.f32 %v1605, %v1746
      %v1802 = vadd.f32 %v1606, %v1749
      %v1803 = vadd.f32 %v1607, %v1751
      %v1804 = vadd.f32 %v1608, %v1754
      %v1805 = vadd.f32 %v1609, %v1756
      %v1806 = vadd.f32 %v1610, %v1759
      %v1807 = vadd.f32 %v1611, %v1761
      %v1808 = vadd.f32 %v1612, %v1764
      %v1809 = vadd.f32 %v1613, %v1766
      %v1810 = vadd.f32 %v1614, %v1769
      %v1811 = vadd.f32 %v1615, %v1771
      %v1812 = vadd.f32 %v1616, %v1774
      %v1813 = vadd.f32 %v1617, %v1776
      %v1814 = vadd.f32 %v1618, %v1779
      %v1815 = vadd.f32 %v1619, %v1781
      %v1816 = vadd.f32 %v1620, %v1784
      %v1817 = vadd.f32 %v1621, %v1786
      %v1818 = vadd.f32 %v1622, %v1789
      %v1819 = vadd.f32 %v1623, %v1791
      %v1820 = vadd.f32 %v1624, %v1794
      %v1821 = vadd.f32 %v1625, %v1796
      %v1830 = vunpack.c.l.b16 %v979
      %v1831 = vunpack.c.l.b16 %v980
      %v1832 = vunpack.c.l.b16 %v981
      %v1833 = vunpack.c.l.b16 %v982
      %v1834 = vunpack.c.l.b16 %v983
      %v1835 = vunpack.c.l.b16 %v984
      %v1836 = vunpack.c.l.b16 %v985
      %v1837 = vunpack.c.l.b16 %v986
      %v1838 = vpack.c.b16 %v1831, %v1830
      %v1839 = vpack.c.b16 %v1833, %v1832
      %v1840 = vpack.c.b16 %v1835, %v1834
      %v1841 = vpack.c.b16 %v1837, %v1836
      %v1846 = vsel %vm1069, %v925, 0
      %v1848 = vsel %vm1069, %v926, 0
      %v1850 = vsel %vm1069, %v927, 0
      %v1852 = vsel %vm1069, %v928, 0
      %v1854 = vsel %vm1069, %v929, 0
      %v1856 = vsel %vm1069, %v930, 0
      %v1858 = vsel %vm1069, %v931, 0
      %v1860 = vsel %vm1069, %v932, 0
      %v1862 = vsel %vm1069, %v933, 0
      %v1864 = vsel %vm1069, %v934, 0
      %v1866 = vsel %vm1069, %v935, 0
      %v1868 = vsel %vm1069, %v936, 0
      %1870 = vmatpush.bf16.msra.mxu0 0
      %1871 = vmatpush.bf16.msra.mxu0 0
      %1872 = vmatpush.bf16.msra.mxu0 0
      %1873 = vmatpush.bf16.msra.mxu0 0
      %1874 = vmatpush.bf16.msra.mxu0 %v1841
      %1875 = vmatpush.bf16.msra.mxu0 %v1840
      %1876 = vmatpush.bf16.msra.mxu0 %v1839
      %1877 = vmatpush.bf16.msra.mxu0 %v1838
      %1878 = vmatmul.bf16.gmra.mxu0 %v1846
      %v1879 = vpop.f32.mrf.mxu0
      %v1880 = vadd.f32 0.0, %v1879
      %v1881 = vpop.f32.mrf.mxu0
      %v1882 = vadd.f32 0.0, %v1881
      %1883 = vmatmul.bf16.gmra.mxu0 %v1848
      %v1884 = vpop.f32.mrf.mxu0
      %v1885 = vadd.f32 0.0, %v1884
      %v1886 = vpop.f32.mrf.mxu0
      %v1887 = vadd.f32 0.0, %v1886
      %1888 = vmatmul.bf16.gmra.mxu0 %v1850
      %v1889 = vpop.f32.mrf.mxu0
      %v1890 = vadd.f32 0.0, %v1889
      %v1891 = vpop.f32.mrf.mxu0
      %v1892 = vadd.f32 0.0, %v1891
      %1893 = vmatmul.bf16.gmra.mxu0 %v1852
      %v1894 = vpop.f32.mrf.mxu0
      %v1895 = vadd.f32 0.0, %v1894
      %v1896 = vpop.f32.mrf.mxu0
      %v1897 = vadd.f32 0.0, %v1896
      %1898 = vmatmul.bf16.gmra.mxu0 %v1854
      %v1899 = vpop.f32.mrf.mxu0
      %v1900 = vadd.f32 0.0, %v1899
      %v1901 = vpop.f32.mrf.mxu0
      %v1902 = vadd.f32 0.0, %v1901
      %1903 = vmatmul.bf16.gmra.mxu0 %v1856
      %v1904 = vpop.f32.mrf.mxu0
      %v1905 = vadd.f32 0.0, %v1904
      %v1906 = vpop.f32.mrf.mxu0
      %v1907 = vadd.f32 0.0, %v1906
      %1908 = vmatmul.bf16.gmra.mxu0 %v1858
      %v1909 = vpop.f32.mrf.mxu0
      %v1910 = vadd.f32 0.0, %v1909
      %v1911 = vpop.f32.mrf.mxu0
      %v1912 = vadd.f32 0.0, %v1911
      %1913 = vmatmul.bf16.gmra.mxu0 %v1860
      %v1914 = vpop.f32.mrf.mxu0
      %v1915 = vadd.f32 0.0, %v1914
      %v1916 = vpop.f32.mrf.mxu0
      %v1917 = vadd.f32 0.0, %v1916
      %1918 = vmatmul.bf16.gmra.mxu0 %v1862
      %v1919 = vpop.f32.mrf.mxu0
      %v1920 = vadd.f32 0.0, %v1919
      %v1921 = vpop.f32.mrf.mxu0
      %v1922 = vadd.f32 0.0, %v1921
      %1923 = vmatmul.bf16.gmra.mxu0 %v1864
      %v1924 = vpop.f32.mrf.mxu0
      %v1925 = vadd.f32 0.0, %v1924
      %v1926 = vpop.f32.mrf.mxu0
      %v1927 = vadd.f32 0.0, %v1926
      %1928 = vmatmul.bf16.gmra.mxu0 %v1866
      %v1929 = vpop.f32.mrf.mxu0
      %v1930 = vadd.f32 0.0, %v1929
      %v1931 = vpop.f32.mrf.mxu0
      %v1932 = vadd.f32 0.0, %v1931
      %1933 = vmatmul.bf16.gmra.mxu0 %v1868
      %v1934 = vpop.f32.mrf.mxu0
      %v1935 = vadd.f32 0.0, %v1934
      %v1936 = vpop.f32.mrf.mxu0
      %v1937 = vadd.f32 0.0, %v1936
      %1938 = vdwg.mxu0
      %v1939 = vadd.f32 %v1798, %v1880
      %v1940 = vadd.f32 %v1799, %v1882
      %v1941 = vadd.f32 %v1800, %v1885
      %v1942 = vadd.f32 %v1801, %v1887
      %v1943 = vadd.f32 %v1802, %v1890
      %v1944 = vadd.f32 %v1803, %v1892
      %v1945 = vadd.f32 %v1804, %v1895
      %v1946 = vadd.f32 %v1805, %v1897
      %v1947 = vadd.f32 %v1806, %v1900
      %v1948 = vadd.f32 %v1807, %v1902
      %v1949 = vadd.f32 %v1808, %v1905
      %v1950 = vadd.f32 %v1809, %v1907
      %v1951 = vadd.f32 %v1810, %v1910
      %v1952 = vadd.f32 %v1811, %v1912
      %v1953 = vadd.f32 %v1812, %v1915
      %v1954 = vadd.f32 %v1813, %v1917
      %v1955 = vadd.f32 %v1814, %v1920
      %v1956 = vadd.f32 %v1815, %v1922
      %v1957 = vadd.f32 %v1816, %v1925
      %v1958 = vadd.f32 %v1817, %v1927
      %v1959 = vadd.f32 %v1818, %v1930
      %v1960 = vadd.f32 %v1819, %v1932
      %v1961 = vadd.f32 %v1820, %v1935
      %v1962 = vadd.f32 %v1821, %v1937
      %vm1963 = vsmask.f32 7424
      %v1964 = vrot.slane %v1197, 1
      %v1965 = vor.u32 %v1194, %v1964
      %v1966 = vrot.slane %v1206, 1
      %v1967 = vsel %vm1963, %v1965, %v1966
      %v1968 = vor.u32 %v1203, %v1966
      %v1969 = vrot.slane %v1215, 1
      %v1970 = vsel %vm1963, %v1968, %v1969
      %v1971 = vor.u32 %v1212, %v1969
      %v1972 = vrot.slane %v1224, 1
      %v1973 = vsel %vm1963, %v1971, %v1972
      %v1974 = vor.u32 %v1221, %v1972
      %v1975 = vrot.slane %v1233, 1
      %v1976 = vsel %vm1963, %v1974, %v1975
      %v1977 = vor.u32 %v1230, %v1975
      %v1978 = vrot.slane %v1242, 1
      %v1979 = vsel %vm1963, %v1977, %v1978
      %v1980 = vor.u32 %v1239, %v1978
      %v1981 = vrot.slane %v1251, 1
      %v1982 = vsel %vm1963, %v1980, %v1981
      %v1983 = vor.u32 %v1248, %v1981
      %v1984 = vrot.slane %v1260, 1
      %v1985 = vsel %vm1963, %v1983, %v1984
      %v1986 = vor.u32 %v1257, %v1984
      %v1987 = vrot.slane %v1269, 1
      %v1988 = vsel %vm1963, %v1986, %v1987
      %v1989 = vor.u32 %v1266, %v1987
      %v1990 = vrot.slane %v1278, 1
      %v1991 = vsel %vm1963, %v1989, %v1990
      %v1992 = vor.u32 %v1275, %v1990
      %v1993 = vrot.slane %v1287, 1
      %v1994 = vsel %vm1963, %v1992, %v1993
      %v1995 = vor.u32 %v1284, %v1993
      %v1996 = vrot.slane %v1665, 1
      %v1997 = vsel %vm1963, %v1995, %v1996
      %v1998 = vor.u32 %v1662, %v1996
      %v2000 = vshll.u32 %v945, 16
      %v2002 = vrot.slane %v2000, 1
      %v2003 = vsel %vm1963, %v1998, %v2002
      %v2012 = vunpack.c.l.b16 %v987
      %v2013 = vunpack.c.l.b16 %v988
      %v2014 = vunpack.c.l.b16 %v989
      %v2015 = vunpack.c.l.b16 %v990
      %v2016 = vunpack.c.l.b16 %v991
      %v2017 = vunpack.c.l.b16 %v992
      %v2018 = vunpack.c.l.b16 %v993
      %v2019 = vunpack.c.l.b16 %v994
      %v2020 = vpack.c.b16 %v2013, %v2012
      %v2021 = vpack.c.b16 %v2015, %v2014
      %v2022 = vpack.c.b16 %v2017, %v2016
      %v2023 = vpack.c.b16 %v2019, %v2018
      %v2029 = vsel %vm1069, %v1967, 0
      %v2032 = vsel %vm1069, %v1970, 0
      %v2035 = vsel %vm1069, %v1973, 0
      %v2038 = vsel %vm1069, %v1976, 0
      %v2041 = vsel %vm1069, %v1979, 0
      %v2044 = vsel %vm1069, %v1982, 0
      %v2047 = vsel %vm1069, %v1985, 0
      %v2050 = vsel %vm1069, %v1988, 0
      %v2053 = vsel %vm1069, %v1991, 0
      %v2056 = vsel %vm1069, %v1994, 0
      %v2059 = vsel %vm1069, %v1997, 0
      %v2062 = vsel %vm1069, %v2003, 0
      %2064 = vmatpush.bf16.msra.mxu0 0
      %2065 = vmatpush.bf16.msra.mxu0 0
      %2066 = vmatpush.bf16.msra.mxu0 0
      %2067 = vmatpush.bf16.msra.mxu0 0
      %2068 = vmatpush.bf16.msra.mxu0 %v2023
      %2069 = vmatpush.bf16.msra.mxu0 %v2022
      %2070 = vmatpush.bf16.msra.mxu0 %v2021
      %2071 = vmatpush.bf16.msra.mxu0 %v2020
      %2072 = vmatmul.bf16.gmra.mxu0 %v2029
      %v2073 = vpop.f32.mrf.mxu0
      %v2074 = vadd.f32 0.0, %v2073
      %v2075 = vpop.f32.mrf.mxu0
      %v2076 = vadd.f32 0.0, %v2075
      %2077 = vmatmul.bf16.gmra.mxu0 %v2032
      %v2078 = vpop.f32.mrf.mxu0
      %v2079 = vadd.f32 0.0, %v2078
      %v2080 = vpop.f32.mrf.mxu0
      %v2081 = vadd.f32 0.0, %v2080
      %2082 = vmatmul.bf16.gmra.mxu0 %v2035
      %v2083 = vpop.f32.mrf.mxu0
      %v2084 = vadd.f32 0.0, %v2083
      %v2085 = vpop.f32.mrf.mxu0
      %v2086 = vadd.f32 0.0, %v2085
      %2087 = vmatmul.bf16.gmra.mxu0 %v2038
      %v2088 = vpop.f32.mrf.mxu0
      %v2089 = vadd.f32 0.0, %v2088
      %v2090 = vpop.f32.mrf.mxu0
      %v2091 = vadd.f32 0.0, %v2090
      %2092 = vmatmul.bf16.gmra.mxu0 %v2041
      %v2093 = vpop.f32.mrf.mxu0
      %v2094 = vadd.f32 0.0, %v2093
      %v2095 = vpop.f32.mrf.mxu0
      %v2096 = vadd.f32 0.0, %v2095
      %2097 = vmatmul.bf16.gmra.mxu0 %v2044
      %v2098 = vpop.f32.mrf.mxu0
      %v2099 = vadd.f32 0.0, %v2098
      %v2100 = vpop.f32.mrf.mxu0
      %v2101 = vadd.f32 0.0, %v2100
      %2102 = vmatmul.bf16.gmra.mxu0 %v2047
      %v2103 = vpop.f32.mrf.mxu0
      %v2104 = vadd.f32 0.0, %v2103
      %v2105 = vpop.f32.mrf.mxu0
      %v2106 = vadd.f32 0.0, %v2105
      %2107 = vmatmul.bf16.gmra.mxu0 %v2050
      %v2108 = vpop.f32.mrf.mxu0
      %v2109 = vadd.f32 0.0, %v2108
      %v2110 = vpop.f32.mrf.mxu0
      %v2111 = vadd.f32 0.0, %v2110
      %2112 = vmatmul.bf16.gmra.mxu0 %v2053
      %v2113 = vpop.f32.mrf.mxu0
      %v2114 = vadd.f32 0.0, %v2113
      %v2115 = vpop.f32.mrf.mxu0
      %v2116 = vadd.f32 0.0, %v2115
      %2117 = vmatmul.bf16.gmra.mxu0 %v2056
      %v2118 = vpop.f32.mrf.mxu0
      %v2119 = vadd.f32 0.0, %v2118
      %v2120 = vpop.f32.mrf.mxu0
      %v2121 = vadd.f32 0.0, %v2120
      %2122 = vmatmul.bf16.gmra.mxu0 %v2059
      %v2123 = vpop.f32.mrf.mxu0
      %v2124 = vadd.f32 0.0, %v2123
      %v2125 = vpop.f32.mrf.mxu0
      %v2126 = vadd.f32 0.0, %v2125
      %2127 = vmatmul.bf16.gmra.mxu0 %v2062
      %v2128 = vpop.f32.mrf.mxu0
      %v2129 = vadd.f32 0.0, %v2128
      %v2130 = vpop.f32.mrf.mxu0
      %v2131 = vadd.f32 0.0, %v2130
      %2132 = vdwg.mxu0
      %v2133 = vadd.f32 %v1939, %v2074
      %v2134 = vadd.f32 %v1940, %v2076
      %v2135 = vadd.f32 %v1941, %v2079
      %v2136 = vadd.f32 %v1942, %v2081
      %v2137 = vadd.f32 %v1943, %v2084
      %v2138 = vadd.f32 %v1944, %v2086
      %v2139 = vadd.f32 %v1945, %v2089
      %v2140 = vadd.f32 %v1946, %v2091
      %v2141 = vadd.f32 %v1947, %v2094
      %v2142 = vadd.f32 %v1948, %v2096
      %v2143 = vadd.f32 %v1949, %v2099
      %v2144 = vadd.f32 %v1950, %v2101
      %v2145 = vadd.f32 %v1951, %v2104
      %v2146 = vadd.f32 %v1952, %v2106
      %v2147 = vadd.f32 %v1953, %v2109
      %v2148 = vadd.f32 %v1954, %v2111
      %v2149 = vadd.f32 %v1955, %v2114
      %v2150 = vadd.f32 %v1956, %v2116
      %v2151 = vadd.f32 %v1957, %v2119
      %v2152 = vadd.f32 %v1958, %v2121
      %v2153 = vadd.f32 %v1959, %v2124
      %v2154 = vadd.f32 %v1960, %v2126
      %v2155 = vadd.f32 %v1961, %v2129
      %v2156 = vadd.f32 %v1962, %v2131
      %v2157 = vrot.slane %v1662, 3
      %v2158 = vrot.slane %v1665, 4
      %v2159 = vor.u32 %v2157, %v2158
      %v2160 = vsel %vm1175, %v1290, %v2159
      %v2161 = vshrl.u32 %v945, 16
      %v2163 = vrot.slane %v2161, 3
      %v2164 = vrot.slane %v2000, 4
      %v2165 = vor.u32 %v2163, %v2164
      %v2166 = vsel %vm1175, %v2159, %v2165
      %v2168 = vshrl.u32 %v946, 16
      %v2170 = vrot.slane %v2168, 3
      %v2171 = vshll.u32 %v946, 16
      %v2173 = vrot.slane %v2171, 4
      %v2174 = vor.u32 %v2170, %v2173
      %v2175 = vsel %vm1175, %v2165, %v2174
      %v2184 = vunpack.c.l.b16 %v995
      %v2185 = vunpack.c.l.b16 %v996
      %v2186 = vunpack.c.l.b16 %v997
      %v2187 = vunpack.c.l.b16 %v998
      %v2188 = vunpack.c.l.b16 %v999
      %v2189 = vunpack.c.l.b16 %v1000
      %v2190 = vunpack.c.l.b16 %v1001
      %v2191 = vunpack.c.l.b16 %v1002
      %v2192 = vpack.c.b16 %v2185, %v2184
      %v2193 = vpack.c.b16 %v2187, %v2186
      %v2194 = vpack.c.b16 %v2189, %v2188
      %v2195 = vpack.c.b16 %v2191, %v2190
      %v2201 = vsel %vm1069, %v2160, 0
      %v2204 = vsel %vm1069, %v2166, 0
      %v2207 = vsel %vm1069, %v2175, 0
      %2209 = vmatpush.bf16.msra.mxu0 0
      %2210 = vmatpush.bf16.msra.mxu0 0
      %2211 = vmatpush.bf16.msra.mxu0 0
      %2212 = vmatpush.bf16.msra.mxu0 0
      %2213 = vmatpush.bf16.msra.mxu0 %v2195
      %2214 = vmatpush.bf16.msra.mxu0 %v2194
      %2215 = vmatpush.bf16.msra.mxu0 %v2193
      %2216 = vmatpush.bf16.msra.mxu0 %v2192
      %2217 = vmatmul.bf16.gmra.mxu0 %v1326
      %v2218 = vpop.f32.mrf.mxu0
      %v2219 = vadd.f32 0.0, %v2218
      %v2220 = vpop.f32.mrf.mxu0
      %v2221 = vadd.f32 0.0, %v2220
      %2222 = vmatmul.bf16.gmra.mxu0 %v1329
      %v2223 = vpop.f32.mrf.mxu0
      %v2224 = vadd.f32 0.0, %v2223
      %v2225 = vpop.f32.mrf.mxu0
      %v2226 = vadd.f32 0.0, %v2225
      %2227 = vmatmul.bf16.gmra.mxu0 %v1332
      %v2228 = vpop.f32.mrf.mxu0
      %v2229 = vadd.f32 0.0, %v2228
      %v2230 = vpop.f32.mrf.mxu0
      %v2231 = vadd.f32 0.0, %v2230
      %2232 = vmatmul.bf16.gmra.mxu0 %v1335
      %v2233 = vpop.f32.mrf.mxu0
      %v2234 = vadd.f32 0.0, %v2233
      %v2235 = vpop.f32.mrf.mxu0
      %v2236 = vadd.f32 0.0, %v2235
      %2237 = vmatmul.bf16.gmra.mxu0 %v1338
      %v2238 = vpop.f32.mrf.mxu0
      %v2239 = vadd.f32 0.0, %v2238
      %v2240 = vpop.f32.mrf.mxu0
      %v2241 = vadd.f32 0.0, %v2240
      %2242 = vmatmul.bf16.gmra.mxu0 %v1341
      %v2243 = vpop.f32.mrf.mxu0
      %v2244 = vadd.f32 0.0, %v2243
      %v2245 = vpop.f32.mrf.mxu0
      %v2246 = vadd.f32 0.0, %v2245
      %2247 = vmatmul.bf16.gmra.mxu0 %v1344
      %v2248 = vpop.f32.mrf.mxu0
      %v2249 = vadd.f32 0.0, %v2248
      %v2250 = vpop.f32.mrf.mxu0
      %v2251 = vadd.f32 0.0, %v2250
      %2252 = vmatmul.bf16.gmra.mxu0 %v1347
      %v2253 = vpop.f32.mrf.mxu0
      %v2254 = vadd.f32 0.0, %v2253
      %v2255 = vpop.f32.mrf.mxu0
      %v2256 = vadd.f32 0.0, %v2255
      %2257 = vmatmul.bf16.gmra.mxu0 %v1350
      %v2258 = vpop.f32.mrf.mxu0
      %v2259 = vadd.f32 0.0, %v2258
      %v2260 = vpop.f32.mrf.mxu0
      %v2261 = vadd.f32 0.0, %v2260
      %2262 = vmatmul.bf16.gmra.mxu0 %v2201
      %v2263 = vpop.f32.mrf.mxu0
      %v2264 = vadd.f32 0.0, %v2263
      %v2265 = vpop.f32.mrf.mxu0
      %v2266 = vadd.f32 0.0, %v2265
      %2267 = vmatmul.bf16.gmra.mxu0 %v2204
      %v2268 = vpop.f32.mrf.mxu0
      %v2269 = vadd.f32 0.0, %v2268
      %v2270 = vpop.f32.mrf.mxu0
      %v2271 = vadd.f32 0.0, %v2270
      %2272 = vmatmul.bf16.gmra.mxu0 %v2207
      %v2273 = vpop.f32.mrf.mxu0
      %v2274 = vadd.f32 0.0, %v2273
      %v2275 = vpop.f32.mrf.mxu0
      %v2276 = vadd.f32 0.0, %v2275
      %2277 = vdwg.mxu0
      %v2278 = vadd.f32 %v2133, %v2219
      %v2279 = vadd.f32 %v2134, %v2221
      %v2280 = vadd.f32 %v2135, %v2224
      %v2281 = vadd.f32 %v2136, %v2226
      %v2282 = vadd.f32 %v2137, %v2229
      %v2283 = vadd.f32 %v2138, %v2231
      %v2284 = vadd.f32 %v2139, %v2234
      %v2285 = vadd.f32 %v2140, %v2236
      %v2286 = vadd.f32 %v2141, %v2239
      %v2287 = vadd.f32 %v2142, %v2241
      %v2288 = vadd.f32 %v2143, %v2244
      %v2289 = vadd.f32 %v2144, %v2246
      %v2290 = vadd.f32 %v2145, %v2249
      %v2291 = vadd.f32 %v2146, %v2251
      %v2292 = vadd.f32 %v2147, %v2254
      %v2293 = vadd.f32 %v2148, %v2256
      %v2294 = vadd.f32 %v2149, %v2259
      %v2295 = vadd.f32 %v2150, %v2261
      %v2296 = vadd.f32 %v2151, %v2264
      %v2297 = vadd.f32 %v2152, %v2266
      %v2298 = vadd.f32 %v2153, %v2269
      %v2299 = vadd.f32 %v2154, %v2271
      %v2300 = vadd.f32 %v2155, %v2274
      %v2301 = vadd.f32 %v2156, %v2276
      %v2302 = vrot.slane %v936, 4
      %v2303 = vsel %vm1019, %v1043, %v2302
      %v2304 = vrot.slane %v945, 4
      %v2305 = vsel %vm1019, %v2302, %v2304
      %v2306 = vrot.slane %v946, 4
      %v2307 = vsel %vm1019, %v2304, %v2306
      %v2316 = vunpack.c.l.b16 %v1003
      %v2317 = vunpack.c.l.b16 %v1004
      %v2318 = vunpack.c.l.b16 %v1005
      %v2319 = vunpack.c.l.b16 %v1006
      %v2320 = vunpack.c.l.b16 %v1007
      %v2321 = vunpack.c.l.b16 %v1008
      %v2322 = vunpack.c.l.b16 %v1009
      %v2323 = vunpack.c.l.b16 %v1010
      %v2324 = vpack.c.b16 %v2317, %v2316
      %v2325 = vpack.c.b16 %v2319, %v2318
      %v2326 = vpack.c.b16 %v2321, %v2320
      %v2327 = vpack.c.b16 %v2323, %v2322
      %v2333 = vsel %vm1069, %v2303, 0
      %v2336 = vsel %vm1069, %v2305, 0
      %v2339 = vsel %vm1069, %v2307, 0
      %2341 = vmatpush.bf16.msra.mxu0 0
      %2342 = vmatpush.bf16.msra.mxu0 0
      %2343 = vmatpush.bf16.msra.mxu0 0
      %2344 = vmatpush.bf16.msra.mxu0 0
      %2345 = vmatpush.bf16.msra.mxu0 %v2327
      %2346 = vmatpush.bf16.msra.mxu0 %v2326
      %2347 = vmatpush.bf16.msra.mxu0 %v2325
      %2348 = vmatpush.bf16.msra.mxu0 %v2324
      %2349 = vmatmul.bf16.gmra.mxu0 %v1080
      %v2350 = vpop.f32.mrf.mxu0
      %v2351 = vadd.f32 0.0, %v2350
      %v2352 = vpop.f32.mrf.mxu0
      %v2353 = vadd.f32 0.0, %v2352
      %2354 = vmatmul.bf16.gmra.mxu0 %v1083
      %v2355 = vpop.f32.mrf.mxu0
      %v2356 = vadd.f32 0.0, %v2355
      %v2357 = vpop.f32.mrf.mxu0
      %v2358 = vadd.f32 0.0, %v2357
      %2359 = vmatmul.bf16.gmra.mxu0 %v1086
      %v2360 = vpop.f32.mrf.mxu0
      %v2361 = vadd.f32 0.0, %v2360
      %v2362 = vpop.f32.mrf.mxu0
      %v2363 = vadd.f32 0.0, %v2362
      %2364 = vmatmul.bf16.gmra.mxu0 %v1089
      %v2365 = vpop.f32.mrf.mxu0
      %v2366 = vadd.f32 0.0, %v2365
      %v2367 = vpop.f32.mrf.mxu0
      %v2368 = vadd.f32 0.0, %v2367
      %2369 = vmatmul.bf16.gmra.mxu0 %v1092
      %v2370 = vpop.f32.mrf.mxu0
      %v2371 = vadd.f32 0.0, %v2370
      %v2372 = vpop.f32.mrf.mxu0
      %v2373 = vadd.f32 0.0, %v2372
      %2374 = vmatmul.bf16.gmra.mxu0 %v1095
      %v2375 = vpop.f32.mrf.mxu0
      %v2376 = vadd.f32 0.0, %v2375
      %v2377 = vpop.f32.mrf.mxu0
      %v2378 = vadd.f32 0.0, %v2377
      %2379 = vmatmul.bf16.gmra.mxu0 %v1098
      %v2380 = vpop.f32.mrf.mxu0
      %v2381 = vadd.f32 0.0, %v2380
      %v2382 = vpop.f32.mrf.mxu0
      %v2383 = vadd.f32 0.0, %v2382
      %2384 = vmatmul.bf16.gmra.mxu0 %v1101
      %v2385 = vpop.f32.mrf.mxu0
      %v2386 = vadd.f32 0.0, %v2385
      %v2387 = vpop.f32.mrf.mxu0
      %v2388 = vadd.f32 0.0, %v2387
      %2389 = vmatmul.bf16.gmra.mxu0 %v1104
      %v2390 = vpop.f32.mrf.mxu0
      %v2391 = vadd.f32 0.0, %v2390
      %v2392 = vpop.f32.mrf.mxu0
      %v2393 = vadd.f32 0.0, %v2392
      %2394 = vmatmul.bf16.gmra.mxu0 %v2333
      %v2395 = vpop.f32.mrf.mxu0
      %v2396 = vadd.f32 0.0, %v2395
      %v2397 = vpop.f32.mrf.mxu0
      %v2398 = vadd.f32 0.0, %v2397
      %2399 = vmatmul.bf16.gmra.mxu0 %v2336
      %v2400 = vpop.f32.mrf.mxu0
      %v2401 = vadd.f32 0.0, %v2400
      %v2402 = vpop.f32.mrf.mxu0
      %v2403 = vadd.f32 0.0, %v2402
      %2404 = vmatmul.bf16.gmra.mxu0 %v2339
      %v2405 = vpop.f32.mrf.mxu0
      %v2406 = vadd.f32 0.0, %v2405
      %v2407 = vpop.f32.mrf.mxu0
      %v2408 = vadd.f32 0.0, %v2407
      %2409 = vdwg.mxu0
      %v2410 = vadd.f32 %v2278, %v2351
      %v2411 = vadd.f32 %v2279, %v2353
      %v2412 = vadd.f32 %v2280, %v2356
      %v2413 = vadd.f32 %v2281, %v2358
      %v2414 = vadd.f32 %v2282, %v2361
      %v2415 = vadd.f32 %v2283, %v2363
      %v2416 = vadd.f32 %v2284, %v2366
      %v2417 = vadd.f32 %v2285, %v2368
      %v2418 = vadd.f32 %v2286, %v2371
      %v2419 = vadd.f32 %v2287, %v2373
      %v2420 = vadd.f32 %v2288, %v2376
      %v2421 = vadd.f32 %v2289, %v2378
      %v2422 = vadd.f32 %v2290, %v2381
      %v2423 = vadd.f32 %v2291, %v2383
      %v2424 = vadd.f32 %v2292, %v2386
      %v2425 = vadd.f32 %v2293, %v2388
      %v2426 = vadd.f32 %v2294, %v2391
      %v2427 = vadd.f32 %v2295, %v2393
      %v2428 = vadd.f32 %v2296, %v2396
      %v2429 = vadd.f32 %v2297, %v2398
      %v2430 = vadd.f32 %v2298, %v2401
      %v2431 = vadd.f32 %v2299, %v2403
      %v2432 = vadd.f32 %v2300, %v2406
      %v2433 = vadd.f32 %v2301, %v2408
      %v2434 = vrot.slane %v1662, 4
      %v2435 = vrot.slane %v1665, 5
      %v2436 = vor.u32 %v2434, %v2435
      %v2437 = vsel %vm1421, %v1471, %v2436
      %v2438 = vrot.slane %v2161, 4
      %v2439 = vrot.slane %v2000, 5
      %v2440 = vor.u32 %v2438, %v2439
      %v2441 = vsel %vm1421, %v2436, %v2440
      %v2442 = vrot.slane %v2168, 4
      %v2443 = vrot.slane %v2171, 5
      %v2444 = vor.u32 %v2442, %v2443
      %v2445 = vsel %vm1421, %v2440, %v2444
      %v2454 = vunpack.c.l.b16 %v1011
      %v2455 = vunpack.c.l.b16 %v1012
      %v2456 = vunpack.c.l.b16 %v1013
      %v2457 = vunpack.c.l.b16 %v1014
      %v2458 = vunpack.c.l.b16 %v1015
      %v2459 = vunpack.c.l.b16 %v1016
      %v2460 = vunpack.c.l.b16 %v1017
      %v2461 = vunpack.c.l.b16 %v1018
      %v2462 = vpack.c.b16 %v2455, %v2454
      %v2463 = vpack.c.b16 %v2457, %v2456
      %v2464 = vpack.c.b16 %v2459, %v2458
      %v2465 = vpack.c.b16 %v2461, %v2460
      %v2471 = vsel %vm1069, %v2437, 0
      %v2474 = vsel %vm1069, %v2441, 0
      %v2477 = vsel %vm1069, %v2445, 0
      %2479 = vmatpush.bf16.msra.mxu0 0
      %2480 = vmatpush.bf16.msra.mxu0 0
      %2481 = vmatpush.bf16.msra.mxu0 0
      %2482 = vmatpush.bf16.msra.mxu0 0
      %2483 = vmatpush.bf16.msra.mxu0 %v2465
      %2484 = vmatpush.bf16.msra.mxu0 %v2464
      %2485 = vmatpush.bf16.msra.mxu0 %v2463
      %2486 = vmatpush.bf16.msra.mxu0 %v2462
      %2487 = vmatmul.bf16.gmra.mxu0 %v1507
      %v2488 = vpop.f32.mrf.mxu0
      %v2489 = vadd.f32 0.0, %v2488
      %v2490 = vpop.f32.mrf.mxu0
      %v2491 = vadd.f32 0.0, %v2490
      %2492 = vmatmul.bf16.gmra.mxu0 %v1510
      %v2493 = vpop.f32.mrf.mxu0
      %v2494 = vadd.f32 0.0, %v2493
      %v2495 = vpop.f32.mrf.mxu0
      %v2496 = vadd.f32 0.0, %v2495
      %2497 = vmatmul.bf16.gmra.mxu0 %v1513
      %v2498 = vpop.f32.mrf.mxu0
      %v2499 = vadd.f32 0.0, %v2498
      %v2500 = vpop.f32.mrf.mxu0
      %v2501 = vadd.f32 0.0, %v2500
      %2502 = vmatmul.bf16.gmra.mxu0 %v1516
      %v2503 = vpop.f32.mrf.mxu0
      %v2504 = vadd.f32 0.0, %v2503
      %v2505 = vpop.f32.mrf.mxu0
      %v2506 = vadd.f32 0.0, %v2505
      %2507 = vmatmul.bf16.gmra.mxu0 %v1519
      %v2508 = vpop.f32.mrf.mxu0
      %v2509 = vadd.f32 0.0, %v2508
      %v2510 = vpop.f32.mrf.mxu0
      %v2511 = vadd.f32 0.0, %v2510
      %2512 = vmatmul.bf16.gmra.mxu0 %v1522
      %v2513 = vpop.f32.mrf.mxu0
      %v2514 = vadd.f32 0.0, %v2513
      %v2515 = vpop.f32.mrf.mxu0
      %v2516 = vadd.f32 0.0, %v2515
      %2517 = vmatmul.bf16.gmra.mxu0 %v1525
      %v2518 = vpop.f32.mrf.mxu0
      %v2519 = vadd.f32 0.0, %v2518
      %v2520 = vpop.f32.mrf.mxu0
      %v2521 = vadd.f32 0.0, %v2520
      %2522 = vmatmul.bf16.gmra.mxu0 %v1528
      %v2523 = vpop.f32.mrf.mxu0
      %v2524 = vadd.f32 0.0, %v2523
      %v2525 = vpop.f32.mrf.mxu0
      %v2526 = vadd.f32 0.0, %v2525
      %2527 = vmatmul.bf16.gmra.mxu0 %v1531
      %v2528 = vpop.f32.mrf.mxu0
      %v2529 = vadd.f32 0.0, %v2528
      %v2530 = vpop.f32.mrf.mxu0
      %v2531 = vadd.f32 0.0, %v2530
      %2532 = vmatmul.bf16.gmra.mxu0 %v2471
      %v2533 = vpop.f32.mrf.mxu0
      %v2534 = vadd.f32 0.0, %v2533
      %v2535 = vpop.f32.mrf.mxu0
      %v2536 = vadd.f32 0.0, %v2535
      %2537 = vmatmul.bf16.gmra.mxu0 %v2474
      %v2538 = vpop.f32.mrf.mxu0
      %v2539 = vadd.f32 0.0, %v2538
      %v2540 = vpop.f32.mrf.mxu0
      %v2541 = vadd.f32 0.0, %v2540
      %2542 = vmatmul.bf16.gmra.mxu0 %v2477
      %v2543 = vpop.f32.mrf.mxu0
      %v2544 = vadd.f32 0.0, %v2543
      %v2545 = vpop.f32.mrf.mxu0
      %v2546 = vadd.f32 0.0, %v2545
      %2547 = vdwg.mxu0
      %v2548 = vadd.f32 %v2410, %v2489
      %v2549 = vadd.f32 %v2411, %v2491
      %v2550 = vadd.f32 %v2412, %v2494
      %v2551 = vadd.f32 %v2413, %v2496
      %v2552 = vadd.f32 %v2414, %v2499
      %v2553 = vadd.f32 %v2415, %v2501
      %v2554 = vadd.f32 %v2416, %v2504
      %v2555 = vadd.f32 %v2417, %v2506
      %v2556 = vadd.f32 %v2418, %v2509
      %v2557 = vadd.f32 %v2419, %v2511
      %v2558 = vadd.f32 %v2420, %v2514
      %v2559 = vadd.f32 %v2421, %v2516
      %v2560 = vadd.f32 %v2422, %v2519
      %v2561 = vadd.f32 %v2423, %v2521
      %v2562 = vadd.f32 %v2424, %v2524
      %v2563 = vadd.f32 %v2425, %v2526
      %v2564 = vadd.f32 %v2426, %v2529
      %v2565 = vadd.f32 %v2427, %v2531
      %v2566 = vadd.f32 %v2428, %v2534
      %v2567 = vadd.f32 %v2429, %v2536
      %v2568 = vadd.f32 %v2430, %v2539
      %v2569 = vadd.f32 %v2431, %v2541
      %v2570 = vadd.f32 %v2432, %v2544
      %v2571 = vadd.f32 %v2433, %v2546
      %v2572 = vld [vmem:[%s6] sm:$0x1]
      %v2574 = vperm.slane %v2572, 0
      %v2576 = vadd.f32 %v2548, %v2574
      %v2577 = vadd.f32 %v2549, %v2574
      %v2578 = vadd.f32 %v2550, %v2574
      %v2579 = vadd.f32 %v2551, %v2574
      %v2580 = vadd.f32 %v2552, %v2574
      %v2581 = vadd.f32 %v2553, %v2574
      %v2582 = vadd.f32 %v2554, %v2574
      %v2583 = vadd.f32 %v2555, %v2574
      %v2584 = vadd.f32 %v2556, %v2574
      %v2585 = vadd.f32 %v2557, %v2574
      %v2586 = vadd.f32 %v2558, %v2574
      %v2587 = vadd.f32 %v2559, %v2574
      %v2588 = vadd.f32 %v2560, %v2574
      %v2589 = vadd.f32 %v2561, %v2574
      %v2590 = vadd.f32 %v2562, %v2574
      %v2591 = vadd.f32 %v2563, %v2574
      %v2592 = vadd.f32 %v2564, %v2574
      %v2593 = vadd.f32 %v2565, %v2574
      %v2594 = vadd.f32 %v2566, %v2574
      %v2595 = vadd.f32 %v2567, %v2574
      %v2596 = vadd.f32 %v2568, %v2574
      %v2597 = vadd.f32 %v2569, %v2574
      %v2598 = vadd.f32 %v2570, %v2574
      %v2599 = vadd.f32 %v2571, %v2574
      %v2600 = vsel %vm808, %v2576, 0.0
      %v2601 = vsel %vm809, %v2577, 0.0
      %v2602 = vsel %vm810, %v2578, 0.0
      %v2603 = vsel %vm808, %v2579, 0.0
      %v2604 = vsel %vm809, %v2580, 0.0
      %v2605 = vsel %vm810, %v2581, 0.0
      %v2606 = vsel %vm808, %v2582, 0.0
      %v2607 = vsel %vm809, %v2583, 0.0
      %v2608 = vsel %vm810, %v2584, 0.0
      %v2609 = vsel %vm808, %v2585, 0.0
      %v2610 = vsel %vm809, %v2586, 0.0
      %v2611 = vsel %vm810, %v2587, 0.0
      %v2612 = vsel %vm808, %v2588, 0.0
      %v2613 = vsel %vm809, %v2589, 0.0
      %v2614 = vsel %vm810, %v2590, 0.0
      %v2615 = vsel %vm808, %v2591, 0.0
      %v2616 = vsel %vm809, %v2592, 0.0
      %v2617 = vsel %vm810, %v2593, 0.0
      %v2618 = vsel %vm808, %v2594, 0.0
      %v2619 = vsel %vm809, %v2595, 0.0
      %v2620 = vsel %vm810, %v2596, 0.0
      %v2621 = vsel %vm808, %v2597, 0.0
      %v2622 = vsel %vm809, %v2598, 0.0
      %v2623 = vsel %vm810, %v2599, 0.0
      %v2624 = vld [vmem:[%s497] sm:$0xf]
      %v2625 = vld [vmem:[%s497 + $0x4] sm:$0xf]
      %v2626 = vld [vmem:[%s497 + $0x8] sm:$0xf]
      %v2627 = vld [vmem:[%s497 + $0xc] sm:$0xf]
      %v2628 = vld [vmem:[%s497 + $0x10] sm:$0xf]
      %v2629 = vld [vmem:[%s497 + $0x14] sm:$0xf]
      %v2630 = vld [vmem:[%s497 + $0x18] sm:$0xf]
      %v2631 = vld [vmem:[%s497 + $0x1c] sm:$0xf]
      %v2632 = vld [vmem:[%s497 + $0x20] sm:$0xf]
      %v2633 = vld [vmem:[%s497 + $0x24] sm:$0xf]
      %v2634 = vld [vmem:[%s497 + $0x28] sm:$0xf]
      %v2635 = vld [vmem:[%s497 + $0x2c] sm:$0xf]
      %v2636 = vld [vmem:[%s497 + $0x30] sm:$0xf]
      %v2637 = vld [vmem:[%s497 + $0x34] sm:$0xf]
      %v2638 = vld [vmem:[%s497 + $0x38] sm:$0xf]
      %v2639 = vld [vmem:[%s497 + $0x3c] sm:$0xf]
      %v2640 = vld [vmem:[%s497 + $0x40] sm:$0xf]
      %v2641 = vld [vmem:[%s497 + $0x44] sm:$0xf]
      %v2642 = vld [vmem:[%s497 + $0x48] sm:$0xf]
      %v2643 = vld [vmem:[%s497 + $0x4c] sm:$0xf]
      %v2644 = vld [vmem:[%s497 + $0x50] sm:$0xf]
      %v2645 = vld [vmem:[%s497 + $0x54] sm:$0xf]
      %v2646 = vld [vmem:[%s497 + $0x58] sm:$0xf]
      %v2647 = vld [vmem:[%s497 + $0x5c] sm:$0xf]
      %v2648 = vunpack.c.l.bf16 %v2624
      %v2649 = vunpack.c.l.bf16 %v2625
      %v2650 = vunpack.c.l.bf16 %v2626
      %v2651 = vunpack.c.l.bf16 %v2627
      %v2652 = vunpack.c.l.bf16 %v2628
      %v2653 = vunpack.c.l.bf16 %v2629
      %v2654 = vunpack.c.l.bf16 %v2630
      %v2655 = vunpack.c.l.bf16 %v2631
      %v2656 = vunpack.c.l.bf16 %v2632
      %v2657 = vunpack.c.l.bf16 %v2633
      %v2658 = vunpack.c.l.bf16 %v2634
      %v2659 = vunpack.c.l.bf16 %v2635
      %v2660 = vunpack.c.l.bf16 %v2636
      %v2661 = vunpack.c.l.bf16 %v2637
      %v2662 = vunpack.c.l.bf16 %v2638
      %v2663 = vunpack.c.l.bf16 %v2639
      %v2664 = vunpack.c.l.bf16 %v2640
      %v2665 = vunpack.c.l.bf16 %v2641
      %v2666 = vunpack.c.l.bf16 %v2642
      %v2667 = vunpack.c.l.bf16 %v2643
      %v2668 = vunpack.c.l.bf16 %v2644
      %v2669 = vunpack.c.l.bf16 %v2645
      %v2670 = vunpack.c.l.bf16 %v2646
      %v2671 = vunpack.c.l.bf16 %v2647
      %v2672 = vadd.f32 %v2600, %v2648
      %v2673 = vadd.f32 %v2601, %v2649
      %v2674 = vadd.f32 %v2602, %v2650
      %v2675 = vadd.f32 %v2603, %v2651
      %v2676 = vadd.f32 %v2604, %v2652
      %v2677 = vadd.f32 %v2605, %v2653
      %v2678 = vadd.f32 %v2606, %v2654
      %v2679 = vadd.f32 %v2607, %v2655
      %v2680 = vadd.f32 %v2608, %v2656
      %v2681 = vadd.f32 %v2609, %v2657
      %v2682 = vadd.f32 %v2610, %v2658
      %v2683 = vadd.f32 %v2611, %v2659
      %v2684 = vadd.f32 %v2612, %v2660
      %v2685 = vadd.f32 %v2613, %v2661
      %v2686 = vadd.f32 %v2614, %v2662
      %v2687 = vadd.f32 %v2615, %v2663
      %v2688 = vadd.f32 %v2616, %v2664
      %v2689 = vadd.f32 %v2617, %v2665
      %v2690 = vadd.f32 %v2618, %v2666
      %v2691 = vadd.f32 %v2619, %v2667
      %v2692 = vadd.f32 %v2620, %v2668
      %v2693 = vadd.f32 %v2621, %v2669
      %v2694 = vadd.f32 %v2622, %v2670
      %v2695 = vadd.f32 %v2623, %v2671
      %v2696 = vmul.f32 %v2672, 0.70710677
      %v2697 = vmul.f32 %v2673, 0.70710677
      %v2698 = vmul.f32 %v2674, 0.70710677
      %v2699 = vmul.f32 %v2675, 0.70710677
      %v2700 = vmul.f32 %v2676, 0.70710677
      %v2701 = vmul.f32 %v2677, 0.70710677
      %v2702 = vmul.f32 %v2678, 0.70710677
      %v2703 = vmul.f32 %v2679, 0.70710677
      %v2704 = vmul.f32 %v2680, 0.70710677
      %v2705 = vmul.f32 %v2681, 0.70710677
      %v2706 = vmul.f32 %v2682, 0.70710677
      %v2707 = vmul.f32 %v2683, 0.70710677
      %v2708 = vmul.f32 %v2684, 0.70710677
      %v2709 = vmul.f32 %v2685, 0.70710677
      %v2710 = vmul.f32 %v2686, 0.70710677
      %v2711 = vmul.f32 %v2687, 0.70710677
      %v2712 = vmul.f32 %v2688, 0.70710677
      %v2713 = vmul.f32 %v2689, 0.70710677
      %v2714 = vmul.f32 %v2690, 0.70710677
      %v2715 = vmul.f32 %v2691, 0.70710677
      %v2716 = vmul.f32 %v2692, 0.70710677
      %v2717 = vmul.f32 %v2693, 0.70710677
      %v2718 = vmul.f32 %v2694, 0.70710677
      %v2719 = vmul.f32 %v2695, 0.70710677
      %v2720 = vpack.c.bf16 %v2696, %v2696
      %v2721 = vpack.c.bf16 %v2697, %v2697
      %v2722 = vpack.c.bf16 %v2698, %v2698
      %v2723 = vpack.c.bf16 %v2699, %v2699
      %v2724 = vpack.c.bf16 %v2700, %v2700
      %v2725 = vpack.c.bf16 %v2701, %v2701
      %v2726 = vpack.c.bf16 %v2702, %v2702
      %v2727 = vpack.c.bf16 %v2703, %v2703
      %v2728 = vpack.c.bf16 %v2704, %v2704
      %v2729 = vpack.c.bf16 %v2705, %v2705
      %v2730 = vpack.c.bf16 %v2706, %v2706
      %v2731 = vpack.c.bf16 %v2707, %v2707
      %v2732 = vpack.c.bf16 %v2708, %v2708
      %v2733 = vpack.c.bf16 %v2709, %v2709
      %v2734 = vpack.c.bf16 %v2710, %v2710
      %v2735 = vpack.c.bf16 %v2711, %v2711
      %v2736 = vpack.c.bf16 %v2712, %v2712
      %v2737 = vpack.c.bf16 %v2713, %v2713
      %v2738 = vpack.c.bf16 %v2714, %v2714
      %v2739 = vpack.c.bf16 %v2715, %v2715
      %v2740 = vpack.c.bf16 %v2716, %v2716
      %v2741 = vpack.c.bf16 %v2717, %v2717
      %v2742 = vpack.c.bf16 %v2718, %v2718
      %v2743 = vpack.c.bf16 %v2719, %v2719
      %vm2744 = vcmask 519168
      %2745 = vst.msk [vmem:[%s507] sm:$0xf] %vm2744, %v2720
      %2746 = vst.msk [vmem:[%s507 + $0x4] sm:$0xf] %vm2744, %v2721
      %2747 = vst.msk [vmem:[%s507 + $0x8] sm:$0xf] %vm2744, %v2722
      %2748 = vst.msk [vmem:[%s507 + $0xc] sm:$0xf] %vm2744, %v2723
      %2749 = vst.msk [vmem:[%s507 + $0x10] sm:$0xf] %vm2744, %v2724
      %2750 = vst.msk [vmem:[%s507 + $0x14] sm:$0xf] %vm2744, %v2725
      %2751 = vst.msk [vmem:[%s507 + $0x18] sm:$0xf] %vm2744, %v2726
      %2752 = vst.msk [vmem:[%s507 + $0x1c] sm:$0xf] %vm2744, %v2727
      %2753 = vst.msk [vmem:[%s507 + $0x20] sm:$0xf] %vm2744, %v2728
      %2754 = vst.msk [vmem:[%s507 + $0x24] sm:$0xf] %vm2744, %v2729
      %2755 = vst.msk [vmem:[%s507 + $0x28] sm:$0xf] %vm2744, %v2730
      %2756 = vst.msk [vmem:[%s507 + $0x2c] sm:$0xf] %vm2744, %v2731
      %2757 = vst.msk [vmem:[%s507 + $0x30] sm:$0xf] %vm2744, %v2732
      %2758 = vst.msk [vmem:[%s507 + $0x34] sm:$0xf] %vm2744, %v2733
      %2759 = vst.msk [vmem:[%s507 + $0x38] sm:$0xf] %vm2744, %v2734
      %2760 = vst.msk [vmem:[%s507 + $0x3c] sm:$0xf] %vm2744, %v2735
      %2761 = vst.msk [vmem:[%s507 + $0x40] sm:$0xf] %vm2744, %v2736
      %2762 = vst.msk [vmem:[%s507 + $0x44] sm:$0xf] %vm2744, %v2737
      %2763 = vst.msk [vmem:[%s507 + $0x48] sm:$0xf] %vm2744, %v2738
      %2764 = vst.msk [vmem:[%s507 + $0x4c] sm:$0xf] %vm2744, %v2739
      %2765 = vst.msk [vmem:[%s507 + $0x50] sm:$0xf] %vm2744, %v2740
      %2766 = vst.msk [vmem:[%s507 + $0x54] sm:$0xf] %vm2744, %v2741
      %2767 = vst.msk [vmem:[%s507 + $0x58] sm:$0xf] %vm2744, %v2742
      %2768 = vst.msk [vmem:[%s507 + $0x5c] sm:$0xf] %vm2744, %v2743
      %s2769 = smul.u32 24, %s24
      %p2770 = scmp.lt.s32.totalorder %s23, 1
      %s2771 = scalar_select %p2770, %s23, 1
      %p2772 = scmp.lt.s32.totalorder %s2769, 47
      %s2773 = scalar_select %p2772, %s2769, 47
      %s2774 = smul.addr %s2771, 48
      %s2775 = sadd.s32 %s2773, %s2774
      %s2776 = smul.addr %s2775, 4
      %s2777 = scalar_lea.vmem %s8, %s2776
      // Predicated region
      $region53: #{_lambda_.6} parent=51 // pred_check
        %p2778 = pneg %p263
      $region54: #{_lambda_.6} parent=51 // pred_check_branch
        %2780 = sbr.rel (%p2778) target = $region56
      $region55: #{_lambda_.6} parent=51 // pred_region
        %s2781 = smul.u32 24, %s24
      $region56: #{_lambda_.6} parent=51 // pred_fallthru
        _
    $region52: #{_lambda_.6} parent=5 // pred_fallthru
      _
    %p2782 = scmp.le.s32.totalorder 2, %s14
    // Predicated region
    $region57: #{_lambda_.6} parent=5 // pred_check
      %p2783 = pneg %p2782
    $region58: #{_lambda_.6} parent=5 // pred_check_branch
      %2785 = sbr.rel (%p2783) target = $region60
    $region59: #{_lambda_.6} parent=5 // pred_region
      %s2786 = ssub.s32 %s14, 2
      // Predicated region
      $region61: #{_lambda_.6} parent=59 // pred_check
        %p2787 = pneg %p269
      $region62: #{_lambda_.6} parent=59 // pred_check_branch
        %2789 = sbr.rel (%p2787) target = $region64
      $region63: #{_lambda_.6} parent=59 // pred_region
        %s2790 = smul.u32 24, %s26
        %p2791 = scmp.lt.s32.totalorder %s25, 1
        %s2792 = scalar_select %p2791, %s25, 1
        %p2793 = scmp.lt.s32.totalorder %s2790, 47
        %s2794 = scalar_select %p2793, %s2790, 47
        %s2795 = smul.addr %s2792, 48
        %s2796 = sadd.s32 %s2794, %s2795
        %s2797 = smul.addr %s2796, 4
        %s2798 = scalar_lea.vmem %s8, %s2797
      $region64: #{_lambda_.6} parent=59 // pred_fallthru
        _
    $region60: #{_lambda_.6} parent=5 // pred_fallthru
      _
  $region6: #{_lambda_.6} parent=0 // loop_footer
    %s18 = sadd.s32 1, %s14
  $region7: #{_lambda_.6} parent=0 // loop_footer_branch
    %13 = sbr.rel target = $region3
  $region8: #{_lambda_.6} parent=0 // loop_exit
    _

// kernel: _lambda_.5
$region0: #{_lambda_.5}
  #allocation0 [shape = 'u32[]', space=smem, size = 0x4, offset = 0x4, fixed_abs, tag = 'smem constant byte address 0x4 - core index']
  #allocation1 [shape = 'u32[72,128]{1,0:T(1,128)}', space=vmem, size = 0x9000, scoped, tag = 'internal scratch']
  %s0 = inlined_call_operand.vmem [shape: bf16[2,384,64], index: 0, kind: input, shape index: {}, may-alias: {0,1,2}]
  %s1 = inlined_call_operand.vmem [shape: bf16[2,384,64], index: 1, kind: input, shape index: {}, may-alias: {0,1,2}]
  %s2 = inlined_call_operand.vmem [shape: bf16[2,384,64], index: 2, kind: input, shape index: {}, may-alias: {0,1,2}]
  %s3 = inlined_call_operand.vmem [shape: f32[1,64], index: 3, kind: input, shape index: {}]
  %s4 = inlined_call_operand.vmem [shape: f32[1,64], index: 4, kind: input, shape index: {}]
  %s5 = inlined_call_operand.vmem [shape: bf16[9,64,64], index: 5, kind: input, shape index: {}]
  %s6 = inlined_call_operand.vmem [shape: f32[1,64], index: 6, kind: input, shape index: {}]
  %s7 = inlined_call_operand.vmem [shape: bf16[2,384,64], index: 7, kind: output, shape index: {0}]
  %s8 = inlined_call_operand.vmem [shape: f32[2,2,2,64], index: 8, kind: output, shape index: {1}]
  %9 = xla_tuple %s7, %s8
  %s10 = sld [smem:[#allocation0]]
  $region69: #{_lambda_.5} parent=0
    _
  %s12 = ssub.s32 1, %s10
  %s13 = scalar_select 0, %s12, %s10
  loop: start=0, step=1, limit=6
  $region2: #{_lambda_.5} parent=0 // loop_pre_header
    _
  $region3: #{_lambda_.5} parent=0 // loop_header
    %s15 = sphi 0, %s19
    %p16 = scmp.ge.s32.totalorder %s15, 6
    %s22 = sphi 0, %s34
    %s23 = sphi 0, %s30
    %s24 = sphi 0, %s22
    %s25 = sphi 0, %s23
    %s26 = sphi 0, %s24
    %s27 = sphi 0, %s25
    %s47 = sphi 0, %s49
    %s50 = sphi 0, %s47
    %s51 = sphi 0, %s50
    %s67 = sphi 0, %s51
    %s75 = sphi 0, %s77
    %s78 = sphi 0, %s75
    %s79 = sphi 0, %s78
    %s95 = sphi 0, %s79
    %s111 = sphi 0, %s113
    %s114 = sphi 0, %s111
    %s115 = sphi 0, %s114
    %s131 = sphi 0, %s115
    %s135 = sphi 0, %s135
    %s137 = sphi 0, %s135
    %s138 = sphi 0, %s137
    %s152 = sphi 0, %s138
    %s156 = sphi 0, %s156
    %s158 = sphi 0, %s156
    %s159 = sphi 0, %s158
    %s173 = sphi 0, %s159
    %s177 = sphi 0, %s177
    %s179 = sphi 0, %s177
    %s180 = sphi 0, %s179
    %s194 = sphi 0, %s180
    %s198 = sphi 0, %s198
    %s200 = sphi 0, %s198
    %s201 = sphi 0, %s200
    %s215 = sphi 0, %s201
    %s223 = sphi 0, %s225
    %s226 = sphi 0, %s223
    %s227 = sphi 0, %s226
    %s243 = sphi 0, %s227
    %s251 = sphi 0, %s253
    %s254 = sphi 0, %s251
    %s255 = sphi 0, %s254
    %s271 = sphi 0, %s255
  $region4: #{_lambda_.5} parent=0 // loop_header_branch
    %18 = sbr.rel (%p16) target = $region8
  $region5: #{_lambda_.5} parent=0 // loop_body
    %s20 = ssub.s32 %s15, 1
    %s21 = ssub.s32 %s15, 2
    %s28 = sadd.s32 1, %s23
    %p29 = scmp.ge.s32.totalorder %s28, 2
    %s30 = scalar_select %p29, 0, %s28
    %s31 = sadd.s32 1, %s22
    %s32 = scalar_select %p29, %s31, %s22
    %p33 = scmp.ge.s32.totalorder %s32, 2
    %s34 = scalar_select %p33, 0, %s32
    %s35 = smul.u32 %s23, 4
    %s36 = ssub.s32 %s35, 1
    %p37 = scmp.gt.s32.totalorder %s36, 0
    %s38 = scalar_select %p37, %s36, 0
    %s39 = smul.u32 %s30, 4
    %s40 = ssub.s32 %s39, 1
    %p41 = scmp.gt.s32.totalorder %s40, 0
    %s42 = scalar_select %p41, %s40, 0
    %s43 = ssub.s32 %s22, %s34
    %s44 = ssub.s32 %s38, %s42
    %s45 = sor.u32 %s43, %s44
    %p46 = scmp.eq.s32.totalorder %s45, 0
    %s48 = sadd.s32 %s47, 1
    %s49 = scalar_select %p46, %s47, %s48
    %p52 = pneg %p46
    %p53 = scmp.eq.s32.totalorder %s15, 3
    %p54 = por %p52, %p53
    %p55 = scmp.ne.s32.totalorder %s47, %s50
    %p56 = scmp.eq.s32.totalorder %s15, 0
    %p57 = por %p55, %p56
    %p58 = scmp.ne.s32.totalorder %s47, %s50
    %p59 = scmp.eq.s32.totalorder %s20, 3
    %p60 = por %p58, %p59
    %p61 = scmp.ne.s32.totalorder %s50, %s51
    %p62 = scmp.eq.s32.totalorder %s20, 0
    %p63 = por %p61, %p62
    %p64 = scmp.ne.s32.totalorder %s50, %s51
    %p65 = scmp.eq.s32.totalorder %s21, 3
    %p66 = por %p64, %p65
    %p68 = scmp.ne.s32.totalorder %s51, %s67
    %p69 = scmp.eq.s32.totalorder %s21, 0
    %p70 = por %p68, %p69
    %s71 = ssub.s32 %s22, %s34
    %s72 = ssub.s32 %s23, %s30
    %s73 = sor.u32 %s71, %s72
    %p74 = scmp.eq.s32.totalorder %s73, 0
    %s76 = sadd.s32 %s75, 1
    %s77 = scalar_select %p74, %s75, %s76
    %p80 = pneg %p74
    %p81 = scmp.eq.s32.totalorder %s15, 3
    %p82 = por %p80, %p81
    %p83 = scmp.ne.s32.totalorder %s75, %s78
    %p84 = scmp.eq.s32.totalorder %s15, 0
    %p85 = por %p83, %p84
    %p86 = scmp.ne.s32.totalorder %s75, %s78
    %p87 = scmp.eq.s32.totalorder %s20, 3
    %p88 = por %p86, %p87
    %p89 = scmp.ne.s32.totalorder %s78, %s79
    %p90 = scmp.eq.s32.totalorder %s20, 0
    %p91 = por %p89, %p90
    %p92 = scmp.ne.s32.totalorder %s78, %s79
    %p93 = scmp.eq.s32.totalorder %s21, 3
    %p94 = por %p92, %p93
    %p96 = scmp.ne.s32.totalorder %s79, %s95
    %p97 = scmp.eq.s32.totalorder %s21, 0
    %p98 = por %p96, %p97
    %s99 = sadd.s32 %s23, 1
    %s100 = smul.u32 %s99, 4
    %p101 = scmp.lt.s32.totalorder %s100, 7
    %s102 = scalar_select %p101, %s100, 7
    %s103 = sadd.s32 %s30, 1
    %s104 = smul.u32 %s103, 4
    %p105 = scmp.lt.s32.totalorder %s104, 7
    %s106 = scalar_select %p105, %s104, 7
    %s107 = ssub.s32 %s22, %s34
    %s108 = ssub.s32 %s102, %s106
    %s109 = sor.u32 %s107, %s108
    %p110 = scmp.eq.s32.totalorder %s109, 0
    %s112 = sadd.s32 %s111, 1
    %s113 = scalar_select %p110, %s111, %s112
    %p116 = pneg %p110
    %p117 = scmp.eq.s32.totalorder %s15, 3
    %p118 = por %p116, %p117
    %p119 = scmp.ne.s32.totalorder %s111, %s114
    %p120 = scmp.eq.s32.totalorder %s15, 0
    %p121 = por %p119, %p120
    %p122 = scmp.ne.s32.totalorder %s111, %s114
    %p123 = scmp.eq.s32.totalorder %s20, 3
    %p124 = por %p122, %p123
    %p125 = scmp.ne.s32.totalorder %s114, %s115
    %p126 = scmp.eq.s32.totalorder %s20, 0
    %p127 = por %p125, %p126
    %p128 = scmp.ne.s32.totalorder %s114, %s115
    %p129 = scmp.eq.s32.totalorder %s21, 3
    %p130 = por %p128, %p129
    %p132 = scmp.ne.s32.totalorder %s115, %s131
    %p133 = scmp.eq.s32.totalorder %s21, 0
    %p134 = por %p132, %p133
    %s136 = sadd.s32 %s135, 1
    %p139 = scmp.eq.s32.totalorder %s15, 3
    %p140 = scmp.ne.s32.totalorder %s135, %s137
    %p141 = scmp.eq.s32.totalorder %s15, 0
    %p142 = por %p140, %p141
    %p143 = scmp.ne.s32.totalorder %s135, %s137
    %p144 = scmp.eq.s32.totalorder %s20, 3
    %p145 = por %p143, %p144
    %p146 = scmp.ne.s32.totalorder %s137, %s138
    %p147 = scmp.eq.s32.totalorder %s20, 0
    %p148 = por %p146, %p147
    %p149 = scmp.ne.s32.totalorder %s137, %s138
    %p150 = scmp.eq.s32.totalorder %s21, 3
    %p151 = por %p149, %p150
    %p153 = scmp.ne.s32.totalorder %s138, %s152
    %p154 = scmp.eq.s32.totalorder %s21, 0
    %p155 = por %p153, %p154
    %s157 = sadd.s32 %s156, 1
    %p160 = scmp.eq.s32.totalorder %s15, 3
    %p161 = scmp.ne.s32.totalorder %s156, %s158
    %p162 = scmp.eq.s32.totalorder %s15, 0
    %p163 = por %p161, %p162
    %p164 = scmp.ne.s32.totalorder %s156, %s158
    %p165 = scmp.eq.s32.totalorder %s20, 3
    %p166 = por %p164, %p165
    %p167 = scmp.ne.s32.totalorder %s158, %s159
    %p168 = scmp.eq.s32.totalorder %s20, 0
    %p169 = por %p167, %p168
    %p170 = scmp.ne.s32.totalorder %s158, %s159
    %p171 = scmp.eq.s32.totalorder %s21, 3
    %p172 = por %p170, %p171
    %p174 = scmp.ne.s32.totalorder %s159, %s173
    %p175 = scmp.eq.s32.totalorder %s21, 0
    %p176 = por %p174, %p175
    %s178 = sadd.s32 %s177, 1
    %p181 = scmp.eq.s32.totalorder %s15, 3
    %p182 = scmp.ne.s32.totalorder %s177, %s179
    %p183 = scmp.eq.s32.totalorder %s15, 0
    %p184 = por %p182, %p183
    %p185 = scmp.ne.s32.totalorder %s177, %s179
    %p186 = scmp.eq.s32.totalorder %s20, 3
    %p187 = por %p185, %p186
    %p188 = scmp.ne.s32.totalorder %s179, %s180
    %p189 = scmp.eq.s32.totalorder %s20, 0
    %p190 = por %p188, %p189
    %p191 = scmp.ne.s32.totalorder %s179, %s180
    %p192 = scmp.eq.s32.totalorder %s21, 3
    %p193 = por %p191, %p192
    %p195 = scmp.ne.s32.totalorder %s180, %s194
    %p196 = scmp.eq.s32.totalorder %s21, 0
    %p197 = por %p195, %p196
    %s199 = sadd.s32 %s198, 1
    %p202 = scmp.eq.s32.totalorder %s15, 3
    %p203 = scmp.ne.s32.totalorder %s198, %s200
    %p204 = scmp.eq.s32.totalorder %s15, 0
    %p205 = por %p203, %p204
    %p206 = scmp.ne.s32.totalorder %s198, %s200
    %p207 = scmp.eq.s32.totalorder %s20, 3
    %p208 = por %p206, %p207
    %p209 = scmp.ne.s32.totalorder %s200, %s201
    %p210 = scmp.eq.s32.totalorder %s20, 0
    %p211 = por %p209, %p210
    %p212 = scmp.ne.s32.totalorder %s200, %s201
    %p213 = scmp.eq.s32.totalorder %s21, 3
    %p214 = por %p212, %p213
    %p216 = scmp.ne.s32.totalorder %s201, %s215
    %p217 = scmp.eq.s32.totalorder %s21, 0
    %p218 = por %p216, %p217
    %s219 = ssub.s32 %s22, %s34
    %s220 = ssub.s32 %s23, %s30
    %s221 = sor.u32 %s219, %s220
    %p222 = scmp.eq.s32.totalorder %s221, 0
    %s224 = sadd.s32 %s223, 1
    %s225 = scalar_select %p222, %s223, %s224
    %p228 = pneg %p222
    %p229 = scmp.eq.s32.totalorder %s15, 3
    %p230 = por %p228, %p229
    %p231 = scmp.ne.s32.totalorder %s223, %s226
    %p232 = scmp.eq.s32.totalorder %s15, 0
    %p233 = por %p231, %p232
    %p234 = scmp.ne.s32.totalorder %s223, %s226
    %p235 = scmp.eq.s32.totalorder %s20, 3
    %p236 = por %p234, %p235
    %p237 = scmp.ne.s32.totalorder %s226, %s227
    %p238 = scmp.eq.s32.totalorder %s20, 0
    %p239 = por %p237, %p238
    %p240 = scmp.ne.s32.totalorder %s226, %s227
    %p241 = scmp.eq.s32.totalorder %s21, 3
    %p242 = por %p240, %p241
    %p244 = scmp.ne.s32.totalorder %s227, %s243
    %p245 = scmp.eq.s32.totalorder %s21, 0
    %p246 = por %p244, %p245
    %s247 = ssub.s32 %s22, %s34
    %s248 = ssub.s32 %s23, %s30
    %s249 = sor.u32 %s247, %s248
    %p250 = scmp.eq.s32.totalorder %s249, 0
    %s252 = sadd.s32 %s251, 1
    %s253 = scalar_select %p250, %s251, %s252
    %p256 = pneg %p250
    %p257 = scmp.eq.s32.totalorder %s15, 3
    %p258 = por %p256, %p257
    %p259 = scmp.ne.s32.totalorder %s251, %s254
    %p260 = scmp.eq.s32.totalorder %s15, 0
    %p261 = por %p259, %p260
    %p262 = scmp.ne.s32.totalorder %s251, %s254
    %p263 = scmp.eq.s32.totalorder %s20, 3
    %p264 = por %p262, %p263
    %p265 = scmp.ne.s32.totalorder %s254, %s255
    %p266 = scmp.eq.s32.totalorder %s20, 0
    %p267 = por %p265, %p266
    %p268 = scmp.ne.s32.totalorder %s254, %s255
    %p269 = scmp.eq.s32.totalorder %s21, 3
    %p270 = por %p268, %p269
    %p272 = scmp.ne.s32.totalorder %s255, %s271
    %p273 = scmp.eq.s32.totalorder %s21, 0
    %p274 = por %p272, %p273
    %p275 = scmp.le.s32.totalorder 1, %s15
    %p276 = scmp.lt.s32.totalorder %s15, 5
    %p277 = pnand %p275, %p276
    %p278 = pneg %p277
    // Predicated region
    $region9: #{_lambda_.5} parent=5 // pred_check
      _
    $region10: #{_lambda_.5} parent=5 // pred_check_branch
      %280 = sbr.rel (%p277) target = $region12
    $region11: #{_lambda_.5} parent=5 // pred_region
      %s281 = ssub.s32 %s15, 1
      // Predicated region
      $region13: #{_lambda_.5} parent=11 // pred_check
        %p282 = pneg %p148
      $region14: #{_lambda_.5} parent=11 // pred_check_branch
        %284 = sbr.rel (%p282) target = $region16
      $region15: #{_lambda_.5} parent=11 // pred_region
        _
      $region16: #{_lambda_.5} parent=11 // pred_fallthru
        _
      // Predicated region
      $region17: #{_lambda_.5} parent=11 // pred_check
        %p285 = pneg %p169
      $region18: #{_lambda_.5} parent=11 // pred_check_branch
        %287 = sbr.rel (%p285) target = $region20
      $region19: #{_lambda_.5} parent=11 // pred_region
        _
      $region20: #{_lambda_.5} parent=11 // pred_fallthru
        _
      // Predicated region
      $region21: #{_lambda_.5} parent=11 // pred_check
        %p288 = pneg %p190
      $region22: #{_lambda_.5} parent=11 // pred_check_branch
        %290 = sbr.rel (%p288) target = $region24
      $region23: #{_lambda_.5} parent=11 // pred_region
        _
      $region24: #{_lambda_.5} parent=11 // pred_fallthru
        _
      // Predicated region
      $region25: #{_lambda_.5} parent=11 // pred_check
        %p291 = pneg %p211
      $region26: #{_lambda_.5} parent=11 // pred_check_branch
        %293 = sbr.rel (%p291) target = $region28
      $region27: #{_lambda_.5} parent=11 // pred_region
        _
      $region28: #{_lambda_.5} parent=11 // pred_fallthru
        _
    $region12: #{_lambda_.5} parent=5 // pred_fallthru
      _
    %p294 = scmp.lt.s32.totalorder %s15, 4
    // Predicated region
    $region29: #{_lambda_.5} parent=5 // pred_check
      %p295 = pneg %p294
    $region30: #{_lambda_.5} parent=5 // pred_check_branch
      %297 = sbr.rel (%p295) target = $region32
    $region31: #{_lambda_.5} parent=5 // pred_region
      // Predicated region
      $region33: #{_lambda_.5} parent=31 // pred_check
        %p298 = pneg %p57
      $region34: #{_lambda_.5} parent=31 // pred_check_branch
        %300 = sbr.rel (%p298) target = $region36
      $region35: #{_lambda_.5} parent=31 // pred_region
        %s301 = smul.u32 %s23, 4
        %s302 = ssub.s32 %s301, 1
        %p303 = scmp.gt.s32.totalorder %s302, 0
        %s304 = scalar_select %p303, %s302, 0
        %s305 = smul.u32 6, %s304
        %p306 = scmp.lt.s32.totalorder %s22, 1
        %s307 = scalar_select %p306, %s22, 1
        %p308 = scmp.lt.s32.totalorder %s305, 47
        %s309 = scalar_select %p308, %s305, 47
        %s310 = smul.addr %s307, 48
        %s311 = sadd.s32 %s309, %s310
        %s312 = smul.addr %s311, 4
        %s313 = scalar_lea.vmem %s0, %s312
        %s314 = smul.u32 %s23, 4
        %s315 = ssub.s32 %s314, 1
        %p316 = scmp.gt.s32.totalorder %s315, 0
        %s317 = scalar_select %p316, %s315, 0
        %s318 = smul.u32 6, %s317
      $region36: #{_lambda_.5} parent=31 // pred_fallthru
        _
      // Predicated region
      $region37: #{_lambda_.5} parent=31 // pred_check
        %p319 = pneg %p85
      $region38: #{_lambda_.5} parent=31 // pred_check_branch
        %321 = sbr.rel (%p319) target = $region40
      $region39: #{_lambda_.5} parent=31 // pred_region
        %s322 = smul.u32 24, %s23
        %p323 = scmp.lt.s32.totalorder %s22, 1
        %s324 = scalar_select %p323, %s22, 1
        %p325 = scmp.lt.s32.totalorder %s322, 47
        %s326 = scalar_select %p325, %s322, 47
        %s327 = smul.addr %s324, 48
        %s328 = sadd.s32 %s326, %s327
        %s329 = smul.addr %s328, 4
        %s330 = scalar_lea.vmem %s1, %s329
        %s331 = smul.u32 24, %s23
      $region40: #{_lambda_.5} parent=31 // pred_fallthru
        _
      // Predicated region
      $region41: #{_lambda_.5} parent=31 // pred_check
        %p332 = pneg %p121
      $region42: #{_lambda_.5} parent=31 // pred_check_branch
        %334 = sbr.rel (%p332) target = $region44
      $region43: #{_lambda_.5} parent=31 // pred_region
        %s335 = sadd.s32 %s23, 1
        %s336 = smul.u32 %s335, 4
        %p337 = scmp.lt.s32.totalorder %s336, 7
        %s338 = scalar_select %p337, %s336, 7
        %s339 = smul.u32 6, %s338
        %p340 = scmp.lt.s32.totalorder %s22, 1
        %s341 = scalar_select %p340, %s22, 1
        %p342 = scmp.lt.s32.totalorder %s339, 47
        %s343 = scalar_select %p342, %s339, 47
        %s344 = smul.addr %s341, 48
        %s345 = sadd.s32 %s343, %s344
        %s346 = smul.addr %s345, 4
        %s347 = scalar_lea.vmem %s2, %s346
        %s348 = sadd.s32 %s23, 1
        %s349 = smul.u32 %s348, 4
        %p350 = scmp.lt.s32.totalorder %s349, 7
        %s351 = scalar_select %p350, %s349, 7
        %s352 = smul.u32 6, %s351
      $region44: #{_lambda_.5} parent=31 // pred_fallthru
        _
    $region32: #{_lambda_.5} parent=5 // pred_fallthru
      _
    %p353 = scmp.le.s32.totalorder 1, %s15
    %p354 = scmp.lt.s32.totalorder %s15, 5
    %p355 = pnand %p353, %p354
    %p356 = pneg %p355
    // Predicated region
    $region45: #{_lambda_.5} parent=5 // pred_check
      _
    $region46: #{_lambda_.5} parent=5 // pred_check_branch
      %358 = sbr.rel (%p355) target = $region48
    $region47: #{_lambda_.5} parent=5 // pred_region
      %s359 = ssub.s32 %s15, 1
      %s360 = smul.u32 %s25, 4
      %s361 = ssub.s32 %s360, 1
      %p362 = scmp.gt.s32.totalorder %s361, 0
      %s363 = scalar_select %p362, %s361, 0
      %s364 = smul.u32 6, %s363
      %p365 = scmp.lt.s32.totalorder %s24, 1
      %s366 = scalar_select %p365, %s24, 1
      %p367 = scmp.lt.s32.totalorder %s364, 47
      %s368 = scalar_select %p367, %s364, 47
      %s369 = smul.addr %s366, 48
      %s370 = sadd.s32 %s368, %s369
      %s371 = smul.addr %s370, 4
      %s372 = scalar_lea.vmem %s0, %s371
      %p373 = pneg %p63
      %p374 = pneg %p60
      %s375 = smul.u32 24, %s25
      %p376 = scmp.lt.s32.totalorder %s24, 1
      %s377 = scalar_select %p376, %s24, 1
      %p378 = scmp.lt.s32.totalorder %s375, 47
      %s379 = scalar_select %p378, %s375, 47
      %s380 = smul.addr %s377, 48
      %s381 = sadd.s32 %s379, %s380
      %s382 = smul.addr %s381, 4
      %s383 = scalar_lea.vmem %s1, %s382
      %p384 = pneg %p91
      %p385 = pneg %p88
      %s386 = sadd.s32 %s25, 1
      %s387 = smul.u32 %s386, 4
      %p388 = scmp.lt.s32.totalorder %s387, 7
      %s389 = scalar_select %p388, %s387, 7
      %s390 = smul.u32 6, %s389
      %p391 = scmp.lt.s32.totalorder %s24, 1
      %s392 = scalar_select %p391, %s24, 1
      %p393 = scmp.lt.s32.totalorder %s390, 47
      %s394 = scalar_select %p393, %s390, 47
      %s395 = smul.addr %s392, 48
      %s396 = sadd.s32 %s394, %s395
      %s397 = smul.addr %s396, 4
      %s398 = scalar_lea.vmem %s2, %s397
      %p399 = pneg %p127
      %p400 = pneg %p124
      %p401 = pneg %p148
      %p402 = pneg %p145
      %p403 = pneg %p169
      %p404 = pneg %p166
      %p405 = pneg %p190
      %p406 = pneg %p187
      %p407 = pneg %p211
      %p408 = pneg %p208
      %p409 = pneg %p239
      %p410 = pneg %p236
      %s411 = smul.u32 24, %s25
      %p412 = scmp.lt.s32.totalorder %s24, 1
      %s413 = scalar_select %p412, %s24, 1
      %p414 = scmp.lt.s32.totalorder %s411, 47
      %s415 = scalar_select %p414, %s411, 47
      %s416 = smul.addr %s413, 48
      %s417 = sadd.s32 %s415, %s416
      %s418 = smul.addr %s417, 4
      %s419 = scalar_lea.vmem %s7, %s418
      %p420 = pneg %p267
      %p421 = pneg %p264
      %p422 = scmp.lt.s32.totalorder %s24, 1
      %s423 = scalar_select %p422, %s24, 1
      %p424 = scmp.lt.s32.totalorder %s25, 1
      %s425 = scalar_select %p424, %s25, 1
      %s426 = smul.addr %s423, 2
      %s427 = sadd.s32 %s425, %s426
      %s428 = smul.addr %s427, 2
      %s429 = scalar_lea.vmem %s8, %s428
      %s430 = smul.u32 %s25, 4
      %s431 = ssub.s32 %s430, 1
      %p432 = scmp.gt.s32.totalorder %s431, 0
      %s433 = scalar_select %p432, %s431, 0
      %s434 = smul.u32 6, %s433
      %p435 = scmp.lt.s32.totalorder %s24, 1
      %s436 = scalar_select %p435, %s24, 1
      %p437 = scmp.lt.s32.totalorder %s434, 47
      %s438 = scalar_select %p437, %s434, 47
      %s439 = smul.addr %s436, 48
      %s440 = sadd.s32 %s438, %s439
      %s441 = smul.addr %s440, 4
      %s442 = scalar_lea.vmem %s0, %s441
      %s443 = smul.u32 %s25, 4
      %s444 = ssub.s32 %s443, 1
      %p445 = scmp.gt.s32.totalorder %s444, 0
      %s446 = scalar_select %p445, %s444, 0
      %s447 = smul.u32 6, %s446
      %s448 = smul.u32 24, %s25
      %p449 = scmp.lt.s32.totalorder %s24, 1
      %s450 = scalar_select %p449, %s24, 1
      %p451 = scmp.lt.s32.totalorder %s448, 47
      %s452 = scalar_select %p451, %s448, 47
      %s453 = smul.addr %s450, 48
      %s454 = sadd.s32 %s452, %s453
      %s455 = smul.addr %s454, 4
      %s456 = scalar_lea.vmem %s1, %s455
      %s457 = smul.u32 24, %s25
      %s458 = sadd.s32 %s25, 1
      %s459 = smul.u32 %s458, 4
      %p460 = scmp.lt.s32.totalorder %s459, 7
      %s461 = scalar_select %p460, %s459, 7
      %s462 = smul.u32 6, %s461
      %p463 = scmp.lt.s32.totalorder %s24, 1
      %s464 = scalar_select %p463, %s24, 1
      %p465 = scmp.lt.s32.totalorder %s462, 47
      %s466 = scalar_select %p465, %s462, 47
      %s467 = smul.addr %s464, 48
      %s468 = sadd.s32 %s466, %s467
      %s469 = smul.addr %s468, 4
      %s470 = scalar_lea.vmem %s2, %s469
      %s471 = sadd.s32 %s25, 1
      %s472 = smul.u32 %s471, 4
      %p473 = scmp.lt.s32.totalorder %s472, 7
      %s474 = scalar_select %p473, %s472, 7
      %s475 = smul.u32 6, %s474
      %s476 = smul.u32 24, %s25
      %p477 = scmp.lt.s32.totalorder %s24, 1
      %s478 = scalar_select %p477, %s24, 1
      %p479 = scmp.lt.s32.totalorder %s476, 47
      %s480 = scalar_select %p479, %s476, 47
      %s481 = smul.addr %s478, 48
      %s482 = sadd.s32 %s480, %s481
      %s483 = smul.addr %s482, 4
      %s484 = scalar_lea.vmem %s7, %s483
      %s485 = smul.u32 24, %s25
      %p486 = scmp.lt.s32.totalorder %s24, 1
      %s487 = scalar_select %p486, %s24, 1
      %p488 = scmp.lt.s32.totalorder %s25, 1
      %s489 = scalar_select %p488, %s25, 1
      %s490 = smul.addr %s487, 2
      %s491 = sadd.s32 %s489, %s490
      %s492 = smul.addr %s491, 2
      %s493 = scalar_lea.vmem %s8, %s492
      %v495 = vlaneseq
      %v496 = vshrl.u32 %v495, 7
      %v497 = vadd.s32 %v496, 8
      %v498 = vadd.s32 %v496, 16
      %vm499 = vcmp.lt.s32.totalorder %v496, 16
      %vm500 = vcmp.lt.s32.totalorder %v497, 16
      %vm501 = vcmp.lt.s32.totalorder %v498, 16
      %v502 = vadd.s32 %v496, 24
      %v503 = vadd.s32 %v496, 32
      %v504 = vadd.s32 %v496, 40
      %vm505 = vcmp.ge.s32.totalorder %v498, 24
      %vm506 = vcmp.ge.s32.totalorder %v502, 24
      %vm507 = vcmp.ge.s32.totalorder %v503, 24
      %vm508 = vcmp.ge.s32.totalorder %v504, 24
      %vm509 = vcmp.lt.s32.totalorder %v498, 40
      %vm510 = vcmp.lt.s32.totalorder %v502, 40
      %vm511 = vcmp.lt.s32.totalorder %v503, 40
      %vm512 = vcmp.lt.s32.totalorder %v504, 40
      %vm513 = vmand %vm505, %vm509
      %vm514 = vmand %vm506, %vm510
      %vm515 = vmand %vm507, %vm511
      %vm516 = vmand %vm508, %vm512
      %p517 = scmp.ge.s32.totalorder %s25, 1
      %s518 = scalar_select %p517, 1, 0
      %v519 = vstv %s518
      %vm520 = vcmp.eq.s32.totalorder %v519, 1
      %vm521 = vmand %vm513, %vm520
      %vm522 = vmand %vm514, %vm520
      %vm523 = vmand %vm515, %vm520
      %vm524 = vmand %vm516, %vm520
      %vm525 = vcmp.lt.s32.totalorder %v502, 16
      %p526 = scmp.lt.s32.totalorder %s25, 1
      %s527 = scalar_select %p526, 1, 0
      %v528 = vstv %s527
      %vm529 = vcmp.eq.s32.totalorder %v528, 1
      %vm530 = vmand %vm499, %vm529
      %vm531 = vmand %vm500, %vm529
      %vm532 = vmand %vm501, %vm529
      %vm533 = vmand %vm525, %vm529
      %v534 = vld [vmem:[%s442 + $0x8] sm:$0xf]
      %v535 = vld [vmem:[%s442 + $0xc] sm:$0xf]
      %v536 = vld [vmem:[%s442 + $0x10] sm:$0xf]
      %v537 = vld [vmem:[%s442 + $0x14] sm:$0xf]
      %v538 = vunpack.c.l.bf16 %v534
      %v539 = vunpack.c.l.bf16 %v535
      %v540 = vunpack.c.l.bf16 %v536
      %v541 = vunpack.c.l.bf16 %v537
      %v542 = vld [vmem:[%s470] sm:$0xf]
      %v543 = vld [vmem:[%s470 + $0x4] sm:$0xf]
      %v544 = vld [vmem:[%s470 + $0x8] sm:$0xf]
      %v545 = vld [vmem:[%s470 + $0xc] sm:$0xf]
      %v546 = vunpack.c.l.bf16 %v542
      %v547 = vunpack.c.l.bf16 %v543
      %v548 = vunpack.c.l.bf16 %v544
      %v549 = vunpack.c.l.bf16 %v545
      %v550 = vld [vmem:[%s3] sm:$0x1]
      %v551 = vld [vmem:[%s4] sm:$0x1]
      %v553 = vperm.slane %v550, 0
      %v555 = vmul.f32 %v538, %v553
      %v556 = vmul.f32 %v539, %v553
      %v557 = vmul.f32 %v540, %v553
      %v558 = vmul.f32 %v541, %v553
      %v560 = vperm.slane %v551, 0
      %v562 = vadd.f32 %v555, %v560
      %v563 = vadd.f32 %v556, %v560
      %v564 = vadd.f32 %v557, %v560
      %v565 = vadd.f32 %v558, %v560
      %vm566 = vcmp.gt.f32.partialorder %v562, 0.0
      %vm567 = vcmp.gt.f32.partialorder %v563, 0.0
      %vm568 = vcmp.gt.f32.partialorder %v564, 0.0
      %vm569 = vcmp.gt.f32.partialorder %v565, 0.0
      %v570 = vmul.f32 %v562, 0.2
      %v571 = vmul.f32 %v563, 0.2
      %v572 = vmul.f32 %v564, 0.2
      %v573 = vmul.f32 %v565, 0.2
      %v574 = vsel %vm566, %v562, %v570
      %v575 = vsel %vm567, %v563, %v571
      %v576 = vsel %vm568, %v564, %v572
      %v577 = vsel %vm569, %v565, %v573
      %v578 = vsel %vm521, 1, 0
      %v579 = vsel %vm522, 1, 0
      %v580 = vsel %vm523, 1, 0
      %v581 = vsel %vm524, 1, 0
      %vm582 = vcmp.eq.s32.totalorder %v578, 1
      %vm583 = vcmp.eq.s32.totalorder %v579, 1
      %vm584 = vcmp.eq.s32.totalorder %v580, 1
      %vm585 = vcmp.eq.s32.totalorder %v581, 1
      %v586 = vsel %vm582, %v574, 0.0
      %v587 = vsel %vm583, %v575, 0.0
      %v588 = vsel %vm584, %v576, 0.0
      %v589 = vsel %vm585, %v577, 0.0
      %v590 = vmul.f32 %v546, %v553
      %v591 = vmul.f32 %v547, %v553
      %v592 = vmul.f32 %v548, %v553
      %v593 = vmul.f32 %v549, %v553
      %v594 = vadd.f32 %v590, %v560
      %v595 = vadd.f32 %v591, %v560
      %v596 = vadd.f32 %v592, %v560
      %v597 = vadd.f32 %v593, %v560
      %vm598 = vcmp.gt.f32.partialorder %v594, 0.0
      %vm599 = vcmp.gt.f32.partialorder %v595, 0.0
      %vm600 = vcmp.gt.f32.partialorder %v596, 0.0
      %vm601 = vcmp.gt.f32.partialorder %v597, 0.0
      %v602 = vmul.f32 %v594, 0.2
      %v603 = vmul.f32 %v595, 0.2
      %v604 = vmul.f32 %v596, 0.2
      %v605 = vmul.f32 %v597, 0.2
      %v606 = vsel %vm598, %v594, %v602
      %v607 = vsel %vm599, %v595, %v603
      %v608 = vsel %vm600, %v596, %v604
      %v609 = vsel %vm601, %v597, %v605
      %v610 = vsel %vm530, 1, 0
      %v611 = vsel %vm531, 1, 0
      %v612 = vsel %vm532, 1, 0
      %v613 = vsel %vm533, 1, 0
      %vm614 = vcmp.eq.s32.totalorder %v610, 1
      %vm615 = vcmp.eq.s32.totalorder %v611, 1
      %vm616 = vcmp.eq.s32.totalorder %v612, 1
      %vm617 = vcmp.eq.s32.totalorder %v613, 1
      %v618 = vsel %vm614, %v606, 0.0
      %v619 = vsel %vm615, %v607, 0.0
      %v620 = vsel %vm616, %v608, 0.0
      %v621 = vsel %vm617, %v609, 0.0
      %v622 = vld [vmem:[%s456] sm:$0xf]
      %v623 = vld [vmem:[%s456 + $0x4] sm:$0xf]
      %v624 = vld [vmem:[%s456 + $0x8] sm:$0xf]
      %v625 = vld [vmem:[%s456 + $0xc] sm:$0xf]
      %v626 = vld [vmem:[%s456 + $0x10] sm:$0xf]
      %v627 = vld [vmem:[%s456 + $0x14] sm:$0xf]
      %v628 = vld [vmem:[%s456 + $0x18] sm:$0xf]
      %v629 = vld [vmem:[%s456 + $0x1c] sm:$0xf]
      %v630 = vld [vmem:[%s456 + $0x20] sm:$0xf]
      %v631 = vld [vmem:[%s456 + $0x24] sm:$0xf]
      %v632 = vld [vmem:[%s456 + $0x28] sm:$0xf]
      %v633 = vld [vmem:[%s456 + $0x2c] sm:$0xf]
      %v634 = vld [vmem:[%s456 + $0x30] sm:$0xf]
      %v635 = vld [vmem:[%s456 + $0x34] sm:$0xf]
      %v636 = vld [vmem:[%s456 + $0x38] sm:$0xf]
      %v637 = vld [vmem:[%s456 + $0x3c] sm:$0xf]
      %v638 = vld [vmem:[%s456 + $0x40] sm:$0xf]
      %v639 = vld [vmem:[%s456 + $0x44] sm:$0xf]
      %v640 = vld [vmem:[%s456 + $0x48] sm:$0xf]
      %v641 = vld [vmem:[%s456 + $0x4c] sm:$0xf]
      %v642 = vld [vmem:[%s456 + $0x50] sm:$0xf]
      %v643 = vld [vmem:[%s456 + $0x54] sm:$0xf]
      %v644 = vld [vmem:[%s456 + $0x58] sm:$0xf]
      %v645 = vld [vmem:[%s456 + $0x5c] sm:$0xf]
      %v646 = vunpack.c.l.bf16 %v622
      %v647 = vunpack.c.l.bf16 %v623
      %v648 = vunpack.c.l.bf16 %v624
      %v649 = vunpack.c.l.bf16 %v625
      %v650 = vunpack.c.l.bf16 %v626
      %v651 = vunpack.c.l.bf16 %v627
      %v652 = vunpack.c.l.bf16 %v628
      %v653 = vunpack.c.l.bf16 %v629
      %v654 = vunpack.c.l.bf16 %v630
      %v655 = vunpack.c.l.bf16 %v631
      %v656 = vunpack.c.l.bf16 %v632
      %v657 = vunpack.c.l.bf16 %v633
      %v658 = vunpack.c.l.bf16 %v634
      %v659 = vunpack.c.l.bf16 %v635
      %v660 = vunpack.c.l.bf16 %v636
      %v661 = vunpack.c.l.bf16 %v637
      %v662 = vunpack.c.l.bf16 %v638
      %v663 = vunpack.c.l.bf16 %v639
      %v664 = vunpack.c.l.bf16 %v640
      %v665 = vunpack.c.l.bf16 %v641
      %v666 = vunpack.c.l.bf16 %v642
      %v667 = vunpack.c.l.bf16 %v643
      %v668 = vunpack.c.l.bf16 %v644
      %v669 = vunpack.c.l.bf16 %v645
      %v670 = vmul.f32 %v646, %v553
      %v671 = vmul.f32 %v647, %v553
      %v672 = vmul.f32 %v648, %v553
      %v673 = vmul.f32 %v649, %v553
      %v674 = vmul.f32 %v650, %v553
      %v675 = vmul.f32 %v651, %v553
      %v676 = vmul.f32 %v652, %v553
      %v677 = vmul.f32 %v653, %v553
      %v678 = vmul.f32 %v654, %v553
      %v679 = vmul.f32 %v655, %v553
      %v680 = vmul.f32 %v656, %v553
      %v681 = vmul.f32 %v657, %v553
      %v682 = vmul.f32 %v658, %v553
      %v683 = vmul.f32 %v659, %v553
      %v684 = vmul.f32 %v660, %v553
      %v685 = vmul.f32 %v661, %v553
      %v686 = vmul.f32 %v662, %v553
      %v687 = vmul.f32 %v663, %v553
      %v688 = vmul.f32 %v664, %v553
      %v689 = vmul.f32 %v665, %v553
      %v690 = vmul.f32 %v666, %v553
      %v691 = vmul.f32 %v667, %v553
      %v692 = vmul.f32 %v668, %v553
      %v693 = vmul.f32 %v669, %v553
      %v694 = vadd.f32 %v670, %v560
      %v695 = vadd.f32 %v671, %v560
      %v696 = vadd.f32 %v672, %v560
      %v697 = vadd.f32 %v673, %v560
      %v698 = vadd.f32 %v674, %v560
      %v699 = vadd.f32 %v675, %v560
      %v700 = vadd.f32 %v676, %v560
      %v701 = vadd.f32 %v677, %v560
      %v702 = vadd.f32 %v678, %v560
      %v703 = vadd.f32 %v679, %v560
      %v704 = vadd.f32 %v680, %v560
      %v705 = vadd.f32 %v681, %v560
      %v706 = vadd.f32 %v682, %v560
      %v707 = vadd.f32 %v683, %v560
      %v708 = vadd.f32 %v684, %v560
      %v709 = vadd.f32 %v685, %v560
      %v710 = vadd.f32 %v686, %v560
      %v711 = vadd.f32 %v687, %v560
      %v712 = vadd.f32 %v688, %v560
      %v713 = vadd.f32 %v689, %v560
      %v714 = vadd.f32 %v690, %v560
      %v715 = vadd.f32 %v691, %v560
      %v716 = vadd.f32 %v692, %v560
      %v717 = vadd.f32 %v693, %v560
      %vm718 = vcmp.gt.f32.partialorder %v694, 0.0
      %vm719 = vcmp.gt.f32.partialorder %v695, 0.0
      %vm720 = vcmp.gt.f32.partialorder %v696, 0.0
      %vm721 = vcmp.gt.f32.partialorder %v697, 0.0
      %vm722 = vcmp.gt.f32.partialorder %v698, 0.0
      %vm723 = vcmp.gt.f32.partialorder %v699, 0.0
      %vm724 = vcmp.gt.f32.partialorder %v700, 0.0
      %vm725 = vcmp.gt.f32.partialorder %v701, 0.0
      %vm726 = vcmp.gt.f32.partialorder %v702, 0.0
      %vm727 = vcmp.gt.f32.partialorder %v703, 0.0
      %vm728 = vcmp.gt.f32.partialorder %v704, 0.0
      %vm729 = vcmp.gt.f32.partialorder %v705, 0.0
      %vm730 = vcmp.gt.f32.partialorder %v706, 0.0
      %vm731 = vcmp.gt.f32.partialorder %v707, 0.0
      %vm732 = vcmp.gt.f32.partialorder %v708, 0.0
      %vm733 = vcmp.gt.f32.partialorder %v709, 0.0
      %vm734 = vcmp.gt.f32.partialorder %v710, 0.0
      %vm735 = vcmp.gt.f32.partialorder %v711, 0.0
      %vm736 = vcmp.gt.f32.partialorder %v712, 0.0
      %vm737 = vcmp.gt.f32.partialorder %v713, 0.0
      %vm738 = vcmp.gt.f32.partialorder %v714, 0.0
      %vm739 = vcmp.gt.f32.partialorder %v715, 0.0
      %vm740 = vcmp.gt.f32.partialorder %v716, 0.0
      %vm741 = vcmp.gt.f32.partialorder %v717, 0.0
      %v742 = vmul.f32 %v694, 0.2
      %v743 = vmul.f32 %v695, 0.2
      %v744 = vmul.f32 %v696, 0.2
      %v745 = vmul.f32 %v697, 0.2
      %v746 = vmul.f32 %v698, 0.2
      %v747 = vmul.f32 %v699, 0.2
      %v748 = vmul.f32 %v700, 0.2
      %v749 = vmul.f32 %v701, 0.2
      %v750 = vmul.f32 %v702, 0.2
      %v751 = vmul.f32 %v703, 0.2
      %v752 = vmul.f32 %v704, 0.2
      %v753 = vmul.f32 %v705, 0.2
      %v754 = vmul.f32 %v706, 0.2
      %v755 = vmul.f32 %v707, 0.2
      %v756 = vmul.f32 %v708, 0.2
      %v757 = vmul.f32 %v709, 0.2
      %v758 = vmul.f32 %v710, 0.2
      %v759 = vmul.f32 %v711, 0.2
      %v760 = vmul.f32 %v712, 0.2
      %v761 = vmul.f32 %v713, 0.2
      %v762 = vmul.f32 %v714, 0.2
      %v763 = vmul.f32 %v715, 0.2
      %v764 = vmul.f32 %v716, 0.2
      %v765 = vmul.f32 %v717, 0.2
      %v766 = vsel %vm718, %v694, %v742
      %v767 = vsel %vm719, %v695, %v743
      %v768 = vsel %vm720, %v696, %v744
      %v769 = vsel %vm721, %v697, %v745
      %v770 = vsel %vm722, %v698, %v746
      %v771 = vsel %vm723, %v699, %v747
      %v772 = vsel %vm724, %v700, %v748
      %v773 = vsel %vm725, %v701, %v749
      %v774 = vsel %vm726, %v702, %v750
      %v775 = vsel %vm727, %v703, %v751
      %v776 = vsel %vm728, %v704, %v752
      %v777 = vsel %vm729, %v705, %v753
      %v778 = vsel %vm730, %v706, %v754
      %v779 = vsel %vm731, %v707, %v755
      %v780 = vsel %vm732, %v708, %v756
      %v781 = vsel %vm733, %v709, %v757
      %v782 = vsel %vm734, %v710, %v758
      %v783 = vsel %vm735, %v711, %v759
      %v784 = vsel %vm736, %v712, %v760
      %v785 = vsel %vm737, %v713, %v761
      %v786 = vsel %vm738, %v714, %v762
      %v787 = vsel %vm739, %v715, %v763
      %v788 = vsel %vm740, %v716, %v764
      %v789 = vsel %vm741, %v717, %v765
      %v790 = vsel %vm499, 1, 0
      %v791 = vsel %vm500, 1, 0
      %v792 = vsel %vm501, 1, 0
      %vm793 = vcmp.eq.s32.totalorder %v790, 1
      %vm794 = vcmp.eq.s32.totalorder %v791, 1
      %vm795 = vcmp.eq.s32.totalorder %v792, 1
      %v796 = vsel %vm793, %v766, 0.0
      %v797 = vsel %vm794, %v767, 0.0
      %v798 = vsel %vm795, %v768, 0.0
      %v799 = vsel %vm793, %v769, 0.0
      %v800 = vsel %vm794, %v770, 0.0
      %v801 = vsel %vm795, %v771, 0.0
      %v802 = vsel %vm793, %v772, 0.0
      %v803 = vsel %vm794, %v773, 0.0
      %v804 = vsel %vm795, %v774, 0.0
      %v805 = vsel %vm793, %v775, 0.0
      %v806 = vsel %vm794, %v776, 0.0
      %v807 = vsel %vm795, %v777, 0.0
      %v808 = vsel %vm793, %v778, 0.0
      %v809 = vsel %vm794, %v779, 0.0
      %v810 = vsel %vm795, %v780, 0.0
      %v811 = vsel %vm793, %v781, 0.0
      %v812 = vsel %vm794, %v782, 0.0
      %v813 = vsel %vm795, %v783, 0.0
      %v814 = vsel %vm793, %v784, 0.0
      %v815 = vsel %vm794, %v785, 0.0
      %v816 = vsel %vm795, %v786, 0.0
      %v817 = vsel %vm793, %v787, 0.0
      %v818 = vsel %vm794, %v788, 0.0
      %v819 = vsel %vm795, %v789, 0.0
      %v820 = vpack.c.bf16 %v796, %v796
      %v821 = vpack.c.bf16 %v797, %v797
      %v822 = vpack.c.bf16 %v798, %v798
      %v823 = vpack.c.bf16 %v799, %v799
      %v824 = vpack.c.bf16 %v800, %v800
      %v825 = vpack.c.bf16 %v801, %v801
      %v826 = vpack.c.bf16 %v802, %v802
      %v827 = vpack.c.bf16 %v803, %v803
      %v828 = vpack.c.bf16 %v804, %v804
      %v829 = vpack.c.bf16 %v805, %v805
      %v830 = vpack.c.bf16 %v806, %v806
      %v831 = vpack.c.bf16 %v807, %v807
      %v832 = vpack.c.bf16 %v808, %v808
      %v833 = vpack.c.bf16 %v809, %v809
      %v834 = vpack.c.bf16 %v810, %v810
      %v835 = vpack.c.bf16 %v811, %v811
      %v836 = vpack.c.bf16 %v812, %v812
      %v837 = vpack.c.bf16 %v813, %v813
      %v838 = vpack.c.bf16 %v814, %v814
      %v839 = vpack.c.bf16 %v815, %v815
      %v840 = vpack.c.bf16 %v816, %v816
      %v841 = vpack.c.bf16 %v817, %v817
      %v842 = vpack.c.bf16 %v818, %v818
      %v843 = vpack.c.bf16 %v819, %v819
      %v844 = vpack.c.bf16 %v586, %v586
      %v845 = vpack.c.bf16 %v587, %v587
      %v846 = vpack.c.bf16 %v588, %v588
      %v847 = vpack.c.bf16 %v589, %v589
      %v848 = vpack.c.bf16 %v618, %v618
      %v849 = vpack.c.bf16 %v619, %v619
      %v850 = vpack.c.bf16 %v620, %v620
      %v851 = vpack.c.bf16 %v621, %v621
      %v856 = vunpack.c.l.b16 %v844
      %v857 = vunpack.c.l.b16 %v845
      %v858 = vunpack.c.l.b16 %v846
      %v859 = vunpack.c.l.b16 %v847
      %v860 = vpack.c.b16 %v857, %v856
      %v861 = vpack.c.b16 %v859, %v858
      %v886 = vunpack.c.l.b16 %v820
      %v887 = vunpack.c.l.b16 %v821
      %v888 = vunpack.c.l.b16 %v822
      %v889 = vunpack.c.l.b16 %v823
      %v890 = vunpack.c.l.b16 %v824
      %v891 = vunpack.c.l.b16 %v825
      %v892 = vunpack.c.l.b16 %v826
      %v893 = vunpack.c.l.b16 %v827
      %v894 = vunpack.c.l.b16 %v828
      %v895 = vunpack.c.l.b16 %v829
      %v896 = vunpack.c.l.b16 %v830
      %v897 = vunpack.c.l.b16 %v831
      %v898 = vunpack.c.l.b16 %v832
      %v899 = vunpack.c.l.b16 %v833
      %v900 = vunpack.c.l.b16 %v834
      %v901 = vunpack.c.l.b16 %v835
      %v902 = vunpack.c.l.b16 %v836
      %v903 = vunpack.c.l.b16 %v837
      %v904 = vunpack.c.l.b16 %v838
      %v905 = vunpack.c.l.b16 %v839
      %v906 = vunpack.c.l.b16 %v840
      %v907 = vunpack.c.l.b16 %v841
      %v908 = vunpack.c.l.b16 %v842
      %v909 = vunpack.c.l.b16 %v843
      %v910 = vpack.c.b16 %v887, %v886
      %v911 = vpack.c.b16 %v889, %v888
      %v912 = vpack.c.b16 %v891, %v890
      %v913 = vpack.c.b16 %v893, %v892
      %v914 = vpack.c.b16 %v895, %v894
      %v915 = vpack.c.b16 %v897, %v896
      %v916 = vpack.c.b16 %v899, %v898
      %v917 = vpack.c.b16 %v901, %v900
      %v918 = vpack.c.b16 %v903, %v902
      %v919 = vpack.c.b16 %v905, %v904
      %v920 = vpack.c.b16 %v907, %v906
      %v921 = vpack.c.b16 %v909, %v908
      %v926 = vunpack.c.l.b16 %v848
      %v927 = vunpack.c.l.b16 %v849
      %v928 = vunpack.c.l.b16 %v850
      %v929 = vunpack.c.l.b16 %v851
      %v930 = vpack.c.b16 %v927, %v926
      %v931 = vpack.c.b16 %v929, %v928
      %v932 = vld [vmem:[%s5] sm:$0xf]
      %v933 = vld [vmem:[%s5 + $0x4] sm:$0xf]
      %v934 = vld [vmem:[%s5 + $0x8] sm:$0xf]
      %v935 = vld [vmem:[%s5 + $0xc] sm:$0xf]
      %v936 = vld [vmem:[%s5 + $0x10] sm:$0xf]
      %v937 = vld [vmem:[%s5 + $0x14] sm:$0xf]
      %v938 = vld [vmem:[%s5 + $0x18] sm:$0xf]
      %v939 = vld [vmem:[%s5 + $0x1c] sm:$0xf]
      %v940 = vld [vmem:[%s5 + $0x20] sm:$0xf]
      %v941 = vld [vmem:[%s5 + $0x24] sm:$0xf]
      %v942 = vld [vmem:[%s5 + $0x28] sm:$0xf]
      %v943 = vld [vmem:[%s5 + $0x2c] sm:$0xf]
      %v944 = vld [vmem:[%s5 + $0x30] sm:$0xf]
      %v945 = vld [vmem:[%s5 + $0x34] sm:$0xf]
      %v946 = vld [vmem:[%s5 + $0x38] sm:$0xf]
      %v947 = vld [vmem:[%s5 + $0x3c] sm:$0xf]
      %v948 = vld [vmem:[%s5 + $0x40] sm:$0xf]
      %v949 = vld [vmem:[%s5 + $0x44] sm:$0xf]
      %v950 = vld [vmem:[%s5 + $0x48] sm:$0xf]
      %v951 = vld [vmem:[%s5 + $0x4c] sm:$0xf]
      %v952 = vld [vmem:[%s5 + $0x50] sm:$0xf]
      %v953 = vld [vmem:[%s5 + $0x54] sm:$0xf]
      %v954 = vld [vmem:[%s5 + $0x58] sm:$0xf]
      %v955 = vld [vmem:[%s5 + $0x5c] sm:$0xf]
      %v956 = vld [vmem:[%s5 + $0x60] sm:$0xf]
      %v957 = vld [vmem:[%s5 + $0x64] sm:$0xf]
      %v958 = vld [vmem:[%s5 + $0x68] sm:$0xf]
      %v959 = vld [vmem:[%s5 + $0x6c] sm:$0xf]
      %v960 = vld [vmem:[%s5 + $0x70] sm:$0xf]
      %v961 = vld [vmem:[%s5 + $0x74] sm:$0xf]
      %v962 = vld [vmem:[%s5 + $0x78] sm:$0xf]
      %v963 = vld [vmem:[%s5 + $0x7c] sm:$0xf]
      %v964 = vld [vmem:[%s5 + $0x80] sm:$0xf]
      %v965 = vld [vmem:[%s5 + $0x84] sm:$0xf]
      %v966 = vld [vmem:[%s5 + $0x88] sm:$0xf]
      %v967 = vld [vmem:[%s5 + $0x8c] sm:$0xf]
      %v968 = vld [vmem:[%s5 + $0x90] sm:$0xf]
      %v969 = vld [vmem:[%s5 + $0x94] sm:$0xf]
      %v970 = vld [vmem:[%s5 + $0x98] sm:$0xf]
      %v971 = vld [vmem:[%s5 + $0x9c] sm:$0xf]
      %v972 = vld [vmem:[%s5 + $0xa0] sm:$0xf]
      %v973 = vld [vmem:[%s5 + $0xa4] sm:$0xf]
      %v974 = vld [vmem:[%s5 + $0xa8] sm:$0xf]
      %v975 = vld [vmem:[%s5 + $0xac] sm:$0xf]
      %v976 = vld [vmem:[%s5 + $0xb0] sm:$0xf]
      %v977 = vld [vmem:[%s5 + $0xb4] sm:$0xf]
      %v978 = vld [vmem:[%s5 + $0xb8] sm:$0xf]
      %v979 = vld [vmem:[%s5 + $0xbc] sm:$0xf]
      %v980 = vld [vmem:[%s5 + $0xc0] sm:$0xf]
      %v981 = vld [vmem:[%s5 + $0xc4] sm:$0xf]
      %v982 = vld [vmem:[%s5 + $0xc8] sm:$0xf]
      %v983 = vld [vmem:[%s5 + $0xcc] sm:$0xf]
      %v984 = vld [vmem:[%s5 + $0xd0] sm:$0xf]
      %v985 = vld [vmem:[%s5 + $0xd4] sm:$0xf]
      %v986 = vld [vmem:[%s5 + $0xd8] sm:$0xf]
      %v987 = vld [vmem:[%s5 + $0xdc] sm:$0xf]
      %v988 = vld [vmem:[%s5 + $0xe0] sm:$0xf]
      %v989 = vld [vmem:[%s5 + $0xe4] sm:$0xf]
      %v990 = vld [vmem:[%s5 + $0xe8] sm:$0xf]
      %v991 = vld [vmem:[%s5 + $0xec] sm:$0xf]
      %v992 = vld [vmem:[%s5 + $0xf0] sm:$0xf]
      %v993 = vld [vmem:[%s5 + $0xf4] sm:$0xf]
      %v994 = vld [vmem:[%s5 + $0xf8] sm:$0xf]
      %v995 = vld [vmem:[%s5 + $0xfc] sm:$0xf]
      %v996 = vld [vmem:[%s5 + $0x100] sm:$0xf]
      %v997 = vld [vmem:[%s5 + $0x104] sm:$0xf]
      %v998 = vld [vmem:[%s5 + $0x108] sm:$0xf]
      %v999 = vld [vmem:[%s5 + $0x10c] sm:$0xf]
      %v1000 = vld [vmem:[%s5 + $0x110] sm:$0xf]
      %v1001 = vld [vmem:[%s5 + $0x114] sm:$0xf]
      %v1002 = vld [vmem:[%s5 + $0x118] sm:$0xf]
      %v1003 = vld [vmem:[%s5 + $0x11c] sm:$0xf]
      %vm1004 = vcmask 1043456
      %v1005 = vrot.slane %v860, 4
      %v1006 = vrot.slane %v861, 4
      %v1007 = vsel %vm1004, %v1005, %v1006
      %v1008 = vrot.slane %v910, 4
      %v1009 = vsel %vm1004, %v1006, %v1008
      %v1010 = vrot.slane %v911, 4
      %v1011 = vsel %vm1004, %v1008, %v1010
      %v1012 = vrot.slane %v912, 4
      %v1013 = vsel %vm1004, %v1010, %v1012
      %v1014 = vrot.slane %v913, 4
      %v1015 = vsel %vm1004, %v1012, %v1014
      %v1016 = vrot.slane %v914, 4
      %v1017 = vsel %vm1004, %v1014, %v1016
      %v1018 = vrot.slane %v915, 4
      %v1019 = vsel %vm1004, %v1016, %v1018
      %v1020 = vrot.slane %v916, 4
      %v1021 = vsel %vm1004, %v1018, %v1020
      %v1022 = vrot.slane %v917, 4
      %v1023 = vsel %vm1004, %v1020, %v1022
      %v1024 = vrot.slane %v918, 4
      %v1025 = vsel %vm1004, %v1022, %v1024
      %v1026 = vrot.slane %v919, 4
      %v1027 = vsel %vm1004, %v1024, %v1026
      %v1028 = vrot.slane %v920, 4
      %v1029 = vsel %vm1004, %v1026, %v1028
      %v1038 = vunpack.c.l.b16 %v940
      %v1039 = vunpack.c.l.b16 %v941
      %v1040 = vunpack.c.l.b16 %v942
      %v1041 = vunpack.c.l.b16 %v943
      %v1042 = vunpack.c.l.b16 %v944
      %v1043 = vunpack.c.l.b16 %v945
      %v1044 = vunpack.c.l.b16 %v946
      %v1045 = vunpack.c.l.b16 %v947
      %v1046 = vpack.c.b16 %v1039, %v1038
      %v1047 = vpack.c.b16 %v1041, %v1040
      %v1048 = vpack.c.b16 %v1043, %v1042
      %v1049 = vpack.c.b16 %v1045, %v1044
      %vm1054 = vcmask 523264
      %v1056 = vsel %vm1054, %v1007, 0
      %v1059 = vsel %vm1054, %v1009, 0
      %v1062 = vsel %vm1054, %v1011, 0
      %v1065 = vsel %vm1054, %v1013, 0
      %v1068 = vsel %vm1054, %v1015, 0
      %v1071 = vsel %vm1054, %v1017, 0
      %v1074 = vsel %vm1054, %v1019, 0
      %v1077 = vsel %vm1054, %v1021, 0
      %v1080 = vsel %vm1054, %v1023, 0
      %v1083 = vsel %vm1054, %v1025, 0
      %v1086 = vsel %vm1054, %v1027, 0
      %v1089 = vsel %vm1054, %v1029, 0
      %1091 = vmatpush.bf16.msra.mxu0 0
      %1092 = vmatpush.bf16.msra.mxu0 0
      %1093 = vmatpush.bf16.msra.mxu0 0
      %1094 = vmatpush.bf16.msra.mxu0 0
      %1095 = vmatpush.bf16.msra.mxu0 %v1049
      %1096 = vmatpush.bf16.msra.mxu0 %v1048
      %1097 = vmatpush.bf16.msra.mxu0 %v1047
      %1098 = vmatpush.bf16.msra.mxu0 %v1046
      %1099 = vmatmul.bf16.gmra.mxu0 %v1056
      %v1100 = vpop.f32.mrf.mxu0
      %v1101 = vadd.f32 0.0, %v1100
      %v1102 = vpop.f32.mrf.mxu0
      %v1103 = vadd.f32 0.0, %v1102
      %1104 = vmatmul.bf16.gmra.mxu0 %v1059
      %v1105 = vpop.f32.mrf.mxu0
      %v1106 = vadd.f32 0.0, %v1105
      %v1107 = vpop.f32.mrf.mxu0
      %v1108 = vadd.f32 0.0, %v1107
      %1109 = vmatmul.bf16.gmra.mxu0 %v1062
      %v1110 = vpop.f32.mrf.mxu0
      %v1111 = vadd.f32 0.0, %v1110
      %v1112 = vpop.f32.mrf.mxu0
      %v1113 = vadd.f32 0.0, %v1112
      %1114 = vmatmul.bf16.gmra.mxu0 %v1065
      %v1115 = vpop.f32.mrf.mxu0
      %v1116 = vadd.f32 0.0, %v1115
      %v1117 = vpop.f32.mrf.mxu0
      %v1118 = vadd.f32 0.0, %v1117
      %1119 = vmatmul.bf16.gmra.mxu0 %v1068
      %v1120 = vpop.f32.mrf.mxu0
      %v1121 = vadd.f32 0.0, %v1120
      %v1122 = vpop.f32.mrf.mxu0
      %v1123 = vadd.f32 0.0, %v1122
      %1124 = vmatmul.bf16.gmra.mxu0 %v1071
      %v1125 = vpop.f32.mrf.mxu0
      %v1126 = vadd.f32 0.0, %v1125
      %v1127 = vpop.f32.mrf.mxu0
      %v1128 = vadd.f32 0.0, %v1127
      %1129 = vmatmul.bf16.gmra.mxu0 %v1074
      %v1130 = vpop.f32.mrf.mxu0
      %v1131 = vadd.f32 0.0, %v1130
      %v1132 = vpop.f32.mrf.mxu0
      %v1133 = vadd.f32 0.0, %v1132
      %1134 = vmatmul.bf16.gmra.mxu0 %v1077
      %v1135 = vpop.f32.mrf.mxu0
      %v1136 = vadd.f32 0.0, %v1135
      %v1137 = vpop.f32.mrf.mxu0
      %v1138 = vadd.f32 0.0, %v1137
      %1139 = vmatmul.bf16.gmra.mxu0 %v1080
      %v1140 = vpop.f32.mrf.mxu0
      %v1141 = vadd.f32 0.0, %v1140
      %v1142 = vpop.f32.mrf.mxu0
      %v1143 = vadd.f32 0.0, %v1142
      %1144 = vmatmul.bf16.gmra.mxu0 %v1083
      %v1145 = vpop.f32.mrf.mxu0
      %v1146 = vadd.f32 0.0, %v1145
      %v1147 = vpop.f32.mrf.mxu0
      %v1148 = vadd.f32 0.0, %v1147
      %1149 = vmatmul.bf16.gmra.mxu0 %v1086
      %v1150 = vpop.f32.mrf.mxu0
      %v1151 = vadd.f32 0.0, %v1150
      %v1152 = vpop.f32.mrf.mxu0
      %v1153 = vadd.f32 0.0, %v1152
      %1154 = vmatmul.bf16.gmra.mxu0 %v1089
      %v1155 = vpop.f32.mrf.mxu0
      %v1156 = vadd.f32 0.0, %v1155
      %v1157 = vpop.f32.mrf.mxu0
      %v1158 = vadd.f32 0.0, %v1157
      %1159 = vdwg.mxu0
      %vm1160 = vsmask.f32 4352
      %v1162 = vshrl.u32 %v860, 16
      %v1164 = vrot.slane %v1162, 3
      %v1165 = vshll.u32 %v860, 16
      %v1167 = vrot.slane %v1165, 4
      %v1168 = vor.u32 %v1164, %v1167
      %v1170 = vshrl.u32 %v861, 16
      %v1172 = vrot.slane %v1170, 3
      %v1173 = vshll.u32 %v861, 16
      %v1175 = vrot.slane %v1173, 4
      %v1176 = vor.u32 %v1172, %v1175
      %v1177 = vsel %vm1160, %v1168, %v1176
      %v1179 = vshrl.u32 %v910, 16
      %v1181 = vrot.slane %v1179, 3
      %v1182 = vshll.u32 %v910, 16
      %v1184 = vrot.slane %v1182, 4
      %v1185 = vor.u32 %v1181, %v1184
      %v1186 = vsel %vm1160, %v1176, %v1185
      %v1188 = vshrl.u32 %v911, 16
      %v1190 = vrot.slane %v1188, 3
      %v1191 = vshll.u32 %v911, 16
      %v1193 = vrot.slane %v1191, 4
      %v1194 = vor.u32 %v1190, %v1193
      %v1195 = vsel %vm1160, %v1185, %v1194
      %v1197 = vshrl.u32 %v912, 16
      %v1199 = vrot.slane %v1197, 3
      %v1200 = vshll.u32 %v912, 16
      %v1202 = vrot.slane %v1200, 4
      %v1203 = vor.u32 %v1199, %v1202
      %v1204 = vsel %vm1160, %v1194, %v1203
      %v1206 = vshrl.u32 %v913, 16
      %v1208 = vrot.slane %v1206, 3
      %v1209 = vshll.u32 %v913, 16
      %v1211 = vrot.slane %v1209, 4
      %v1212 = vor.u32 %v1208, %v1211
      %v1213 = vsel %vm1160, %v1203, %v1212
      %v1215 = vshrl.u32 %v914, 16
      %v1217 = vrot.slane %v1215, 3
      %v1218 = vshll.u32 %v914, 16
      %v1220 = vrot.slane %v1218, 4
      %v1221 = vor.u32 %v1217, %v1220
      %v1222 = vsel %vm1160, %v1212, %v1221
      %v1224 = vshrl.u32 %v915, 16
      %v1226 = vrot.slane %v1224, 3
      %v1227 = vshll.u32 %v915, 16
      %v1229 = vrot.slane %v1227, 4
      %v1230 = vor.u32 %v1226, %v1229
      %v1231 = vsel %vm1160, %v1221, %v1230
      %v1233 = vshrl.u32 %v916, 16
      %v1235 = vrot.slane %v1233, 3
      %v1236 = vshll.u32 %v916, 16
      %v1238 = vrot.slane %v1236, 4
      %v1239 = vor.u32 %v1235, %v1238
      %v1240 = vsel %vm1160, %v1230, %v1239
      %v1242 = vshrl.u32 %v917, 16
      %v1244 = vrot.slane %v1242, 3
      %v1245 = vshll.u32 %v917, 16
      %v1247 = vrot.slane %v1245, 4
      %v1248 = vor.u32 %v1244, %v1247
      %v1249 = vsel %vm1160, %v1239, %v1248
      %v1251 = vshrl.u32 %v918, 16
      %v1253 = vrot.slane %v1251, 3
      %v1254 = vshll.u32 %v918, 16
      %v1256 = vrot.slane %v1254, 4
      %v1257 = vor.u32 %v1253, %v1256
      %v1258 = vsel %vm1160, %v1248, %v1257
      %v1260 = vshrl.u32 %v919, 16
      %v1262 = vrot.slane %v1260, 3
      %v1263 = vshll.u32 %v919, 16
      %v1265 = vrot.slane %v1263, 4
      %v1266 = vor.u32 %v1262, %v1265
      %v1267 = vsel %vm1160, %v1257, %v1266
      %v1269 = vshrl.u32 %v920, 16
      %v1271 = vrot.slane %v1269, 3
      %v1272 = vshll.u32 %v920, 16
      %v1274 = vrot.slane %v1272, 4
      %v1275 = vor.u32 %v1271, %v1274
      %v1276 = vsel %vm1160, %v1266, %v1275
      %v1285 = vunpack.c.l.b16 %v932
      %v1286 = vunpack.c.l.b16 %v933
      %v1287 = vunpack.c.l.b16 %v934
      %v1288 = vunpack.c.l.b16 %v935
      %v1289 = vunpack.c.l.b16 %v936
      %v1290 = vunpack.c.l.b16 %v937
      %v1291 = vunpack.c.l.b16 %v938
      %v1292 = vunpack.c.l.b16 %v939
      %v1293 = vpack.c.b16 %v1286, %v1285
      %v1294 = vpack.c.b16 %v1288, %v1287
      %v1295 = vpack.c.b16 %v1290, %v1289
      %v1296 = vpack.c.b16 %v1292, %v1291
      %v1302 = vsel %vm1054, %v1177, 0
      %v1305 = vsel %vm1054, %v1186, 0
      %v1308 = vsel %vm1054, %v1195, 0
      %v1311 = vsel %vm1054, %v1204, 0
      %v1314 = vsel %vm1054, %v1213, 0
      %v1317 = vsel %vm1054, %v1222, 0
      %v1320 = vsel %vm1054, %v1231, 0
      %v1323 = vsel %vm1054, %v1240, 0
      %v1326 = vsel %vm1054, %v1249, 0
      %v1329 = vsel %vm1054, %v1258, 0
      %v1332 = vsel %vm1054, %v1267, 0
      %v1335 = vsel %vm1054, %v1276, 0
      %1337 = vmatpush.bf16.msra.mxu0 0
      %1338 = vmatpush.bf16.msra.mxu0 0
      %1339 = vmatpush.bf16.msra.mxu0 0
      %1340 = vmatpush.bf16.msra.mxu0 0
      %1341 = vmatpush.bf16.msra.mxu0 %v1296
      %1342 = vmatpush.bf16.msra.mxu0 %v1295
      %1343 = vmatpush.bf16.msra.mxu0 %v1294
      %1344 = vmatpush.bf16.msra.mxu0 %v1293
      %1345 = vmatmul.bf16.gmra.mxu0 %v1302
      %v1346 = vpop.f32.mrf.mxu0
      %v1347 = vadd.f32 %v1101, %v1346
      %v1348 = vpop.f32.mrf.mxu0
      %v1349 = vadd.f32 %v1103, %v1348
      %1350 = vmatmul.bf16.gmra.mxu0 %v1305
      %v1351 = vpop.f32.mrf.mxu0
      %v1352 = vadd.f32 %v1106, %v1351
      %v1353 = vpop.f32.mrf.mxu0
      %v1354 = vadd.f32 %v1108, %v1353
      %1355 = vmatmul.bf16.gmra.mxu0 %v1308
      %v1356 = vpop.f32.mrf.mxu0
      %v1357 = vadd.f32 %v1111, %v1356
      %v1358 = vpop.f32.mrf.mxu0
      %v1359 = vadd.f32 %v1113, %v1358
      %1360 = vmatmul.bf16.gmra.mxu0 %v1311
      %v1361 = vpop.f32.mrf.mxu0
      %v1362 = vadd.f32 %v1116, %v1361
      %v1363 = vpop.f32.mrf.mxu0
      %v1364 = vadd.f32 %v1118, %v1363
      %1365 = vmatmul.bf16.gmra.mxu0 %v1314
      %v1366 = vpop.f32.mrf.mxu0
      %v1367 = vadd.f32 %v1121, %v1366
      %v1368 = vpop.f32.mrf.mxu0
      %v1369 = vadd.f32 %v1123, %v1368
      %1370 = vmatmul.bf16.gmra.mxu0 %v1317
      %v1371 = vpop.f32.mrf.mxu0
      %v1372 = vadd.f32 %v1126, %v1371
      %v1373 = vpop.f32.mrf.mxu0
      %v1374 = vadd.f32 %v1128, %v1373
      %1375 = vmatmul.bf16.gmra.mxu0 %v1320
      %v1376 = vpop.f32.mrf.mxu0
      %v1377 = vadd.f32 %v1131, %v1376
      %v1378 = vpop.f32.mrf.mxu0
      %v1379 = vadd.f32 %v1133, %v1378
      %1380 = vmatmul.bf16.gmra.mxu0 %v1323
      %v1381 = vpop.f32.mrf.mxu0
      %v1382 = vadd.f32 %v1136, %v1381
      %v1383 = vpop.f32.mrf.mxu0
      %v1384 = vadd.f32 %v1138, %v1383
      %1385 = vmatmul.bf16.gmra.mxu0 %v1326
      %v1386 = vpop.f32.mrf.mxu0
      %v1387 = vadd.f32 %v1141, %v1386
      %v1388 = vpop.f32.mrf.mxu0
      %v1389 = vadd.f32 %v1143, %v1388
      %1390 = vmatmul.bf16.gmra.mxu0 %v1329
      %v1391 = vpop.f32.mrf.mxu0
      %v1392 = vadd.f32 %v1146, %v1391
      %v1393 = vpop.f32.mrf.mxu0
      %v1394 = vadd.f32 %v1148, %v1393
      %1395 = vmatmul.bf16.gmra.mxu0 %v1332
      %v1396 = vpop.f32.mrf.mxu0
      %v1397 = vadd.f32 %v1151, %v1396
      %v1398 = vpop.f32.mrf.mxu0
      %v1399 = vadd.f32 %v1153, %v1398
      %1400 = vmatmul.bf16.gmra.mxu0 %v1335
      %v1401 = vpop.f32.mrf.mxu0
      %v1402 = vadd.f32 %v1156, %v1401
      %v1403 = vpop.f32.mrf.mxu0
      %v1404 = vadd.f32 %v1158, %v1403
      %1405 = vdwg.mxu0
      %vm1406 = vsmask.f32 3328
      %v1407 = vrot.slane %v1162, 4
      %v1408 = vrot.slane %v1165, 5
      %v1409 = vor.u32 %v1407, %v1408
      %v1410 = vrot.slane %v1170, 4
      %v1411 = vrot.slane %v1173, 5
      %v1412 = vor.u32 %v1410, %v1411
      %v1413 = vsel %vm1406, %v1409, %v1412
      %v1414 = vrot.slane %v1179, 4
      %v1415 = vrot.slane %v1182, 5
      %v1416 = vor.u32 %v1414, %v1415
      %v1417 = vsel %vm1406, %v1412, %v1416
      %v1418 = vrot.slane %v1188, 4
      %v1419 = vrot.slane %v1191, 5
      %v1420 = vor.u32 %v1418, %v1419
      %v1421 = vsel %vm1406, %v1416, %v1420
      %v1422 = vrot.slane %v1197, 4
      %v1423 = vrot.slane %v1200, 5
      %v1424 = vor.u32 %v1422, %v1423
      %v1425 = vsel %vm1406, %v1420, %v1424
      %v1426 = vrot.slane %v1206, 4
      %v1427 = vrot.slane %v1209, 5
      %v1428 = vor.u32 %v1426, %v1427
      %v1429 = vsel %vm1406, %v1424, %v1428
      %v1430 = vrot.slane %v1215, 4
      %v1431 = vrot.slane %v1218, 5
      %v1432 = vor.u32 %v1430, %v1431
      %v1433 = vsel %vm1406, %v1428, %v1432
      %v1434 = vrot.slane %v1224, 4
      %v1435 = vrot.slane %v1227, 5
      %v1436 = vor.u32 %v1434, %v1435
      %v1437 = vsel %vm1406, %v1432, %v1436
      %v1438 = vrot.slane %v1233, 4
      %v1439 = vrot.slane %v1236, 5
      %v1440 = vor.u32 %v1438, %v1439
      %v1441 = vsel %vm1406, %v1436, %v1440
      %v1442 = vrot.slane %v1242, 4
      %v1443 = vrot.slane %v1245, 5
      %v1444 = vor.u32 %v1442, %v1443
      %v1445 = vsel %vm1406, %v1440, %v1444
      %v1446 = vrot.slane %v1251, 4
      %v1447 = vrot.slane %v1254, 5
      %v1448 = vor.u32 %v1446, %v1447
      %v1449 = vsel %vm1406, %v1444, %v1448
      %v1450 = vrot.slane %v1260, 4
      %v1451 = vrot.slane %v1263, 5
      %v1452 = vor.u32 %v1450, %v1451
      %v1453 = vsel %vm1406, %v1448, %v1452
      %v1454 = vrot.slane %v1269, 4
      %v1455 = vrot.slane %v1272, 5
      %v1456 = vor.u32 %v1454, %v1455
      %v1457 = vsel %vm1406, %v1452, %v1456
      %v1466 = vunpack.c.l.b16 %v948
      %v1467 = vunpack.c.l.b16 %v949
      %v1468 = vunpack.c.l.b16 %v950
      %v1469 = vunpack.c.l.b16 %v951
      %v1470 = vunpack.c.l.b16 %v952
      %v1471 = vunpack.c.l.b16 %v953
      %v1472 = vunpack.c.l.b16 %v954
      %v1473 = vunpack.c.l.b16 %v955
      %v1474 = vpack.c.b16 %v1467, %v1466
      %v1475 = vpack.c.b16 %v1469, %v1468
      %v1476 = vpack.c.b16 %v1471, %v1470
      %v1477 = vpack.c.b16 %v1473, %v1472
      %v1483 = vsel %vm1054, %v1413, 0
      %v1486 = vsel %vm1054, %v1417, 0
      %v1489 = vsel %vm1054, %v1421, 0
      %v1492 = vsel %vm1054, %v1425, 0
      %v1495 = vsel %vm1054, %v1429, 0
      %v1498 = vsel %vm1054, %v1433, 0
      %v1501 = vsel %vm1054, %v1437, 0
      %v1504 = vsel %vm1054, %v1441, 0
      %v1507 = vsel %vm1054, %v1445, 0
      %v1510 = vsel %vm1054, %v1449, 0
      %v1513 = vsel %vm1054, %v1453, 0
      %v1516 = vsel %vm1054, %v1457, 0
      %1518 = vmatpush.bf16.msra.mxu0 0
      %1519 = vmatpush.bf16.msra.mxu0 0
      %1520 = vmatpush.bf16.msra.mxu0 0
      %1521 = vmatpush.bf16.msra.mxu0 0
      %1522 = vmatpush.bf16.msra.mxu0 %v1477
      %1523 = vmatpush.bf16.msra.mxu0 %v1476
      %1524 = vmatpush.bf16.msra.mxu0 %v1475
      %1525 = vmatpush.bf16.msra.mxu0 %v1474
      %1526 = vmatmul.bf16.gmra.mxu0 %v1483
      %v1527 = vpop.f32.mrf.mxu0
      %v1528 = vadd.f32 0.0, %v1527
      %v1529 = vpop.f32.mrf.mxu0
      %v1530 = vadd.f32 0.0, %v1529
      %1531 = vmatmul.bf16.gmra.mxu0 %v1486
      %v1532 = vpop.f32.mrf.mxu0
      %v1533 = vadd.f32 0.0, %v1532
      %v1534 = vpop.f32.mrf.mxu0
      %v1535 = vadd.f32 0.0, %v1534
      %1536 = vmatmul.bf16.gmra.mxu0 %v1489
      %v1537 = vpop.f32.mrf.mxu0
      %v1538 = vadd.f32 0.0, %v1537
      %v1539 = vpop.f32.mrf.mxu0
      %v1540 = vadd.f32 0.0, %v1539
      %1541 = vmatmul.bf16.gmra.mxu0 %v1492
      %v1542 = vpop.f32.mrf.mxu0
      %v1543 = vadd.f32 0.0, %v1542
      %v1544 = vpop.f32.mrf.mxu0
      %v1545 = vadd.f32 0.0, %v1544
      %1546 = vmatmul.bf16.gmra.mxu0 %v1495
      %v1547 = vpop.f32.mrf.mxu0
      %v1548 = vadd.f32 0.0, %v1547
      %v1549 = vpop.f32.mrf.mxu0
      %v1550 = vadd.f32 0.0, %v1549
      %1551 = vmatmul.bf16.gmra.mxu0 %v1498
      %v1552 = vpop.f32.mrf.mxu0
      %v1553 = vadd.f32 0.0, %v1552
      %v1554 = vpop.f32.mrf.mxu0
      %v1555 = vadd.f32 0.0, %v1554
      %1556 = vmatmul.bf16.gmra.mxu0 %v1501
      %v1557 = vpop.f32.mrf.mxu0
      %v1558 = vadd.f32 0.0, %v1557
      %v1559 = vpop.f32.mrf.mxu0
      %v1560 = vadd.f32 0.0, %v1559
      %1561 = vmatmul.bf16.gmra.mxu0 %v1504
      %v1562 = vpop.f32.mrf.mxu0
      %v1563 = vadd.f32 0.0, %v1562
      %v1564 = vpop.f32.mrf.mxu0
      %v1565 = vadd.f32 0.0, %v1564
      %1566 = vmatmul.bf16.gmra.mxu0 %v1507
      %v1567 = vpop.f32.mrf.mxu0
      %v1568 = vadd.f32 0.0, %v1567
      %v1569 = vpop.f32.mrf.mxu0
      %v1570 = vadd.f32 0.0, %v1569
      %1571 = vmatmul.bf16.gmra.mxu0 %v1510
      %v1572 = vpop.f32.mrf.mxu0
      %v1573 = vadd.f32 0.0, %v1572
      %v1574 = vpop.f32.mrf.mxu0
      %v1575 = vadd.f32 0.0, %v1574
      %1576 = vmatmul.bf16.gmra.mxu0 %v1513
      %v1577 = vpop.f32.mrf.mxu0
      %v1578 = vadd.f32 0.0, %v1577
      %v1579 = vpop.f32.mrf.mxu0
      %v1580 = vadd.f32 0.0, %v1579
      %1581 = vmatmul.bf16.gmra.mxu0 %v1516
      %v1582 = vpop.f32.mrf.mxu0
      %v1583 = vadd.f32 0.0, %v1582
      %v1584 = vpop.f32.mrf.mxu0
      %v1585 = vadd.f32 0.0, %v1584
      %1586 = vdwg.mxu0
      %v1587 = vadd.f32 %v1347, %v1528
      %v1588 = vadd.f32 %v1349, %v1530
      %v1589 = vadd.f32 %v1352, %v1533
      %v1590 = vadd.f32 %v1354, %v1535
      %v1591 = vadd.f32 %v1357, %v1538
      %v1592 = vadd.f32 %v1359, %v1540
      %v1593 = vadd.f32 %v1362, %v1543
      %v1594 = vadd.f32 %v1364, %v1545
      %v1595 = vadd.f32 %v1367, %v1548
      %v1596 = vadd.f32 %v1369, %v1550
      %v1597 = vadd.f32 %v1372, %v1553
      %v1598 = vadd.f32 %v1374, %v1555
      %v1599 = vadd.f32 %v1377, %v1558
      %v1600 = vadd.f32 %v1379, %v1560
      %v1601 = vadd.f32 %v1382, %v1563
      %v1602 = vadd.f32 %v1384, %v1565
      %v1603 = vadd.f32 %v1387, %v1568
      %v1604 = vadd.f32 %v1389, %v1570
      %v1605 = vadd.f32 %v1392, %v1573
      %v1606 = vadd.f32 %v1394, %v1575
      %v1607 = vadd.f32 %v1397, %v1578
      %v1608 = vadd.f32 %v1399, %v1580
      %v1609 = vadd.f32 %v1402, %v1583
      %v1610 = vadd.f32 %v1404, %v1585
      %vm1611 = vsmask.f32 256
      %v1612 = vrot.slane %v1170, 7
      %v1613 = vrot.slane %v1179, 7
      %v1614 = vor.u32 %v1613, %v1182
      %v1615 = vsel %vm1611, %v1612, %v1614
      %v1616 = vrot.slane %v1188, 7
      %v1617 = vor.u32 %v1616, %v1191
      %v1618 = vsel %vm1611, %v1613, %v1617
      %v1619 = vrot.slane %v1197, 7
      %v1620 = vor.u32 %v1619, %v1200
      %v1621 = vsel %vm1611, %v1616, %v1620
      %v1622 = vrot.slane %v1206, 7
      %v1623 = vor.u32 %v1622, %v1209
      %v1624 = vsel %vm1611, %v1619, %v1623
      %v1625 = vrot.slane %v1215, 7
      %v1626 = vor.u32 %v1625, %v1218
      %v1627 = vsel %vm1611, %v1622, %v1626
      %v1628 = vrot.slane %v1224, 7
      %v1629 = vor.u32 %v1628, %v1227
      %v1630 = vsel %vm1611, %v1625, %v1629
      %v1631 = vrot.slane %v1233, 7
      %v1632 = vor.u32 %v1631, %v1236
      %v1633 = vsel %vm1611, %v1628, %v1632
      %v1634 = vrot.slane %v1242, 7
      %v1635 = vor.u32 %v1634, %v1245
      %v1636 = vsel %vm1611, %v1631, %v1635
      %v1637 = vrot.slane %v1251, 7
      %v1638 = vor.u32 %v1637, %v1254
      %v1639 = vsel %vm1611, %v1634, %v1638
      %v1640 = vrot.slane %v1260, 7
      %v1641 = vor.u32 %v1640, %v1263
      %v1642 = vsel %vm1611, %v1637, %v1641
      %v1643 = vrot.slane %v1269, 7
      %v1644 = vor.u32 %v1643, %v1272
      %v1645 = vsel %vm1611, %v1640, %v1644
      %v1647 = vshrl.u32 %v921, 16
      %v1649 = vrot.slane %v1647, 7
      %v1650 = vshll.u32 %v921, 16
      %v1652 = vor.u32 %v1649, %v1650
      %v1653 = vsel %vm1611, %v1643, %v1652
      %v1662 = vunpack.c.l.b16 %v956
      %v1663 = vunpack.c.l.b16 %v957
      %v1664 = vunpack.c.l.b16 %v958
      %v1665 = vunpack.c.l.b16 %v959
      %v1666 = vunpack.c.l.b16 %v960
      %v1667 = vunpack.c.l.b16 %v961
      %v1668 = vunpack.c.l.b16 %v962
      %v1669 = vunpack.c.l.b16 %v963
      %v1670 = vpack.c.b16 %v1663, %v1662
      %v1671 = vpack.c.b16 %v1665, %v1664
      %v1672 = vpack.c.b16 %v1667, %v1666
      %v1673 = vpack.c.b16 %v1669, %v1668
      %v1679 = vsel %vm1054, %v1615, 0
      %v1682 = vsel %vm1054, %v1618, 0
      %v1685 = vsel %vm1054, %v1621, 0
      %v1688 = vsel %vm1054, %v1624, 0
      %v1691 = vsel %vm1054, %v1627, 0
      %v1694 = vsel %vm1054, %v1630, 0
      %v1697 = vsel %vm1054, %v1633, 0
      %v1700 = vsel %vm1054, %v1636, 0
      %v1703 = vsel %vm1054, %v1639, 0
      %v1706 = vsel %vm1054, %v1642, 0
      %v1709 = vsel %vm1054, %v1645, 0
      %v1712 = vsel %vm1054, %v1653, 0
      %1714 = vmatpush.bf16.msra.mxu0 0
      %1715 = vmatpush.bf16.msra.mxu0 0
      %1716 = vmatpush.bf16.msra.mxu0 0
      %1717 = vmatpush.bf16.msra.mxu0 0
      %1718 = vmatpush.bf16.msra.mxu0 %v1673
      %1719 = vmatpush.bf16.msra.mxu0 %v1672
      %1720 = vmatpush.bf16.msra.mxu0 %v1671
      %1721 = vmatpush.bf16.msra.mxu0 %v1670
      %1722 = vmatmul.bf16.gmra.mxu0 %v1679
      %v1723 = vpop.f32.mrf.mxu0
      %v1724 = vadd.f32 0.0, %v1723
      %v1725 = vpop.f32.mrf.mxu0
      %v1726 = vadd.f32 0.0, %v1725
      %1727 = vmatmul.bf16.gmra.mxu0 %v1682
      %v1728 = vpop.f32.mrf.mxu0
      %v1729 = vadd.f32 0.0, %v1728
      %v1730 = vpop.f32.mrf.mxu0
      %v1731 = vadd.f32 0.0, %v1730
      %1732 = vmatmul.bf16.gmra.mxu0 %v1685
      %v1733 = vpop.f32.mrf.mxu0
      %v1734 = vadd.f32 0.0, %v1733
      %v1735 = vpop.f32.mrf.mxu0
      %v1736 = vadd.f32 0.0, %v1735
      %1737 = vmatmul.bf16.gmra.mxu0 %v1688
      %v1738 = vpop.f32.mrf.mxu0
      %v1739 = vadd.f32 0.0, %v1738
      %v1740 = vpop.f32.mrf.mxu0
      %v1741 = vadd.f32 0.0, %v1740
      %1742 = vmatmul.bf16.gmra.mxu0 %v1691
      %v1743 = vpop.f32.mrf.mxu0
      %v1744 = vadd.f32 0.0, %v1743
      %v1745 = vpop.f32.mrf.mxu0
      %v1746 = vadd.f32 0.0, %v1745
      %1747 = vmatmul.bf16.gmra.mxu0 %v1694
      %v1748 = vpop.f32.mrf.mxu0
      %v1749 = vadd.f32 0.0, %v1748
      %v1750 = vpop.f32.mrf.mxu0
      %v1751 = vadd.f32 0.0, %v1750
      %1752 = vmatmul.bf16.gmra.mxu0 %v1697
      %v1753 = vpop.f32.mrf.mxu0
      %v1754 = vadd.f32 0.0, %v1753
      %v1755 = vpop.f32.mrf.mxu0
      %v1756 = vadd.f32 0.0, %v1755
      %1757 = vmatmul.bf16.gmra.mxu0 %v1700
      %v1758 = vpop.f32.mrf.mxu0
      %v1759 = vadd.f32 0.0, %v1758
      %v1760 = vpop.f32.mrf.mxu0
      %v1761 = vadd.f32 0.0, %v1760
      %1762 = vmatmul.bf16.gmra.mxu0 %v1703
      %v1763 = vpop.f32.mrf.mxu0
      %v1764 = vadd.f32 0.0, %v1763
      %v1765 = vpop.f32.mrf.mxu0
      %v1766 = vadd.f32 0.0, %v1765
      %1767 = vmatmul.bf16.gmra.mxu0 %v1706
      %v1768 = vpop.f32.mrf.mxu0
      %v1769 = vadd.f32 0.0, %v1768
      %v1770 = vpop.f32.mrf.mxu0
      %v1771 = vadd.f32 0.0, %v1770
      %1772 = vmatmul.bf16.gmra.mxu0 %v1709
      %v1773 = vpop.f32.mrf.mxu0
      %v1774 = vadd.f32 0.0, %v1773
      %v1775 = vpop.f32.mrf.mxu0
      %v1776 = vadd.f32 0.0, %v1775
      %1777 = vmatmul.bf16.gmra.mxu0 %v1712
      %v1778 = vpop.f32.mrf.mxu0
      %v1779 = vadd.f32 0.0, %v1778
      %v1780 = vpop.f32.mrf.mxu0
      %v1781 = vadd.f32 0.0, %v1780
      %1782 = vdwg.mxu0
      %v1783 = vadd.f32 %v1587, %v1724
      %v1784 = vadd.f32 %v1588, %v1726
      %v1785 = vadd.f32 %v1589, %v1729
      %v1786 = vadd.f32 %v1590, %v1731
      %v1787 = vadd.f32 %v1591, %v1734
      %v1788 = vadd.f32 %v1592, %v1736
      %v1789 = vadd.f32 %v1593, %v1739
      %v1790 = vadd.f32 %v1594, %v1741
      %v1791 = vadd.f32 %v1595, %v1744
      %v1792 = vadd.f32 %v1596, %v1746
      %v1793 = vadd.f32 %v1597, %v1749
      %v1794 = vadd.f32 %v1598, %v1751
      %v1795 = vadd.f32 %v1599, %v1754
      %v1796 = vadd.f32 %v1600, %v1756
      %v1797 = vadd.f32 %v1601, %v1759
      %v1798 = vadd.f32 %v1602, %v1761
      %v1799 = vadd.f32 %v1603, %v1764
      %v1800 = vadd.f32 %v1604, %v1766
      %v1801 = vadd.f32 %v1605, %v1769
      %v1802 = vadd.f32 %v1606, %v1771
      %v1803 = vadd.f32 %v1607, %v1774
      %v1804 = vadd.f32 %v1608, %v1776
      %v1805 = vadd.f32 %v1609, %v1779
      %v1806 = vadd.f32 %v1610, %v1781
      %v1815 = vunpack.c.l.b16 %v964
      %v1816 = vunpack.c.l.b16 %v965
      %v1817 = vunpack.c.l.b16 %v966
      %v1818 = vunpack.c.l.b16 %v967
      %v1819 = vunpack.c.l.b16 %v968
      %v1820 = vunpack.c.l.b16 %v969
      %v1821 = vunpack.c.l.b16 %v970
      %v1822 = vunpack.c.l.b16 %v971
      %v1823 = vpack.c.b16 %v1816, %v1815
      %v1824 = vpack.c.b16 %v1818, %v1817
      %v1825 = vpack.c.b16 %v1820, %v1819
      %v1826 = vpack.c.b16 %v1822, %v1821
      %v1831 = vsel %vm1054, %v910, 0
      %v1833 = vsel %vm1054, %v911, 0
      %v1835 = vsel %vm1054, %v912, 0
      %v1837 = vsel %vm1054, %v913, 0
      %v1839 = vsel %vm1054, %v914, 0
      %v1841 = vsel %vm1054, %v915, 0
      %v1843 = vsel %vm1054, %v916, 0
      %v1845 = vsel %vm1054, %v917, 0
      %v1847 = vsel %vm1054, %v918, 0
      %v1849 = vsel %vm1054, %v919, 0
      %v1851 = vsel %vm1054, %v920, 0
      %v1853 = vsel %vm1054, %v921, 0
      %1855 = vmatpush.bf16.msra.mxu0 0
      %1856 = vmatpush.bf16.msra.mxu0 0
      %1857 = vmatpush.bf16.msra.mxu0 0
      %1858 = vmatpush.bf16.msra.mxu0 0
      %1859 = vmatpush.bf16.msra.mxu0 %v1826
      %1860 = vmatpush.bf16.msra.mxu0 %v1825
      %1861 = vmatpush.bf16.msra.mxu0 %v1824
      %1862 = vmatpush.bf16.msra.mxu0 %v1823
      %1863 = vmatmul.bf16.gmra.mxu0 %v1831
      %v1864 = vpop.f32.mrf.mxu0
      %v1865 = vadd.f32 0.0, %v1864
      %v1866 = vpop.f32.mrf.mxu0
      %v1867 = vadd.f32 0.0, %v1866
      %1868 = vmatmul.bf16.gmra.mxu0 %v1833
      %v1869 = vpop.f32.mrf.mxu0
      %v1870 = vadd.f32 0.0, %v1869
      %v1871 = vpop.f32.mrf.mxu0
      %v1872 = vadd.f32 0.0, %v1871
      %1873 = vmatmul.bf16.gmra.mxu0 %v1835
      %v1874 = vpop.f32.mrf.mxu0
      %v1875 = vadd.f32 0.0, %v1874
      %v1876 = vpop.f32.mrf.mxu0
      %v1877 = vadd.f32 0.0, %v1876
      %1878 = vmatmul.bf16.gmra.mxu0 %v1837
      %v1879 = vpop.f32.mrf.mxu0
      %v1880 = vadd.f32 0.0, %v1879
      %v1881 = vpop.f32.mrf.mxu0
      %v1882 = vadd.f32 0.0, %v1881
      %1883 = vmatmul.bf16.gmra.mxu0 %v1839
      %v1884 = vpop.f32.mrf.mxu0
      %v1885 = vadd.f32 0.0, %v1884
      %v1886 = vpop.f32.mrf.mxu0
      %v1887 = vadd.f32 0.0, %v1886
      %1888 = vmatmul.bf16.gmra.mxu0 %v1841
      %v1889 = vpop.f32.mrf.mxu0
      %v1890 = vadd.f32 0.0, %v1889
      %v1891 = vpop.f32.mrf.mxu0
      %v1892 = vadd.f32 0.0, %v1891
      %1893 = vmatmul.bf16.gmra.mxu0 %v1843
      %v1894 = vpop.f32.mrf.mxu0
      %v1895 = vadd.f32 0.0, %v1894
      %v1896 = vpop.f32.mrf.mxu0
      %v1897 = vadd.f32 0.0, %v1896
      %1898 = vmatmul.bf16.gmra.mxu0 %v1845
      %v1899 = vpop.f32.mrf.mxu0
      %v1900 = vadd.f32 0.0, %v1899
      %v1901 = vpop.f32.mrf.mxu0
      %v1902 = vadd.f32 0.0, %v1901
      %1903 = vmatmul.bf16.gmra.mxu0 %v1847
      %v1904 = vpop.f32.mrf.mxu0
      %v1905 = vadd.f32 0.0, %v1904
      %v1906 = vpop.f32.mrf.mxu0
      %v1907 = vadd.f32 0.0, %v1906
      %1908 = vmatmul.bf16.gmra.mxu0 %v1849
      %v1909 = vpop.f32.mrf.mxu0
      %v1910 = vadd.f32 0.0, %v1909
      %v1911 = vpop.f32.mrf.mxu0
      %v1912 = vadd.f32 0.0, %v1911
      %1913 = vmatmul.bf16.gmra.mxu0 %v1851
      %v1914 = vpop.f32.mrf.mxu0
      %v1915 = vadd.f32 0.0, %v1914
      %v1916 = vpop.f32.mrf.mxu0
      %v1917 = vadd.f32 0.0, %v1916
      %1918 = vmatmul.bf16.gmra.mxu0 %v1853
      %v1919 = vpop.f32.mrf.mxu0
      %v1920 = vadd.f32 0.0, %v1919
      %v1921 = vpop.f32.mrf.mxu0
      %v1922 = vadd.f32 0.0, %v1921
      %1923 = vdwg.mxu0
      %v1924 = vadd.f32 %v1783, %v1865
      %v1925 = vadd.f32 %v1784, %v1867
      %v1926 = vadd.f32 %v1785, %v1870
      %v1927 = vadd.f32 %v1786, %v1872
      %v1928 = vadd.f32 %v1787, %v1875
      %v1929 = vadd.f32 %v1788, %v1877
      %v1930 = vadd.f32 %v1789, %v1880
      %v1931 = vadd.f32 %v1790, %v1882
      %v1932 = vadd.f32 %v1791, %v1885
      %v1933 = vadd.f32 %v1792, %v1887
      %v1934 = vadd.f32 %v1793, %v1890
      %v1935 = vadd.f32 %v1794, %v1892
      %v1936 = vadd.f32 %v1795, %v1895
      %v1937 = vadd.f32 %v1796, %v1897
      %v1938 = vadd.f32 %v1797, %v1900
      %v1939 = vadd.f32 %v1798, %v1902
      %v1940 = vadd.f32 %v1799, %v1905
      %v1941 = vadd.f32 %v1800, %v1907
      %v1942 = vadd.f32 %v1801, %v1910
      %v1943 = vadd.f32 %v1802, %v1912
      %v1944 = vadd.f32 %v1803, %v1915
      %v1945 = vadd.f32 %v1804, %v1917
      %v1946 = vadd.f32 %v1805, %v1920
      %v1947 = vadd.f32 %v1806, %v1922
      %vm1948 = vsmask.f32 7424
      %v1949 = vrot.slane %v1182, 1
      %v1950 = vor.u32 %v1179, %v1949
      %v1951 = vrot.slane %v1191, 1
      %v1952 = vsel %vm1948, %v1950, %v1951
      %v1953 = vor.u32 %v1188, %v1951
      %v1954 = vrot.slane %v1200, 1
      %v1955 = vsel %vm1948, %v1953, %v1954
      %v1956 = vor.u32 %v1197, %v1954
      %v1957 = vrot.slane %v1209, 1
      %v1958 = vsel %vm1948, %v1956, %v1957
      %v1959 = vor.u32 %v1206, %v1957
      %v1960 = vrot.slane %v1218, 1
      %v1961 = vsel %vm1948, %v1959, %v1960
      %v1962 = vor.u32 %v1215, %v1960
      %v1963 = vrot.slane %v1227, 1
      %v1964 = vsel %vm1948, %v1962, %v1963
      %v1965 = vor.u32 %v1224, %v1963
      %v1966 = vrot.slane %v1236, 1
      %v1967 = vsel %vm1948, %v1965, %v1966
      %v1968 = vor.u32 %v1233, %v1966
      %v1969 = vrot.slane %v1245, 1
      %v1970 = vsel %vm1948, %v1968, %v1969
      %v1971 = vor.u32 %v1242, %v1969
      %v1972 = vrot.slane %v1254, 1
      %v1973 = vsel %vm1948, %v1971, %v1972
      %v1974 = vor.u32 %v1251, %v1972
      %v1975 = vrot.slane %v1263, 1
      %v1976 = vsel %vm1948, %v1974, %v1975
      %v1977 = vor.u32 %v1260, %v1975
      %v1978 = vrot.slane %v1272, 1
      %v1979 = vsel %vm1948, %v1977, %v1978
      %v1980 = vor.u32 %v1269, %v1978
      %v1981 = vrot.slane %v1650, 1
      %v1982 = vsel %vm1948, %v1980, %v1981
      %v1983 = vor.u32 %v1647, %v1981
      %v1985 = vshll.u32 %v930, 16
      %v1987 = vrot.slane %v1985, 1
      %v1988 = vsel %vm1948, %v1983, %v1987
      %v1997 = vunpack.c.l.b16 %v972
      %v1998 = vunpack.c.l.b16 %v973
      %v1999 = vunpack.c.l.b16 %v974
      %v2000 = vunpack.c.l.b16 %v975
      %v2001 = vunpack.c.l.b16 %v976
      %v2002 = vunpack.c.l.b16 %v977
      %v2003 = vunpack.c.l.b16 %v978
      %v2004 = vunpack.c.l.b16 %v979
      %v2005 = vpack.c.b16 %v1998, %v1997
      %v2006 = vpack.c.b16 %v2000, %v1999
      %v2007 = vpack.c.b16 %v2002, %v2001
      %v2008 = vpack.c.b16 %v2004, %v2003
      %v2014 = vsel %vm1054, %v1952, 0
      %v2017 = vsel %vm1054, %v1955, 0
      %v2020 = vsel %vm1054, %v1958, 0
      %v2023 = vsel %vm1054, %v1961, 0
      %v2026 = vsel %vm1054, %v1964, 0
      %v2029 = vsel %vm1054, %v1967, 0
      %v2032 = vsel %vm1054, %v1970, 0
      %v2035 = vsel %vm1054, %v1973, 0
      %v2038 = vsel %vm1054, %v1976, 0
      %v2041 = vsel %vm1054, %v1979, 0
      %v2044 = vsel %vm1054, %v1982, 0
      %v2047 = vsel %vm1054, %v1988, 0
      %2049 = vmatpush.bf16.msra.mxu0 0
      %2050 = vmatpush.bf16.msra.mxu0 0
      %2051 = vmatpush.bf16.msra.mxu0 0
      %2052 = vmatpush.bf16.msra.mxu0 0
      %2053 = vmatpush.bf16.msra.mxu0 %v2008
      %2054 = vmatpush.bf16.msra.mxu0 %v2007
      %2055 = vmatpush.bf16.msra.mxu0 %v2006
      %2056 = vmatpush.bf16.msra.mxu0 %v2005
      %2057 = vmatmul.bf16.gmra.mxu0 %v2014
      %v2058 = vpop.f32.mrf.mxu0
      %v2059 = vadd.f32 0.0, %v2058
      %v2060 = vpop.f32.mrf.mxu0
      %v2061 = vadd.f32 0.0, %v2060
      %2062 = vmatmul.bf16.gmra.mxu0 %v2017
      %v2063 = vpop.f32.mrf.mxu0
      %v2064 = vadd.f32 0.0, %v2063
      %v2065 = vpop.f32.mrf.mxu0
      %v2066 = vadd.f32 0.0, %v2065
      %2067 = vmatmul.bf16.gmra.mxu0 %v2020
      %v2068 = vpop.f32.mrf.mxu0
      %v2069 = vadd.f32 0.0, %v2068
      %v2070 = vpop.f32.mrf.mxu0
      %v2071 = vadd.f32 0.0, %v2070
      %2072 = vmatmul.bf16.gmra.mxu0 %v2023
      %v2073 = vpop.f32.mrf.mxu0
      %v2074 = vadd.f32 0.0, %v2073
      %v2075 = vpop.f32.mrf.mxu0
      %v2076 = vadd.f32 0.0, %v2075
      %2077 = vmatmul.bf16.gmra.mxu0 %v2026
      %v2078 = vpop.f32.mrf.mxu0
      %v2079 = vadd.f32 0.0, %v2078
      %v2080 = vpop.f32.mrf.mxu0
      %v2081 = vadd.f32 0.0, %v2080
      %2082 = vmatmul.bf16.gmra.mxu0 %v2029
      %v2083 = vpop.f32.mrf.mxu0
      %v2084 = vadd.f32 0.0, %v2083
      %v2085 = vpop.f32.mrf.mxu0
      %v2086 = vadd.f32 0.0, %v2085
      %2087 = vmatmul.bf16.gmra.mxu0 %v2032
      %v2088 = vpop.f32.mrf.mxu0
      %v2089 = vadd.f32 0.0, %v2088
      %v2090 = vpop.f32.mrf.mxu0
      %v2091 = vadd.f32 0.0, %v2090
      %2092 = vmatmul.bf16.gmra.mxu0 %v2035
      %v2093 = vpop.f32.mrf.mxu0
      %v2094 = vadd.f32 0.0, %v2093
      %v2095 = vpop.f32.mrf.mxu0
      %v2096 = vadd.f32 0.0, %v2095
      %2097 = vmatmul.bf16.gmra.mxu0 %v2038
      %v2098 = vpop.f32.mrf.mxu0
      %v2099 = vadd.f32 0.0, %v2098
      %v2100 = vpop.f32.mrf.mxu0
      %v2101 = vadd.f32 0.0, %v2100
      %2102 = vmatmul.bf16.gmra.mxu0 %v2041
      %v2103 = vpop.f32.mrf.mxu0
      %v2104 = vadd.f32 0.0, %v2103
      %v2105 = vpop.f32.mrf.mxu0
      %v2106 = vadd.f32 0.0, %v2105
      %2107 = vmatmul.bf16.gmra.mxu0 %v2044
      %v2108 = vpop.f32.mrf.mxu0
      %v2109 = vadd.f32 0.0, %v2108
      %v2110 = vpop.f32.mrf.mxu0
      %v2111 = vadd.f32 0.0, %v2110
      %2112 = vmatmul.bf16.gmra.mxu0 %v2047
      %v2113 = vpop.f32.mrf.mxu0
      %v2114 = vadd.f32 0.0, %v2113
      %v2115 = vpop.f32.mrf.mxu0
      %v2116 = vadd.f32 0.0, %v2115
      %2117 = vdwg.mxu0
      %v2118 = vadd.f32 %v1924, %v2059
      %v2119 = vadd.f32 %v1925, %v2061
      %v2120 = vadd.f32 %v1926, %v2064
      %v2121 = vadd.f32 %v1927, %v2066
      %v2122 = vadd.f32 %v1928, %v2069
      %v2123 = vadd.f32 %v1929, %v2071
      %v2124 = vadd.f32 %v1930, %v2074
      %v2125 = vadd.f32 %v1931, %v2076
      %v2126 = vadd.f32 %v1932, %v2079
      %v2127 = vadd.f32 %v1933, %v2081
      %v2128 = vadd.f32 %v1934, %v2084
      %v2129 = vadd.f32 %v1935, %v2086
      %v2130 = vadd.f32 %v1936, %v2089
      %v2131 = vadd.f32 %v1937, %v2091
      %v2132 = vadd.f32 %v1938, %v2094
      %v2133 = vadd.f32 %v1939, %v2096
      %v2134 = vadd.f32 %v1940, %v2099
      %v2135 = vadd.f32 %v1941, %v2101
      %v2136 = vadd.f32 %v1942, %v2104
      %v2137 = vadd.f32 %v1943, %v2106
      %v2138 = vadd.f32 %v1944, %v2109
      %v2139 = vadd.f32 %v1945, %v2111
      %v2140 = vadd.f32 %v1946, %v2114
      %v2141 = vadd.f32 %v1947, %v2116
      %v2142 = vrot.slane %v1647, 3
      %v2143 = vrot.slane %v1650, 4
      %v2144 = vor.u32 %v2142, %v2143
      %v2145 = vsel %vm1160, %v1275, %v2144
      %v2146 = vshrl.u32 %v930, 16
      %v2148 = vrot.slane %v2146, 3
      %v2149 = vrot.slane %v1985, 4
      %v2150 = vor.u32 %v2148, %v2149
      %v2151 = vsel %vm1160, %v2144, %v2150
      %v2153 = vshrl.u32 %v931, 16
      %v2155 = vrot.slane %v2153, 3
      %v2156 = vshll.u32 %v931, 16
      %v2158 = vrot.slane %v2156, 4
      %v2159 = vor.u32 %v2155, %v2158
      %v2160 = vsel %vm1160, %v2150, %v2159
      %v2169 = vunpack.c.l.b16 %v980
      %v2170 = vunpack.c.l.b16 %v981
      %v2171 = vunpack.c.l.b16 %v982
      %v2172 = vunpack.c.l.b16 %v983
      %v2173 = vunpack.c.l.b16 %v984
      %v2174 = vunpack.c.l.b16 %v985
      %v2175 = vunpack.c.l.b16 %v986
      %v2176 = vunpack.c.l.b16 %v987
      %v2177 = vpack.c.b16 %v2170, %v2169
      %v2178 = vpack.c.b16 %v2172, %v2171
      %v2179 = vpack.c.b16 %v2174, %v2173
      %v2180 = vpack.c.b16 %v2176, %v2175
      %v2186 = vsel %vm1054, %v2145, 0
      %v2189 = vsel %vm1054, %v2151, 0
      %v2192 = vsel %vm1054, %v2160, 0
      %2194 = vmatpush.bf16.msra.mxu0 0
      %2195 = vmatpush.bf16.msra.mxu0 0
      %2196 = vmatpush.bf16.msra.mxu0 0
      %2197 = vmatpush.bf16.msra.mxu0 0
      %2198 = vmatpush.bf16.msra.mxu0 %v2180
      %2199 = vmatpush.bf16.msra.mxu0 %v2179
      %2200 = vmatpush.bf16.msra.mxu0 %v2178
      %2201 = vmatpush.bf16.msra.mxu0 %v2177
      %2202 = vmatmul.bf16.gmra.mxu0 %v1311
      %v2203 = vpop.f32.mrf.mxu0
      %v2204 = vadd.f32 0.0, %v2203
      %v2205 = vpop.f32.mrf.mxu0
      %v2206 = vadd.f32 0.0, %v2205
      %2207 = vmatmul.bf16.gmra.mxu0 %v1314
      %v2208 = vpop.f32.mrf.mxu0
      %v2209 = vadd.f32 0.0, %v2208
      %v2210 = vpop.f32.mrf.mxu0
      %v2211 = vadd.f32 0.0, %v2210
      %2212 = vmatmul.bf16.gmra.mxu0 %v1317
      %v2213 = vpop.f32.mrf.mxu0
      %v2214 = vadd.f32 0.0, %v2213
      %v2215 = vpop.f32.mrf.mxu0
      %v2216 = vadd.f32 0.0, %v2215
      %2217 = vmatmul.bf16.gmra.mxu0 %v1320
      %v2218 = vpop.f32.mrf.mxu0
      %v2219 = vadd.f32 0.0, %v2218
      %v2220 = vpop.f32.mrf.mxu0
      %v2221 = vadd.f32 0.0, %v2220
      %2222 = vmatmul.bf16.gmra.mxu0 %v1323
      %v2223 = vpop.f32.mrf.mxu0
      %v2224 = vadd.f32 0.0, %v2223
      %v2225 = vpop.f32.mrf.mxu0
      %v2226 = vadd.f32 0.0, %v2225
      %2227 = vmatmul.bf16.gmra.mxu0 %v1326
      %v2228 = vpop.f32.mrf.mxu0
      %v2229 = vadd.f32 0.0, %v2228
      %v2230 = vpop.f32.mrf.mxu0
      %v2231 = vadd.f32 0.0, %v2230
      %2232 = vmatmul.bf16.gmra.mxu0 %v1329
      %v2233 = vpop.f32.mrf.mxu0
      %v2234 = vadd.f32 0.0, %v2233
      %v2235 = vpop.f32.mrf.mxu0
      %v2236 = vadd.f32 0.0, %v2235
      %2237 = vmatmul.bf16.gmra.mxu0 %v1332
      %v2238 = vpop.f32.mrf.mxu0
      %v2239 = vadd.f32 0.0, %v2238
      %v2240 = vpop.f32.mrf.mxu0
      %v2241 = vadd.f32 0.0, %v2240
      %2242 = vmatmul.bf16.gmra.mxu0 %v1335
      %v2243 = vpop.f32.mrf.mxu0
      %v2244 = vadd.f32 0.0, %v2243
      %v2245 = vpop.f32.mrf.mxu0
      %v2246 = vadd.f32 0.0, %v2245
      %2247 = vmatmul.bf16.gmra.mxu0 %v2186
      %v2248 = vpop.f32.mrf.mxu0
      %v2249 = vadd.f32 0.0, %v2248
      %v2250 = vpop.f32.mrf.mxu0
      %v2251 = vadd.f32 0.0, %v2250
      %2252 = vmatmul.bf16.gmra.mxu0 %v2189
      %v2253 = vpop.f32.mrf.mxu0
      %v2254 = vadd.f32 0.0, %v2253
      %v2255 = vpop.f32.mrf.mxu0
      %v2256 = vadd.f32 0.0, %v2255
      %2257 = vmatmul.bf16.gmra.mxu0 %v2192
      %v2258 = vpop.f32.mrf.mxu0
      %v2259 = vadd.f32 0.0, %v2258
      %v2260 = vpop.f32.mrf.mxu0
      %v2261 = vadd.f32 0.0, %v2260
      %2262 = vdwg.mxu0
      %v2263 = vadd.f32 %v2118, %v2204
      %v2264 = vadd.f32 %v2119, %v2206
      %v2265 = vadd.f32 %v2120, %v2209
      %v2266 = vadd.f32 %v2121, %v2211
      %v2267 = vadd.f32 %v2122, %v2214
      %v2268 = vadd.f32 %v2123, %v2216
      %v2269 = vadd.f32 %v2124, %v2219
      %v2270 = vadd.f32 %v2125, %v2221
      %v2271 = vadd.f32 %v2126, %v2224
      %v2272 = vadd.f32 %v2127, %v2226
      %v2273 = vadd.f32 %v2128, %v2229
      %v2274 = vadd.f32 %v2129, %v2231
      %v2275 = vadd.f32 %v2130, %v2234
      %v2276 = vadd.f32 %v2131, %v2236
      %v2277 = vadd.f32 %v2132, %v2239
      %v2278 = vadd.f32 %v2133, %v2241
      %v2279 = vadd.f32 %v2134, %v2244
      %v2280 = vadd.f32 %v2135, %v2246
      %v2281 = vadd.f32 %v2136, %v2249
      %v2282 = vadd.f32 %v2137, %v2251
      %v2283 = vadd.f32 %v2138, %v2254
      %v2284 = vadd.f32 %v2139, %v2256
      %v2285 = vadd.f32 %v2140, %v2259
      %v2286 = vadd.f32 %v2141, %v2261
      %v2287 = vrot.slane %v921, 4
      %v2288 = vsel %vm1004, %v1028, %v2287
      %v2289 = vrot.slane %v930, 4
      %v2290 = vsel %vm1004, %v2287, %v2289
      %v2291 = vrot.slane %v931, 4
      %v2292 = vsel %vm1004, %v2289, %v2291
      %v2301 = vunpack.c.l.b16 %v988
      %v2302 = vunpack.c.l.b16 %v989
      %v2303 = vunpack.c.l.b16 %v990
      %v2304 = vunpack.c.l.b16 %v991
      %v2305 = vunpack.c.l.b16 %v992
      %v2306 = vunpack.c.l.b16 %v993
      %v2307 = vunpack.c.l.b16 %v994
      %v2308 = vunpack.c.l.b16 %v995
      %v2309 = vpack.c.b16 %v2302, %v2301
      %v2310 = vpack.c.b16 %v2304, %v2303
      %v2311 = vpack.c.b16 %v2306, %v2305
      %v2312 = vpack.c.b16 %v2308, %v2307
      %v2318 = vsel %vm1054, %v2288, 0
      %v2321 = vsel %vm1054, %v2290, 0
      %v2324 = vsel %vm1054, %v2292, 0
      %2326 = vmatpush.bf16.msra.mxu0 0
      %2327 = vmatpush.bf16.msra.mxu0 0
      %2328 = vmatpush.bf16.msra.mxu0 0
      %2329 = vmatpush.bf16.msra.mxu0 0
      %2330 = vmatpush.bf16.msra.mxu0 %v2312
      %2331 = vmatpush.bf16.msra.mxu0 %v2311
      %2332 = vmatpush.bf16.msra.mxu0 %v2310
      %2333 = vmatpush.bf16.msra.mxu0 %v2309
      %2334 = vmatmul.bf16.gmra.mxu0 %v1065
      %v2335 = vpop.f32.mrf.mxu0
      %v2336 = vadd.f32 0.0, %v2335
      %v2337 = vpop.f32.mrf.mxu0
      %v2338 = vadd.f32 0.0, %v2337
      %2339 = vmatmul.bf16.gmra.mxu0 %v1068
      %v2340 = vpop.f32.mrf.mxu0
      %v2341 = vadd.f32 0.0, %v2340
      %v2342 = vpop.f32.mrf.mxu0
      %v2343 = vadd.f32 0.0, %v2342
      %2344 = vmatmul.bf16.gmra.mxu0 %v1071
      %v2345 = vpop.f32.mrf.mxu0
      %v2346 = vadd.f32 0.0, %v2345
      %v2347 = vpop.f32.mrf.mxu0
      %v2348 = vadd.f32 0.0, %v2347
      %2349 = vmatmul.bf16.gmra.mxu0 %v1074
      %v2350 = vpop.f32.mrf.mxu0
      %v2351 = vadd.f32 0.0, %v2350
      %v2352 = vpop.f32.mrf.mxu0
      %v2353 = vadd.f32 0.0, %v2352
      %2354 = vmatmul.bf16.gmra.mxu0 %v1077
      %v2355 = vpop.f32.mrf.mxu0
      %v2356 = vadd.f32 0.0, %v2355
      %v2357 = vpop.f32.mrf.mxu0
      %v2358 = vadd.f32 0.0, %v2357
      %2359 = vmatmul.bf16.gmra.mxu0 %v1080
      %v2360 = vpop.f32.mrf.mxu0
      %v2361 = vadd.f32 0.0, %v2360
      %v2362 = vpop.f32.mrf.mxu0
      %v2363 = vadd.f32 0.0, %v2362
      %2364 = vmatmul.bf16.gmra.mxu0 %v1083
      %v2365 = vpop.f32.mrf.mxu0
      %v2366 = vadd.f32 0.0, %v2365
      %v2367 = vpop.f32.mrf.mxu0
      %v2368 = vadd.f32 0.0, %v2367
      %2369 = vmatmul.bf16.gmra.mxu0 %v1086
      %v2370 = vpop.f32.mrf.mxu0
      %v2371 = vadd.f32 0.0, %v2370
      %v2372 = vpop.f32.mrf.mxu0
      %v2373 = vadd.f32 0.0, %v2372
      %2374 = vmatmul.bf16.gmra.mxu0 %v1089
      %v2375 = vpop.f32.mrf.mxu0
      %v2376 = vadd.f32 0.0, %v2375
      %v2377 = vpop.f32.mrf.mxu0
      %v2378 = vadd.f32 0.0, %v2377
      %2379 = vmatmul.bf16.gmra.mxu0 %v2318
      %v2380 = vpop.f32.mrf.mxu0
      %v2381 = vadd.f32 0.0, %v2380
      %v2382 = vpop.f32.mrf.mxu0
      %v2383 = vadd.f32 0.0, %v2382
      %2384 = vmatmul.bf16.gmra.mxu0 %v2321
      %v2385 = vpop.f32.mrf.mxu0
      %v2386 = vadd.f32 0.0, %v2385
      %v2387 = vpop.f32.mrf.mxu0
      %v2388 = vadd.f32 0.0, %v2387
      %2389 = vmatmul.bf16.gmra.mxu0 %v2324
      %v2390 = vpop.f32.mrf.mxu0
      %v2391 = vadd.f32 0.0, %v2390
      %v2392 = vpop.f32.mrf.mxu0
      %v2393 = vadd.f32 0.0, %v2392
      %2394 = vdwg.mxu0
      %v2395 = vadd.f32 %v2263, %v2336
      %v2396 = vadd.f32 %v2264, %v2338
      %v2397 = vadd.f32 %v2265, %v2341
      %v2398 = vadd.f32 %v2266, %v2343
      %v2399 = vadd.f32 %v2267, %v2346
      %v2400 = vadd.f32 %v2268, %v2348
      %v2401 = vadd.f32 %v2269, %v2351
      %v2402 = vadd.f32 %v2270, %v2353
      %v2403 = vadd.f32 %v2271, %v2356
      %v2404 = vadd.f32 %v2272, %v2358
      %v2405 = vadd.f32 %v2273, %v2361
      %v2406 = vadd.f32 %v2274, %v2363
      %v2407 = vadd.f32 %v2275, %v2366
      %v2408 = vadd.f32 %v2276, %v2368
      %v2409 = vadd.f32 %v2277, %v2371
      %v2410 = vadd.f32 %v2278, %v2373
      %v2411 = vadd.f32 %v2279, %v2376
      %v2412 = vadd.f32 %v2280, %v2378
      %v2413 = vadd.f32 %v2281, %v2381
      %v2414 = vadd.f32 %v2282, %v2383
      %v2415 = vadd.f32 %v2283, %v2386
      %v2416 = vadd.f32 %v2284, %v2388
      %v2417 = vadd.f32 %v2285, %v2391
      %v2418 = vadd.f32 %v2286, %v2393
      %v2419 = vrot.slane %v1647, 4
      %v2420 = vrot.slane %v1650, 5
      %v2421 = vor.u32 %v2419, %v2420
      %v2422 = vsel %vm1406, %v1456, %v2421
      %v2423 = vrot.slane %v2146, 4
      %v2424 = vrot.slane %v1985, 5
      %v2425 = vor.u32 %v2423, %v2424
      %v2426 = vsel %vm1406, %v2421, %v2425
      %v2427 = vrot.slane %v2153, 4
      %v2428 = vrot.slane %v2156, 5
      %v2429 = vor.u32 %v2427, %v2428
      %v2430 = vsel %vm1406, %v2425, %v2429
      %v2439 = vunpack.c.l.b16 %v996
      %v2440 = vunpack.c.l.b16 %v997
      %v2441 = vunpack.c.l.b16 %v998
      %v2442 = vunpack.c.l.b16 %v999
      %v2443 = vunpack.c.l.b16 %v1000
      %v2444 = vunpack.c.l.b16 %v1001
      %v2445 = vunpack.c.l.b16 %v1002
      %v2446 = vunpack.c.l.b16 %v1003
      %v2447 = vpack.c.b16 %v2440, %v2439
      %v2448 = vpack.c.b16 %v2442, %v2441
      %v2449 = vpack.c.b16 %v2444, %v2443
      %v2450 = vpack.c.b16 %v2446, %v2445
      %v2456 = vsel %vm1054, %v2422, 0
      %v2459 = vsel %vm1054, %v2426, 0
      %v2462 = vsel %vm1054, %v2430, 0
      %2464 = vmatpush.bf16.msra.mxu0 0
      %2465 = vmatpush.bf16.msra.mxu0 0
      %2466 = vmatpush.bf16.msra.mxu0 0
      %2467 = vmatpush.bf16.msra.mxu0 0
      %2468 = vmatpush.bf16.msra.mxu0 %v2450
      %2469 = vmatpush.bf16.msra.mxu0 %v2449
      %2470 = vmatpush.bf16.msra.mxu0 %v2448
      %2471 = vmatpush.bf16.msra.mxu0 %v2447
      %2472 = vmatmul.bf16.gmra.mxu0 %v1492
      %v2473 = vpop.f32.mrf.mxu0
      %v2474 = vadd.f32 0.0, %v2473
      %v2475 = vpop.f32.mrf.mxu0
      %v2476 = vadd.f32 0.0, %v2475
      %2477 = vmatmul.bf16.gmra.mxu0 %v1495
      %v2478 = vpop.f32.mrf.mxu0
      %v2479 = vadd.f32 0.0, %v2478
      %v2480 = vpop.f32.mrf.mxu0
      %v2481 = vadd.f32 0.0, %v2480
      %2482 = vmatmul.bf16.gmra.mxu0 %v1498
      %v2483 = vpop.f32.mrf.mxu0
      %v2484 = vadd.f32 0.0, %v2483
      %v2485 = vpop.f32.mrf.mxu0
      %v2486 = vadd.f32 0.0, %v2485
      %2487 = vmatmul.bf16.gmra.mxu0 %v1501
      %v2488 = vpop.f32.mrf.mxu0
      %v2489 = vadd.f32 0.0, %v2488
      %v2490 = vpop.f32.mrf.mxu0
      %v2491 = vadd.f32 0.0, %v2490
      %2492 = vmatmul.bf16.gmra.mxu0 %v1504
      %v2493 = vpop.f32.mrf.mxu0
      %v2494 = vadd.f32 0.0, %v2493
      %v2495 = vpop.f32.mrf.mxu0
      %v2496 = vadd.f32 0.0, %v2495
      %2497 = vmatmul.bf16.gmra.mxu0 %v1507
      %v2498 = vpop.f32.mrf.mxu0
      %v2499 = vadd.f32 0.0, %v2498
      %v2500 = vpop.f32.mrf.mxu0
      %v2501 = vadd.f32 0.0, %v2500
      %2502 = vmatmul.bf16.gmra.mxu0 %v1510
      %v2503 = vpop.f32.mrf.mxu0
      %v2504 = vadd.f32 0.0, %v2503
      %v2505 = vpop.f32.mrf.mxu0
      %v2506 = vadd.f32 0.0, %v2505
      %2507 = vmatmul.bf16.gmra.mxu0 %v1513
      %v2508 = vpop.f32.mrf.mxu0
      %v2509 = vadd.f32 0.0, %v2508
      %v2510 = vpop.f32.mrf.mxu0
      %v2511 = vadd.f32 0.0, %v2510
      %2512 = vmatmul.bf16.gmra.mxu0 %v1516
      %v2513 = vpop.f32.mrf.mxu0
      %v2514 = vadd.f32 0.0, %v2513
      %v2515 = vpop.f32.mrf.mxu0
      %v2516 = vadd.f32 0.0, %v2515
      %2517 = vmatmul.bf16.gmra.mxu0 %v2456
      %v2518 = vpop.f32.mrf.mxu0
      %v2519 = vadd.f32 0.0, %v2518
      %v2520 = vpop.f32.mrf.mxu0
      %v2521 = vadd.f32 0.0, %v2520
      %2522 = vmatmul.bf16.gmra.mxu0 %v2459
      %v2523 = vpop.f32.mrf.mxu0
      %v2524 = vadd.f32 0.0, %v2523
      %v2525 = vpop.f32.mrf.mxu0
      %v2526 = vadd.f32 0.0, %v2525
      %2527 = vmatmul.bf16.gmra.mxu0 %v2462
      %v2528 = vpop.f32.mrf.mxu0
      %v2529 = vadd.f32 0.0, %v2528
      %v2530 = vpop.f32.mrf.mxu0
      %v2531 = vadd.f32 0.0, %v2530
      %2532 = vdwg.mxu0
      %v2533 = vadd.f32 %v2395, %v2474
      %v2534 = vadd.f32 %v2396, %v2476
      %v2535 = vadd.f32 %v2397, %v2479
      %v2536 = vadd.f32 %v2398, %v2481
      %v2537 = vadd.f32 %v2399, %v2484
      %v2538 = vadd.f32 %v2400, %v2486
      %v2539 = vadd.f32 %v2401, %v2489
      %v2540 = vadd.f32 %v2402, %v2491
      %v2541 = vadd.f32 %v2403, %v2494
      %v2542 = vadd.f32 %v2404, %v2496
      %v2543 = vadd.f32 %v2405, %v2499
      %v2544 = vadd.f32 %v2406, %v2501
      %v2545 = vadd.f32 %v2407, %v2504
      %v2546 = vadd.f32 %v2408, %v2506
      %v2547 = vadd.f32 %v2409, %v2509
      %v2548 = vadd.f32 %v2410, %v2511
      %v2549 = vadd.f32 %v2411, %v2514
      %v2550 = vadd.f32 %v2412, %v2516
      %v2551 = vadd.f32 %v2413, %v2519
      %v2552 = vadd.f32 %v2414, %v2521
      %v2553 = vadd.f32 %v2415, %v2524
      %v2554 = vadd.f32 %v2416, %v2526
      %v2555 = vadd.f32 %v2417, %v2529
      %v2556 = vadd.f32 %v2418, %v2531
      %v2557 = vld [vmem:[%s6] sm:$0x1]
      %v2559 = vperm.slane %v2557, 0
      %v2561 = vadd.f32 %v2533, %v2559
      %v2562 = vadd.f32 %v2534, %v2559
      %v2563 = vadd.f32 %v2535, %v2559
      %v2564 = vadd.f32 %v2536, %v2559
      %v2565 = vadd.f32 %v2537, %v2559
      %v2566 = vadd.f32 %v2538, %v2559
      %v2567 = vadd.f32 %v2539, %v2559
      %v2568 = vadd.f32 %v2540, %v2559
      %v2569 = vadd.f32 %v2541, %v2559
      %v2570 = vadd.f32 %v2542, %v2559
      %v2571 = vadd.f32 %v2543, %v2559
      %v2572 = vadd.f32 %v2544, %v2559
      %v2573 = vadd.f32 %v2545, %v2559
      %v2574 = vadd.f32 %v2546, %v2559
      %v2575 = vadd.f32 %v2547, %v2559
      %v2576 = vadd.f32 %v2548, %v2559
      %v2577 = vadd.f32 %v2549, %v2559
      %v2578 = vadd.f32 %v2550, %v2559
      %v2579 = vadd.f32 %v2551, %v2559
      %v2580 = vadd.f32 %v2552, %v2559
      %v2581 = vadd.f32 %v2553, %v2559
      %v2582 = vadd.f32 %v2554, %v2559
      %v2583 = vadd.f32 %v2555, %v2559
      %v2584 = vadd.f32 %v2556, %v2559
      %v2585 = vsel %vm793, %v2561, 0.0
      %v2586 = vsel %vm794, %v2562, 0.0
      %v2587 = vsel %vm795, %v2563, 0.0
      %v2588 = vsel %vm793, %v2564, 0.0
      %v2589 = vsel %vm794, %v2565, 0.0
      %v2590 = vsel %vm795, %v2566, 0.0
      %v2591 = vsel %vm793, %v2567, 0.0
      %v2592 = vsel %vm794, %v2568, 0.0
      %v2593 = vsel %vm795, %v2569, 0.0
      %v2594 = vsel %vm793, %v2570, 0.0
      %v2595 = vsel %vm794, %v2571, 0.0
      %v2596 = vsel %vm795, %v2572, 0.0
      %v2597 = vsel %vm793, %v2573, 0.0
      %v2598 = vsel %vm794, %v2574, 0.0
      %v2599 = vsel %vm795, %v2575, 0.0
      %v2600 = vsel %vm793, %v2576, 0.0
      %v2601 = vsel %vm794, %v2577, 0.0
      %v2602 = vsel %vm795, %v2578, 0.0
      %v2603 = vsel %vm793, %v2579, 0.0
      %v2604 = vsel %vm794, %v2580, 0.0
      %v2605 = vsel %vm795, %v2581, 0.0
      %v2606 = vsel %vm793, %v2582, 0.0
      %v2607 = vsel %vm794, %v2583, 0.0
      %v2608 = vsel %vm795, %v2584, 0.0
      %v2609 = vsel %vm1054, %v2585, 0.0
      %v2610 = vsel %vm1054, %v2586, 0.0
      %v2611 = vadd.f32 %v2609, %v2610
      %v2612 = vsel %vm1054, %v2587, 0.0
      %v2613 = vadd.f32 %v2611, %v2612
      %v2614 = vsel %vm1054, %v2588, 0.0
      %v2615 = vadd.f32 %v2613, %v2614
      %v2616 = vsel %vm1054, %v2589, 0.0
      %v2617 = vadd.f32 %v2615, %v2616
      %v2618 = vsel %vm1054, %v2590, 0.0
      %v2619 = vadd.f32 %v2617, %v2618
      %v2620 = vsel %vm1054, %v2591, 0.0
      %v2621 = vadd.f32 %v2619, %v2620
      %v2622 = vsel %vm1054, %v2592, 0.0
      %v2623 = vadd.f32 %v2621, %v2622
      %v2624 = vsel %vm1054, %v2593, 0.0
      %v2625 = vadd.f32 %v2623, %v2624
      %v2626 = vsel %vm1054, %v2594, 0.0
      %v2627 = vadd.f32 %v2625, %v2626
      %v2628 = vsel %vm1054, %v2595, 0.0
      %v2629 = vadd.f32 %v2627, %v2628
      %v2630 = vsel %vm1054, %v2596, 0.0
      %v2631 = vadd.f32 %v2629, %v2630
      %v2632 = vsel %vm1054, %v2597, 0.0
      %v2633 = vadd.f32 %v2631, %v2632
      %v2634 = vsel %vm1054, %v2598, 0.0
      %v2635 = vadd.f32 %v2633, %v2634
      %v2636 = vsel %vm1054, %v2599, 0.0
      %v2637 = vadd.f32 %v2635, %v2636
      %v2638 = vsel %vm1054, %v2600, 0.0
      %v2639 = vadd.f32 %v2637, %v2638
      %v2640 = vsel %vm1054, %v2601, 0.0
      %v2641 = vadd.f32 %v2639, %v2640
      %v2642 = vsel %vm1054, %v2602, 0.0
      %v2643 = vadd.f32 %v2641, %v2642
      %v2644 = vsel %vm1054, %v2603, 0.0
      %v2645 = vadd.f32 %v2643, %v2644
      %v2646 = vsel %vm1054, %v2604, 0.0
      %v2647 = vadd.f32 %v2645, %v2646
      %v2648 = vsel %vm1054, %v2605, 0.0
      %v2649 = vadd.f32 %v2647, %v2648
      %v2650 = vsel %vm1054, %v2606, 0.0
      %v2651 = vadd.f32 %v2649, %v2650
      %v2652 = vsel %vm1054, %v2607, 0.0
      %v2653 = vadd.f32 %v2651, %v2652
      %v2654 = vsel %vm1054, %v2608, 0.0
      %v2655 = vadd.f32 %v2653, %v2654
      %v2656 = vrot.slane %v2655, 4
      %v2657 = vadd.f32 %v2655, %v2656
      %v2658 = vrot.slane %v2657, 2
      %v2659 = vadd.f32 %v2657, %v2658
      %v2660 = vrot.slane %v2659, 1
      %v2661 = vadd.f32 %v2659, %v2660
      %v2662 = vmul.f32 %v2585, %v2585
      %v2663 = vmul.f32 %v2586, %v2586
      %v2664 = vmul.f32 %v2587, %v2587
      %v2665 = vmul.f32 %v2588, %v2588
      %v2666 = vmul.f32 %v2589, %v2589
      %v2667 = vmul.f32 %v2590, %v2590
      %v2668 = vmul.f32 %v2591, %v2591
      %v2669 = vmul.f32 %v2592, %v2592
      %v2670 = vmul.f32 %v2593, %v2593
      %v2671 = vmul.f32 %v2594, %v2594
      %v2672 = vmul.f32 %v2595, %v2595
      %v2673 = vmul.f32 %v2596, %v2596
      %v2674 = vmul.f32 %v2597, %v2597
      %v2675 = vmul.f32 %v2598, %v2598
      %v2676 = vmul.f32 %v2599, %v2599
      %v2677 = vmul.f32 %v2600, %v2600
      %v2678 = vmul.f32 %v2601, %v2601
      %v2679 = vmul.f32 %v2602, %v2602
      %v2680 = vmul.f32 %v2603, %v2603
      %v2681 = vmul.f32 %v2604, %v2604
      %v2682 = vmul.f32 %v2605, %v2605
      %v2683 = vmul.f32 %v2606, %v2606
      %v2684 = vmul.f32 %v2607, %v2607
      %v2685 = vmul.f32 %v2608, %v2608
      %v2686 = vsel %vm1054, %v2662, 0.0
      %v2687 = vsel %vm1054, %v2663, 0.0
      %v2688 = vadd.f32 %v2686, %v2687
      %v2689 = vsel %vm1054, %v2664, 0.0
      %v2690 = vadd.f32 %v2688, %v2689
      %v2691 = vsel %vm1054, %v2665, 0.0
      %v2692 = vadd.f32 %v2690, %v2691
      %v2693 = vsel %vm1054, %v2666, 0.0
      %v2694 = vadd.f32 %v2692, %v2693
      %v2695 = vsel %vm1054, %v2667, 0.0
      %v2696 = vadd.f32 %v2694, %v2695
      %v2697 = vsel %vm1054, %v2668, 0.0
      %v2698 = vadd.f32 %v2696, %v2697
      %v2699 = vsel %vm1054, %v2669, 0.0
      %v2700 = vadd.f32 %v2698, %v2699
      %v2701 = vsel %vm1054, %v2670, 0.0
      %v2702 = vadd.f32 %v2700, %v2701
      %v2703 = vsel %vm1054, %v2671, 0.0
      %v2704 = vadd.f32 %v2702, %v2703
      %v2705 = vsel %vm1054, %v2672, 0.0
      %v2706 = vadd.f32 %v2704, %v2705
      %v2707 = vsel %vm1054, %v2673, 0.0
      %v2708 = vadd.f32 %v2706, %v2707
      %v2709 = vsel %vm1054, %v2674, 0.0
      %v2710 = vadd.f32 %v2708, %v2709
      %v2711 = vsel %vm1054, %v2675, 0.0
      %v2712 = vadd.f32 %v2710, %v2711
      %v2713 = vsel %vm1054, %v2676, 0.0
      %v2714 = vadd.f32 %v2712, %v2713
      %v2715 = vsel %vm1054, %v2677, 0.0
      %v2716 = vadd.f32 %v2714, %v2715
      %v2717 = vsel %vm1054, %v2678, 0.0
      %v2718 = vadd.f32 %v2716, %v2717
      %v2719 = vsel %vm1054, %v2679, 0.0
      %v2720 = vadd.f32 %v2718, %v2719
      %v2721 = vsel %vm1054, %v2680, 0.0
      %v2722 = vadd.f32 %v2720, %v2721
      %v2723 = vsel %vm1054, %v2681, 0.0
      %v2724 = vadd.f32 %v2722, %v2723
      %v2725 = vsel %vm1054, %v2682, 0.0
      %v2726 = vadd.f32 %v2724, %v2725
      %v2727 = vsel %vm1054, %v2683, 0.0
      %v2728 = vadd.f32 %v2726, %v2727
      %v2729 = vsel %vm1054, %v2684, 0.0
      %v2730 = vadd.f32 %v2728, %v2729
      %v2731 = vsel %vm1054, %v2685, 0.0
      %v2732 = vadd.f32 %v2730, %v2731
      %v2733 = vrot.slane %v2732, 4
      %v2734 = vadd.f32 %v2732, %v2733
      %v2735 = vrot.slane %v2734, 2
      %v2736 = vadd.f32 %v2734, %v2735
      %v2737 = vrot.slane %v2736, 1
      %v2738 = vadd.f32 %v2736, %v2737
      %vm2739 = vcmask 1040384
      %v2740 = vsel %vm2739, %v2661, %v2738
      %vm2741 = vcmask 517120
      %2742 = vst.msk [vmem:[%s493] sm:$0x3] %vm2741, %v2740
      %v2743 = vpack.c.bf16 %v2585, %v2585
      %v2744 = vpack.c.bf16 %v2586, %v2586
      %v2745 = vpack.c.bf16 %v2587, %v2587
      %v2746 = vpack.c.bf16 %v2588, %v2588
      %v2747 = vpack.c.bf16 %v2589, %v2589
      %v2748 = vpack.c.bf16 %v2590, %v2590
      %v2749 = vpack.c.bf16 %v2591, %v2591
      %v2750 = vpack.c.bf16 %v2592, %v2592
      %v2751 = vpack.c.bf16 %v2593, %v2593
      %v2752 = vpack.c.bf16 %v2594, %v2594
      %v2753 = vpack.c.bf16 %v2595, %v2595
      %v2754 = vpack.c.bf16 %v2596, %v2596
      %v2755 = vpack.c.bf16 %v2597, %v2597
      %v2756 = vpack.c.bf16 %v2598, %v2598
      %v2757 = vpack.c.bf16 %v2599, %v2599
      %v2758 = vpack.c.bf16 %v2600, %v2600
      %v2759 = vpack.c.bf16 %v2601, %v2601
      %v2760 = vpack.c.bf16 %v2602, %v2602
      %v2761 = vpack.c.bf16 %v2603, %v2603
      %v2762 = vpack.c.bf16 %v2604, %v2604
      %v2763 = vpack.c.bf16 %v2605, %v2605
      %v2764 = vpack.c.bf16 %v2606, %v2606
      %v2765 = vpack.c.bf16 %v2607, %v2607
      %v2766 = vpack.c.bf16 %v2608, %v2608
      %vm2767 = vcmask 519168
      %2768 = vst.msk [vmem:[%s484] sm:$0xf] %vm2767, %v2743
      %2769 = vst.msk [vmem:[%s484 + $0x4] sm:$0xf] %vm2767, %v2744
      %2770 = vst.msk [vmem:[%s484 + $0x8] sm:$0xf] %vm2767, %v2745
      %2771 = vst.msk [vmem:[%s484 + $0xc] sm:$0xf] %vm2767, %v2746
      %2772 = vst.msk [vmem:[%s484 + $0x10] sm:$0xf] %vm2767, %v2747
      %2773 = vst.msk [vmem:[%s484 + $0x14] sm:$0xf] %vm2767, %v2748
      %2774 = vst.msk [vmem:[%s484 + $0x18] sm:$0xf] %vm2767, %v2749
      %2775 = vst.msk [vmem:[%s484 + $0x1c] sm:$0xf] %vm2767, %v2750
      %2776 = vst.msk [vmem:[%s484 + $0x20] sm:$0xf] %vm2767, %v2751
      %2777 = vst.msk [vmem:[%s484 + $0x24] sm:$0xf] %vm2767, %v2752
      %2778 = vst.msk [vmem:[%s484 + $0x28] sm:$0xf] %vm2767, %v2753
      %2779 = vst.msk [vmem:[%s484 + $0x2c] sm:$0xf] %vm2767, %v2754
      %2780 = vst.msk [vmem:[%s484 + $0x30] sm:$0xf] %vm2767, %v2755
      %2781 = vst.msk [vmem:[%s484 + $0x34] sm:$0xf] %vm2767, %v2756
      %2782 = vst.msk [vmem:[%s484 + $0x38] sm:$0xf] %vm2767, %v2757
      %2783 = vst.msk [vmem:[%s484 + $0x3c] sm:$0xf] %vm2767, %v2758
      %2784 = vst.msk [vmem:[%s484 + $0x40] sm:$0xf] %vm2767, %v2759
      %2785 = vst.msk [vmem:[%s484 + $0x44] sm:$0xf] %vm2767, %v2760
      %2786 = vst.msk [vmem:[%s484 + $0x48] sm:$0xf] %vm2767, %v2761
      %2787 = vst.msk [vmem:[%s484 + $0x4c] sm:$0xf] %vm2767, %v2762
      %2788 = vst.msk [vmem:[%s484 + $0x50] sm:$0xf] %vm2767, %v2763
      %2789 = vst.msk [vmem:[%s484 + $0x54] sm:$0xf] %vm2767, %v2764
      %2790 = vst.msk [vmem:[%s484 + $0x58] sm:$0xf] %vm2767, %v2765
      %2791 = vst.msk [vmem:[%s484 + $0x5c] sm:$0xf] %vm2767, %v2766
      %s2792 = smul.u32 24, %s25
      %p2793 = scmp.lt.s32.totalorder %s24, 1
      %s2794 = scalar_select %p2793, %s24, 1
      %p2795 = scmp.lt.s32.totalorder %s2792, 47
      %s2796 = scalar_select %p2795, %s2792, 47
      %s2797 = smul.addr %s2794, 48
      %s2798 = sadd.s32 %s2796, %s2797
      %s2799 = smul.addr %s2798, 4
      %s2800 = scalar_lea.vmem %s7, %s2799
      %p2801 = scmp.lt.s32.totalorder %s24, 1
      %s2802 = scalar_select %p2801, %s24, 1
      %p2803 = scmp.lt.s32.totalorder %s25, 1
      %s2804 = scalar_select %p2803, %s25, 1
      %s2805 = smul.addr %s2802, 2
      %s2806 = sadd.s32 %s2804, %s2805
      %s2807 = smul.addr %s2806, 2
      %s2808 = scalar_lea.vmem %s8, %s2807
      // Predicated region
      $region49: #{_lambda_.5} parent=47 // pred_check
        %p2809 = pneg %p236
      $region50: #{_lambda_.5} parent=47 // pred_check_branch
        %2811 = sbr.rel (%p2809) target = $region52
      $region51: #{_lambda_.5} parent=47 // pred_region
        %s2812 = smul.u32 24, %s25
      $region52: #{_lambda_.5} parent=47 // pred_fallthru
        _
      // Predicated region
      $region53: #{_lambda_.5} parent=47 // pred_check
        %p2813 = pneg %p264
      $region54: #{_lambda_.5} parent=47 // pred_check_branch
        %2815 = sbr.rel (%p2813) target = $region56
      $region55: #{_lambda_.5} parent=47 // pred_region
        _
      $region56: #{_lambda_.5} parent=47 // pred_fallthru
        _
    $region48: #{_lambda_.5} parent=5 // pred_fallthru
      _
    %p2816 = scmp.le.s32.totalorder 2, %s15
    // Predicated region
    $region57: #{_lambda_.5} parent=5 // pred_check
      %p2817 = pneg %p2816
    $region58: #{_lambda_.5} parent=5 // pred_check_branch
      %2819 = sbr.rel (%p2817) target = $region60
    $region59: #{_lambda_.5} parent=5 // pred_region
      %s2820 = ssub.s32 %s15, 2
      // Predicated region
      $region61: #{_lambda_.5} parent=59 // pred_check
        %p2821 = pneg %p242
      $region62: #{_lambda_.5} parent=59 // pred_check_branch
        %2823 = sbr.rel (%p2821) target = $region64
      $region63: #{_lambda_.5} parent=59 // pred_region
        %s2824 = smul.u32 24, %s27
        %p2825 = scmp.lt.s32.totalorder %s26, 1
        %s2826 = scalar_select %p2825, %s26, 1
        %p2827 = scmp.lt.s32.totalorder %s2824, 47
        %s2828 = scalar_select %p2827, %s2824, 47
        %s2829 = smul.addr %s2826, 48
        %s2830 = sadd.s32 %s2828, %s2829
        %s2831 = smul.addr %s2830, 4
        %s2832 = scalar_lea.vmem %s7, %s2831
      $region64: #{_lambda_.5} parent=59 // pred_fallthru
        _
      // Predicated region
      $region65: #{_lambda_.5} parent=59 // pred_check
        %p2833 = pneg %p270
      $region66: #{_lambda_.5} parent=59 // pred_check_branch
        %2835 = sbr.rel (%p2833) target = $region68
      $region67: #{_lambda_.5} parent=59 // pred_region
        %p2836 = scmp.lt.s32.totalorder %s26, 1
        %s2837 = scalar_select %p2836, %s26, 1
        %p2838 = scmp.lt.s32.totalorder %s27, 1
        %s2839 = scalar_select %p2838, %s27, 1
        %s2840 = smul.addr %s2837, 2
        %s2841 = sadd.s32 %s2839, %s2840
        %s2842 = smul.addr %s2841, 2
        %s2843 = scalar_lea.vmem %s8, %s2842
      $region68: #{_lambda_.5} parent=59 // pred_fallthru
        _
    $region60: #{_lambda_.5} parent=5 // pred_fallthru
      _
  $region6: #{_lambda_.5} parent=0 // loop_footer
    %s19 = sadd.s32 1, %s15
  $region7: #{_lambda_.5} parent=0 // loop_footer_branch
    %14 = sbr.rel target = $region3
  $region8: #{_lambda_.5} parent=0 // loop_exit
    _

// kernel: _lambda_.7
$region0: #{_lambda_.7}
  #allocation0 [shape = 'u32[]', space=smem, size = 0x4, offset = 0x4, fixed_abs, tag = 'smem constant byte address 0x4 - core index']
  #allocation1 [shape = 'u32[72,128]{1,0:T(1,128)}', space=vmem, size = 0x9000, scoped, tag = 'internal scratch']
  %s0 = inlined_call_operand.vmem [shape: bf16[2,384,64], index: 0, kind: input, shape index: {}, may-alias: {0,1,2}]
  %s1 = inlined_call_operand.vmem [shape: bf16[2,384,64], index: 1, kind: input, shape index: {}, may-alias: {0,1,2}]
  %s2 = inlined_call_operand.vmem [shape: bf16[2,384,64], index: 2, kind: input, shape index: {}, may-alias: {0,1,2}]
  %s3 = inlined_call_operand.vmem [shape: bf16[9,64,8], index: 3, kind: input, shape index: {}]
  %s4 = inlined_call_operand.vmem [shape: f32[1,8], index: 4, kind: input, shape index: {}]
  %s5 = inlined_call_operand.vmem [shape: f32[2,384,8], index: 5, kind: output, shape index: {}]
  %s6 = sld [smem:[#allocation0]]
  $region53: #{_lambda_.7} parent=0
    _
  %s8 = ssub.s32 1, %s6
  %s9 = scalar_select 0, %s8, %s6
  loop: start=0, step=1, limit=6
  $region2: #{_lambda_.7} parent=0 // loop_pre_header
    _
  $region3: #{_lambda_.7} parent=0 // loop_header
    %s11 = sphi 0, %s15
    %p12 = scmp.ge.s32.totalorder %s11, 6
    %s18 = sphi 0, %s30
    %s19 = sphi 0, %s26
    %s20 = sphi 0, %s18
    %s21 = sphi 0, %s19
    %s22 = sphi 0, %s20
    %s23 = sphi 0, %s21
    %s43 = sphi 0, %s45
    %s46 = sphi 0, %s43
    %s47 = sphi 0, %s46
    %s63 = sphi 0, %s47
    %s71 = sphi 0, %s73
    %s74 = sphi 0, %s71
    %s75 = sphi 0, %s74
    %s91 = sphi 0, %s75
    %s107 = sphi 0, %s109
    %s110 = sphi 0, %s107
    %s111 = sphi 0, %s110
    %s127 = sphi 0, %s111
    %s131 = sphi 0, %s131
    %s133 = sphi 0, %s131
    %s134 = sphi 0, %s133
    %s148 = sphi 0, %s134
    %s152 = sphi 0, %s152
    %s154 = sphi 0, %s152
    %s155 = sphi 0, %s154
    %s169 = sphi 0, %s155
    %s177 = sphi 0, %s179
    %s180 = sphi 0, %s177
    %s181 = sphi 0, %s180
    %s197 = sphi 0, %s181
  $region4: #{_lambda_.7} parent=0 // loop_header_branch
    %14 = sbr.rel (%p12) target = $region8
  $region5: #{_lambda_.7} parent=0 // loop_body
    %s16 = ssub.s32 %s11, 1
    %s17 = ssub.s32 %s11, 2
    %s24 = sadd.s32 1, %s19
    %p25 = scmp.ge.s32.totalorder %s24, 2
    %s26 = scalar_select %p25, 0, %s24
    %s27 = sadd.s32 1, %s18
    %s28 = scalar_select %p25, %s27, %s18
    %p29 = scmp.ge.s32.totalorder %s28, 2
    %s30 = scalar_select %p29, 0, %s28
    %s31 = smul.u32 %s19, 4
    %s32 = ssub.s32 %s31, 1
    %p33 = scmp.gt.s32.totalorder %s32, 0
    %s34 = scalar_select %p33, %s32, 0
    %s35 = smul.u32 %s26, 4
    %s36 = ssub.s32 %s35, 1
    %p37 = scmp.gt.s32.totalorder %s36, 0
    %s38 = scalar_select %p37, %s36, 0
    %s39 = ssub.s32 %s18, %s30
    %s40 = ssub.s32 %s34, %s38
    %s41 = sor.u32 %s39, %s40
    %p42 = scmp.eq.s32.totalorder %s41, 0
    %s44 = sadd.s32 %s43, 1
    %s45 = scalar_select %p42, %s43, %s44
    %p48 = pneg %p42
    %p49 = scmp.eq.s32.totalorder %s11, 3
    %p50 = por %p48, %p49
    %p51 = scmp.ne.s32.totalorder %s43, %s46
    %p52 = scmp.eq.s32.totalorder %s11, 0
    %p53 = por %p51, %p52
    %p54 = scmp.ne.s32.totalorder %s43, %s46
    %p55 = scmp.eq.s32.totalorder %s16, 3
    %p56 = por %p54, %p55
    %p57 = scmp.ne.s32.totalorder %s46, %s47
    %p58 = scmp.eq.s32.totalorder %s16, 0
    %p59 = por %p57, %p58
    %p60 = scmp.ne.s32.totalorder %s46, %s47
    %p61 = scmp.eq.s32.totalorder %s17, 3
    %p62 = por %p60, %p61
    %p64 = scmp.ne.s32.totalorder %s47, %s63
    %p65 = scmp.eq.s32.totalorder %s17, 0
    %p66 = por %p64, %p65
    %s67 = ssub.s32 %s18, %s30
    %s68 = ssub.s32 %s19, %s26
    %s69 = sor.u32 %s67, %s68
    %p70 = scmp.eq.s32.totalorder %s69, 0
    %s72 = sadd.s32 %s71, 1
    %s73 = scalar_select %p70, %s71, %s72
    %p76 = pneg %p70
    %p77 = scmp.eq.s32.totalorder %s11, 3
    %p78 = por %p76, %p77
    %p79 = scmp.ne.s32.totalorder %s71, %s74
    %p80 = scmp.eq.s32.totalorder %s11, 0
    %p81 = por %p79, %p80
    %p82 = scmp.ne.s32.totalorder %s71, %s74
    %p83 = scmp.eq.s32.totalorder %s16, 3
    %p84 = por %p82, %p83
    %p85 = scmp.ne.s32.totalorder %s74, %s75
    %p86 = scmp.eq.s32.totalorder %s16, 0
    %p87 = por %p85, %p86
    %p88 = scmp.ne.s32.totalorder %s74, %s75
    %p89 = scmp.eq.s32.totalorder %s17, 3
    %p90 = por %p88, %p89
    %p92 = scmp.ne.s32.totalorder %s75, %s91
    %p93 = scmp.eq.s32.totalorder %s17, 0
    %p94 = por %p92, %p93
    %s95 = sadd.s32 %s19, 1
    %s96 = smul.u32 %s95, 4
    %p97 = scmp.lt.s32.totalorder %s96, 7
    %s98 = scalar_select %p97, %s96, 7
    %s99 = sadd.s32 %s26, 1
    %s100 = smul.u32 %s99, 4
    %p101 = scmp.lt.s32.totalorder %s100, 7
    %s102 = scalar_select %p101, %s100, 7
    %s103 = ssub.s32 %s18, %s30
    %s104 = ssub.s32 %s98, %s102
    %s105 = sor.u32 %s103, %s104
    %p106 = scmp.eq.s32.totalorder %s105, 0
    %s108 = sadd.s32 %s107, 1
    %s109 = scalar_select %p106, %s107, %s108
    %p112 = pneg %p106
    %p113 = scmp.eq.s32.totalorder %s11, 3
    %p114 = por %p112, %p113
    %p115 = scmp.ne.s32.totalorder %s107, %s110
    %p116 = scmp.eq.s32.totalorder %s11, 0
    %p117 = por %p115, %p116
    %p118 = scmp.ne.s32.totalorder %s107, %s110
    %p119 = scmp.eq.s32.totalorder %s16, 3
    %p120 = por %p118, %p119
    %p121 = scmp.ne.s32.totalorder %s110, %s111
    %p122 = scmp.eq.s32.totalorder %s16, 0
    %p123 = por %p121, %p122
    %p124 = scmp.ne.s32.totalorder %s110, %s111
    %p125 = scmp.eq.s32.totalorder %s17, 3
    %p126 = por %p124, %p125
    %p128 = scmp.ne.s32.totalorder %s111, %s127
    %p129 = scmp.eq.s32.totalorder %s17, 0
    %p130 = por %p128, %p129
    %s132 = sadd.s32 %s131, 1
    %p135 = scmp.eq.s32.totalorder %s11, 3
    %p136 = scmp.ne.s32.totalorder %s131, %s133
    %p137 = scmp.eq.s32.totalorder %s11, 0
    %p138 = por %p136, %p137
    %p139 = scmp.ne.s32.totalorder %s131, %s133
    %p140 = scmp.eq.s32.totalorder %s16, 3
    %p141 = por %p139, %p140
    %p142 = scmp.ne.s32.totalorder %s133, %s134
    %p143 = scmp.eq.s32.totalorder %s16, 0
    %p144 = por %p142, %p143
    %p145 = scmp.ne.s32.totalorder %s133, %s134
    %p146 = scmp.eq.s32.totalorder %s17, 3
    %p147 = por %p145, %p146
    %p149 = scmp.ne.s32.totalorder %s134, %s148
    %p150 = scmp.eq.s32.totalorder %s17, 0
    %p151 = por %p149, %p150
    %s153 = sadd.s32 %s152, 1
    %p156 = scmp.eq.s32.totalorder %s11, 3
    %p157 = scmp.ne.s32.totalorder %s152, %s154
    %p158 = scmp.eq.s32.totalorder %s11, 0
    %p159 = por %p157, %p158
    %p160 = scmp.ne.s32.totalorder %s152, %s154
    %p161 = scmp.eq.s32.totalorder %s16, 3
    %p162 = por %p160, %p161
    %p163 = scmp.ne.s32.totalorder %s154, %s155
    %p164 = scmp.eq.s32.totalorder %s16, 0
    %p165 = por %p163, %p164
    %p166 = scmp.ne.s32.totalorder %s154, %s155
    %p167 = scmp.eq.s32.totalorder %s17, 3
    %p168 = por %p166, %p167
    %p170 = scmp.ne.s32.totalorder %s155, %s169
    %p171 = scmp.eq.s32.totalorder %s17, 0
    %p172 = por %p170, %p171
    %s173 = ssub.s32 %s18, %s30
    %s174 = ssub.s32 %s19, %s26
    %s175 = sor.u32 %s173, %s174
    %p176 = scmp.eq.s32.totalorder %s175, 0
    %s178 = sadd.s32 %s177, 1
    %s179 = scalar_select %p176, %s177, %s178
    %p182 = pneg %p176
    %p183 = scmp.eq.s32.totalorder %s11, 3
    %p184 = por %p182, %p183
    %p185 = scmp.ne.s32.totalorder %s177, %s180
    %p186 = scmp.eq.s32.totalorder %s11, 0
    %p187 = por %p185, %p186
    %p188 = scmp.ne.s32.totalorder %s177, %s180
    %p189 = scmp.eq.s32.totalorder %s16, 3
    %p190 = por %p188, %p189
    %p191 = scmp.ne.s32.totalorder %s180, %s181
    %p192 = scmp.eq.s32.totalorder %s16, 0
    %p193 = por %p191, %p192
    %p194 = scmp.ne.s32.totalorder %s180, %s181
    %p195 = scmp.eq.s32.totalorder %s17, 3
    %p196 = por %p194, %p195
    %p198 = scmp.ne.s32.totalorder %s181, %s197
    %p199 = scmp.eq.s32.totalorder %s17, 0
    %p200 = por %p198, %p199
    %p201 = scmp.le.s32.totalorder 1, %s11
    %p202 = scmp.lt.s32.totalorder %s11, 5
    %p203 = pnand %p201, %p202
    %p204 = pneg %p203
    // Predicated region
    $region9: #{_lambda_.7} parent=5 // pred_check
      _
    $region10: #{_lambda_.7} parent=5 // pred_check_branch
      %206 = sbr.rel (%p203) target = $region12
    $region11: #{_lambda_.7} parent=5 // pred_region
      %s207 = ssub.s32 %s11, 1
      // Predicated region
      $region13: #{_lambda_.7} parent=11 // pred_check
        %p208 = pneg %p144
      $region14: #{_lambda_.7} parent=11 // pred_check_branch
        %210 = sbr.rel (%p208) target = $region16
      $region15: #{_lambda_.7} parent=11 // pred_region
        _
      $region16: #{_lambda_.7} parent=11 // pred_fallthru
        _
      // Predicated region
      $region17: #{_lambda_.7} parent=11 // pred_check
        %p211 = pneg %p165
      $region18: #{_lambda_.7} parent=11 // pred_check_branch
        %213 = sbr.rel (%p211) target = $region20
      $region19: #{_lambda_.7} parent=11 // pred_region
        _
      $region20: #{_lambda_.7} parent=11 // pred_fallthru
        _
    $region12: #{_lambda_.7} parent=5 // pred_fallthru
      _
    %p214 = scmp.lt.s32.totalorder %s11, 4
    // Predicated region
    $region21: #{_lambda_.7} parent=5 // pred_check
      %p215 = pneg %p214
    $region22: #{_lambda_.7} parent=5 // pred_check_branch
      %217 = sbr.rel (%p215) target = $region24
    $region23: #{_lambda_.7} parent=5 // pred_region
      // Predicated region
      $region25: #{_lambda_.7} parent=23 // pred_check
        %p218 = pneg %p53
      $region26: #{_lambda_.7} parent=23 // pred_check_branch
        %220 = sbr.rel (%p218) target = $region28
      $region27: #{_lambda_.7} parent=23 // pred_region
        %s221 = smul.u32 %s19, 4
        %s222 = ssub.s32 %s221, 1
        %p223 = scmp.gt.s32.totalorder %s222, 0
        %s224 = scalar_select %p223, %s222, 0
        %s225 = smul.u32 6, %s224
        %p226 = scmp.lt.s32.totalorder %s18, 1
        %s227 = scalar_select %p226, %s18, 1
        %p228 = scmp.lt.s32.totalorder %s225, 47
        %s229 = scalar_select %p228, %s225, 47
        %s230 = smul.addr %s227, 48
        %s231 = sadd.s32 %s229, %s230
        %s232 = smul.addr %s231, 4
        %s233 = scalar_lea.vmem %s0, %s232
        %s234 = smul.u32 %s19, 4
        %s235 = ssub.s32 %s234, 1
        %p236 = scmp.gt.s32.totalorder %s235, 0
        %s237 = scalar_select %p236, %s235, 0
        %s238 = smul.u32 6, %s237
      $region28: #{_lambda_.7} parent=23 // pred_fallthru
        _
      // Predicated region
      $region29: #{_lambda_.7} parent=23 // pred_check
        %p239 = pneg %p81
      $region30: #{_lambda_.7} parent=23 // pred_check_branch
        %241 = sbr.rel (%p239) target = $region32
      $region31: #{_lambda_.7} parent=23 // pred_region
        %s242 = smul.u32 24, %s19
        %p243 = scmp.lt.s32.totalorder %s18, 1
        %s244 = scalar_select %p243, %s18, 1
        %p245 = scmp.lt.s32.totalorder %s242, 47
        %s246 = scalar_select %p245, %s242, 47
        %s247 = smul.addr %s244, 48
        %s248 = sadd.s32 %s246, %s247
        %s249 = smul.addr %s248, 4
        %s250 = scalar_lea.vmem %s1, %s249
        %s251 = smul.u32 24, %s19
      $region32: #{_lambda_.7} parent=23 // pred_fallthru
        _
      // Predicated region
      $region33: #{_lambda_.7} parent=23 // pred_check
        %p252 = pneg %p117
      $region34: #{_lambda_.7} parent=23 // pred_check_branch
        %254 = sbr.rel (%p252) target = $region36
      $region35: #{_lambda_.7} parent=23 // pred_region
        %s255 = sadd.s32 %s19, 1
        %s256 = smul.u32 %s255, 4
        %p257 = scmp.lt.s32.totalorder %s256, 7
        %s258 = scalar_select %p257, %s256, 7
        %s259 = smul.u32 6, %s258
        %p260 = scmp.lt.s32.totalorder %s18, 1
        %s261 = scalar_select %p260, %s18, 1
        %p262 = scmp.lt.s32.totalorder %s259, 47
        %s263 = scalar_select %p262, %s259, 47
        %s264 = smul.addr %s261, 48
        %s265 = sadd.s32 %s263, %s264
        %s266 = smul.addr %s265, 4
        %s267 = scalar_lea.vmem %s2, %s266
        %s268 = sadd.s32 %s19, 1
        %s269 = smul.u32 %s268, 4
        %p270 = scmp.lt.s32.totalorder %s269, 7
        %s271 = scalar_select %p270, %s269, 7
        %s272 = smul.u32 6, %s271
      $region36: #{_lambda_.7} parent=23 // pred_fallthru
        _
    $region24: #{_lambda_.7} parent=5 // pred_fallthru
      _
    %p273 = scmp.le.s32.totalorder 1, %s11
    %p274 = scmp.lt.s32.totalorder %s11, 5
    %p275 = pnand %p273, %p274
    %p276 = pneg %p275
    // Predicated region
    $region37: #{_lambda_.7} parent=5 // pred_check
      _
    $region38: #{_lambda_.7} parent=5 // pred_check_branch
      %278 = sbr.rel (%p275) target = $region40
    $region39: #{_lambda_.7} parent=5 // pred_region
      %s279 = ssub.s32 %s11, 1
      %s280 = smul.u32 %s21, 4
      %s281 = ssub.s32 %s280, 1
      %p282 = scmp.gt.s32.totalorder %s281, 0
      %s283 = scalar_select %p282, %s281, 0
      %s284 = smul.u32 6, %s283
      %p285 = scmp.lt.s32.totalorder %s20, 1
      %s286 = scalar_select %p285, %s20, 1
      %p287 = scmp.lt.s32.totalorder %s284, 47
      %s288 = scalar_select %p287, %s284, 47
      %s289 = smul.addr %s286, 48
      %s290 = sadd.s32 %s288, %s289
      %s291 = smul.addr %s290, 4
      %s292 = scalar_lea.vmem %s0, %s291
      %p293 = pneg %p59
      %p294 = pneg %p56
      %s295 = smul.u32 24, %s21
      %p296 = scmp.lt.s32.totalorder %s20, 1
      %s297 = scalar_select %p296, %s20, 1
      %p298 = scmp.lt.s32.totalorder %s295, 47
      %s299 = scalar_select %p298, %s295, 47
      %s300 = smul.addr %s297, 48
      %s301 = sadd.s32 %s299, %s300
      %s302 = smul.addr %s301, 4
      %s303 = scalar_lea.vmem %s1, %s302
      %p304 = pneg %p87
      %p305 = pneg %p84
      %s306 = sadd.s32 %s21, 1
      %s307 = smul.u32 %s306, 4
      %p308 = scmp.lt.s32.totalorder %s307, 7
      %s309 = scalar_select %p308, %s307, 7
      %s310 = smul.u32 6, %s309
      %p311 = scmp.lt.s32.totalorder %s20, 1
      %s312 = scalar_select %p311, %s20, 1
      %p313 = scmp.lt.s32.totalorder %s310, 47
      %s314 = scalar_select %p313, %s310, 47
      %s315 = smul.addr %s312, 48
      %s316 = sadd.s32 %s314, %s315
      %s317 = smul.addr %s316, 4
      %s318 = scalar_lea.vmem %s2, %s317
      %p319 = pneg %p123
      %p320 = pneg %p120
      %p321 = pneg %p144
      %p322 = pneg %p141
      %p323 = pneg %p165
      %p324 = pneg %p162
      %p325 = pneg %p193
      %p326 = pneg %p190
      %s327 = smul.u32 24, %s21
      %p328 = scmp.lt.s32.totalorder %s20, 1
      %s329 = scalar_select %p328, %s20, 1
      %p330 = scmp.lt.s32.totalorder %s327, 47
      %s331 = scalar_select %p330, %s327, 47
      %s332 = smul.addr %s329, 48
      %s333 = sadd.s32 %s331, %s332
      %s334 = smul.addr %s333, 8
      %s335 = scalar_lea.vmem %s5, %s334
      %s336 = smul.u32 %s21, 4
      %s337 = ssub.s32 %s336, 1
      %p338 = scmp.gt.s32.totalorder %s337, 0
      %s339 = scalar_select %p338, %s337, 0
      %s340 = smul.u32 6, %s339
      %p341 = scmp.lt.s32.totalorder %s20, 1
      %s342 = scalar_select %p341, %s20, 1
      %p343 = scmp.lt.s32.totalorder %s340, 47
      %s344 = scalar_select %p343, %s340, 47
      %s345 = smul.addr %s342, 48
      %s346 = sadd.s32 %s344, %s345
      %s347 = smul.addr %s346, 4
      %s348 = scalar_lea.vmem %s0, %s347
      %s349 = smul.u32 %s21, 4
      %s350 = ssub.s32 %s349, 1
      %p351 = scmp.gt.s32.totalorder %s350, 0
      %s352 = scalar_select %p351, %s350, 0
      %s353 = smul.u32 6, %s352
      %s354 = smul.u32 24, %s21
      %p355 = scmp.lt.s32.totalorder %s20, 1
      %s356 = scalar_select %p355, %s20, 1
      %p357 = scmp.lt.s32.totalorder %s354, 47
      %s358 = scalar_select %p357, %s354, 47
      %s359 = smul.addr %s356, 48
      %s360 = sadd.s32 %s358, %s359
      %s361 = smul.addr %s360, 4
      %s362 = scalar_lea.vmem %s1, %s361
      %s363 = smul.u32 24, %s21
      %s364 = sadd.s32 %s21, 1
      %s365 = smul.u32 %s364, 4
      %p366 = scmp.lt.s32.totalorder %s365, 7
      %s367 = scalar_select %p366, %s365, 7
      %s368 = smul.u32 6, %s367
      %p369 = scmp.lt.s32.totalorder %s20, 1
      %s370 = scalar_select %p369, %s20, 1
      %p371 = scmp.lt.s32.totalorder %s368, 47
      %s372 = scalar_select %p371, %s368, 47
      %s373 = smul.addr %s370, 48
      %s374 = sadd.s32 %s372, %s373
      %s375 = smul.addr %s374, 4
      %s376 = scalar_lea.vmem %s2, %s375
      %s377 = sadd.s32 %s21, 1
      %s378 = smul.u32 %s377, 4
      %p379 = scmp.lt.s32.totalorder %s378, 7
      %s380 = scalar_select %p379, %s378, 7
      %s381 = smul.u32 6, %s380
      %s382 = smul.u32 24, %s21
      %p383 = scmp.lt.s32.totalorder %s20, 1
      %s384 = scalar_select %p383, %s20, 1
      %p385 = scmp.lt.s32.totalorder %s382, 47
      %s386 = scalar_select %p385, %s382, 47
      %s387 = smul.addr %s384, 48
      %s388 = sadd.s32 %s386, %s387
      %s389 = smul.addr %s388, 8
      %s390 = scalar_lea.vmem %s5, %s389
      %s391 = smul.u32 24, %s21
      %v393 = vlaneseq
      %v394 = vshrl.u32 %v393, 7
      %v395 = vadd.s32 %v394, 8
      %v396 = vadd.s32 %v394, 16
      %vm397 = vcmp.lt.s32.totalorder %v394, 16
      %vm398 = vcmp.lt.s32.totalorder %v395, 16
      %vm399 = vcmp.lt.s32.totalorder %v396, 16
      %v400 = vadd.s32 %v394, 24
      %v401 = vadd.s32 %v394, 32
      %v402 = vadd.s32 %v394, 40
      %vm403 = vcmp.ge.s32.totalorder %v396, 24
      %vm404 = vcmp.ge.s32.totalorder %v400, 24
      %vm405 = vcmp.ge.s32.totalorder %v401, 24
      %vm406 = vcmp.ge.s32.totalorder %v402, 24
      %vm407 = vcmp.lt.s32.totalorder %v396, 40
      %vm408 = vcmp.lt.s32.totalorder %v400, 40
      %vm409 = vcmp.lt.s32.totalorder %v401, 40
      %vm410 = vcmp.lt.s32.totalorder %v402, 40
      %vm411 = vmand %vm403, %vm407
      %vm412 = vmand %vm404, %vm408
      %vm413 = vmand %vm405, %vm409
      %vm414 = vmand %vm406, %vm410
      %p415 = scmp.ge.s32.totalorder %s21, 1
      %s416 = scalar_select %p415, 1, 0
      %v417 = vstv %s416
      %vm418 = vcmp.eq.s32.totalorder %v417, 1
      %vm419 = vmand %vm411, %vm418
      %vm420 = vmand %vm412, %vm418
      %vm421 = vmand %vm413, %vm418
      %vm422 = vmand %vm414, %vm418
      %vm423 = vcmp.lt.s32.totalorder %v400, 16
      %p424 = scmp.lt.s32.totalorder %s21, 1
      %s425 = scalar_select %p424, 1, 0
      %v426 = vstv %s425
      %vm427 = vcmp.eq.s32.totalorder %v426, 1
      %vm428 = vmand %vm397, %vm427
      %vm429 = vmand %vm398, %vm427
      %vm430 = vmand %vm399, %vm427
      %vm431 = vmand %vm423, %vm427
      %v432 = vld [vmem:[%s348 + $0x8] sm:$0xf]
      %v433 = vld [vmem:[%s348 + $0xc] sm:$0xf]
      %v434 = vld [vmem:[%s348 + $0x10] sm:$0xf]
      %v435 = vld [vmem:[%s348 + $0x14] sm:$0xf]
      %v436 = vunpack.c.l.bf16 %v432
      %v437 = vunpack.c.l.bf16 %v433
      %v438 = vunpack.c.l.bf16 %v434
      %v439 = vunpack.c.l.bf16 %v435
      %v440 = vld [vmem:[%s376] sm:$0xf]
      %v441 = vld [vmem:[%s376 + $0x4] sm:$0xf]
      %v442 = vld [vmem:[%s376 + $0x8] sm:$0xf]
      %v443 = vld [vmem:[%s376 + $0xc] sm:$0xf]
      %v444 = vunpack.c.l.bf16 %v440
      %v445 = vunpack.c.l.bf16 %v441
      %v446 = vunpack.c.l.bf16 %v442
      %v447 = vunpack.c.l.bf16 %v443
      %v448 = vsel %vm419, 1, 0
      %v449 = vsel %vm420, 1, 0
      %v450 = vsel %vm421, 1, 0
      %v451 = vsel %vm422, 1, 0
      %vm452 = vcmp.eq.s32.totalorder %v448, 1
      %vm453 = vcmp.eq.s32.totalorder %v449, 1
      %vm454 = vcmp.eq.s32.totalorder %v450, 1
      %vm455 = vcmp.eq.s32.totalorder %v451, 1
      %v456 = vsel %vm452, %v436, 0.0
      %v457 = vsel %vm453, %v437, 0.0
      %v458 = vsel %vm454, %v438, 0.0
      %v459 = vsel %vm455, %v439, 0.0
      %v460 = vsel %vm428, 1, 0
      %v461 = vsel %vm429, 1, 0
      %v462 = vsel %vm430, 1, 0
      %v463 = vsel %vm431, 1, 0
      %vm464 = vcmp.eq.s32.totalorder %v460, 1
      %vm465 = vcmp.eq.s32.totalorder %v461, 1
      %vm466 = vcmp.eq.s32.totalorder %v462, 1
      %vm467 = vcmp.eq.s32.totalorder %v463, 1
      %v468 = vsel %vm464, %v444, 0.0
      %v469 = vsel %vm465, %v445, 0.0
      %v470 = vsel %vm466, %v446, 0.0
      %v471 = vsel %vm467, %v447, 0.0
      %v472 = vld [vmem:[%s362] sm:$0xf]
      %v473 = vld [vmem:[%s362 + $0x4] sm:$0xf]
      %v474 = vld [vmem:[%s362 + $0x8] sm:$0xf]
      %v475 = vld [vmem:[%s362 + $0xc] sm:$0xf]
      %v476 = vld [vmem:[%s362 + $0x10] sm:$0xf]
      %v477 = vld [vmem:[%s362 + $0x14] sm:$0xf]
      %v478 = vld [vmem:[%s362 + $0x18] sm:$0xf]
      %v479 = vld [vmem:[%s362 + $0x1c] sm:$0xf]
      %v480 = vld [vmem:[%s362 + $0x20] sm:$0xf]
      %v481 = vld [vmem:[%s362 + $0x24] sm:$0xf]
      %v482 = vld [vmem:[%s362 + $0x28] sm:$0xf]
      %v483 = vld [vmem:[%s362 + $0x2c] sm:$0xf]
      %v484 = vld [vmem:[%s362 + $0x30] sm:$0xf]
      %v485 = vld [vmem:[%s362 + $0x34] sm:$0xf]
      %v486 = vld [vmem:[%s362 + $0x38] sm:$0xf]
      %v487 = vld [vmem:[%s362 + $0x3c] sm:$0xf]
      %v488 = vld [vmem:[%s362 + $0x40] sm:$0xf]
      %v489 = vld [vmem:[%s362 + $0x44] sm:$0xf]
      %v490 = vld [vmem:[%s362 + $0x48] sm:$0xf]
      %v491 = vld [vmem:[%s362 + $0x4c] sm:$0xf]
      %v492 = vld [vmem:[%s362 + $0x50] sm:$0xf]
      %v493 = vld [vmem:[%s362 + $0x54] sm:$0xf]
      %v494 = vld [vmem:[%s362 + $0x58] sm:$0xf]
      %v495 = vld [vmem:[%s362 + $0x5c] sm:$0xf]
      %v496 = vpack.c.bf16 %v456, %v456
      %v497 = vpack.c.bf16 %v457, %v457
      %v498 = vpack.c.bf16 %v458, %v458
      %v499 = vpack.c.bf16 %v459, %v459
      %v500 = vpack.c.bf16 %v468, %v468
      %v501 = vpack.c.bf16 %v469, %v469
      %v502 = vpack.c.bf16 %v470, %v470
      %v503 = vpack.c.bf16 %v471, %v471
      %v508 = vunpack.c.l.b16 %v496
      %v509 = vunpack.c.l.b16 %v497
      %v510 = vunpack.c.l.b16 %v498
      %v511 = vunpack.c.l.b16 %v499
      %v512 = vpack.c.b16 %v509, %v508
      %v513 = vpack.c.b16 %v511, %v510
      %v538 = vunpack.c.l.b16 %v472
      %v539 = vunpack.c.l.b16 %v473
      %v540 = vunpack.c.l.b16 %v474
      %v541 = vunpack.c.l.b16 %v475
      %v542 = vunpack.c.l.b16 %v476
      %v543 = vunpack.c.l.b16 %v477
      %v544 = vunpack.c.l.b16 %v478
      %v545 = vunpack.c.l.b16 %v479
      %v546 = vunpack.c.l.b16 %v480
      %v547 = vunpack.c.l.b16 %v481
      %v548 = vunpack.c.l.b16 %v482
      %v549 = vunpack.c.l.b16 %v483
      %v550 = vunpack.c.l.b16 %v484
      %v551 = vunpack.c.l.b16 %v485
      %v552 = vunpack.c.l.b16 %v486
      %v553 = vunpack.c.l.b16 %v487
      %v554 = vunpack.c.l.b16 %v488
      %v555 = vunpack.c.l.b16 %v489
      %v556 = vunpack.c.l.b16 %v490
      %v557 = vunpack.c.l.b16 %v491
      %v558 = vunpack.c.l.b16 %v492
      %v559 = vunpack.c.l.b16 %v493
      %v560 = vunpack.c.l.b16 %v494
      %v561 = vunpack.c.l.b16 %v495
      %v562 = vpack.c.b16 %v539, %v538
      %v563 = vpack.c.b16 %v541, %v540
      %v564 = vpack.c.b16 %v543, %v542
      %v565 = vpack.c.b16 %v545, %v544
      %v566 = vpack.c.b16 %v547, %v546
      %v567 = vpack.c.b16 %v549, %v548
      %v568 = vpack.c.b16 %v551, %v550
      %v569 = vpack.c.b16 %v553, %v552
      %v570 = vpack.c.b16 %v555, %v554
      %v571 = vpack.c.b16 %v557, %v556
      %v572 = vpack.c.b16 %v559, %v558
      %v573 = vpack.c.b16 %v561, %v560
      %v578 = vunpack.c.l.b16 %v500
      %v579 = vunpack.c.l.b16 %v501
      %v580 = vunpack.c.l.b16 %v502
      %v581 = vunpack.c.l.b16 %v503
      %v582 = vpack.c.b16 %v579, %v578
      %v583 = vpack.c.b16 %v581, %v580
      %v584 = vld [vmem:[%s3] sm:$0xf]
      %v585 = vld [vmem:[%s3 + $0x4] sm:$0xf]
      %v586 = vld [vmem:[%s3 + $0x8] sm:$0xf]
      %v587 = vld [vmem:[%s3 + $0xc] sm:$0xf]
      %v588 = vld [vmem:[%s3 + $0x10] sm:$0xf]
      %v589 = vld [vmem:[%s3 + $0x14] sm:$0xf]
      %v590 = vld [vmem:[%s3 + $0x18] sm:$0xf]
      %v591 = vld [vmem:[%s3 + $0x1c] sm:$0xf]
      %v592 = vld [vmem:[%s3 + $0x20] sm:$0xf]
      %v593 = vld [vmem:[%s3 + $0x24] sm:$0xf]
      %v594 = vld [vmem:[%s3 + $0x28] sm:$0xf]
      %v595 = vld [vmem:[%s3 + $0x2c] sm:$0xf]
      %v596 = vld [vmem:[%s3 + $0x30] sm:$0xf]
      %v597 = vld [vmem:[%s3 + $0x34] sm:$0xf]
      %v598 = vld [vmem:[%s3 + $0x38] sm:$0xf]
      %v599 = vld [vmem:[%s3 + $0x3c] sm:$0xf]
      %v600 = vld [vmem:[%s3 + $0x40] sm:$0xf]
      %v601 = vld [vmem:[%s3 + $0x44] sm:$0xf]
      %v602 = vld [vmem:[%s3 + $0x48] sm:$0xf]
      %v603 = vld [vmem:[%s3 + $0x4c] sm:$0xf]
      %v604 = vld [vmem:[%s3 + $0x50] sm:$0xf]
      %v605 = vld [vmem:[%s3 + $0x54] sm:$0xf]
      %v606 = vld [vmem:[%s3 + $0x58] sm:$0xf]
      %v607 = vld [vmem:[%s3 + $0x5c] sm:$0xf]
      %v608 = vld [vmem:[%s3 + $0x60] sm:$0xf]
      %v609 = vld [vmem:[%s3 + $0x64] sm:$0xf]
      %v610 = vld [vmem:[%s3 + $0x68] sm:$0xf]
      %v611 = vld [vmem:[%s3 + $0x6c] sm:$0xf]
      %v612 = vld [vmem:[%s3 + $0x70] sm:$0xf]
      %v613 = vld [vmem:[%s3 + $0x74] sm:$0xf]
      %v614 = vld [vmem:[%s3 + $0x78] sm:$0xf]
      %v615 = vld [vmem:[%s3 + $0x7c] sm:$0xf]
      %v616 = vld [vmem:[%s3 + $0x80] sm:$0xf]
      %v617 = vld [vmem:[%s3 + $0x84] sm:$0xf]
      %v618 = vld [vmem:[%s3 + $0x88] sm:$0xf]
      %v619 = vld [vmem:[%s3 + $0x8c] sm:$0xf]
      %v620 = vld [vmem:[%s3 + $0x90] sm:$0xf]
      %v621 = vld [vmem:[%s3 + $0x94] sm:$0xf]
      %v622 = vld [vmem:[%s3 + $0x98] sm:$0xf]
      %v623 = vld [vmem:[%s3 + $0x9c] sm:$0xf]
      %v624 = vld [vmem:[%s3 + $0xa0] sm:$0xf]
      %v625 = vld [vmem:[%s3 + $0xa4] sm:$0xf]
      %v626 = vld [vmem:[%s3 + $0xa8] sm:$0xf]
      %v627 = vld [vmem:[%s3 + $0xac] sm:$0xf]
      %v628 = vld [vmem:[%s3 + $0xb0] sm:$0xf]
      %v629 = vld [vmem:[%s3 + $0xb4] sm:$0xf]
      %v630 = vld [vmem:[%s3 + $0xb8] sm:$0xf]
      %v631 = vld [vmem:[%s3 + $0xbc] sm:$0xf]
      %v632 = vld [vmem:[%s3 + $0xc0] sm:$0xf]
      %v633 = vld [vmem:[%s3 + $0xc4] sm:$0xf]
      %v634 = vld [vmem:[%s3 + $0xc8] sm:$0xf]
      %v635 = vld [vmem:[%s3 + $0xcc] sm:$0xf]
      %v636 = vld [vmem:[%s3 + $0xd0] sm:$0xf]
      %v637 = vld [vmem:[%s3 + $0xd4] sm:$0xf]
      %v638 = vld [vmem:[%s3 + $0xd8] sm:$0xf]
      %v639 = vld [vmem:[%s3 + $0xdc] sm:$0xf]
      %v640 = vld [vmem:[%s3 + $0xe0] sm:$0xf]
      %v641 = vld [vmem:[%s3 + $0xe4] sm:$0xf]
      %v642 = vld [vmem:[%s3 + $0xe8] sm:$0xf]
      %v643 = vld [vmem:[%s3 + $0xec] sm:$0xf]
      %v644 = vld [vmem:[%s3 + $0xf0] sm:$0xf]
      %v645 = vld [vmem:[%s3 + $0xf4] sm:$0xf]
      %v646 = vld [vmem:[%s3 + $0xf8] sm:$0xf]
      %v647 = vld [vmem:[%s3 + $0xfc] sm:$0xf]
      %v648 = vld [vmem:[%s3 + $0x100] sm:$0xf]
      %v649 = vld [vmem:[%s3 + $0x104] sm:$0xf]
      %v650 = vld [vmem:[%s3 + $0x108] sm:$0xf]
      %v651 = vld [vmem:[%s3 + $0x10c] sm:$0xf]
      %v652 = vld [vmem:[%s3 + $0x110] sm:$0xf]
      %v653 = vld [vmem:[%s3 + $0x114] sm:$0xf]
      %v654 = vld [vmem:[%s3 + $0x118] sm:$0xf]
      %v655 = vld [vmem:[%s3 + $0x11c] sm:$0xf]
      %vm656 = vcmask 1043456
      %v657 = vrot.slane %v512, 4
      %v658 = vrot.slane %v513, 4
      %v659 = vsel %vm656, %v657, %v658
      %v660 = vrot.slane %v562, 4
      %v661 = vsel %vm656, %v658, %v660
      %v662 = vrot.slane %v563, 4
      %v663 = vsel %vm656, %v660, %v662
      %v664 = vrot.slane %v564, 4
      %v665 = vsel %vm656, %v662, %v664
      %v666 = vrot.slane %v565, 4
      %v667 = vsel %vm656, %v664, %v666
      %v668 = vrot.slane %v566, 4
      %v669 = vsel %vm656, %v666, %v668
      %v670 = vrot.slane %v567, 4
      %v671 = vsel %vm656, %v668, %v670
      %v672 = vrot.slane %v568, 4
      %v673 = vsel %vm656, %v670, %v672
      %v674 = vrot.slane %v569, 4
      %v675 = vsel %vm656, %v672, %v674
      %v676 = vrot.slane %v570, 4
      %v677 = vsel %vm656, %v674, %v676
      %v678 = vrot.slane %v571, 4
      %v679 = vsel %vm656, %v676, %v678
      %v680 = vrot.slane %v572, 4
      %v681 = vsel %vm656, %v678, %v680
      %v690 = vunpack.c.l.b16 %v592
      %v691 = vunpack.c.l.b16 %v593
      %v692 = vunpack.c.l.b16 %v594
      %v693 = vunpack.c.l.b16 %v595
      %v694 = vunpack.c.l.b16 %v596
      %v695 = vunpack.c.l.b16 %v597
      %v696 = vunpack.c.l.b16 %v598
      %v697 = vunpack.c.l.b16 %v599
      %v698 = vpack.c.b16 %v691, %v690
      %v699 = vpack.c.b16 %v693, %v692
      %v700 = vpack.c.b16 %v695, %v694
      %v701 = vpack.c.b16 %v697, %v696
      %vm706 = vcmask 523264
      %v708 = vsel %vm706, %v659, 0
      %v711 = vsel %vm706, %v661, 0
      %v714 = vsel %vm706, %v663, 0
      %v717 = vsel %vm706, %v665, 0
      %v720 = vsel %vm706, %v667, 0
      %v723 = vsel %vm706, %v669, 0
      %v726 = vsel %vm706, %v671, 0
      %v729 = vsel %vm706, %v673, 0
      %v732 = vsel %vm706, %v675, 0
      %v735 = vsel %vm706, %v677, 0
      %v738 = vsel %vm706, %v679, 0
      %v741 = vsel %vm706, %v681, 0
      %743 = vmatpush.bf16.msra.mxu0 0
      %744 = vmatpush.bf16.msra.mxu0 0
      %745 = vmatpush.bf16.msra.mxu0 0
      %746 = vmatpush.bf16.msra.mxu0 0
      %747 = vmatpush.bf16.msra.mxu0 %v701
      %748 = vmatpush.bf16.msra.mxu0 %v700
      %749 = vmatpush.bf16.msra.mxu0 %v699
      %750 = vmatpush.bf16.msra.mxu0 %v698
      %751 = vmatmul.bf16.gmra.mxu0 %v708
      %v752 = vpop.f32.mrf.mxu0
      %v753 = vadd.f32 0.0, %v752
      %v754 = vpop.f32.mrf.mxu0
      %v755 = vadd.f32 0.0, %v754
      %756 = vmatmul.bf16.gmra.mxu0 %v711
      %v757 = vpop.f32.mrf.mxu0
      %v758 = vadd.f32 0.0, %v757
      %v759 = vpop.f32.mrf.mxu0
      %v760 = vadd.f32 0.0, %v759
      %761 = vmatmul.bf16.gmra.mxu0 %v714
      %v762 = vpop.f32.mrf.mxu0
      %v763 = vadd.f32 0.0, %v762
      %v764 = vpop.f32.mrf.mxu0
      %v765 = vadd.f32 0.0, %v764
      %766 = vmatmul.bf16.gmra.mxu0 %v717
      %v767 = vpop.f32.mrf.mxu0
      %v768 = vadd.f32 0.0, %v767
      %v769 = vpop.f32.mrf.mxu0
      %v770 = vadd.f32 0.0, %v769
      %771 = vmatmul.bf16.gmra.mxu0 %v720
      %v772 = vpop.f32.mrf.mxu0
      %v773 = vadd.f32 0.0, %v772
      %v774 = vpop.f32.mrf.mxu0
      %v775 = vadd.f32 0.0, %v774
      %776 = vmatmul.bf16.gmra.mxu0 %v723
      %v777 = vpop.f32.mrf.mxu0
      %v778 = vadd.f32 0.0, %v777
      %v779 = vpop.f32.mrf.mxu0
      %v780 = vadd.f32 0.0, %v779
      %781 = vmatmul.bf16.gmra.mxu0 %v726
      %v782 = vpop.f32.mrf.mxu0
      %v783 = vadd.f32 0.0, %v782
      %v784 = vpop.f32.mrf.mxu0
      %v785 = vadd.f32 0.0, %v784
      %786 = vmatmul.bf16.gmra.mxu0 %v729
      %v787 = vpop.f32.mrf.mxu0
      %v788 = vadd.f32 0.0, %v787
      %v789 = vpop.f32.mrf.mxu0
      %v790 = vadd.f32 0.0, %v789
      %791 = vmatmul.bf16.gmra.mxu0 %v732
      %v792 = vpop.f32.mrf.mxu0
      %v793 = vadd.f32 0.0, %v792
      %v794 = vpop.f32.mrf.mxu0
      %v795 = vadd.f32 0.0, %v794
      %796 = vmatmul.bf16.gmra.mxu0 %v735
      %v797 = vpop.f32.mrf.mxu0
      %v798 = vadd.f32 0.0, %v797
      %v799 = vpop.f32.mrf.mxu0
      %v800 = vadd.f32 0.0, %v799
      %801 = vmatmul.bf16.gmra.mxu0 %v738
      %v802 = vpop.f32.mrf.mxu0
      %v803 = vadd.f32 0.0, %v802
      %v804 = vpop.f32.mrf.mxu0
      %v805 = vadd.f32 0.0, %v804
      %806 = vmatmul.bf16.gmra.mxu0 %v741
      %v807 = vpop.f32.mrf.mxu0
      %v808 = vadd.f32 0.0, %v807
      %v809 = vpop.f32.mrf.mxu0
      %v810 = vadd.f32 0.0, %v809
      %811 = vdwg.mxu0
      %vm812 = vsmask.f32 4352
      %v814 = vshrl.u32 %v512, 16
      %v816 = vrot.slane %v814, 3
      %v817 = vshll.u32 %v512, 16
      %v819 = vrot.slane %v817, 4
      %v820 = vor.u32 %v816, %v819
      %v822 = vshrl.u32 %v513, 16
      %v824 = vrot.slane %v822, 3
      %v825 = vshll.u32 %v513, 16
      %v827 = vrot.slane %v825, 4
      %v828 = vor.u32 %v824, %v827
      %v829 = vsel %vm812, %v820, %v828
      %v831 = vshrl.u32 %v562, 16
      %v833 = vrot.slane %v831, 3
      %v834 = vshll.u32 %v562, 16
      %v836 = vrot.slane %v834, 4
      %v837 = vor.u32 %v833, %v836
      %v838 = vsel %vm812, %v828, %v837
      %v840 = vshrl.u32 %v563, 16
      %v842 = vrot.slane %v840, 3
      %v843 = vshll.u32 %v563, 16
      %v845 = vrot.slane %v843, 4
      %v846 = vor.u32 %v842, %v845
      %v847 = vsel %vm812, %v837, %v846
      %v849 = vshrl.u32 %v564, 16
      %v851 = vrot.slane %v849, 3
      %v852 = vshll.u32 %v564, 16
      %v854 = vrot.slane %v852, 4
      %v855 = vor.u32 %v851, %v854
      %v856 = vsel %vm812, %v846, %v855
      %v858 = vshrl.u32 %v565, 16
      %v860 = vrot.slane %v858, 3
      %v861 = vshll.u32 %v565, 16
      %v863 = vrot.slane %v861, 4
      %v864 = vor.u32 %v860, %v863
      %v865 = vsel %vm812, %v855, %v864
      %v867 = vshrl.u32 %v566, 16
      %v869 = vrot.slane %v867, 3
      %v870 = vshll.u32 %v566, 16
      %v872 = vrot.slane %v870, 4
      %v873 = vor.u32 %v869, %v872
      %v874 = vsel %vm812, %v864, %v873
      %v876 = vshrl.u32 %v567, 16
      %v878 = vrot.slane %v876, 3
      %v879 = vshll.u32 %v567, 16
      %v881 = vrot.slane %v879, 4
      %v882 = vor.u32 %v878, %v881
      %v883 = vsel %vm812, %v873, %v882
      %v885 = vshrl.u32 %v568, 16
      %v887 = vrot.slane %v885, 3
      %v888 = vshll.u32 %v568, 16
      %v890 = vrot.slane %v888, 4
      %v891 = vor.u32 %v887, %v890
      %v892 = vsel %vm812, %v882, %v891
      %v894 = vshrl.u32 %v569, 16
      %v896 = vrot.slane %v894, 3
      %v897 = vshll.u32 %v569, 16
      %v899 = vrot.slane %v897, 4
      %v900 = vor.u32 %v896, %v899
      %v901 = vsel %vm812, %v891, %v900
      %v903 = vshrl.u32 %v570, 16
      %v905 = vrot.slane %v903, 3
      %v906 = vshll.u32 %v570, 16
      %v908 = vrot.slane %v906, 4
      %v909 = vor.u32 %v905, %v908
      %v910 = vsel %vm812, %v900, %v909
      %v912 = vshrl.u32 %v571, 16
      %v914 = vrot.slane %v912, 3
      %v915 = vshll.u32 %v571, 16
      %v917 = vrot.slane %v915, 4
      %v918 = vor.u32 %v914, %v917
      %v919 = vsel %vm812, %v909, %v918
      %v921 = vshrl.u32 %v572, 16
      %v923 = vrot.slane %v921, 3
      %v924 = vshll.u32 %v572, 16
      %v926 = vrot.slane %v924, 4
      %v927 = vor.u32 %v923, %v926
      %v928 = vsel %vm812, %v918, %v927
      %v937 = vunpack.c.l.b16 %v584
      %v938 = vunpack.c.l.b16 %v585
      %v939 = vunpack.c.l.b16 %v586
      %v940 = vunpack.c.l.b16 %v587
      %v941 = vunpack.c.l.b16 %v588
      %v942 = vunpack.c.l.b16 %v589
      %v943 = vunpack.c.l.b16 %v590
      %v944 = vunpack.c.l.b16 %v591
      %v945 = vpack.c.b16 %v938, %v937
      %v946 = vpack.c.b16 %v940, %v939
      %v947 = vpack.c.b16 %v942, %v941
      %v948 = vpack.c.b16 %v944, %v943
      %v954 = vsel %vm706, %v829, 0
      %v957 = vsel %vm706, %v838, 0
      %v960 = vsel %vm706, %v847, 0
      %v963 = vsel %vm706, %v856, 0
      %v966 = vsel %vm706, %v865, 0
      %v969 = vsel %vm706, %v874, 0
      %v972 = vsel %vm706, %v883, 0
      %v975 = vsel %vm706, %v892, 0
      %v978 = vsel %vm706, %v901, 0
      %v981 = vsel %vm706, %v910, 0
      %v984 = vsel %vm706, %v919, 0
      %v987 = vsel %vm706, %v928, 0
      %989 = vmatpush.bf16.msra.mxu0 0
      %990 = vmatpush.bf16.msra.mxu0 0
      %991 = vmatpush.bf16.msra.mxu0 0
      %992 = vmatpush.bf16.msra.mxu0 0
      %993 = vmatpush.bf16.msra.mxu0 %v948
      %994 = vmatpush.bf16.msra.mxu0 %v947
      %995 = vmatpush.bf16.msra.mxu0 %v946
      %996 = vmatpush.bf16.msra.mxu0 %v945
      %997 = vmatmul.bf16.gmra.mxu0 %v954
      %v998 = vpop.f32.mrf.mxu0
      %v999 = vadd.f32 %v753, %v998
      %v1000 = vpop.f32.mrf.mxu0
      %v1001 = vadd.f32 %v755, %v1000
      %1002 = vmatmul.bf16.gmra.mxu0 %v957
      %v1003 = vpop.f32.mrf.mxu0
      %v1004 = vadd.f32 %v758, %v1003
      %v1005 = vpop.f32.mrf.mxu0
      %v1006 = vadd.f32 %v760, %v1005
      %1007 = vmatmul.bf16.gmra.mxu0 %v960
      %v1008 = vpop.f32.mrf.mxu0
      %v1009 = vadd.f32 %v763, %v1008
      %v1010 = vpop.f32.mrf.mxu0
      %v1011 = vadd.f32 %v765, %v1010
      %1012 = vmatmul.bf16.gmra.mxu0 %v963
      %v1013 = vpop.f32.mrf.mxu0
      %v1014 = vadd.f32 %v768, %v1013
      %v1015 = vpop.f32.mrf.mxu0
      %v1016 = vadd.f32 %v770, %v1015
      %1017 = vmatmul.bf16.gmra.mxu0 %v966
      %v1018 = vpop.f32.mrf.mxu0
      %v1019 = vadd.f32 %v773, %v1018
      %v1020 = vpop.f32.mrf.mxu0
      %v1021 = vadd.f32 %v775, %v1020
      %1022 = vmatmul.bf16.gmra.mxu0 %v969
      %v1023 = vpop.f32.mrf.mxu0
      %v1024 = vadd.f32 %v778, %v1023
      %v1025 = vpop.f32.mrf.mxu0
      %v1026 = vadd.f32 %v780, %v1025
      %1027 = vmatmul.bf16.gmra.mxu0 %v972
      %v1028 = vpop.f32.mrf.mxu0
      %v1029 = vadd.f32 %v783, %v1028
      %v1030 = vpop.f32.mrf.mxu0
      %v1031 = vadd.f32 %v785, %v1030
      %1032 = vmatmul.bf16.gmra.mxu0 %v975
      %v1033 = vpop.f32.mrf.mxu0
      %v1034 = vadd.f32 %v788, %v1033
      %v1035 = vpop.f32.mrf.mxu0
      %v1036 = vadd.f32 %v790, %v1035
      %1037 = vmatmul.bf16.gmra.mxu0 %v978
      %v1038 = vpop.f32.mrf.mxu0
      %v1039 = vadd.f32 %v793, %v1038
      %v1040 = vpop.f32.mrf.mxu0
      %v1041 = vadd.f32 %v795, %v1040
      %1042 = vmatmul.bf16.gmra.mxu0 %v981
      %v1043 = vpop.f32.mrf.mxu0
      %v1044 = vadd.f32 %v798, %v1043
      %v1045 = vpop.f32.mrf.mxu0
      %v1046 = vadd.f32 %v800, %v1045
      %1047 = vmatmul.bf16.gmra.mxu0 %v984
      %v1048 = vpop.f32.mrf.mxu0
      %v1049 = vadd.f32 %v803, %v1048
      %v1050 = vpop.f32.mrf.mxu0
      %v1051 = vadd.f32 %v805, %v1050
      %1052 = vmatmul.bf16.gmra.mxu0 %v987
      %v1053 = vpop.f32.mrf.mxu0
      %v1054 = vadd.f32 %v808, %v1053
      %v1055 = vpop.f32.mrf.mxu0
      %v1056 = vadd.f32 %v810, %v1055
      %1057 = vdwg.mxu0
      %vm1058 = vsmask.f32 3328
      %v1059 = vrot.slane %v814, 4
      %v1060 = vrot.slane %v817, 5
      %v1061 = vor.u32 %v1059, %v1060
      %v1062 = vrot.slane %v822, 4
      %v1063 = vrot.slane %v825, 5
      %v1064 = vor.u32 %v1062, %v1063
      %v1065 = vsel %vm1058, %v1061, %v1064
      %v1066 = vrot.slane %v831, 4
      %v1067 = vrot.slane %v834, 5
      %v1068 = vor.u32 %v1066, %v1067
      %v1069 = vsel %vm1058, %v1064, %v1068
      %v1070 = vrot.slane %v840, 4
      %v1071 = vrot.slane %v843, 5
      %v1072 = vor.u32 %v1070, %v1071
      %v1073 = vsel %vm1058, %v1068, %v1072
      %v1074 = vrot.slane %v849, 4
      %v1075 = vrot.slane %v852, 5
      %v1076 = vor.u32 %v1074, %v1075
      %v1077 = vsel %vm1058, %v1072, %v1076
      %v1078 = vrot.slane %v858, 4
      %v1079 = vrot.slane %v861, 5
      %v1080 = vor.u32 %v1078, %v1079
      %v1081 = vsel %vm1058, %v1076, %v1080
      %v1082 = vrot.slane %v867, 4
      %v1083 = vrot.slane %v870, 5
      %v1084 = vor.u32 %v1082, %v1083
      %v1085 = vsel %vm1058, %v1080, %v1084
      %v1086 = vrot.slane %v876, 4
      %v1087 = vrot.slane %v879, 5
      %v1088 = vor.u32 %v1086, %v1087
      %v1089 = vsel %vm1058, %v1084, %v1088
      %v1090 = vrot.slane %v885, 4
      %v1091 = vrot.slane %v888, 5
      %v1092 = vor.u32 %v1090, %v1091
      %v1093 = vsel %vm1058, %v1088, %v1092
      %v1094 = vrot.slane %v894, 4
      %v1095 = vrot.slane %v897, 5
      %v1096 = vor.u32 %v1094, %v1095
      %v1097 = vsel %vm1058, %v1092, %v1096
      %v1098 = vrot.slane %v903, 4
      %v1099 = vrot.slane %v906, 5
      %v1100 = vor.u32 %v1098, %v1099
      %v1101 = vsel %vm1058, %v1096, %v1100
      %v1102 = vrot.slane %v912, 4
      %v1103 = vrot.slane %v915, 5
      %v1104 = vor.u32 %v1102, %v1103
      %v1105 = vsel %vm1058, %v1100, %v1104
      %v1106 = vrot.slane %v921, 4
      %v1107 = vrot.slane %v924, 5
      %v1108 = vor.u32 %v1106, %v1107
      %v1109 = vsel %vm1058, %v1104, %v1108
      %v1118 = vunpack.c.l.b16 %v600
      %v1119 = vunpack.c.l.b16 %v601
      %v1120 = vunpack.c.l.b16 %v602
      %v1121 = vunpack.c.l.b16 %v603
      %v1122 = vunpack.c.l.b16 %v604
      %v1123 = vunpack.c.l.b16 %v605
      %v1124 = vunpack.c.l.b16 %v606
      %v1125 = vunpack.c.l.b16 %v607
      %v1126 = vpack.c.b16 %v1119, %v1118
      %v1127 = vpack.c.b16 %v1121, %v1120
      %v1128 = vpack.c.b16 %v1123, %v1122
      %v1129 = vpack.c.b16 %v1125, %v1124
      %v1135 = vsel %vm706, %v1065, 0
      %v1138 = vsel %vm706, %v1069, 0
      %v1141 = vsel %vm706, %v1073, 0
      %v1144 = vsel %vm706, %v1077, 0
      %v1147 = vsel %vm706, %v1081, 0
      %v1150 = vsel %vm706, %v1085, 0
      %v1153 = vsel %vm706, %v1089, 0
      %v1156 = vsel %vm706, %v1093, 0
      %v1159 = vsel %vm706, %v1097, 0
      %v1162 = vsel %vm706, %v1101, 0
      %v1165 = vsel %vm706, %v1105, 0
      %v1168 = vsel %vm706, %v1109, 0
      %1170 = vmatpush.bf16.msra.mxu0 0
      %1171 = vmatpush.bf16.msra.mxu0 0
      %1172 = vmatpush.bf16.msra.mxu0 0
      %1173 = vmatpush.bf16.msra.mxu0 0
      %1174 = vmatpush.bf16.msra.mxu0 %v1129
      %1175 = vmatpush.bf16.msra.mxu0 %v1128
      %1176 = vmatpush.bf16.msra.mxu0 %v1127
      %1177 = vmatpush.bf16.msra.mxu0 %v1126
      %1178 = vmatmul.bf16.gmra.mxu0 %v1135
      %v1179 = vpop.f32.mrf.mxu0
      %v1180 = vadd.f32 0.0, %v1179
      %v1181 = vpop.f32.mrf.mxu0
      %v1182 = vadd.f32 0.0, %v1181
      %1183 = vmatmul.bf16.gmra.mxu0 %v1138
      %v1184 = vpop.f32.mrf.mxu0
      %v1185 = vadd.f32 0.0, %v1184
      %v1186 = vpop.f32.mrf.mxu0
      %v1187 = vadd.f32 0.0, %v1186
      %1188 = vmatmul.bf16.gmra.mxu0 %v1141
      %v1189 = vpop.f32.mrf.mxu0
      %v1190 = vadd.f32 0.0, %v1189
      %v1191 = vpop.f32.mrf.mxu0
      %v1192 = vadd.f32 0.0, %v1191
      %1193 = vmatmul.bf16.gmra.mxu0 %v1144
      %v1194 = vpop.f32.mrf.mxu0
      %v1195 = vadd.f32 0.0, %v1194
      %v1196 = vpop.f32.mrf.mxu0
      %v1197 = vadd.f32 0.0, %v1196
      %1198 = vmatmul.bf16.gmra.mxu0 %v1147
      %v1199 = vpop.f32.mrf.mxu0
      %v1200 = vadd.f32 0.0, %v1199
      %v1201 = vpop.f32.mrf.mxu0
      %v1202 = vadd.f32 0.0, %v1201
      %1203 = vmatmul.bf16.gmra.mxu0 %v1150
      %v1204 = vpop.f32.mrf.mxu0
      %v1205 = vadd.f32 0.0, %v1204
      %v1206 = vpop.f32.mrf.mxu0
      %v1207 = vadd.f32 0.0, %v1206
      %1208 = vmatmul.bf16.gmra.mxu0 %v1153
      %v1209 = vpop.f32.mrf.mxu0
      %v1210 = vadd.f32 0.0, %v1209
      %v1211 = vpop.f32.mrf.mxu0
      %v1212 = vadd.f32 0.0, %v1211
      %1213 = vmatmul.bf16.gmra.mxu0 %v1156
      %v1214 = vpop.f32.mrf.mxu0
      %v1215 = vadd.f32 0.0, %v1214
      %v1216 = vpop.f32.mrf.mxu0
      %v1217 = vadd.f32 0.0, %v1216
      %1218 = vmatmul.bf16.gmra.mxu0 %v1159
      %v1219 = vpop.f32.mrf.mxu0
      %v1220 = vadd.f32 0.0, %v1219
      %v1221 = vpop.f32.mrf.mxu0
      %v1222 = vadd.f32 0.0, %v1221
      %1223 = vmatmul.bf16.gmra.mxu0 %v1162
      %v1224 = vpop.f32.mrf.mxu0
      %v1225 = vadd.f32 0.0, %v1224
      %v1226 = vpop.f32.mrf.mxu0
      %v1227 = vadd.f32 0.0, %v1226
      %1228 = vmatmul.bf16.gmra.mxu0 %v1165
      %v1229 = vpop.f32.mrf.mxu0
      %v1230 = vadd.f32 0.0, %v1229
      %v1231 = vpop.f32.mrf.mxu0
      %v1232 = vadd.f32 0.0, %v1231
      %1233 = vmatmul.bf16.gmra.mxu0 %v1168
      %v1234 = vpop.f32.mrf.mxu0
      %v1235 = vadd.f32 0.0, %v1234
      %v1236 = vpop.f32.mrf.mxu0
      %v1237 = vadd.f32 0.0, %v1236
      %1238 = vdwg.mxu0
      %v1239 = vadd.f32 %v999, %v1180
      %v1240 = vadd.f32 %v1001, %v1182
      %v1241 = vadd.f32 %v1004, %v1185
      %v1242 = vadd.f32 %v1006, %v1187
      %v1243 = vadd.f32 %v1009, %v1190
      %v1244 = vadd.f32 %v1011, %v1192
      %v1245 = vadd.f32 %v1014, %v1195
      %v1246 = vadd.f32 %v1016, %v1197
      %v1247 = vadd.f32 %v1019, %v1200
      %v1248 = vadd.f32 %v1021, %v1202
      %v1249 = vadd.f32 %v1024, %v1205
      %v1250 = vadd.f32 %v1026, %v1207
      %v1251 = vadd.f32 %v1029, %v1210
      %v1252 = vadd.f32 %v1031, %v1212
      %v1253 = vadd.f32 %v1034, %v1215
      %v1254 = vadd.f32 %v1036, %v1217
      %v1255 = vadd.f32 %v1039, %v1220
      %v1256 = vadd.f32 %v1041, %v1222
      %v1257 = vadd.f32 %v1044, %v1225
      %v1258 = vadd.f32 %v1046, %v1227
      %v1259 = vadd.f32 %v1049, %v1230
      %v1260 = vadd.f32 %v1051, %v1232
      %v1261 = vadd.f32 %v1054, %v1235
      %v1262 = vadd.f32 %v1056, %v1237
      %vm1263 = vsmask.f32 256
      %v1264 = vrot.slane %v822, 7
      %v1265 = vrot.slane %v831, 7
      %v1266 = vor.u32 %v1265, %v834
      %v1267 = vsel %vm1263, %v1264, %v1266
      %v1268 = vrot.slane %v840, 7
      %v1269 = vor.u32 %v1268, %v843
      %v1270 = vsel %vm1263, %v1265, %v1269
      %v1271 = vrot.slane %v849, 7
      %v1272 = vor.u32 %v1271, %v852
      %v1273 = vsel %vm1263, %v1268, %v1272
      %v1274 = vrot.slane %v858, 7
      %v1275 = vor.u32 %v1274, %v861
      %v1276 = vsel %vm1263, %v1271, %v1275
      %v1277 = vrot.slane %v867, 7
      %v1278 = vor.u32 %v1277, %v870
      %v1279 = vsel %vm1263, %v1274, %v1278
      %v1280 = vrot.slane %v876, 7
      %v1281 = vor.u32 %v1280, %v879
      %v1282 = vsel %vm1263, %v1277, %v1281
      %v1283 = vrot.slane %v885, 7
      %v1284 = vor.u32 %v1283, %v888
      %v1285 = vsel %vm1263, %v1280, %v1284
      %v1286 = vrot.slane %v894, 7
      %v1287 = vor.u32 %v1286, %v897
      %v1288 = vsel %vm1263, %v1283, %v1287
      %v1289 = vrot.slane %v903, 7
      %v1290 = vor.u32 %v1289, %v906
      %v1291 = vsel %vm1263, %v1286, %v1290
      %v1292 = vrot.slane %v912, 7
      %v1293 = vor.u32 %v1292, %v915
      %v1294 = vsel %vm1263, %v1289, %v1293
      %v1295 = vrot.slane %v921, 7
      %v1296 = vor.u32 %v1295, %v924
      %v1297 = vsel %vm1263, %v1292, %v1296
      %v1299 = vshrl.u32 %v573, 16
      %v1301 = vrot.slane %v1299, 7
      %v1302 = vshll.u32 %v573, 16
      %v1304 = vor.u32 %v1301, %v1302
      %v1305 = vsel %vm1263, %v1295, %v1304
      %v1314 = vunpack.c.l.b16 %v608
      %v1315 = vunpack.c.l.b16 %v609
      %v1316 = vunpack.c.l.b16 %v610
      %v1317 = vunpack.c.l.b16 %v611
      %v1318 = vunpack.c.l.b16 %v612
      %v1319 = vunpack.c.l.b16 %v613
      %v1320 = vunpack.c.l.b16 %v614
      %v1321 = vunpack.c.l.b16 %v615
      %v1322 = vpack.c.b16 %v1315, %v1314
      %v1323 = vpack.c.b16 %v1317, %v1316
      %v1324 = vpack.c.b16 %v1319, %v1318
      %v1325 = vpack.c.b16 %v1321, %v1320
      %v1331 = vsel %vm706, %v1267, 0
      %v1334 = vsel %vm706, %v1270, 0
      %v1337 = vsel %vm706, %v1273, 0
      %v1340 = vsel %vm706, %v1276, 0
      %v1343 = vsel %vm706, %v1279, 0
      %v1346 = vsel %vm706, %v1282, 0
      %v1349 = vsel %vm706, %v1285, 0
      %v1352 = vsel %vm706, %v1288, 0
      %v1355 = vsel %vm706, %v1291, 0
      %v1358 = vsel %vm706, %v1294, 0
      %v1361 = vsel %vm706, %v1297, 0
      %v1364 = vsel %vm706, %v1305, 0
      %1366 = vmatpush.bf16.msra.mxu0 0
      %1367 = vmatpush.bf16.msra.mxu0 0
      %1368 = vmatpush.bf16.msra.mxu0 0
      %1369 = vmatpush.bf16.msra.mxu0 0
      %1370 = vmatpush.bf16.msra.mxu0 %v1325
      %1371 = vmatpush.bf16.msra.mxu0 %v1324
      %1372 = vmatpush.bf16.msra.mxu0 %v1323
      %1373 = vmatpush.bf16.msra.mxu0 %v1322
      %1374 = vmatmul.bf16.gmra.mxu0 %v1331
      %v1375 = vpop.f32.mrf.mxu0
      %v1376 = vadd.f32 0.0, %v1375
      %v1377 = vpop.f32.mrf.mxu0
      %v1378 = vadd.f32 0.0, %v1377
      %1379 = vmatmul.bf16.gmra.mxu0 %v1334
      %v1380 = vpop.f32.mrf.mxu0
      %v1381 = vadd.f32 0.0, %v1380
      %v1382 = vpop.f32.mrf.mxu0
      %v1383 = vadd.f32 0.0, %v1382
      %1384 = vmatmul.bf16.gmra.mxu0 %v1337
      %v1385 = vpop.f32.mrf.mxu0
      %v1386 = vadd.f32 0.0, %v1385
      %v1387 = vpop.f32.mrf.mxu0
      %v1388 = vadd.f32 0.0, %v1387
      %1389 = vmatmul.bf16.gmra.mxu0 %v1340
      %v1390 = vpop.f32.mrf.mxu0
      %v1391 = vadd.f32 0.0, %v1390
      %v1392 = vpop.f32.mrf.mxu0
      %v1393 = vadd.f32 0.0, %v1392
      %1394 = vmatmul.bf16.gmra.mxu0 %v1343
      %v1395 = vpop.f32.mrf.mxu0
      %v1396 = vadd.f32 0.0, %v1395
      %v1397 = vpop.f32.mrf.mxu0
      %v1398 = vadd.f32 0.0, %v1397
      %1399 = vmatmul.bf16.gmra.mxu0 %v1346
      %v1400 = vpop.f32.mrf.mxu0
      %v1401 = vadd.f32 0.0, %v1400
      %v1402 = vpop.f32.mrf.mxu0
      %v1403 = vadd.f32 0.0, %v1402
      %1404 = vmatmul.bf16.gmra.mxu0 %v1349
      %v1405 = vpop.f32.mrf.mxu0
      %v1406 = vadd.f32 0.0, %v1405
      %v1407 = vpop.f32.mrf.mxu0
      %v1408 = vadd.f32 0.0, %v1407
      %1409 = vmatmul.bf16.gmra.mxu0 %v1352
      %v1410 = vpop.f32.mrf.mxu0
      %v1411 = vadd.f32 0.0, %v1410
      %v1412 = vpop.f32.mrf.mxu0
      %v1413 = vadd.f32 0.0, %v1412
      %1414 = vmatmul.bf16.gmra.mxu0 %v1355
      %v1415 = vpop.f32.mrf.mxu0
      %v1416 = vadd.f32 0.0, %v1415
      %v1417 = vpop.f32.mrf.mxu0
      %v1418 = vadd.f32 0.0, %v1417
      %1419 = vmatmul.bf16.gmra.mxu0 %v1358
      %v1420 = vpop.f32.mrf.mxu0
      %v1421 = vadd.f32 0.0, %v1420
      %v1422 = vpop.f32.mrf.mxu0
      %v1423 = vadd.f32 0.0, %v1422
      %1424 = vmatmul.bf16.gmra.mxu0 %v1361
      %v1425 = vpop.f32.mrf.mxu0
      %v1426 = vadd.f32 0.0, %v1425
      %v1427 = vpop.f32.mrf.mxu0
      %v1428 = vadd.f32 0.0, %v1427
      %1429 = vmatmul.bf16.gmra.mxu0 %v1364
      %v1430 = vpop.f32.mrf.mxu0
      %v1431 = vadd.f32 0.0, %v1430
      %v1432 = vpop.f32.mrf.mxu0
      %v1433 = vadd.f32 0.0, %v1432
      %1434 = vdwg.mxu0
      %v1435 = vadd.f32 %v1239, %v1376
      %v1436 = vadd.f32 %v1240, %v1378
      %v1437 = vadd.f32 %v1241, %v1381
      %v1438 = vadd.f32 %v1242, %v1383
      %v1439 = vadd.f32 %v1243, %v1386
      %v1440 = vadd.f32 %v1244, %v1388
      %v1441 = vadd.f32 %v1245, %v1391
      %v1442 = vadd.f32 %v1246, %v1393
      %v1443 = vadd.f32 %v1247, %v1396
      %v1444 = vadd.f32 %v1248, %v1398
      %v1445 = vadd.f32 %v1249, %v1401
      %v1446 = vadd.f32 %v1250, %v1403
      %v1447 = vadd.f32 %v1251, %v1406
      %v1448 = vadd.f32 %v1252, %v1408
      %v1449 = vadd.f32 %v1253, %v1411
      %v1450 = vadd.f32 %v1254, %v1413
      %v1451 = vadd.f32 %v1255, %v1416
      %v1452 = vadd.f32 %v1256, %v1418
      %v1453 = vadd.f32 %v1257, %v1421
      %v1454 = vadd.f32 %v1258, %v1423
      %v1455 = vadd.f32 %v1259, %v1426
      %v1456 = vadd.f32 %v1260, %v1428
      %v1457 = vadd.f32 %v1261, %v1431
      %v1458 = vadd.f32 %v1262, %v1433
      %v1467 = vunpack.c.l.b16 %v616
      %v1468 = vunpack.c.l.b16 %v617
      %v1469 = vunpack.c.l.b16 %v618
      %v1470 = vunpack.c.l.b16 %v619
      %v1471 = vunpack.c.l.b16 %v620
      %v1472 = vunpack.c.l.b16 %v621
      %v1473 = vunpack.c.l.b16 %v622
      %v1474 = vunpack.c.l.b16 %v623
      %v1475 = vpack.c.b16 %v1468, %v1467
      %v1476 = vpack.c.b16 %v1470, %v1469
      %v1477 = vpack.c.b16 %v1472, %v1471
      %v1478 = vpack.c.b16 %v1474, %v1473
      %v1483 = vsel %vm706, %v562, 0
      %v1485 = vsel %vm706, %v563, 0
      %v1487 = vsel %vm706, %v564, 0
      %v1489 = vsel %vm706, %v565, 0
      %v1491 = vsel %vm706, %v566, 0
      %v1493 = vsel %vm706, %v567, 0
      %v1495 = vsel %vm706, %v568, 0
      %v1497 = vsel %vm706, %v569, 0
      %v1499 = vsel %vm706, %v570, 0
      %v1501 = vsel %vm706, %v571, 0
      %v1503 = vsel %vm706, %v572, 0
      %v1505 = vsel %vm706, %v573, 0
      %1507 = vmatpush.bf16.msra.mxu0 0
      %1508 = vmatpush.bf16.msra.mxu0 0
      %1509 = vmatpush.bf16.msra.mxu0 0
      %1510 = vmatpush.bf16.msra.mxu0 0
      %1511 = vmatpush.bf16.msra.mxu0 %v1478
      %1512 = vmatpush.bf16.msra.mxu0 %v1477
      %1513 = vmatpush.bf16.msra.mxu0 %v1476
      %1514 = vmatpush.bf16.msra.mxu0 %v1475
      %1515 = vmatmul.bf16.gmra.mxu0 %v1483
      %v1516 = vpop.f32.mrf.mxu0
      %v1517 = vadd.f32 0.0, %v1516
      %v1518 = vpop.f32.mrf.mxu0
      %v1519 = vadd.f32 0.0, %v1518
      %1520 = vmatmul.bf16.gmra.mxu0 %v1485
      %v1521 = vpop.f32.mrf.mxu0
      %v1522 = vadd.f32 0.0, %v1521
      %v1523 = vpop.f32.mrf.mxu0
      %v1524 = vadd.f32 0.0, %v1523
      %1525 = vmatmul.bf16.gmra.mxu0 %v1487
      %v1526 = vpop.f32.mrf.mxu0
      %v1527 = vadd.f32 0.0, %v1526
      %v1528 = vpop.f32.mrf.mxu0
      %v1529 = vadd.f32 0.0, %v1528
      %1530 = vmatmul.bf16.gmra.mxu0 %v1489
      %v1531 = vpop.f32.mrf.mxu0
      %v1532 = vadd.f32 0.0, %v1531
      %v1533 = vpop.f32.mrf.mxu0
      %v1534 = vadd.f32 0.0, %v1533
      %1535 = vmatmul.bf16.gmra.mxu0 %v1491
      %v1536 = vpop.f32.mrf.mxu0
      %v1537 = vadd.f32 0.0, %v1536
      %v1538 = vpop.f32.mrf.mxu0
      %v1539 = vadd.f32 0.0, %v1538
      %1540 = vmatmul.bf16.gmra.mxu0 %v1493
      %v1541 = vpop.f32.mrf.mxu0
      %v1542 = vadd.f32 0.0, %v1541
      %v1543 = vpop.f32.mrf.mxu0
      %v1544 = vadd.f32 0.0, %v1543
      %1545 = vmatmul.bf16.gmra.mxu0 %v1495
      %v1546 = vpop.f32.mrf.mxu0
      %v1547 = vadd.f32 0.0, %v1546
      %v1548 = vpop.f32.mrf.mxu0
      %v1549 = vadd.f32 0.0, %v1548
      %1550 = vmatmul.bf16.gmra.mxu0 %v1497
      %v1551 = vpop.f32.mrf.mxu0
      %v1552 = vadd.f32 0.0, %v1551
      %v1553 = vpop.f32.mrf.mxu0
      %v1554 = vadd.f32 0.0, %v1553
      %1555 = vmatmul.bf16.gmra.mxu0 %v1499
      %v1556 = vpop.f32.mrf.mxu0
      %v1557 = vadd.f32 0.0, %v1556
      %v1558 = vpop.f32.mrf.mxu0
      %v1559 = vadd.f32 0.0, %v1558
      %1560 = vmatmul.bf16.gmra.mxu0 %v1501
      %v1561 = vpop.f32.mrf.mxu0
      %v1562 = vadd.f32 0.0, %v1561
      %v1563 = vpop.f32.mrf.mxu0
      %v1564 = vadd.f32 0.0, %v1563
      %1565 = vmatmul.bf16.gmra.mxu0 %v1503
      %v1566 = vpop.f32.mrf.mxu0
      %v1567 = vadd.f32 0.0, %v1566
      %v1568 = vpop.f32.mrf.mxu0
      %v1569 = vadd.f32 0.0, %v1568
      %1570 = vmatmul.bf16.gmra.mxu0 %v1505
      %v1571 = vpop.f32.mrf.mxu0
      %v1572 = vadd.f32 0.0, %v1571
      %v1573 = vpop.f32.mrf.mxu0
      %v1574 = vadd.f32 0.0, %v1573
      %1575 = vdwg.mxu0
      %v1576 = vadd.f32 %v1435, %v1517
      %v1577 = vadd.f32 %v1436, %v1519
      %v1578 = vadd.f32 %v1437, %v1522
      %v1579 = vadd.f32 %v1438, %v1524
      %v1580 = vadd.f32 %v1439, %v1527
      %v1581 = vadd.f32 %v1440, %v1529
      %v1582 = vadd.f32 %v1441, %v1532
      %v1583 = vadd.f32 %v1442, %v1534
      %v1584 = vadd.f32 %v1443, %v1537
      %v1585 = vadd.f32 %v1444, %v1539
      %v1586 = vadd.f32 %v1445, %v1542
      %v1587 = vadd.f32 %v1446, %v1544
      %v1588 = vadd.f32 %v1447, %v1547
      %v1589 = vadd.f32 %v1448, %v1549
      %v1590 = vadd.f32 %v1449, %v1552
      %v1591 = vadd.f32 %v1450, %v1554
      %v1592 = vadd.f32 %v1451, %v1557
      %v1593 = vadd.f32 %v1452, %v1559
      %v1594 = vadd.f32 %v1453, %v1562
      %v1595 = vadd.f32 %v1454, %v1564
      %v1596 = vadd.f32 %v1455, %v1567
      %v1597 = vadd.f32 %v1456, %v1569
      %v1598 = vadd.f32 %v1457, %v1572
      %v1599 = vadd.f32 %v1458, %v1574
      %vm1600 = vsmask.f32 7424
      %v1601 = vrot.slane %v834, 1
      %v1602 = vor.u32 %v831, %v1601
      %v1603 = vrot.slane %v843, 1
      %v1604 = vsel %vm1600, %v1602, %v1603
      %v1605 = vor.u32 %v840, %v1603
      %v1606 = vrot.slane %v852, 1
      %v1607 = vsel %vm1600, %v1605, %v1606
      %v1608 = vor.u32 %v849, %v1606
      %v1609 = vrot.slane %v861, 1
      %v1610 = vsel %vm1600, %v1608, %v1609
      %v1611 = vor.u32 %v858, %v1609
      %v1612 = vrot.slane %v870, 1
      %v1613 = vsel %vm1600, %v1611, %v1612
      %v1614 = vor.u32 %v867, %v1612
      %v1615 = vrot.slane %v879, 1
      %v1616 = vsel %vm1600, %v1614, %v1615
      %v1617 = vor.u32 %v876, %v1615
      %v1618 = vrot.slane %v888, 1
      %v1619 = vsel %vm1600, %v1617, %v1618
      %v1620 = vor.u32 %v885, %v1618
      %v1621 = vrot.slane %v897, 1
      %v1622 = vsel %vm1600, %v1620, %v1621
      %v1623 = vor.u32 %v894, %v1621
      %v1624 = vrot.slane %v906, 1
      %v1625 = vsel %vm1600, %v1623, %v1624
      %v1626 = vor.u32 %v903, %v1624
      %v1627 = vrot.slane %v915, 1
      %v1628 = vsel %vm1600, %v1626, %v1627
      %v1629 = vor.u32 %v912, %v1627
      %v1630 = vrot.slane %v924, 1
      %v1631 = vsel %vm1600, %v1629, %v1630
      %v1632 = vor.u32 %v921, %v1630
      %v1633 = vrot.slane %v1302, 1
      %v1634 = vsel %vm1600, %v1632, %v1633
      %v1635 = vor.u32 %v1299, %v1633
      %v1637 = vshll.u32 %v582, 16
      %v1639 = vrot.slane %v1637, 1
      %v1640 = vsel %vm1600, %v1635, %v1639
      %v1649 = vunpack.c.l.b16 %v624
      %v1650 = vunpack.c.l.b16 %v625
      %v1651 = vunpack.c.l.b16 %v626
      %v1652 = vunpack.c.l.b16 %v627
      %v1653 = vunpack.c.l.b16 %v628
      %v1654 = vunpack.c.l.b16 %v629
      %v1655 = vunpack.c.l.b16 %v630
      %v1656 = vunpack.c.l.b16 %v631
      %v1657 = vpack.c.b16 %v1650, %v1649
      %v1658 = vpack.c.b16 %v1652, %v1651
      %v1659 = vpack.c.b16 %v1654, %v1653
      %v1660 = vpack.c.b16 %v1656, %v1655
      %v1666 = vsel %vm706, %v1604, 0
      %v1669 = vsel %vm706, %v1607, 0
      %v1672 = vsel %vm706, %v1610, 0
      %v1675 = vsel %vm706, %v1613, 0
      %v1678 = vsel %vm706, %v1616, 0
      %v1681 = vsel %vm706, %v1619, 0
      %v1684 = vsel %vm706, %v1622, 0
      %v1687 = vsel %vm706, %v1625, 0
      %v1690 = vsel %vm706, %v1628, 0
      %v1693 = vsel %vm706, %v1631, 0
      %v1696 = vsel %vm706, %v1634, 0
      %v1699 = vsel %vm706, %v1640, 0
      %1701 = vmatpush.bf16.msra.mxu0 0
      %1702 = vmatpush.bf16.msra.mxu0 0
      %1703 = vmatpush.bf16.msra.mxu0 0
      %1704 = vmatpush.bf16.msra.mxu0 0
      %1705 = vmatpush.bf16.msra.mxu0 %v1660
      %1706 = vmatpush.bf16.msra.mxu0 %v1659
      %1707 = vmatpush.bf16.msra.mxu0 %v1658
      %1708 = vmatpush.bf16.msra.mxu0 %v1657
      %1709 = vmatmul.bf16.gmra.mxu0 %v1666
      %v1710 = vpop.f32.mrf.mxu0
      %v1711 = vadd.f32 0.0, %v1710
      %v1712 = vpop.f32.mrf.mxu0
      %v1713 = vadd.f32 0.0, %v1712
      %1714 = vmatmul.bf16.gmra.mxu0 %v1669
      %v1715 = vpop.f32.mrf.mxu0
      %v1716 = vadd.f32 0.0, %v1715
      %v1717 = vpop.f32.mrf.mxu0
      %v1718 = vadd.f32 0.0, %v1717
      %1719 = vmatmul.bf16.gmra.mxu0 %v1672
      %v1720 = vpop.f32.mrf.mxu0
      %v1721 = vadd.f32 0.0, %v1720
      %v1722 = vpop.f32.mrf.mxu0
      %v1723 = vadd.f32 0.0, %v1722
      %1724 = vmatmul.bf16.gmra.mxu0 %v1675
      %v1725 = vpop.f32.mrf.mxu0
      %v1726 = vadd.f32 0.0, %v1725
      %v1727 = vpop.f32.mrf.mxu0
      %v1728 = vadd.f32 0.0, %v1727
      %1729 = vmatmul.bf16.gmra.mxu0 %v1678
      %v1730 = vpop.f32.mrf.mxu0
      %v1731 = vadd.f32 0.0, %v1730
      %v1732 = vpop.f32.mrf.mxu0
      %v1733 = vadd.f32 0.0, %v1732
      %1734 = vmatmul.bf16.gmra.mxu0 %v1681
      %v1735 = vpop.f32.mrf.mxu0
      %v1736 = vadd.f32 0.0, %v1735
      %v1737 = vpop.f32.mrf.mxu0
      %v1738 = vadd.f32 0.0, %v1737
      %1739 = vmatmul.bf16.gmra.mxu0 %v1684
      %v1740 = vpop.f32.mrf.mxu0
      %v1741 = vadd.f32 0.0, %v1740
      %v1742 = vpop.f32.mrf.mxu0
      %v1743 = vadd.f32 0.0, %v1742
      %1744 = vmatmul.bf16.gmra.mxu0 %v1687
      %v1745 = vpop.f32.mrf.mxu0
      %v1746 = vadd.f32 0.0, %v1745
      %v1747 = vpop.f32.mrf.mxu0
      %v1748 = vadd.f32 0.0, %v1747
      %1749 = vmatmul.bf16.gmra.mxu0 %v1690
      %v1750 = vpop.f32.mrf.mxu0
      %v1751 = vadd.f32 0.0, %v1750
      %v1752 = vpop.f32.mrf.mxu0
      %v1753 = vadd.f32 0.0, %v1752
      %1754 = vmatmul.bf16.gmra.mxu0 %v1693
      %v1755 = vpop.f32.mrf.mxu0
      %v1756 = vadd.f32 0.0, %v1755
      %v1757 = vpop.f32.mrf.mxu0
      %v1758 = vadd.f32 0.0, %v1757
      %1759 = vmatmul.bf16.gmra.mxu0 %v1696
      %v1760 = vpop.f32.mrf.mxu0
      %v1761 = vadd.f32 0.0, %v1760
      %v1762 = vpop.f32.mrf.mxu0
      %v1763 = vadd.f32 0.0, %v1762
      %1764 = vmatmul.bf16.gmra.mxu0 %v1699
      %v1765 = vpop.f32.mrf.mxu0
      %v1766 = vadd.f32 0.0, %v1765
      %v1767 = vpop.f32.mrf.mxu0
      %v1768 = vadd.f32 0.0, %v1767
      %1769 = vdwg.mxu0
      %v1770 = vadd.f32 %v1576, %v1711
      %v1771 = vadd.f32 %v1577, %v1713
      %v1772 = vadd.f32 %v1578, %v1716
      %v1773 = vadd.f32 %v1579, %v1718
      %v1774 = vadd.f32 %v1580, %v1721
      %v1775 = vadd.f32 %v1581, %v1723
      %v1776 = vadd.f32 %v1582, %v1726
      %v1777 = vadd.f32 %v1583, %v1728
      %v1778 = vadd.f32 %v1584, %v1731
      %v1779 = vadd.f32 %v1585, %v1733
      %v1780 = vadd.f32 %v1586, %v1736
      %v1781 = vadd.f32 %v1587, %v1738
      %v1782 = vadd.f32 %v1588, %v1741
      %v1783 = vadd.f32 %v1589, %v1743
      %v1784 = vadd.f32 %v1590, %v1746
      %v1785 = vadd.f32 %v1591, %v1748
      %v1786 = vadd.f32 %v1592, %v1751
      %v1787 = vadd.f32 %v1593, %v1753
      %v1788 = vadd.f32 %v1594, %v1756
      %v1789 = vadd.f32 %v1595, %v1758
      %v1790 = vadd.f32 %v1596, %v1761
      %v1791 = vadd.f32 %v1597, %v1763
      %v1792 = vadd.f32 %v1598, %v1766
      %v1793 = vadd.f32 %v1599, %v1768
      %v1794 = vrot.slane %v1299, 3
      %v1795 = vrot.slane %v1302, 4
      %v1796 = vor.u32 %v1794, %v1795
      %v1797 = vsel %vm812, %v927, %v1796
      %v1798 = vshrl.u32 %v582, 16
      %v1800 = vrot.slane %v1798, 3
      %v1801 = vrot.slane %v1637, 4
      %v1802 = vor.u32 %v1800, %v1801
      %v1803 = vsel %vm812, %v1796, %v1802
      %v1805 = vshrl.u32 %v583, 16
      %v1807 = vrot.slane %v1805, 3
      %v1808 = vshll.u32 %v583, 16
      %v1810 = vrot.slane %v1808, 4
      %v1811 = vor.u32 %v1807, %v1810
      %v1812 = vsel %vm812, %v1802, %v1811
      %v1821 = vunpack.c.l.b16 %v632
      %v1822 = vunpack.c.l.b16 %v633
      %v1823 = vunpack.c.l.b16 %v634
      %v1824 = vunpack.c.l.b16 %v635
      %v1825 = vunpack.c.l.b16 %v636
      %v1826 = vunpack.c.l.b16 %v637
      %v1827 = vunpack.c.l.b16 %v638
      %v1828 = vunpack.c.l.b16 %v639
      %v1829 = vpack.c.b16 %v1822, %v1821
      %v1830 = vpack.c.b16 %v1824, %v1823
      %v1831 = vpack.c.b16 %v1826, %v1825
      %v1832 = vpack.c.b16 %v1828, %v1827
      %v1838 = vsel %vm706, %v1797, 0
      %v1841 = vsel %vm706, %v1803, 0
      %v1844 = vsel %vm706, %v1812, 0
      %1846 = vmatpush.bf16.msra.mxu0 0
      %1847 = vmatpush.bf16.msra.mxu0 0
      %1848 = vmatpush.bf16.msra.mxu0 0
      %1849 = vmatpush.bf16.msra.mxu0 0
      %1850 = vmatpush.bf16.msra.mxu0 %v1832
      %1851 = vmatpush.bf16.msra.mxu0 %v1831
      %1852 = vmatpush.bf16.msra.mxu0 %v1830
      %1853 = vmatpush.bf16.msra.mxu0 %v1829
      %1854 = vmatmul.bf16.gmra.mxu0 %v963
      %v1855 = vpop.f32.mrf.mxu0
      %v1856 = vadd.f32 0.0, %v1855
      %v1857 = vpop.f32.mrf.mxu0
      %v1858 = vadd.f32 0.0, %v1857
      %1859 = vmatmul.bf16.gmra.mxu0 %v966
      %v1860 = vpop.f32.mrf.mxu0
      %v1861 = vadd.f32 0.0, %v1860
      %v1862 = vpop.f32.mrf.mxu0
      %v1863 = vadd.f32 0.0, %v1862
      %1864 = vmatmul.bf16.gmra.mxu0 %v969
      %v1865 = vpop.f32.mrf.mxu0
      %v1866 = vadd.f32 0.0, %v1865
      %v1867 = vpop.f32.mrf.mxu0
      %v1868 = vadd.f32 0.0, %v1867
      %1869 = vmatmul.bf16.gmra.mxu0 %v972
      %v1870 = vpop.f32.mrf.mxu0
      %v1871 = vadd.f32 0.0, %v1870
      %v1872 = vpop.f32.mrf.mxu0
      %v1873 = vadd.f32 0.0, %v1872
      %1874 = vmatmul.bf16.gmra.mxu0 %v975
      %v1875 = vpop.f32.mrf.mxu0
      %v1876 = vadd.f32 0.0, %v1875
      %v1877 = vpop.f32.mrf.mxu0
      %v1878 = vadd.f32 0.0, %v1877
      %1879 = vmatmul.bf16.gmra.mxu0 %v978
      %v1880 = vpop.f32.mrf.mxu0
      %v1881 = vadd.f32 0.0, %v1880
      %v1882 = vpop.f32.mrf.mxu0
      %v1883 = vadd.f32 0.0, %v1882
      %1884 = vmatmul.bf16.gmra.mxu0 %v981
      %v1885 = vpop.f32.mrf.mxu0
      %v1886 = vadd.f32 0.0, %v1885
      %v1887 = vpop.f32.mrf.mxu0
      %v1888 = vadd.f32 0.0, %v1887
      %1889 = vmatmul.bf16.gmra.mxu0 %v984
      %v1890 = vpop.f32.mrf.mxu0
      %v1891 = vadd.f32 0.0, %v1890
      %v1892 = vpop.f32.mrf.mxu0
      %v1893 = vadd.f32 0.0, %v1892
      %1894 = vmatmul.bf16.gmra.mxu0 %v987
      %v1895 = vpop.f32.mrf.mxu0
      %v1896 = vadd.f32 0.0, %v1895
      %v1897 = vpop.f32.mrf.mxu0
      %v1898 = vadd.f32 0.0, %v1897
      %1899 = vmatmul.bf16.gmra.mxu0 %v1838
      %v1900 = vpop.f32.mrf.mxu0
      %v1901 = vadd.f32 0.0, %v1900
      %v1902 = vpop.f32.mrf.mxu0
      %v1903 = vadd.f32 0.0, %v1902
      %1904 = vmatmul.bf16.gmra.mxu0 %v1841
      %v1905 = vpop.f32.mrf.mxu0
      %v1906 = vadd.f32 0.0, %v1905
      %v1907 = vpop.f32.mrf.mxu0
      %v1908 = vadd.f32 0.0, %v1907
      %1909 = vmatmul.bf16.gmra.mxu0 %v1844
      %v1910 = vpop.f32.mrf.mxu0
      %v1911 = vadd.f32 0.0, %v1910
      %v1912 = vpop.f32.mrf.mxu0
      %v1913 = vadd.f32 0.0, %v1912
      %1914 = vdwg.mxu0
      %v1915 = vadd.f32 %v1770, %v1856
      %v1916 = vadd.f32 %v1771, %v1858
      %v1917 = vadd.f32 %v1772, %v1861
      %v1918 = vadd.f32 %v1773, %v1863
      %v1919 = vadd.f32 %v1774, %v1866
      %v1920 = vadd.f32 %v1775, %v1868
      %v1921 = vadd.f32 %v1776, %v1871
      %v1922 = vadd.f32 %v1777, %v1873
      %v1923 = vadd.f32 %v1778, %v1876
      %v1924 = vadd.f32 %v1779, %v1878
      %v1925 = vadd.f32 %v1780, %v1881
      %v1926 = vadd.f32 %v1781, %v1883
      %v1927 = vadd.f32 %v1782, %v1886
      %v1928 = vadd.f32 %v1783, %v1888
      %v1929 = vadd.f32 %v1784, %v1891
      %v1930 = vadd.f32 %v1785, %v1893
      %v1931 = vadd.f32 %v1786, %v1896
      %v1932 = vadd.f32 %v1787, %v1898
      %v1933 = vadd.f32 %v1788, %v1901
      %v1934 = vadd.f32 %v1789, %v1903
      %v1935 = vadd.f32 %v1790, %v1906
      %v1936 = vadd.f32 %v1791, %v1908
      %v1937 = vadd.f32 %v1792, %v1911
      %v1938 = vadd.f32 %v1793, %v1913
      %v1939 = vrot.slane %v573, 4
      %v1940 = vsel %vm656, %v680, %v1939
      %v1941 = vrot.slane %v582, 4
      %v1942 = vsel %vm656, %v1939, %v1941
      %v1943 = vrot.slane %v583, 4
      %v1944 = vsel %vm656, %v1941, %v1943
      %v1953 = vunpack.c.l.b16 %v640
      %v1954 = vunpack.c.l.b16 %v641
      %v1955 = vunpack.c.l.b16 %v642
      %v1956 = vunpack.c.l.b16 %v643
      %v1957 = vunpack.c.l.b16 %v644
      %v1958 = vunpack.c.l.b16 %v645
      %v1959 = vunpack.c.l.b16 %v646
      %v1960 = vunpack.c.l.b16 %v647
      %v1961 = vpack.c.b16 %v1954, %v1953
      %v1962 = vpack.c.b16 %v1956, %v1955
      %v1963 = vpack.c.b16 %v1958, %v1957
      %v1964 = vpack.c.b16 %v1960, %v1959
      %v1970 = vsel %vm706, %v1940, 0
      %v1973 = vsel %vm706, %v1942, 0
      %v1976 = vsel %vm706, %v1944, 0
      %1978 = vmatpush.bf16.msra.mxu0 0
      %1979 = vmatpush.bf16.msra.mxu0 0
      %1980 = vmatpush.bf16.msra.mxu0 0
      %1981 = vmatpush.bf16.msra.mxu0 0
      %1982 = vmatpush.bf16.msra.mxu0 %v1964
      %1983 = vmatpush.bf16.msra.mxu0 %v1963
      %1984 = vmatpush.bf16.msra.mxu0 %v1962
      %1985 = vmatpush.bf16.msra.mxu0 %v1961
      %1986 = vmatmul.bf16.gmra.mxu0 %v717
      %v1987 = vpop.f32.mrf.mxu0
      %v1988 = vadd.f32 0.0, %v1987
      %v1989 = vpop.f32.mrf.mxu0
      %v1990 = vadd.f32 0.0, %v1989
      %1991 = vmatmul.bf16.gmra.mxu0 %v720
      %v1992 = vpop.f32.mrf.mxu0
      %v1993 = vadd.f32 0.0, %v1992
      %v1994 = vpop.f32.mrf.mxu0
      %v1995 = vadd.f32 0.0, %v1994
      %1996 = vmatmul.bf16.gmra.mxu0 %v723
      %v1997 = vpop.f32.mrf.mxu0
      %v1998 = vadd.f32 0.0, %v1997
      %v1999 = vpop.f32.mrf.mxu0
      %v2000 = vadd.f32 0.0, %v1999
      %2001 = vmatmul.bf16.gmra.mxu0 %v726
      %v2002 = vpop.f32.mrf.mxu0
      %v2003 = vadd.f32 0.0, %v2002
      %v2004 = vpop.f32.mrf.mxu0
      %v2005 = vadd.f32 0.0, %v2004
      %2006 = vmatmul.bf16.gmra.mxu0 %v729
      %v2007 = vpop.f32.mrf.mxu0
      %v2008 = vadd.f32 0.0, %v2007
      %v2009 = vpop.f32.mrf.mxu0
      %v2010 = vadd.f32 0.0, %v2009
      %2011 = vmatmul.bf16.gmra.mxu0 %v732
      %v2012 = vpop.f32.mrf.mxu0
      %v2013 = vadd.f32 0.0, %v2012
      %v2014 = vpop.f32.mrf.mxu0
      %v2015 = vadd.f32 0.0, %v2014
      %2016 = vmatmul.bf16.gmra.mxu0 %v735
      %v2017 = vpop.f32.mrf.mxu0
      %v2018 = vadd.f32 0.0, %v2017
      %v2019 = vpop.f32.mrf.mxu0
      %v2020 = vadd.f32 0.0, %v2019
      %2021 = vmatmul.bf16.gmra.mxu0 %v738
      %v2022 = vpop.f32.mrf.mxu0
      %v2023 = vadd.f32 0.0, %v2022
      %v2024 = vpop.f32.mrf.mxu0
      %v2025 = vadd.f32 0.0, %v2024
      %2026 = vmatmul.bf16.gmra.mxu0 %v741
      %v2027 = vpop.f32.mrf.mxu0
      %v2028 = vadd.f32 0.0, %v2027
      %v2029 = vpop.f32.mrf.mxu0
      %v2030 = vadd.f32 0.0, %v2029
      %2031 = vmatmul.bf16.gmra.mxu0 %v1970
      %v2032 = vpop.f32.mrf.mxu0
      %v2033 = vadd.f32 0.0, %v2032
      %v2034 = vpop.f32.mrf.mxu0
      %v2035 = vadd.f32 0.0, %v2034
      %2036 = vmatmul.bf16.gmra.mxu0 %v1973
      %v2037 = vpop.f32.mrf.mxu0
      %v2038 = vadd.f32 0.0, %v2037
      %v2039 = vpop.f32.mrf.mxu0
      %v2040 = vadd.f32 0.0, %v2039
      %2041 = vmatmul.bf16.gmra.mxu0 %v1976
      %v2042 = vpop.f32.mrf.mxu0
      %v2043 = vadd.f32 0.0, %v2042
      %v2044 = vpop.f32.mrf.mxu0
      %v2045 = vadd.f32 0.0, %v2044
      %2046 = vdwg.mxu0
      %v2047 = vadd.f32 %v1915, %v1988
      %v2048 = vadd.f32 %v1916, %v1990
      %v2049 = vadd.f32 %v1917, %v1993
      %v2050 = vadd.f32 %v1918, %v1995
      %v2051 = vadd.f32 %v1919, %v1998
      %v2052 = vadd.f32 %v1920, %v2000
      %v2053 = vadd.f32 %v1921, %v2003
      %v2054 = vadd.f32 %v1922, %v2005
      %v2055 = vadd.f32 %v1923, %v2008
      %v2056 = vadd.f32 %v1924, %v2010
      %v2057 = vadd.f32 %v1925, %v2013
      %v2058 = vadd.f32 %v1926, %v2015
      %v2059 = vadd.f32 %v1927, %v2018
      %v2060 = vadd.f32 %v1928, %v2020
      %v2061 = vadd.f32 %v1929, %v2023
      %v2062 = vadd.f32 %v1930, %v2025
      %v2063 = vadd.f32 %v1931, %v2028
      %v2064 = vadd.f32 %v1932, %v2030
      %v2065 = vadd.f32 %v1933, %v2033
      %v2066 = vadd.f32 %v1934, %v2035
      %v2067 = vadd.f32 %v1935, %v2038
      %v2068 = vadd.f32 %v1936, %v2040
      %v2069 = vadd.f32 %v1937, %v2043
      %v2070 = vadd.f32 %v1938, %v2045
      %v2071 = vrot.slane %v1299, 4
      %v2072 = vrot.slane %v1302, 5
      %v2073 = vor.u32 %v2071, %v2072
      %v2074 = vsel %vm1058, %v1108, %v2073
      %v2075 = vrot.slane %v1798, 4
      %v2076 = vrot.slane %v1637, 5
      %v2077 = vor.u32 %v2075, %v2076
      %v2078 = vsel %vm1058, %v2073, %v2077
      %v2079 = vrot.slane %v1805, 4
      %v2080 = vrot.slane %v1808, 5
      %v2081 = vor.u32 %v2079, %v2080
      %v2082 = vsel %vm1058, %v2077, %v2081
      %v2091 = vunpack.c.l.b16 %v648
      %v2092 = vunpack.c.l.b16 %v649
      %v2093 = vunpack.c.l.b16 %v650
      %v2094 = vunpack.c.l.b16 %v651
      %v2095 = vunpack.c.l.b16 %v652
      %v2096 = vunpack.c.l.b16 %v653
      %v2097 = vunpack.c.l.b16 %v654
      %v2098 = vunpack.c.l.b16 %v655
      %v2099 = vpack.c.b16 %v2092, %v2091
      %v2100 = vpack.c.b16 %v2094, %v2093
      %v2101 = vpack.c.b16 %v2096, %v2095
      %v2102 = vpack.c.b16 %v2098, %v2097
      %v2108 = vsel %vm706, %v2074, 0
      %v2111 = vsel %vm706, %v2078, 0
      %v2114 = vsel %vm706, %v2082, 0
      %2116 = vmatpush.bf16.msra.mxu0 0
      %2117 = vmatpush.bf16.msra.mxu0 0
      %2118 = vmatpush.bf16.msra.mxu0 0
      %2119 = vmatpush.bf16.msra.mxu0 0
      %2120 = vmatpush.bf16.msra.mxu0 %v2102
      %2121 = vmatpush.bf16.msra.mxu0 %v2101
      %2122 = vmatpush.bf16.msra.mxu0 %v2100
      %2123 = vmatpush.bf16.msra.mxu0 %v2099
      %2124 = vmatmul.bf16.gmra.mxu0 %v1144
      %v2125 = vpop.f32.mrf.mxu0
      %v2126 = vadd.f32 0.0, %v2125
      %v2127 = vpop.f32.mrf.mxu0
      %v2128 = vadd.f32 0.0, %v2127
      %2129 = vmatmul.bf16.gmra.mxu0 %v1147
      %v2130 = vpop.f32.mrf.mxu0
      %v2131 = vadd.f32 0.0, %v2130
      %v2132 = vpop.f32.mrf.mxu0
      %v2133 = vadd.f32 0.0, %v2132
      %2134 = vmatmul.bf16.gmra.mxu0 %v1150
      %v2135 = vpop.f32.mrf.mxu0
      %v2136 = vadd.f32 0.0, %v2135
      %v2137 = vpop.f32.mrf.mxu0
      %v2138 = vadd.f32 0.0, %v2137
      %2139 = vmatmul.bf16.gmra.mxu0 %v1153
      %v2140 = vpop.f32.mrf.mxu0
      %v2141 = vadd.f32 0.0, %v2140
      %v2142 = vpop.f32.mrf.mxu0
      %v2143 = vadd.f32 0.0, %v2142
      %2144 = vmatmul.bf16.gmra.mxu0 %v1156
      %v2145 = vpop.f32.mrf.mxu0
      %v2146 = vadd.f32 0.0, %v2145
      %v2147 = vpop.f32.mrf.mxu0
      %v2148 = vadd.f32 0.0, %v2147
      %2149 = vmatmul.bf16.gmra.mxu0 %v1159
      %v2150 = vpop.f32.mrf.mxu0
      %v2151 = vadd.f32 0.0, %v2150
      %v2152 = vpop.f32.mrf.mxu0
      %v2153 = vadd.f32 0.0, %v2152
      %2154 = vmatmul.bf16.gmra.mxu0 %v1162
      %v2155 = vpop.f32.mrf.mxu0
      %v2156 = vadd.f32 0.0, %v2155
      %v2157 = vpop.f32.mrf.mxu0
      %v2158 = vadd.f32 0.0, %v2157
      %2159 = vmatmul.bf16.gmra.mxu0 %v1165
      %v2160 = vpop.f32.mrf.mxu0
      %v2161 = vadd.f32 0.0, %v2160
      %v2162 = vpop.f32.mrf.mxu0
      %v2163 = vadd.f32 0.0, %v2162
      %2164 = vmatmul.bf16.gmra.mxu0 %v1168
      %v2165 = vpop.f32.mrf.mxu0
      %v2166 = vadd.f32 0.0, %v2165
      %v2167 = vpop.f32.mrf.mxu0
      %v2168 = vadd.f32 0.0, %v2167
      %2169 = vmatmul.bf16.gmra.mxu0 %v2108
      %v2170 = vpop.f32.mrf.mxu0
      %v2171 = vadd.f32 0.0, %v2170
      %v2172 = vpop.f32.mrf.mxu0
      %v2173 = vadd.f32 0.0, %v2172
      %2174 = vmatmul.bf16.gmra.mxu0 %v2111
      %v2175 = vpop.f32.mrf.mxu0
      %v2176 = vadd.f32 0.0, %v2175
      %v2177 = vpop.f32.mrf.mxu0
      %v2178 = vadd.f32 0.0, %v2177
      %2179 = vmatmul.bf16.gmra.mxu0 %v2114
      %v2180 = vpop.f32.mrf.mxu0
      %v2181 = vadd.f32 0.0, %v2180
      %v2182 = vpop.f32.mrf.mxu0
      %v2183 = vadd.f32 0.0, %v2182
      %2184 = vdwg.mxu0
      %v2185 = vadd.f32 %v2047, %v2126
      %v2186 = vadd.f32 %v2048, %v2128
      %v2187 = vadd.f32 %v2049, %v2131
      %v2188 = vadd.f32 %v2050, %v2133
      %v2189 = vadd.f32 %v2051, %v2136
      %v2190 = vadd.f32 %v2052, %v2138
      %v2191 = vadd.f32 %v2053, %v2141
      %v2192 = vadd.f32 %v2054, %v2143
      %v2193 = vadd.f32 %v2055, %v2146
      %v2194 = vadd.f32 %v2056, %v2148
      %v2195 = vadd.f32 %v2057, %v2151
      %v2196 = vadd.f32 %v2058, %v2153
      %v2197 = vadd.f32 %v2059, %v2156
      %v2198 = vadd.f32 %v2060, %v2158
      %v2199 = vadd.f32 %v2061, %v2161
      %v2200 = vadd.f32 %v2062, %v2163
      %v2201 = vadd.f32 %v2063, %v2166
      %v2202 = vadd.f32 %v2064, %v2168
      %v2203 = vadd.f32 %v2065, %v2171
      %v2204 = vadd.f32 %v2066, %v2173
      %v2205 = vadd.f32 %v2067, %v2176
      %v2206 = vadd.f32 %v2068, %v2178
      %v2207 = vadd.f32 %v2069, %v2181
      %v2208 = vadd.f32 %v2070, %v2183
      %v2209 = vld [vmem:[%s4] sm:$0x1]
      %v2211 = vperm.slane %v2209, 0
      %v2213 = vadd.f32 %v2185, %v2211
      %v2214 = vadd.f32 %v2186, %v2211
      %v2215 = vadd.f32 %v2187, %v2211
      %v2216 = vadd.f32 %v2188, %v2211
      %v2217 = vadd.f32 %v2189, %v2211
      %v2218 = vadd.f32 %v2190, %v2211
      %v2219 = vadd.f32 %v2191, %v2211
      %v2220 = vadd.f32 %v2192, %v2211
      %v2221 = vadd.f32 %v2193, %v2211
      %v2222 = vadd.f32 %v2194, %v2211
      %v2223 = vadd.f32 %v2195, %v2211
      %v2224 = vadd.f32 %v2196, %v2211
      %v2225 = vadd.f32 %v2197, %v2211
      %v2226 = vadd.f32 %v2198, %v2211
      %v2227 = vadd.f32 %v2199, %v2211
      %v2228 = vadd.f32 %v2200, %v2211
      %v2229 = vadd.f32 %v2201, %v2211
      %v2230 = vadd.f32 %v2202, %v2211
      %v2231 = vadd.f32 %v2203, %v2211
      %v2232 = vadd.f32 %v2204, %v2211
      %v2233 = vadd.f32 %v2205, %v2211
      %v2234 = vadd.f32 %v2206, %v2211
      %v2235 = vadd.f32 %v2207, %v2211
      %v2236 = vadd.f32 %v2208, %v2211
      %v2237 = vsel %vm397, 1, 0
      %v2238 = vsel %vm398, 1, 0
      %v2239 = vsel %vm399, 1, 0
      %vm2240 = vcmp.eq.s32.totalorder %v2237, 1
      %vm2241 = vcmp.eq.s32.totalorder %v2238, 1
      %vm2242 = vcmp.eq.s32.totalorder %v2239, 1
      %v2243 = vsel %vm2240, %v2213, 0.0
      %v2244 = vsel %vm2241, %v2214, 0.0
      %v2245 = vsel %vm2242, %v2215, 0.0
      %v2246 = vsel %vm2240, %v2216, 0.0
      %v2247 = vsel %vm2241, %v2217, 0.0
      %v2248 = vsel %vm2242, %v2218, 0.0
      %v2249 = vsel %vm2240, %v2219, 0.0
      %v2250 = vsel %vm2241, %v2220, 0.0
      %v2251 = vsel %vm2242, %v2221, 0.0
      %v2252 = vsel %vm2240, %v2222, 0.0
      %v2253 = vsel %vm2241, %v2223, 0.0
      %v2254 = vsel %vm2242, %v2224, 0.0
      %v2255 = vsel %vm2240, %v2225, 0.0
      %v2256 = vsel %vm2241, %v2226, 0.0
      %v2257 = vsel %vm2242, %v2227, 0.0
      %v2258 = vsel %vm2240, %v2228, 0.0
      %v2259 = vsel %vm2241, %v2229, 0.0
      %v2260 = vsel %vm2242, %v2230, 0.0
      %v2261 = vsel %vm2240, %v2231, 0.0
      %v2262 = vsel %vm2241, %v2232, 0.0
      %v2263 = vsel %vm2242, %v2233, 0.0
      %v2264 = vsel %vm2240, %v2234, 0.0
      %v2265 = vsel %vm2241, %v2235, 0.0
      %v2266 = vsel %vm2242, %v2236, 0.0
      %vm2267 = vcmask 64512
      %2268 = vst.msk [vmem:[%s390] sm:$0xff] %vm2267, %v2243
      %2269 = vst.msk [vmem:[%s390 + $0x8] sm:$0xff] %vm2267, %v2244
      %2270 = vst.msk [vmem:[%s390 + $0x10] sm:$0xff] %vm2267, %v2245
      %2271 = vst.msk [vmem:[%s390 + $0x18] sm:$0xff] %vm2267, %v2246
      %2272 = vst.msk [vmem:[%s390 + $0x20] sm:$0xff] %vm2267, %v2247
      %2273 = vst.msk [vmem:[%s390 + $0x28] sm:$0xff] %vm2267, %v2248
      %2274 = vst.msk [vmem:[%s390 + $0x30] sm:$0xff] %vm2267, %v2249
      %2275 = vst.msk [vmem:[%s390 + $0x38] sm:$0xff] %vm2267, %v2250
      %2276 = vst.msk [vmem:[%s390 + $0x40] sm:$0xff] %vm2267, %v2251
      %2277 = vst.msk [vmem:[%s390 + $0x48] sm:$0xff] %vm2267, %v2252
      %2278 = vst.msk [vmem:[%s390 + $0x50] sm:$0xff] %vm2267, %v2253
      %2279 = vst.msk [vmem:[%s390 + $0x58] sm:$0xff] %vm2267, %v2254
      %2280 = vst.msk [vmem:[%s390 + $0x60] sm:$0xff] %vm2267, %v2255
      %2281 = vst.msk [vmem:[%s390 + $0x68] sm:$0xff] %vm2267, %v2256
      %2282 = vst.msk [vmem:[%s390 + $0x70] sm:$0xff] %vm2267, %v2257
      %2283 = vst.msk [vmem:[%s390 + $0x78] sm:$0xff] %vm2267, %v2258
      %2284 = vst.msk [vmem:[%s390 + $0x80] sm:$0xff] %vm2267, %v2259
      %2285 = vst.msk [vmem:[%s390 + $0x88] sm:$0xff] %vm2267, %v2260
      %2286 = vst.msk [vmem:[%s390 + $0x90] sm:$0xff] %vm2267, %v2261
      %2287 = vst.msk [vmem:[%s390 + $0x98] sm:$0xff] %vm2267, %v2262
      %2288 = vst.msk [vmem:[%s390 + $0xa0] sm:$0xff] %vm2267, %v2263
      %2289 = vst.msk [vmem:[%s390 + $0xa8] sm:$0xff] %vm2267, %v2264
      %2290 = vst.msk [vmem:[%s390 + $0xb0] sm:$0xff] %vm2267, %v2265
      %2291 = vst.msk [vmem:[%s390 + $0xb8] sm:$0xff] %vm2267, %v2266
      %s2292 = smul.u32 24, %s21
      %p2293 = scmp.lt.s32.totalorder %s20, 1
      %s2294 = scalar_select %p2293, %s20, 1
      %p2295 = scmp.lt.s32.totalorder %s2292, 47
      %s2296 = scalar_select %p2295, %s2292, 47
      %s2297 = smul.addr %s2294, 48
      %s2298 = sadd.s32 %s2296, %s2297
      %s2299 = smul.addr %s2298, 8
      %s2300 = scalar_lea.vmem %s5, %s2299
      // Predicated region
      $region41: #{_lambda_.7} parent=39 // pred_check
        %p2301 = pneg %p190
      $region42: #{_lambda_.7} parent=39 // pred_check_branch
        %2303 = sbr.rel (%p2301) target = $region44
      $region43: #{_lambda_.7} parent=39 // pred_region
        %s2304 = smul.u32 24, %s21
      $region44: #{_lambda_.7} parent=39 // pred_fallthru
        _
    $region40: #{_lambda_.7} parent=5 // pred_fallthru
      _
    %p2305 = scmp.le.s32.totalorder 2, %s11
    // Predicated region
    $region45: #{_lambda_.7} parent=5 // pred_check
      %p2306 = pneg %p2305
    $region46: #{_lambda_.7} parent=5 // pred_check_branch
      %2308 = sbr.rel (%p2306) target = $region48
    $region47: #{_lambda_.7} parent=5 // pred_region
      %s2309 = ssub.s32 %s11, 2
      // Predicated region
      $region49: #{_lambda_.7} parent=47 // pred_check
        %p2310 = pneg %p196
      $region50: #{_lambda_.7} parent=47 // pred_check_branch
        %2312 = sbr.rel (%p2310) target = $region52
      $region51: #{_lambda_.7} parent=47 // pred_region
        %s2313 = smul.u32 24, %s23
        %p2314 = scmp.lt.s32.totalorder %s22, 1
        %s2315 = scalar_select %p2314, %s22, 1
        %p2316 = scmp.lt.s32.totalorder %s2313, 47
        %s2317 = scalar_select %p2316, %s2313, 47
        %s2318 = smul.addr %s2315, 48
        %s2319 = sadd.s32 %s2317, %s2318
        %s2320 = smul.addr %s2319, 8
        %s2321 = scalar_lea.vmem %s5, %s2320
      $region52: #{_lambda_.7} parent=47 // pred_fallthru
        _
    $region48: #{_lambda_.7} parent=5 // pred_fallthru
      _
  $region6: #{_lambda_.7} parent=0 // loop_footer
    %s15 = sadd.s32 1, %s11
  $region7: #{_lambda_.7} parent=0 // loop_footer_branch
    %10 = sbr.rel target = $region3
  $region8: #{_lambda_.7} parent=0 // loop_exit
    _

</llo_original>
